<compile_context>
chip_gen: v7x
topology: tpu7x:2x2x1
jax: 0.10.0
libtpu: 0.0.40
codegen_flags: <defaults>
</compile_context>

<pallas_src>
import functools

import jax
import jax.numpy as jnp
from jax import lax
from jax.experimental import pallas as pl
from jax.experimental.pallas import tpu as pltpu

SUBLANE = 8   # pad batch / input-feature rows to the sublane tile
LANES = 128   # FC slab lane width


def _round_up(v, m):
    return ((v + m - 1) // m) * m


# ----------------------------------------------------------------------------
# Fused kernel factory.  Gate order follows PyTorch nn.LSTM: i, f, g, o.
# ----------------------------------------------------------------------------
def _make_fused_kernel(T: int, Bp: int, Dp: int, H: int, L: int):
    layer_base = Dp + H                    # start of residual-layer weight rows
    bias_base = layer_base + L * 2 * H     # start of bias rows (1 row per layer)
    fc_b_base = H + LANES                  # start of FC bias/vector rows

    def lstm_layer(in_ref, out_ref, gbuf, w_ih, w_hh, bias, residual):
        x_all = in_ref[...]                                    # (T*Bp, Din)
        # Hoisted input projection: one MXU pass over the whole sequence.
        gbuf[...] = jnp.dot(x_all, w_ih,
                            preferred_element_type=jnp.float32) + bias
        h = None
        c = None
        for t in range(T):                 # static unroll; all offsets constant
            r0 = t * Bp
            g_pre = gbuf[pl.ds(r0, Bp), :]                      # (Bp, 4H)
            if t > 0:
                # TODO(synk): consider pltpu.matmul_push_rhs/acc_lhs/pop to keep
                # W_hh staged in the MXU across the T steps; jnp.dot kept here
                # because the explicit MXU API has shape constraints at K=H=32.
                g_pre = g_pre + jnp.dot(h, w_hh,
                                        preferred_element_type=jnp.float32)
            sg = jax.nn.sigmoid(g_pre)                # i/f/o share one EUP pass
            g_g = jnp.tanh(g_pre[:, 2 * H:3 * H])     # tanh only on g-gate slice
            i_g = sg[:, 0:H]
            o_g = sg[:, 3 * H:4 * H]
            if t == 0:
                c = i_g * g_g                         # h0 = c0 = 0: skip f*c
            else:
                f_g = sg[:, H:2 * H]
                c = f_g * c + i_g * g_g
            h = o_g * jnp.tanh(c)
            if residual:
                out_ref[pl.ds(r0, Bp), :] = h + x_all[r0:r0 + Bp, :]
            else:
                out_ref[pl.ds(r0, Bp), :] = h

    def kernel(x_ref, lstm_ref, fc_ref, out_ref, abuf, bbuf, gbuf):
        # ---- first LSTM layer (input_size -> H) ----
        w_ih0 = lstm_ref[pl.ds(0, Dp), :]
        w_hh0 = lstm_ref[pl.ds(Dp, H), :]
        b0 = lstm_ref[pl.ds(bias_base, 1), :]
        lstm_layer(x_ref, abuf, gbuf, w_ih0, w_hh0, b0, residual=False)

        # ---- residual LSTM stack: VMEM ping-pong ----
        cur, nxt = abuf, bbuf
        for l in range(L):
            base = layer_base + l * 2 * H
            w_ih = lstm_ref[pl.ds(base, H), :]
            w_hh = lstm_ref[pl.ds(base + H, H), :]
            b = lstm_ref[pl.ds(bias_base + 1 + l, 1), :]
            lstm_layer(cur, nxt, gbuf, w_ih, w_hh, b, residual=True)
            cur, nxt = nxt, cur

        # ---- fused MLP head on the (T*Bp, H) activation slab ----
        # FC weights are zero-padded to full 128-lane width, so no lane
        # sub-slicing is needed (padded columns stay exactly zero through ReLU).
        xf = cur[...]
        w1 = fc_ref[pl.ds(0, H), :]              # (H, 128)   real (H, 64)
        w2 = fc_ref[pl.ds(H, LANES), :]          # (128, 128) real (64, 32)
        b1 = fc_ref[pl.ds(fc_b_base, 1), :]
        b2 = fc_ref[pl.ds(fc_b_base + 1, 1), :]
        w3 = fc_ref[pl.ds(fc_b_base + 2, 1), :]  # (1, 128)   real (1, 32)
        sc = fc_ref[pl.ds(fc_b_base + 3, 1), :]  # [b3, w4, b4, 0, ...]
        b3 = sc[:, 0:1]
        w4 = sc[:, 1:2]
        b4 = sc[:, 2:3]

        h1 = jnp.maximum(
            jnp.dot(xf, w1, preferred_element_type=jnp.float32) + b1, 0.0)
        h2 = jnp.maximum(
            jnp.dot(h1, w2, preferred_element_type=jnp.float32) + b2, 0.0)
        # (32,1) and (1,1) layers on the VPU/XLU: broadcast-mul + lane reduce.
        h3 = jnp.maximum(
            jnp.sum(h2 * w3, axis=-1, keepdims=True) + b3, 0.0)
        out_ref[...] = jax.nn.sigmoid(h3 * w4 + b4)

    return kernel


# ----------------------------------------------------------------------------
# Parameter packing (done once, outside the jitted forward).
# ----------------------------------------------------------------------------
def pack_reslstm_params(params):
    """Pack all LSTM params into one (., 4H) slab and all FC params into one
    zero-padded (., 128) slab."""
    wih0, whh0, b0 = params["first_lstm"]
    D = wih0.shape[0]
    H = whh0.shape[0]
    L = len(params["lstms"])
    G = 4 * H
    Dp = max(SUBLANE, _round_up(D, SUBLANE))

    rows = [jnp.pad(wih0, ((0, Dp - D), (0, 0))), whh0]
    for (wih, whh, _) in params["lstms"]:
        rows.append(wih)
        rows.append(whh)
    rows.append(b0.reshape(1, G))
    for (_, _, b) in params["lstms"]:
        rows.append(b.reshape(1, G))
    lstm_slab = jnp.concatenate(rows, axis=0)           # (Dp + H + L*2H + L+1, 4H)

    (w1, b1), (w2, b2), (w3, b3), (w4, b4) = params["fc"]
    assert H <= LANES and w2.shape[0] <= LANES

    def pad_to(a, r, c):
        return jnp.pad(a, ((0, r - a.shape[0]), (0, c - a.shape[1])))

    fc_slab = jnp.concatenate(
        [
            pad_to(w1, H, LANES),                          # rows [0, H)
            pad_to(w2, LANES, LANES),                      # rows [H, H+128)
            pad_to(b1, 1, LANES),                          # row  H+128
            pad_to(b2, 1, LANES),                          # row  H+129
            pad_to(w3.T, 1, LANES),                        # row  H+130
            pad_to(jnp.concatenate([b3, w4, b4], axis=1),  # row  H+131
                   1, LANES),
        ],
        axis=0,
    )
    return lstm_slab, fc_slab


# ----------------------------------------------------------------------------
# Full ResLSTM forward (wrapper glue in plain JAX, hot path in one Pallas call).
# ----------------------------------------------------------------------------
@functools.partial(jax.jit, static_argnames=("hidden_size", "num_layers"))
def reslstm_forward(x, lstm_slab, fc_slab, *, hidden_size, num_layers):
    """x: (B, T, input_size), batch-first like PyTorch. Returns (B, T, 1)."""
    B, T, D = x.shape
    H = hidden_size
    L = num_layers
    Dp = max(SUBLANE, _round_up(D, SUBLANE))
    Bp = _round_up(B, SUBLANE)
    N = T * Bp

    # Pad batch to full sublanes + input features to Dp, go time-major, fold
    # time into the sublane axis.
    x = x.astype(jnp.float32)
    x_pad = jnp.pad(x, ((0, Bp - B), (0, 0), (0, Dp - D)))
    x_tm = jnp.transpose(x_pad, (1, 0, 2)).reshape(N, Dp)    # (T*Bp, Dp)

    vmem = pl.BlockSpec(memory_space=pltpu.MemorySpace.VMEM)
    out = pl.pallas_call(
        _make_fused_kernel(T, Bp, Dp, H, L),
        out_shape=jax.ShapeDtypeStruct((N, 1), jnp.float32),
        in_specs=[vmem, vmem, vmem],
        out_specs=vmem,
        scratch_shapes=[
            pltpu.VMEM((N, H), jnp.float32),       # activation ping
            pltpu.VMEM((N, H), jnp.float32),       # activation pong
            pltpu.VMEM((N, 4 * H), jnp.float32),   # hoisted gate pre-activations
        ],
    )(x_tm, lstm_slab, fc_slab)

    out = out.reshape(T, Bp, 1)[:, :B, :]                    # drop batch padding
    return jnp.transpose(out, (1, 0, 2))                     # (B, T, 1)


# ----------------------------------------------------------------------------
# Parameter construction (deterministic, PyTorch-like uniform init).
# ----------------------------------------------------------------------------
def _uniform(key, shape, bound):
    return jax.random.uniform(key, shape, jnp.float32, -bound, bound)


def init_reslstm_params(key, input_size, hidden_size, num_layers):
    params = {}
    H = hidden_size
    bound = 1.0 / jnp.sqrt(jnp.float32(H))

    def lstm_params(k, in_dim):
        k1, k2, k3, k4 = jax.random.split(k, 4)
        w_ih = _uniform(k1, (in_dim, 4 * H), bound)   # stored transposed: (D, 4H)
        w_hh = _uniform(k2, (H, 4 * H), bound)        # (H, 4H)
        b = _uniform(k3, (1, 4 * H), bound) + _uniform(k4, (1, 4 * H), bound)
        return (w_ih, w_hh, b)

    keys = jax.random.split(key, num_layers + 2)
    params["first_lstm"] = lstm_params(keys[0], input_size)
    params["lstms"] = [lstm_params(keys[i + 1], H) for i in range(num_layers)]

    # fc: DeepNeuralNetwork(H, 64, 32, 1) + output Linear(1,1)+Sigmoid
    dims = [(H, 64), (64, 32), (32, 1), (1, 1)]
    fc_keys = jax.random.split(keys[-1], len(dims) * 2)
    fc = []
    for i, (din, dout) in enumerate(dims):
        bnd = 1.0 / jnp.sqrt(jnp.float32(din))
        W = _uniform(fc_keys[2 * i], (din, dout), bnd)
        b = _uniform(fc_keys[2 * i + 1], (1, dout), bnd)
        fc.append((W, b))
    params["fc"] = fc
    return params


# ----------------------------------------------------------------------------
# Pure-JAX reference (lightweight correctness check).
# ----------------------------------------------------------------------------
def reslstm_reference(x, params):
    def lstm_ref(x_bt, w_ih, w_hh, b, residual):
        B, T, _ = x_bt.shape
        H = w_hh.shape[0]

        def step(carry, x_t):
            h, c = carry
            gates = x_t @ w_ih + h @ w_hh + b
            i = jax.nn.sigmoid(gates[:, :H])
            f = jax.nn.sigmoid(gates[:, H:2 * H])
            g = jnp.tanh(gates[:, 2 * H:3 * H])
            o = jax.nn.sigmoid(gates[:, 3 * H:])
            c = f * c + i * g
            h = o * jnp.tanh(c)
            return (h, c), h

        h0 = jnp.zeros((B, H), jnp.float32)
        c0 = jnp.zeros((B, H), jnp.float32)
        _, hs = lax.scan(step, (h0, c0), jnp.transpose(x_bt, (1, 0, 2)))
        out = jnp.transpose(hs, (1, 0, 2))
        return out + x_bt if residual else out

    w_ih, w_hh, b = params["first_lstm"]
    y = lstm_ref(x, w_ih, w_hh, b, False)
    for (w_ih, w_hh, b) in params["lstms"]:
        y = lstm_ref(y, w_ih, w_hh, b, True)
    for k, (W, bb) in enumerate(params["fc"]):
        y = y @ W + bb
        y = jax.nn.sigmoid(y) if k == len(params["fc"]) - 1 else jnp.maximum(y, 0.0)
    return y


if __name__ == "__main__":
    B, T, INPUT_SIZE, HIDDEN = 2, 8, 4, 32
    NUM_LAYERS = 5

    key = jax.random.PRNGKey(0)
    k_param, k_x = jax.random.split(key)
    params = init_reslstm_params(k_param, INPUT_SIZE, HIDDEN, NUM_LAYERS)
    lstm_slab, fc_slab = pack_reslstm_params(params)   # packed once, outside jit
    x = jax.random.normal(k_x, (B, T, INPUT_SIZE), jnp.float32)

    out = reslstm_forward(x, lstm_slab, fc_slab,
                          hidden_size=HIDDEN, num_layers=NUM_LAYERS)
    out = jax.block_until_ready(out)

    assert out.shape == (B, T, 1), out.shape
    ref = reslstm_reference(x, params)
    assert jnp.allclose(out, ref, atol=2e-3, rtol=2e-3), float(jnp.max(jnp.abs(out - ref)))

    print("KERNEL_OK")
</pallas_src>

<mosaic_0001>
module attributes {stable_mosaic.version = 11 : i64} {
  func.func @kernel(%arg0: memref<64x8xf32, #tpu.memory_space<vmem>>, %arg1: memref<366x128xf32, #tpu.memory_space<vmem>>, %arg2: memref<164x128xf32, #tpu.memory_space<vmem>>, %arg3: memref<64x1xf32, #tpu.memory_space<vmem>>, %arg4: memref<64x32xf32, #tpu.memory_space<vmem>>, %arg5: memref<64x32xf32, #tpu.memory_space<vmem>>, %arg6: memref<64x128xf32, #tpu.memory_space<vmem>>) attributes {dimension_semantics = [], scalar_prefetch = 0 : i64, scratch_operands = 3 : i64, tpu.core_type = #tpu.core_type<tc>} {
    %c0 = arith.constant 0 : index
    %c0_0 = arith.constant 0 : index
    %0 = vector.load %arg1[%c0, %c0_0] : memref<366x128xf32, #tpu.memory_space<vmem>>, vector<8x128xf32>
    %c8 = arith.constant 8 : index
    %c0_1 = arith.constant 0 : index
    %1 = vector.load %arg1[%c8, %c0_1] : memref<366x128xf32, #tpu.memory_space<vmem>>, vector<32x128xf32>
    %c360 = arith.constant 360 : index
    %c0_2 = arith.constant 0 : index
    %2 = vector.load %arg1[%c360, %c0_2] : memref<366x128xf32, #tpu.memory_space<vmem>>, vector<1x128xf32>
    %c0_3 = arith.constant 0 : index
    %c0_4 = arith.constant 0 : index
    %3 = vector.load %arg0[%c0_3, %c0_4] : memref<64x8xf32, #tpu.memory_space<vmem>>, vector<64x8xf32>
    %cst = arith.constant dense<0.000000e+00> : vector<64x128xf32>
    %4 = tpu.matmul %3, %0, %cst {dimension_numbers = #tpu.dot_dimension_numbers<[1], [0], [0], [1], [0, 0, 1, 1], [], []>} : vector<64x8xf32>, vector<8x128xf32>, vector<64x128xf32> -> vector<64x128xf32>
    %5 = vector.broadcast %2 : vector<1x128xf32> to vector<64x128xf32>
    %6 = arith.addf %4, %5 : vector<64x128xf32>
    %c0_5 = arith.constant 0 : index
    %c0_6 = arith.constant 0 : index
    %7 = vector.load %arg6[%c0_5, %c0_6] : memref<64x128xf32, #tpu.memory_space<vmem>>, vector<64x128xf32>
    tpu.vector_store %arg6[%c0_5, %c0_6], %6 {strides = array<i32>} : memref<64x128xf32, #tpu.memory_space<vmem>>, vector<64x128xf32>,
    %c0_7 = arith.constant 0 : index
    %c0_8 = arith.constant 0 : index
    %8 = vector.load %arg6[%c0_7, %c0_8] : memref<64x128xf32, #tpu.memory_space<vmem>>, vector<8x128xf32>
    %9 = arith.negf %8 : vector<8x128xf32>
    %10 = math.exp %9 : vector<8x128xf32>
    %cst_9 = arith.constant 1.000000e+00 : f32
    %11 = vector.broadcast %cst_9 : f32 to vector<8x128xf32>
    %12 = arith.addf %11, %10 : vector<8x128xf32>
    %13 = arith.divf %11, %12 : vector<8x128xf32>
    %14 = vector.extract_strided_slice %8 {offsets = [0, 64], sizes = [8, 32], strides = [1, 1]} : vector<8x128xf32> to vector<8x32xf32>
    %15 = math.tanh %14 : vector<8x32xf32>
    %16 = vector.extract_strided_slice %13 {offsets = [0, 0], sizes = [8, 32], strides = [1, 1]} : vector<8x128xf32> to vector<8x32xf32>
    %17 = vector.extract_strided_slice %13 {offsets = [0, 96], sizes = [8, 32], strides = [1, 1]} : vector<8x128xf32> to vector<8x32xf32>
    %18 = arith.mulf %16, %15 : vector<8x32xf32>
    %19 = math.tanh %18 : vector<8x32xf32>
    %20 = arith.mulf %17, %19 : vector<8x32xf32>
    %c0_10 = arith.constant 0 : index
    %c0_11 = arith.constant 0 : index
    %21 = vector.load %arg4[%c0_10, %c0_11] : memref<64x32xf32, #tpu.memory_space<vmem>>, vector<8x32xf32>
    tpu.vector_store %arg4[%c0_10, %c0_11], %20 {strides = array<i32>} : memref<64x32xf32, #tpu.memory_space<vmem>>, vector<8x32xf32>,
    %c8_12 = arith.constant 8 : index
    %c0_13 = arith.constant 0 : index
    %22 = vector.load %arg6[%c8_12, %c0_13] : memref<64x128xf32, #tpu.memory_space<vmem>>, vector<8x128xf32>
    %cst_14 = arith.constant dense<0.000000e+00> : vector<8x128xf32>
    %23 = tpu.matmul %20, %1, %cst_14 {dimension_numbers = #tpu.dot_dimension_numbers<[1], [0], [0], [1], [0, 0, 1, 1], [], []>} : vector<8x32xf32>, vector<32x128xf32>, vector<8x128xf32> -> vector<8x128xf32>
    %24 = arith.addf %22, %23 : vector<8x128xf32>
    %25 = arith.negf %24 : vector<8x128xf32>
    %26 = math.exp %25 : vector<8x128xf32>
    %cst_15 = arith.constant 1.000000e+00 : f32
    %27 = vector.broadcast %cst_15 : f32 to vector<8x128xf32>
    %28 = arith.addf %27, %26 : vector<8x128xf32>
    %29 = arith.divf %27, %28 : vector<8x128xf32>
    %30 = vector.extract_strided_slice %24 {offsets = [0, 64], sizes = [8, 32], strides = [1, 1]} : vector<8x128xf32> to vector<8x32xf32>
    %31 = math.tanh %30 : vector<8x32xf32>
    %32 = vector.extract_strided_slice %29 {offsets = [0, 0], sizes = [8, 32], strides = [1, 1]} : vector<8x128xf32> to vector<8x32xf32>
    %33 = vector.extract_strided_slice %29 {offsets = [0, 96], sizes = [8, 32], strides = [1, 1]} : vector<8x128xf32> to vector<8x32xf32>
    %34 = vector.extract_strided_slice %29 {offsets = [0, 32], sizes = [8, 32], strides = [1, 1]} : vector<8x128xf32> to vector<8x32xf32>
    %35 = arith.mulf %34, %18 : vector<8x32xf32>
    %36 = arith.mulf %32, %31 : vector<8x32xf32>
    %37 = arith.addf %35, %36 : vector<8x32xf32>
    %38 = math.tanh %37 : vector<8x32xf32>
    %39 = arith.mulf %33, %38 : vector<8x32xf32>
    %c8_16 = arith.constant 8 : index
    %c0_17 = arith.constant 0 : index
    %40 = vector.load %arg4[%c8_16, %c0_17] : memref<64x32xf32, #tpu.memory_space<vmem>>, vector<8x32xf32>
    tpu.vector_store %arg4[%c8_16, %c0_17], %39 {strides = array<i32>} : memref<64x32xf32, #tpu.memory_space<vmem>>, vector<8x32xf32>,
    %c16 = arith.constant 16 : index
    %c0_18 = arith.constant 0 : index
    %41 = vector.load %arg6[%c16, %c0_18] : memref<64x128xf32, #tpu.memory_space<vmem>>, vector<8x128xf32>
    %cst_19 = arith.constant dense<0.000000e+00> : vector<8x128xf32>
    %42 = tpu.matmul %39, %1, %cst_19 {dimension_numbers = #tpu.dot_dimension_numbers<[1], [0], [0], [1], [0, 0, 1, 1], [], []>} : vector<8x32xf32>, vector<32x128xf32>, vector<8x128xf32> -> vector<8x128xf32>
    %43 = arith.addf %41, %42 : vector<8x128xf32>
    %44 = arith.negf %43 : vector<8x128xf32>
    %45 = math.exp %44 : vector<8x128xf32>
    %cst_20 = arith.constant 1.000000e+00 : f32
    %46 = vector.broadcast %cst_20 : f32 to vector<8x128xf32>
    %47 = arith.addf %46, %45 : vector<8x128xf32>
    %48 = arith.divf %46, %47 : vector<8x128xf32>
    %49 = vector.extract_strided_slice %43 {offsets = [0, 64], sizes = [8, 32], strides = [1, 1]} : vector<8x128xf32> to vector<8x32xf32>
    %50 = math.tanh %49 : vector<8x32xf32>
    %51 = vector.extract_strided_slice %48 {offsets = [0, 0], sizes = [8, 32], strides = [1, 1]} : vector<8x128xf32> to vector<8x32xf32>
    %52 = vector.extract_strided_slice %48 {offsets = [0, 96], sizes = [8, 32], strides = [1, 1]} : vector<8x128xf32> to vector<8x32xf32>
    %53 = vector.extract_strided_slice %48 {offsets = [0, 32], sizes = [8, 32], strides = [1, 1]} : vector<8x128xf32> to vector<8x32xf32>
    %54 = arith.mulf %53, %37 : vector<8x32xf32>
    %55 = arith.mulf %51, %50 : vector<8x32xf32>
    %56 = arith.addf %54, %55 : vector<8x32xf32>
    %57 = math.tanh %56 : vector<8x32xf32>
    %58 = arith.mulf %52, %57 : vector<8x32xf32>
    %c16_21 = arith.constant 16 : index
    %c0_22 = arith.constant 0 : index
    %59 = vector.load %arg4[%c16_21, %c0_22] : memref<64x32xf32, #tpu.memory_space<vmem>>, vector<8x32xf32>
    tpu.vector_store %arg4[%c16_21, %c0_22], %58 {strides = array<i32>} : memref<64x32xf32, #tpu.memory_space<vmem>>, vector<8x32xf32>,
    %c24 = arith.constant 24 : index
    %c0_23 = arith.constant 0 : index
    %60 = vector.load %arg6[%c24, %c0_23] : memref<64x128xf32, #tpu.memory_space<vmem>>, vector<8x128xf32>
    %cst_24 = arith.constant dense<0.000000e+00> : vector<8x128xf32>
    %61 = tpu.matmul %58, %1, %cst_24 {dimension_numbers = #tpu.dot_dimension_numbers<[1], [0], [0], [1], [0, 0, 1, 1], [], []>} : vector<8x32xf32>, vector<32x128xf32>, vector<8x128xf32> -> vector<8x128xf32>
    %62 = arith.addf %60, %61 : vector<8x128xf32>
    %63 = arith.negf %62 : vector<8x128xf32>
    %64 = math.exp %63 : vector<8x128xf32>
    %cst_25 = arith.constant 1.000000e+00 : f32
    %65 = vector.broadcast %cst_25 : f32 to vector<8x128xf32>
    %66 = arith.addf %65, %64 : vector<8x128xf32>
    %67 = arith.divf %65, %66 : vector<8x128xf32>
    %68 = vector.extract_strided_slice %62 {offsets = [0, 64], sizes = [8, 32], strides = [1, 1]} : vector<8x128xf32> to vector<8x32xf32>
    %69 = math.tanh %68 : vector<8x32xf32>
    %70 = vector.extract_strided_slice %67 {offsets = [0, 0], sizes = [8, 32], strides = [1, 1]} : vector<8x128xf32> to vector<8x32xf32>
    %71 = vector.extract_strided_slice %67 {offsets = [0, 96], sizes = [8, 32], strides = [1, 1]} : vector<8x128xf32> to vector<8x32xf32>
    %72 = vector.extract_strided_slice %67 {offsets = [0, 32], sizes = [8, 32], strides = [1, 1]} : vector<8x128xf32> to vector<8x32xf32>
    %73 = arith.mulf %72, %56 : vector<8x32xf32>
    %74 = arith.mulf %70, %69 : vector<8x32xf32>
    %75 = arith.addf %73, %74 : vector<8x32xf32>
    %76 = math.tanh %75 : vector<8x32xf32>
    %77 = arith.mulf %71, %76 : vector<8x32xf32>
    %c24_26 = arith.constant 24 : index
    %c0_27 = arith.constant 0 : index
    %78 = vector.load %arg4[%c24_26, %c0_27] : memref<64x32xf32, #tpu.memory_space<vmem>>, vector<8x32xf32>
    tpu.vector_store %arg4[%c24_26, %c0_27], %77 {strides = array<i32>} : memref<64x32xf32, #tpu.memory_space<vmem>>, vector<8x32xf32>,
    %c32 = arith.constant 32 : index
    %c0_28 = arith.constant 0 : index
    %79 = vector.load %arg6[%c32, %c0_28] : memref<64x128xf32, #tpu.memory_space<vmem>>, vector<8x128xf32>
    %cst_29 = arith.constant dense<0.000000e+00> : vector<8x128xf32>
    %80 = tpu.matmul %77, %1, %cst_29 {dimension_numbers = #tpu.dot_dimension_numbers<[1], [0], [0], [1], [0, 0, 1, 1], [], []>} : vector<8x32xf32>, vector<32x128xf32>, vector<8x128xf32> -> vector<8x128xf32>
    %81 = arith.addf %79, %80 : vector<8x128xf32>
    %82 = arith.negf %81 : vector<8x128xf32>
    %83 = math.exp %82 : vector<8x128xf32>
    %cst_30 = arith.constant 1.000000e+00 : f32
    %84 = vector.broadcast %cst_30 : f32 to vector<8x128xf32>
    %85 = arith.addf %84, %83 : vector<8x128xf32>
    %86 = arith.divf %84, %85 : vector<8x128xf32>
    %87 = vector.extract_strided_slice %81 {offsets = [0, 64], sizes = [8, 32], strides = [1, 1]} : vector<8x128xf32> to vector<8x32xf32>
    %88 = math.tanh %87 : vector<8x32xf32>
    %89 = vector.extract_strided_slice %86 {offsets = [0, 0], sizes = [8, 32], strides = [1, 1]} : vector<8x128xf32> to vector<8x32xf32>
    %90 = vector.extract_strided_slice %86 {offsets = [0, 96], sizes = [8, 32], strides = [1, 1]} : vector<8x128xf32> to vector<8x32xf32>
    %91 = vector.extract_strided_slice %86 {offsets = [0, 32], sizes = [8, 32], strides = [1, 1]} : vector<8x128xf32> to vector<8x32xf32>
    %92 = arith.mulf %91, %75 : vector<8x32xf32>
    %93 = arith.mulf %89, %88 : vector<8x32xf32>
    %94 = arith.addf %92, %93 : vector<8x32xf32>
    %95 = math.tanh %94 : vector<8x32xf32>
    %96 = arith.mulf %90, %95 : vector<8x32xf32>
    %c32_31 = arith.constant 32 : index
    %c0_32 = arith.constant 0 : index
    %97 = vector.load %arg4[%c32_31, %c0_32] : memref<64x32xf32, #tpu.memory_space<vmem>>, vector<8x32xf32>
    tpu.vector_store %arg4[%c32_31, %c0_32], %96 {strides = array<i32>} : memref<64x32xf32, #tpu.memory_space<vmem>>, vector<8x32xf32>,
    %c40 = arith.constant 40 : index
    %c0_33 = arith.constant 0 : index
    %98 = vector.load %arg6[%c40, %c0_33] : memref<64x128xf32, #tpu.memory_space<vmem>>, vector<8x128xf32>
    %cst_34 = arith.constant dense<0.000000e+00> : vector<8x128xf32>
    %99 = tpu.matmul %96, %1, %cst_34 {dimension_numbers = #tpu.dot_dimension_numbers<[1], [0], [0], [1], [0, 0, 1, 1], [], []>} : vector<8x32xf32>, vector<32x128xf32>, vector<8x128xf32> -> vector<8x128xf32>
    %100 = arith.addf %98, %99 : vector<8x128xf32>
    %101 = arith.negf %100 : vector<8x128xf32>
    %102 = math.exp %101 : vector<8x128xf32>
    %cst_35 = arith.constant 1.000000e+00 : f32
    %103 = vector.broadcast %cst_35 : f32 to vector<8x128xf32>
    %104 = arith.addf %103, %102 : vector<8x128xf32>
    %105 = arith.divf %103, %104 : vector<8x128xf32>
    %106 = vector.extract_strided_slice %100 {offsets = [0, 64], sizes = [8, 32], strides = [1, 1]} : vector<8x128xf32> to vector<8x32xf32>
    %107 = math.tanh %106 : vector<8x32xf32>
    %108 = vector.extract_strided_slice %105 {offsets = [0, 0], sizes = [8, 32], strides = [1, 1]} : vector<8x128xf32> to vector<8x32xf32>
    %109 = vector.extract_strided_slice %105 {offsets = [0, 96], sizes = [8, 32], strides = [1, 1]} : vector<8x128xf32> to vector<8x32xf32>
    %110 = vector.extract_strided_slice %105 {offsets = [0, 32], sizes = [8, 32], strides = [1, 1]} : vector<8x128xf32> to vector<8x32xf32>
    %111 = arith.mulf %110, %94 : vector<8x32xf32>
    %112 = arith.mulf %108, %107 : vector<8x32xf32>
    %113 = arith.addf %111, %112 : vector<8x32xf32>
    %114 = math.tanh %113 : vector<8x32xf32>
    %115 = arith.mulf %109, %114 : vector<8x32xf32>
    %c40_36 = arith.constant 40 : index
    %c0_37 = arith.constant 0 : index
    %116 = vector.load %arg4[%c40_36, %c0_37] : memref<64x32xf32, #tpu.memory_space<vmem>>, vector<8x32xf32>
    tpu.vector_store %arg4[%c40_36, %c0_37], %115 {strides = array<i32>} : memref<64x32xf32, #tpu.memory_space<vmem>>, vector<8x32xf32>,
    %c48 = arith.constant 48 : index
    %c0_38 = arith.constant 0 : index
    %117 = vector.load %arg6[%c48, %c0_38] : memref<64x128xf32, #tpu.memory_space<vmem>>, vector<8x128xf32>
    %cst_39 = arith.constant dense<0.000000e+00> : vector<8x128xf32>
    %118 = tpu.matmul %115, %1, %cst_39 {dimension_numbers = #tpu.dot_dimension_numbers<[1], [0], [0], [1], [0, 0, 1, 1], [], []>} : vector<8x32xf32>, vector<32x128xf32>, vector<8x128xf32> -> vector<8x128xf32>
    %119 = arith.addf %117, %118 : vector<8x128xf32>
    %120 = arith.negf %119 : vector<8x128xf32>
    %121 = math.exp %120 : vector<8x128xf32>
    %cst_40 = arith.constant 1.000000e+00 : f32
    %122 = vector.broadcast %cst_40 : f32 to vector<8x128xf32>
    %123 = arith.addf %122, %121 : vector<8x128xf32>
    %124 = arith.divf %122, %123 : vector<8x128xf32>
    %125 = vector.extract_strided_slice %119 {offsets = [0, 64], sizes = [8, 32], strides = [1, 1]} : vector<8x128xf32> to vector<8x32xf32>
    %126 = math.tanh %125 : vector<8x32xf32>
    %127 = vector.extract_strided_slice %124 {offsets = [0, 0], sizes = [8, 32], strides = [1, 1]} : vector<8x128xf32> to vector<8x32xf32>
    %128 = vector.extract_strided_slice %124 {offsets = [0, 96], sizes = [8, 32], strides = [1, 1]} : vector<8x128xf32> to vector<8x32xf32>
    %129 = vector.extract_strided_slice %124 {offsets = [0, 32], sizes = [8, 32], strides = [1, 1]} : vector<8x128xf32> to vector<8x32xf32>
    %130 = arith.mulf %129, %113 : vector<8x32xf32>
    %131 = arith.mulf %127, %126 : vector<8x32xf32>
    %132 = arith.addf %130, %131 : vector<8x32xf32>
    %133 = math.tanh %132 : vector<8x32xf32>
    %134 = arith.mulf %128, %133 : vector<8x32xf32>
    %c48_41 = arith.constant 48 : index
    %c0_42 = arith.constant 0 : index
    %135 = vector.load %arg4[%c48_41, %c0_42] : memref<64x32xf32, #tpu.memory_space<vmem>>, vector<8x32xf32>
    tpu.vector_store %arg4[%c48_41, %c0_42], %134 {strides = array<i32>} : memref<64x32xf32, #tpu.memory_space<vmem>>, vector<8x32xf32>,
    %c56 = arith.constant 56 : index
    %c0_43 = arith.constant 0 : index
    %136 = vector.load %arg6[%c56, %c0_43] : memref<64x128xf32, #tpu.memory_space<vmem>>, vector<8x128xf32>
    %cst_44 = arith.constant dense<0.000000e+00> : vector<8x128xf32>
    %137 = tpu.matmul %134, %1, %cst_44 {dimension_numbers = #tpu.dot_dimension_numbers<[1], [0], [0], [1], [0, 0, 1, 1], [], []>} : vector<8x32xf32>, vector<32x128xf32>, vector<8x128xf32> -> vector<8x128xf32>
    %138 = arith.addf %136, %137 : vector<8x128xf32>
    %139 = arith.negf %138 : vector<8x128xf32>
    %140 = math.exp %139 : vector<8x128xf32>
    %cst_45 = arith.constant 1.000000e+00 : f32
    %141 = vector.broadcast %cst_45 : f32 to vector<8x128xf32>
    %142 = arith.addf %141, %140 : vector<8x128xf32>
    %143 = arith.divf %141, %142 : vector<8x128xf32>
    %144 = vector.extract_strided_slice %138 {offsets = [0, 64], sizes = [8, 32], strides = [1, 1]} : vector<8x128xf32> to vector<8x32xf32>
    %145 = math.tanh %144 : vector<8x32xf32>
    %146 = vector.extract_strided_slice %143 {offsets = [0, 0], sizes = [8, 32], strides = [1, 1]} : vector<8x128xf32> to vector<8x32xf32>
    %147 = vector.extract_strided_slice %143 {offsets = [0, 96], sizes = [8, 32], strides = [1, 1]} : vector<8x128xf32> to vector<8x32xf32>
    %148 = vector.extract_strided_slice %143 {offsets = [0, 32], sizes = [8, 32], strides = [1, 1]} : vector<8x128xf32> to vector<8x32xf32>
    %149 = arith.mulf %148, %132 : vector<8x32xf32>
    %150 = arith.mulf %146, %145 : vector<8x32xf32>
    %151 = arith.addf %149, %150 : vector<8x32xf32>
    %152 = math.tanh %151 : vector<8x32xf32>
    %153 = arith.mulf %147, %152 : vector<8x32xf32>
    %c56_46 = arith.constant 56 : index
    %c0_47 = arith.constant 0 : index
    %154 = vector.load %arg4[%c56_46, %c0_47] : memref<64x32xf32, #tpu.memory_space<vmem>>, vector<8x32xf32>
    tpu.vector_store %arg4[%c56_46, %c0_47], %153 {strides = array<i32>} : memref<64x32xf32, #tpu.memory_space<vmem>>, vector<8x32xf32>,
    %c40_48 = arith.constant 40 : index
    %c0_49 = arith.constant 0 : index
    %155 = vector.load %arg1[%c40_48, %c0_49] : memref<366x128xf32, #tpu.memory_space<vmem>>, vector<32x128xf32>
    %c72 = arith.constant 72 : index
    %c0_50 = arith.constant 0 : index
    %156 = vector.load %arg1[%c72, %c0_50] : memref<366x128xf32, #tpu.memory_space<vmem>>, vector<32x128xf32>
    %c361 = arith.constant 361 : index
    %c0_51 = arith.constant 0 : index
    %157 = vector.load %arg1[%c361, %c0_51] : memref<366x128xf32, #tpu.memory_space<vmem>>, vector<1x128xf32>
    %c0_52 = arith.constant 0 : index
    %c0_53 = arith.constant 0 : index
    %158 = vector.load %arg4[%c0_52, %c0_53] : memref<64x32xf32, #tpu.memory_space<vmem>>, vector<64x32xf32>
    %cst_54 = arith.constant dense<0.000000e+00> : vector<64x128xf32>
    %159 = tpu.matmul %158, %155, %cst_54 {dimension_numbers = #tpu.dot_dimension_numbers<[1], [0], [0], [1], [0, 0, 1, 1], [], []>} : vector<64x32xf32>, vector<32x128xf32>, vector<64x128xf32> -> vector<64x128xf32>
    %160 = vector.broadcast %157 : vector<1x128xf32> to vector<64x128xf32>
    %161 = arith.addf %159, %160 : vector<64x128xf32>
    %c0_55 = arith.constant 0 : index
    %c0_56 = arith.constant 0 : index
    %162 = vector.load %arg6[%c0_55, %c0_56] : memref<64x128xf32, #tpu.memory_space<vmem>>, vector<64x128xf32>
    tpu.vector_store %arg6[%c0_55, %c0_56], %161 {strides = array<i32>} : memref<64x128xf32, #tpu.memory_space<vmem>>, vector<64x128xf32>,
    %c0_57 = arith.constant 0 : index
    %c0_58 = arith.constant 0 : index
    %163 = vector.load %arg6[%c0_57, %c0_58] : memref<64x128xf32, #tpu.memory_space<vmem>>, vector<8x128xf32>
    %164 = arith.negf %163 : vector<8x128xf32>
    %165 = math.exp %164 : vector<8x128xf32>
    %cst_59 = arith.constant 1.000000e+00 : f32
    %166 = vector.broadcast %cst_59 : f32 to vector<8x128xf32>
    %167 = arith.addf %166, %165 : vector<8x128xf32>
    %168 = arith.divf %166, %167 : vector<8x128xf32>
    %169 = vector.extract_strided_slice %163 {offsets = [0, 64], sizes = [8, 32], strides = [1, 1]} : vector<8x128xf32> to vector<8x32xf32>
    %170 = math.tanh %169 : vector<8x32xf32>
    %171 = vector.extract_strided_slice %168 {offsets = [0, 0], sizes = [8, 32], strides = [1, 1]} : vector<8x128xf32> to vector<8x32xf32>
    %172 = vector.extract_strided_slice %168 {offsets = [0, 96], sizes = [8, 32], strides = [1, 1]} : vector<8x128xf32> to vector<8x32xf32>
    %173 = arith.mulf %171, %170 : vector<8x32xf32>
    %174 = math.tanh %173 : vector<8x32xf32>
    %175 = arith.mulf %172, %174 : vector<8x32xf32>
    %176 = vector.extract_strided_slice %158 {offsets = [0, 0], sizes = [8, 32], strides = [1, 1]} : vector<64x32xf32> to vector<8x32xf32>
    %177 = arith.addf %175, %176 : vector<8x32xf32>
    %c0_60 = arith.constant 0 : index
    %c0_61 = arith.constant 0 : index
    %178 = vector.load %arg5[%c0_60, %c0_61] : memref<64x32xf32, #tpu.memory_space<vmem>>, vector<8x32xf32>
    tpu.vector_store %arg5[%c0_60, %c0_61], %177 {strides = array<i32>} : memref<64x32xf32, #tpu.memory_space<vmem>>, vector<8x32xf32>,
    %c8_62 = arith.constant 8 : index
    %c0_63 = arith.constant 0 : index
    %179 = vector.load %arg6[%c8_62, %c0_63] : memref<64x128xf32, #tpu.memory_space<vmem>>, vector<8x128xf32>
    %cst_64 = arith.constant dense<0.000000e+00> : vector<8x128xf32>
    %180 = tpu.matmul %175, %156, %cst_64 {dimension_numbers = #tpu.dot_dimension_numbers<[1], [0], [0], [1], [0, 0, 1, 1], [], []>} : vector<8x32xf32>, vector<32x128xf32>, vector<8x128xf32> -> vector<8x128xf32>
    %181 = arith.addf %179, %180 : vector<8x128xf32>
    %182 = arith.negf %181 : vector<8x128xf32>
    %183 = math.exp %182 : vector<8x128xf32>
    %cst_65 = arith.constant 1.000000e+00 : f32
    %184 = vector.broadcast %cst_65 : f32 to vector<8x128xf32>
    %185 = arith.addf %184, %183 : vector<8x128xf32>
    %186 = arith.divf %184, %185 : vector<8x128xf32>
    %187 = vector.extract_strided_slice %181 {offsets = [0, 64], sizes = [8, 32], strides = [1, 1]} : vector<8x128xf32> to vector<8x32xf32>
    %188 = math.tanh %187 : vector<8x32xf32>
    %189 = vector.extract_strided_slice %186 {offsets = [0, 0], sizes = [8, 32], strides = [1, 1]} : vector<8x128xf32> to vector<8x32xf32>
    %190 = vector.extract_strided_slice %186 {offsets = [0, 96], sizes = [8, 32], strides = [1, 1]} : vector<8x128xf32> to vector<8x32xf32>
    %191 = vector.extract_strided_slice %186 {offsets = [0, 32], sizes = [8, 32], strides = [1, 1]} : vector<8x128xf32> to vector<8x32xf32>
    %192 = arith.mulf %191, %173 : vector<8x32xf32>
    %193 = arith.mulf %189, %188 : vector<8x32xf32>
    %194 = arith.addf %192, %193 : vector<8x32xf32>
    %195 = math.tanh %194 : vector<8x32xf32>
    %196 = arith.mulf %190, %195 : vector<8x32xf32>
    %197 = vector.extract_strided_slice %158 {offsets = [8, 0], sizes = [8, 32], strides = [1, 1]} : vector<64x32xf32> to vector<8x32xf32>
    %198 = arith.addf %196, %197 : vector<8x32xf32>
    %c8_66 = arith.constant 8 : index
    %c0_67 = arith.constant 0 : index
    %199 = vector.load %arg5[%c8_66, %c0_67] : memref<64x32xf32, #tpu.memory_space<vmem>>, vector<8x32xf32>
    tpu.vector_store %arg5[%c8_66, %c0_67], %198 {strides = array<i32>} : memref<64x32xf32, #tpu.memory_space<vmem>>, vector<8x32xf32>,
    %c16_68 = arith.constant 16 : index
    %c0_69 = arith.constant 0 : index
    %200 = vector.load %arg6[%c16_68, %c0_69] : memref<64x128xf32, #tpu.memory_space<vmem>>, vector<8x128xf32>
    %cst_70 = arith.constant dense<0.000000e+00> : vector<8x128xf32>
    %201 = tpu.matmul %196, %156, %cst_70 {dimension_numbers = #tpu.dot_dimension_numbers<[1], [0], [0], [1], [0, 0, 1, 1], [], []>} : vector<8x32xf32>, vector<32x128xf32>, vector<8x128xf32> -> vector<8x128xf32>
    %202 = arith.addf %200, %201 : vector<8x128xf32>
    %203 = arith.negf %202 : vector<8x128xf32>
    %204 = math.exp %203 : vector<8x128xf32>
    %cst_71 = arith.constant 1.000000e+00 : f32
    %205 = vector.broadcast %cst_71 : f32 to vector<8x128xf32>
    %206 = arith.addf %205, %204 : vector<8x128xf32>
    %207 = arith.divf %205, %206 : vector<8x128xf32>
    %208 = vector.extract_strided_slice %202 {offsets = [0, 64], sizes = [8, 32], strides = [1, 1]} : vector<8x128xf32> to vector<8x32xf32>
    %209 = math.tanh %208 : vector<8x32xf32>
    %210 = vector.extract_strided_slice %207 {offsets = [0, 0], sizes = [8, 32], strides = [1, 1]} : vector<8x128xf32> to vector<8x32xf32>
    %211 = vector.extract_strided_slice %207 {offsets = [0, 96], sizes = [8, 32], strides = [1, 1]} : vector<8x128xf32> to vector<8x32xf32>
    %212 = vector.extract_strided_slice %207 {offsets = [0, 32], sizes = [8, 32], strides = [1, 1]} : vector<8x128xf32> to vector<8x32xf32>
    %213 = arith.mulf %212, %194 : vector<8x32xf32>
    %214 = arith.mulf %210, %209 : vector<8x32xf32>
    %215 = arith.addf %213, %214 : vector<8x32xf32>
    %216 = math.tanh %215 : vector<8x32xf32>
    %217 = arith.mulf %211, %216 : vector<8x32xf32>
    %218 = vector.extract_strided_slice %158 {offsets = [16, 0], sizes = [8, 32], strides = [1, 1]} : vector<64x32xf32> to vector<8x32xf32>
    %219 = arith.addf %217, %218 : vector<8x32xf32>
    %c16_72 = arith.constant 16 : index
    %c0_73 = arith.constant 0 : index
    %220 = vector.load %arg5[%c16_72, %c0_73] : memref<64x32xf32, #tpu.memory_space<vmem>>, vector<8x32xf32>
    tpu.vector_store %arg5[%c16_72, %c0_73], %219 {strides = array<i32>} : memref<64x32xf32, #tpu.memory_space<vmem>>, vector<8x32xf32>,
    %c24_74 = arith.constant 24 : index
    %c0_75 = arith.constant 0 : index
    %221 = vector.load %arg6[%c24_74, %c0_75] : memref<64x128xf32, #tpu.memory_space<vmem>>, vector<8x128xf32>
    %cst_76 = arith.constant dense<0.000000e+00> : vector<8x128xf32>
    %222 = tpu.matmul %217, %156, %cst_76 {dimension_numbers = #tpu.dot_dimension_numbers<[1], [0], [0], [1], [0, 0, 1, 1], [], []>} : vector<8x32xf32>, vector<32x128xf32>, vector<8x128xf32> -> vector<8x128xf32>
    %223 = arith.addf %221, %222 : vector<8x128xf32>
    %224 = arith.negf %223 : vector<8x128xf32>
    %225 = math.exp %224 : vector<8x128xf32>
    %cst_77 = arith.constant 1.000000e+00 : f32
    %226 = vector.broadcast %cst_77 : f32 to vector<8x128xf32>
    %227 = arith.addf %226, %225 : vector<8x128xf32>
    %228 = arith.divf %226, %227 : vector<8x128xf32>
    %229 = vector.extract_strided_slice %223 {offsets = [0, 64], sizes = [8, 32], strides = [1, 1]} : vector<8x128xf32> to vector<8x32xf32>
    %230 = math.tanh %229 : vector<8x32xf32>
    %231 = vector.extract_strided_slice %228 {offsets = [0, 0], sizes = [8, 32], strides = [1, 1]} : vector<8x128xf32> to vector<8x32xf32>
    %232 = vector.extract_strided_slice %228 {offsets = [0, 96], sizes = [8, 32], strides = [1, 1]} : vector<8x128xf32> to vector<8x32xf32>
    %233 = vector.extract_strided_slice %228 {offsets = [0, 32], sizes = [8, 32], strides = [1, 1]} : vector<8x128xf32> to vector<8x32xf32>
    %234 = arith.mulf %233, %215 : vector<8x32xf32>
    %235 = arith.mulf %231, %230 : vector<8x32xf32>
    %236 = arith.addf %234, %235 : vector<8x32xf32>
    %237 = math.tanh %236 : vector<8x32xf32>
    %238 = arith.mulf %232, %237 : vector<8x32xf32>
    %239 = vector.extract_strided_slice %158 {offsets = [24, 0], sizes = [8, 32], strides = [1, 1]} : vector<64x32xf32> to vector<8x32xf32>
    %240 = arith.addf %238, %239 : vector<8x32xf32>
    %c24_78 = arith.constant 24 : index
    %c0_79 = arith.constant 0 : index
    %241 = vector.load %arg5[%c24_78, %c0_79] : memref<64x32xf32, #tpu.memory_space<vmem>>, vector<8x32xf32>
    tpu.vector_store %arg5[%c24_78, %c0_79], %240 {strides = array<i32>} : memref<64x32xf32, #tpu.memory_space<vmem>>, vector<8x32xf32>,
    %c32_80 = arith.constant 32 : index
    %c0_81 = arith.constant 0 : index
    %242 = vector.load %arg6[%c32_80, %c0_81] : memref<64x128xf32, #tpu.memory_space<vmem>>, vector<8x128xf32>
    %cst_82 = arith.constant dense<0.000000e+00> : vector<8x128xf32>
    %243 = tpu.matmul %238, %156, %cst_82 {dimension_numbers = #tpu.dot_dimension_numbers<[1], [0], [0], [1], [0, 0, 1, 1], [], []>} : vector<8x32xf32>, vector<32x128xf32>, vector<8x128xf32> -> vector<8x128xf32>
    %244 = arith.addf %242, %243 : vector<8x128xf32>
    %245 = arith.negf %244 : vector<8x128xf32>
    %246 = math.exp %245 : vector<8x128xf32>
    %cst_83 = arith.constant 1.000000e+00 : f32
    %247 = vector.broadcast %cst_83 : f32 to vector<8x128xf32>
    %248 = arith.addf %247, %246 : vector<8x128xf32>
    %249 = arith.divf %247, %248 : vector<8x128xf32>
    %250 = vector.extract_strided_slice %244 {offsets = [0, 64], sizes = [8, 32], strides = [1, 1]} : vector<8x128xf32> to vector<8x32xf32>
    %251 = math.tanh %250 : vector<8x32xf32>
    %252 = vector.extract_strided_slice %249 {offsets = [0, 0], sizes = [8, 32], strides = [1, 1]} : vector<8x128xf32> to vector<8x32xf32>
    %253 = vector.extract_strided_slice %249 {offsets = [0, 96], sizes = [8, 32], strides = [1, 1]} : vector<8x128xf32> to vector<8x32xf32>
    %254 = vector.extract_strided_slice %249 {offsets = [0, 32], sizes = [8, 32], strides = [1, 1]} : vector<8x128xf32> to vector<8x32xf32>
    %255 = arith.mulf %254, %236 : vector<8x32xf32>
    %256 = arith.mulf %252, %251 : vector<8x32xf32>
    %257 = arith.addf %255, %256 : vector<8x32xf32>
    %258 = math.tanh %257 : vector<8x32xf32>
    %259 = arith.mulf %253, %258 : vector<8x32xf32>
    %260 = vector.extract_strided_slice %158 {offsets = [32, 0], sizes = [8, 32], strides = [1, 1]} : vector<64x32xf32> to vector<8x32xf32>
    %261 = arith.addf %259, %260 : vector<8x32xf32>
    %c32_84 = arith.constant 32 : index
    %c0_85 = arith.constant 0 : index
    %262 = vector.load %arg5[%c32_84, %c0_85] : memref<64x32xf32, #tpu.memory_space<vmem>>, vector<8x32xf32>
    tpu.vector_store %arg5[%c32_84, %c0_85], %261 {strides = array<i32>} : memref<64x32xf32, #tpu.memory_space<vmem>>, vector<8x32xf32>,
    %c40_86 = arith.constant 40 : index
    %c0_87 = arith.constant 0 : index
    %263 = vector.load %arg6[%c40_86, %c0_87] : memref<64x128xf32, #tpu.memory_space<vmem>>, vector<8x128xf32>
    %cst_88 = arith.constant dense<0.000000e+00> : vector<8x128xf32>
    %264 = tpu.matmul %259, %156, %cst_88 {dimension_numbers = #tpu.dot_dimension_numbers<[1], [0], [0], [1], [0, 0, 1, 1], [], []>} : vector<8x32xf32>, vector<32x128xf32>, vector<8x128xf32> -> vector<8x128xf32>
    %265 = arith.addf %263, %264 : vector<8x128xf32>
    %266 = arith.negf %265 : vector<8x128xf32>
    %267 = math.exp %266 : vector<8x128xf32>
    %cst_89 = arith.constant 1.000000e+00 : f32
    %268 = vector.broadcast %cst_89 : f32 to vector<8x128xf32>
    %269 = arith.addf %268, %267 : vector<8x128xf32>
    %270 = arith.divf %268, %269 : vector<8x128xf32>
    %271 = vector.extract_strided_slice %265 {offsets = [0, 64], sizes = [8, 32], strides = [1, 1]} : vector<8x128xf32> to vector<8x32xf32>
    %272 = math.tanh %271 : vector<8x32xf32>
    %273 = vector.extract_strided_slice %270 {offsets = [0, 0], sizes = [8, 32], strides = [1, 1]} : vector<8x128xf32> to vector<8x32xf32>
    %274 = vector.extract_strided_slice %270 {offsets = [0, 96], sizes = [8, 32], strides = [1, 1]} : vector<8x128xf32> to vector<8x32xf32>
    %275 = vector.extract_strided_slice %270 {offsets = [0, 32], sizes = [8, 32], strides = [1, 1]} : vector<8x128xf32> to vector<8x32xf32>
    %276 = arith.mulf %275, %257 : vector<8x32xf32>
    %277 = arith.mulf %273, %272 : vector<8x32xf32>
    %278 = arith.addf %276, %277 : vector<8x32xf32>
    %279 = math.tanh %278 : vector<8x32xf32>
    %280 = arith.mulf %274, %279 : vector<8x32xf32>
    %281 = vector.extract_strided_slice %158 {offsets = [40, 0], sizes = [8, 32], strides = [1, 1]} : vector<64x32xf32> to vector<8x32xf32>
    %282 = arith.addf %280, %281 : vector<8x32xf32>
    %c40_90 = arith.constant 40 : index
    %c0_91 = arith.constant 0 : index
    %283 = vector.load %arg5[%c40_90, %c0_91] : memref<64x32xf32, #tpu.memory_space<vmem>>, vector<8x32xf32>
    tpu.vector_store %arg5[%c40_90, %c0_91], %282 {strides = array<i32>} : memref<64x32xf32, #tpu.memory_space<vmem>>, vector<8x32xf32>,
    %c48_92 = arith.constant 48 : index
    %c0_93 = arith.constant 0 : index
    %284 = vector.load %arg6[%c48_92, %c0_93] : memref<64x128xf32, #tpu.memory_space<vmem>>, vector<8x128xf32>
    %cst_94 = arith.constant dense<0.000000e+00> : vector<8x128xf32>
    %285 = tpu.matmul %280, %156, %cst_94 {dimension_numbers = #tpu.dot_dimension_numbers<[1], [0], [0], [1], [0, 0, 1, 1], [], []>} : vector<8x32xf32>, vector<32x128xf32>, vector<8x128xf32> -> vector<8x128xf32>
    %286 = arith.addf %284, %285 : vector<8x128xf32>
    %287 = arith.negf %286 : vector<8x128xf32>
    %288 = math.exp %287 : vector<8x128xf32>
    %cst_95 = arith.constant 1.000000e+00 : f32
    %289 = vector.broadcast %cst_95 : f32 to vector<8x128xf32>
    %290 = arith.addf %289, %288 : vector<8x128xf32>
    %291 = arith.divf %289, %290 : vector<8x128xf32>
    %292 = vector.extract_strided_slice %286 {offsets = [0, 64], sizes = [8, 32], strides = [1, 1]} : vector<8x128xf32> to vector<8x32xf32>
    %293 = math.tanh %292 : vector<8x32xf32>
    %294 = vector.extract_strided_slice %291 {offsets = [0, 0], sizes = [8, 32], strides = [1, 1]} : vector<8x128xf32> to vector<8x32xf32>
    %295 = vector.extract_strided_slice %291 {offsets = [0, 96], sizes = [8, 32], strides = [1, 1]} : vector<8x128xf32> to vector<8x32xf32>
    %296 = vector.extract_strided_slice %291 {offsets = [0, 32], sizes = [8, 32], strides = [1, 1]} : vector<8x128xf32> to vector<8x32xf32>
    %297 = arith.mulf %296, %278 : vector<8x32xf32>
    %298 = arith.mulf %294, %293 : vector<8x32xf32>
    %299 = arith.addf %297, %298 : vector<8x32xf32>
    %300 = math.tanh %299 : vector<8x32xf32>
    %301 = arith.mulf %295, %300 : vector<8x32xf32>
    %302 = vector.extract_strided_slice %158 {offsets = [48, 0], sizes = [8, 32], strides = [1, 1]} : vector<64x32xf32> to vector<8x32xf32>
    %303 = arith.addf %301, %302 : vector<8x32xf32>
    %c48_96 = arith.constant 48 : index
    %c0_97 = arith.constant 0 : index
    %304 = vector.load %arg5[%c48_96, %c0_97] : memref<64x32xf32, #tpu.memory_space<vmem>>, vector<8x32xf32>
    tpu.vector_store %arg5[%c48_96, %c0_97], %303 {strides = array<i32>} : memref<64x32xf32, #tpu.memory_space<vmem>>, vector<8x32xf32>,
    %c56_98 = arith.constant 56 : index
    %c0_99 = arith.constant 0 : index
    %305 = vector.load %arg6[%c56_98, %c0_99] : memref<64x128xf32, #tpu.memory_space<vmem>>, vector<8x128xf32>
    %cst_100 = arith.constant dense<0.000000e+00> : vector<8x128xf32>
    %306 = tpu.matmul %301, %156, %cst_100 {dimension_numbers = #tpu.dot_dimension_numbers<[1], [0], [0], [1], [0, 0, 1, 1], [], []>} : vector<8x32xf32>, vector<32x128xf32>, vector<8x128xf32> -> vector<8x128xf32>
    %307 = arith.addf %305, %306 : vector<8x128xf32>
    %308 = arith.negf %307 : vector<8x128xf32>
    %309 = math.exp %308 : vector<8x128xf32>
    %cst_101 = arith.constant 1.000000e+00 : f32
    %310 = vector.broadcast %cst_101 : f32 to vector<8x128xf32>
    %311 = arith.addf %310, %309 : vector<8x128xf32>
    %312 = arith.divf %310, %311 : vector<8x128xf32>
    %313 = vector.extract_strided_slice %307 {offsets = [0, 64], sizes = [8, 32], strides = [1, 1]} : vector<8x128xf32> to vector<8x32xf32>
    %314 = math.tanh %313 : vector<8x32xf32>
    %315 = vector.extract_strided_slice %312 {offsets = [0, 0], sizes = [8, 32], strides = [1, 1]} : vector<8x128xf32> to vector<8x32xf32>
    %316 = vector.extract_strided_slice %312 {offsets = [0, 96], sizes = [8, 32], strides = [1, 1]} : vector<8x128xf32> to vector<8x32xf32>
    %317 = vector.extract_strided_slice %312 {offsets = [0, 32], sizes = [8, 32], strides = [1, 1]} : vector<8x128xf32> to vector<8x32xf32>
    %318 = arith.mulf %317, %299 : vector<8x32xf32>
    %319 = arith.mulf %315, %314 : vector<8x32xf32>
    %320 = arith.addf %318, %319 : vector<8x32xf32>
    %321 = math.tanh %320 : vector<8x32xf32>
    %322 = arith.mulf %316, %321 : vector<8x32xf32>
    %323 = vector.extract_strided_slice %158 {offsets = [56, 0], sizes = [8, 32], strides = [1, 1]} : vector<64x32xf32> to vector<8x32xf32>
    %324 = arith.addf %322, %323 : vector<8x32xf32>
    %c56_102 = arith.constant 56 : index
    %c0_103 = arith.constant 0 : index
    %325 = vector.load %arg5[%c56_102, %c0_103] : memref<64x32xf32, #tpu.memory_space<vmem>>, vector<8x32xf32>
    tpu.vector_store %arg5[%c56_102, %c0_103], %324 {strides = array<i32>} : memref<64x32xf32, #tpu.memory_space<vmem>>, vector<8x32xf32>,
    %c104 = arith.constant 104 : index
    %c0_104 = arith.constant 0 : index
    %326 = vector.load %arg1[%c104, %c0_104] : memref<366x128xf32, #tpu.memory_space<vmem>>, vector<32x128xf32>
    %c136 = arith.constant 136 : index
    %c0_105 = arith.constant 0 : index
    %327 = vector.load %arg1[%c136, %c0_105] : memref<366x128xf32, #tpu.memory_space<vmem>>, vector<32x128xf32>
    %c362 = arith.constant 362 : index
    %c0_106 = arith.constant 0 : index
    %328 = vector.load %arg1[%c362, %c0_106] : memref<366x128xf32, #tpu.memory_space<vmem>>, vector<1x128xf32>
    %c0_107 = arith.constant 0 : index
    %c0_108 = arith.constant 0 : index
    %329 = vector.load %arg5[%c0_107, %c0_108] : memref<64x32xf32, #tpu.memory_space<vmem>>, vector<64x32xf32>
    %cst_109 = arith.constant dense<0.000000e+00> : vector<64x128xf32>
    %330 = tpu.matmul %329, %326, %cst_109 {dimension_numbers = #tpu.dot_dimension_numbers<[1], [0], [0], [1], [0, 0, 1, 1], [], []>} : vector<64x32xf32>, vector<32x128xf32>, vector<64x128xf32> -> vector<64x128xf32>
    %331 = vector.broadcast %328 : vector<1x128xf32> to vector<64x128xf32>
    %332 = arith.addf %330, %331 : vector<64x128xf32>
    %c0_110 = arith.constant 0 : index
    %c0_111 = arith.constant 0 : index
    %333 = vector.load %arg6[%c0_110, %c0_111] : memref<64x128xf32, #tpu.memory_space<vmem>>, vector<64x128xf32>
    tpu.vector_store %arg6[%c0_110, %c0_111], %332 {strides = array<i32>} : memref<64x128xf32, #tpu.memory_space<vmem>>, vector<64x128xf32>,
    %c0_112 = arith.constant 0 : index
    %c0_113 = arith.constant 0 : index
    %334 = vector.load %arg6[%c0_112, %c0_113] : memref<64x128xf32, #tpu.memory_space<vmem>>, vector<8x128xf32>
    %335 = arith.negf %334 : vector<8x128xf32>
    %336 = math.exp %335 : vector<8x128xf32>
    %cst_114 = arith.constant 1.000000e+00 : f32
    %337 = vector.broadcast %cst_114 : f32 to vector<8x128xf32>
    %338 = arith.addf %337, %336 : vector<8x128xf32>
    %339 = arith.divf %337, %338 : vector<8x128xf32>
    %340 = vector.extract_strided_slice %334 {offsets = [0, 64], sizes = [8, 32], strides = [1, 1]} : vector<8x128xf32> to vector<8x32xf32>
    %341 = math.tanh %340 : vector<8x32xf32>
    %342 = vector.extract_strided_slice %339 {offsets = [0, 0], sizes = [8, 32], strides = [1, 1]} : vector<8x128xf32> to vector<8x32xf32>
    %343 = vector.extract_strided_slice %339 {offsets = [0, 96], sizes = [8, 32], strides = [1, 1]} : vector<8x128xf32> to vector<8x32xf32>
    %344 = arith.mulf %342, %341 : vector<8x32xf32>
    %345 = math.tanh %344 : vector<8x32xf32>
    %346 = arith.mulf %343, %345 : vector<8x32xf32>
    %347 = vector.extract_strided_slice %329 {offsets = [0, 0], sizes = [8, 32], strides = [1, 1]} : vector<64x32xf32> to vector<8x32xf32>
    %348 = arith.addf %346, %347 : vector<8x32xf32>
    %c0_115 = arith.constant 0 : index
    %c0_116 = arith.constant 0 : index
    %349 = vector.load %arg4[%c0_115, %c0_116] : memref<64x32xf32, #tpu.memory_space<vmem>>, vector<8x32xf32>
    tpu.vector_store %arg4[%c0_115, %c0_116], %348 {strides = array<i32>} : memref<64x32xf32, #tpu.memory_space<vmem>>, vector<8x32xf32>,
    %c8_117 = arith.constant 8 : index
    %c0_118 = arith.constant 0 : index
    %350 = vector.load %arg6[%c8_117, %c0_118] : memref<64x128xf32, #tpu.memory_space<vmem>>, vector<8x128xf32>
    %cst_119 = arith.constant dense<0.000000e+00> : vector<8x128xf32>
    %351 = tpu.matmul %346, %327, %cst_119 {dimension_numbers = #tpu.dot_dimension_numbers<[1], [0], [0], [1], [0, 0, 1, 1], [], []>} : vector<8x32xf32>, vector<32x128xf32>, vector<8x128xf32> -> vector<8x128xf32>
    %352 = arith.addf %350, %351 : vector<8x128xf32>
    %353 = arith.negf %352 : vector<8x128xf32>
    %354 = math.exp %353 : vector<8x128xf32>
    %cst_120 = arith.constant 1.000000e+00 : f32
    %355 = vector.broadcast %cst_120 : f32 to vector<8x128xf32>
    %356 = arith.addf %355, %354 : vector<8x128xf32>
    %357 = arith.divf %355, %356 : vector<8x128xf32>
    %358 = vector.extract_strided_slice %352 {offsets = [0, 64], sizes = [8, 32], strides = [1, 1]} : vector<8x128xf32> to vector<8x32xf32>
    %359 = math.tanh %358 : vector<8x32xf32>
    %360 = vector.extract_strided_slice %357 {offsets = [0, 0], sizes = [8, 32], strides = [1, 1]} : vector<8x128xf32> to vector<8x32xf32>
    %361 = vector.extract_strided_slice %357 {offsets = [0, 96], sizes = [8, 32], strides = [1, 1]} : vector<8x128xf32> to vector<8x32xf32>
    %362 = vector.extract_strided_slice %357 {offsets = [0, 32], sizes = [8, 32], strides = [1, 1]} : vector<8x128xf32> to vector<8x32xf32>
    %363 = arith.mulf %362, %344 : vector<8x32xf32>
    %364 = arith.mulf %360, %359 : vector<8x32xf32>
    %365 = arith.addf %363, %364 : vector<8x32xf32>
    %366 = math.tanh %365 : vector<8x32xf32>
    %367 = arith.mulf %361, %366 : vector<8x32xf32>
    %368 = vector.extract_strided_slice %329 {offsets = [8, 0], sizes = [8, 32], strides = [1, 1]} : vector<64x32xf32> to vector<8x32xf32>
    %369 = arith.addf %367, %368 : vector<8x32xf32>
    %c8_121 = arith.constant 8 : index
    %c0_122 = arith.constant 0 : index
    %370 = vector.load %arg4[%c8_121, %c0_122] : memref<64x32xf32, #tpu.memory_space<vmem>>, vector<8x32xf32>
    tpu.vector_store %arg4[%c8_121, %c0_122], %369 {strides = array<i32>} : memref<64x32xf32, #tpu.memory_space<vmem>>, vector<8x32xf32>,
    %c16_123 = arith.constant 16 : index
    %c0_124 = arith.constant 0 : index
    %371 = vector.load %arg6[%c16_123, %c0_124] : memref<64x128xf32, #tpu.memory_space<vmem>>, vector<8x128xf32>
    %cst_125 = arith.constant dense<0.000000e+00> : vector<8x128xf32>
    %372 = tpu.matmul %367, %327, %cst_125 {dimension_numbers = #tpu.dot_dimension_numbers<[1], [0], [0], [1], [0, 0, 1, 1], [], []>} : vector<8x32xf32>, vector<32x128xf32>, vector<8x128xf32> -> vector<8x128xf32>
    %373 = arith.addf %371, %372 : vector<8x128xf32>
    %374 = arith.negf %373 : vector<8x128xf32>
    %375 = math.exp %374 : vector<8x128xf32>
    %cst_126 = arith.constant 1.000000e+00 : f32
    %376 = vector.broadcast %cst_126 : f32 to vector<8x128xf32>
    %377 = arith.addf %376, %375 : vector<8x128xf32>
    %378 = arith.divf %376, %377 : vector<8x128xf32>
    %379 = vector.extract_strided_slice %373 {offsets = [0, 64], sizes = [8, 32], strides = [1, 1]} : vector<8x128xf32> to vector<8x32xf32>
    %380 = math.tanh %379 : vector<8x32xf32>
    %381 = vector.extract_strided_slice %378 {offsets = [0, 0], sizes = [8, 32], strides = [1, 1]} : vector<8x128xf32> to vector<8x32xf32>
    %382 = vector.extract_strided_slice %378 {offsets = [0, 96], sizes = [8, 32], strides = [1, 1]} : vector<8x128xf32> to vector<8x32xf32>
    %383 = vector.extract_strided_slice %378 {offsets = [0, 32], sizes = [8, 32], strides = [1, 1]} : vector<8x128xf32> to vector<8x32xf32>
    %384 = arith.mulf %383, %365 : vector<8x32xf32>
    %385 = arith.mulf %381, %380 : vector<8x32xf32>
    %386 = arith.addf %384, %385 : vector<8x32xf32>
    %387 = math.tanh %386 : vector<8x32xf32>
    %388 = arith.mulf %382, %387 : vector<8x32xf32>
    %389 = vector.extract_strided_slice %329 {offsets = [16, 0], sizes = [8, 32], strides = [1, 1]} : vector<64x32xf32> to vector<8x32xf32>
    %390 = arith.addf %388, %389 : vector<8x32xf32>
    %c16_127 = arith.constant 16 : index
    %c0_128 = arith.constant 0 : index
    %391 = vector.load %arg4[%c16_127, %c0_128] : memref<64x32xf32, #tpu.memory_space<vmem>>, vector<8x32xf32>
    tpu.vector_store %arg4[%c16_127, %c0_128], %390 {strides = array<i32>} : memref<64x32xf32, #tpu.memory_space<vmem>>, vector<8x32xf32>,
    %c24_129 = arith.constant 24 : index
    %c0_130 = arith.constant 0 : index
    %392 = vector.load %arg6[%c24_129, %c0_130] : memref<64x128xf32, #tpu.memory_space<vmem>>, vector<8x128xf32>
    %cst_131 = arith.constant dense<0.000000e+00> : vector<8x128xf32>
    %393 = tpu.matmul %388, %327, %cst_131 {dimension_numbers = #tpu.dot_dimension_numbers<[1], [0], [0], [1], [0, 0, 1, 1], [], []>} : vector<8x32xf32>, vector<32x128xf32>, vector<8x128xf32> -> vector<8x128xf32>
    %394 = arith.addf %392, %393 : vector<8x128xf32>
    %395 = arith.negf %394 : vector<8x128xf32>
    %396 = math.exp %395 : vector<8x128xf32>
    %cst_132 = arith.constant 1.000000e+00 : f32
    %397 = vector.broadcast %cst_132 : f32 to vector<8x128xf32>
    %398 = arith.addf %397, %396 : vector<8x128xf32>
    %399 = arith.divf %397, %398 : vector<8x128xf32>
    %400 = vector.extract_strided_slice %394 {offsets = [0, 64], sizes = [8, 32], strides = [1, 1]} : vector<8x128xf32> to vector<8x32xf32>
    %401 = math.tanh %400 : vector<8x32xf32>
    %402 = vector.extract_strided_slice %399 {offsets = [0, 0], sizes = [8, 32], strides = [1, 1]} : vector<8x128xf32> to vector<8x32xf32>
    %403 = vector.extract_strided_slice %399 {offsets = [0, 96], sizes = [8, 32], strides = [1, 1]} : vector<8x128xf32> to vector<8x32xf32>
    %404 = vector.extract_strided_slice %399 {offsets = [0, 32], sizes = [8, 32], strides = [1, 1]} : vector<8x128xf32> to vector<8x32xf32>
    %405 = arith.mulf %404, %386 : vector<8x32xf32>
    %406 = arith.mulf %402, %401 : vector<8x32xf32>
    %407 = arith.addf %405, %406 : vector<8x32xf32>
    %408 = math.tanh %407 : vector<8x32xf32>
    %409 = arith.mulf %403, %408 : vector<8x32xf32>
    %410 = vector.extract_strided_slice %329 {offsets = [24, 0], sizes = [8, 32], strides = [1, 1]} : vector<64x32xf32> to vector<8x32xf32>
    %411 = arith.addf %409, %410 : vector<8x32xf32>
    %c24_133 = arith.constant 24 : index
    %c0_134 = arith.constant 0 : index
    %412 = vector.load %arg4[%c24_133, %c0_134] : memref<64x32xf32, #tpu.memory_space<vmem>>, vector<8x32xf32>
    tpu.vector_store %arg4[%c24_133, %c0_134], %411 {strides = array<i32>} : memref<64x32xf32, #tpu.memory_space<vmem>>, vector<8x32xf32>,
    %c32_135 = arith.constant 32 : index
    %c0_136 = arith.constant 0 : index
    %413 = vector.load %arg6[%c32_135, %c0_136] : memref<64x128xf32, #tpu.memory_space<vmem>>, vector<8x128xf32>
    %cst_137 = arith.constant dense<0.000000e+00> : vector<8x128xf32>
    %414 = tpu.matmul %409, %327, %cst_137 {dimension_numbers = #tpu.dot_dimension_numbers<[1], [0], [0], [1], [0, 0, 1, 1], [], []>} : vector<8x32xf32>, vector<32x128xf32>, vector<8x128xf32> -> vector<8x128xf32>
    %415 = arith.addf %413, %414 : vector<8x128xf32>
    %416 = arith.negf %415 : vector<8x128xf32>
    %417 = math.exp %416 : vector<8x128xf32>
    %cst_138 = arith.constant 1.000000e+00 : f32
    %418 = vector.broadcast %cst_138 : f32 to vector<8x128xf32>
    %419 = arith.addf %418, %417 : vector<8x128xf32>
    %420 = arith.divf %418, %419 : vector<8x128xf32>
    %421 = vector.extract_strided_slice %415 {offsets = [0, 64], sizes = [8, 32], strides = [1, 1]} : vector<8x128xf32> to vector<8x32xf32>
    %422 = math.tanh %421 : vector<8x32xf32>
    %423 = vector.extract_strided_slice %420 {offsets = [0, 0], sizes = [8, 32], strides = [1, 1]} : vector<8x128xf32> to vector<8x32xf32>
    %424 = vector.extract_strided_slice %420 {offsets = [0, 96], sizes = [8, 32], strides = [1, 1]} : vector<8x128xf32> to vector<8x32xf32>
    %425 = vector.extract_strided_slice %420 {offsets = [0, 32], sizes = [8, 32], strides = [1, 1]} : vector<8x128xf32> to vector<8x32xf32>
    %426 = arith.mulf %425, %407 : vector<8x32xf32>
    %427 = arith.mulf %423, %422 : vector<8x32xf32>
    %428 = arith.addf %426, %427 : vector<8x32xf32>
    %429 = math.tanh %428 : vector<8x32xf32>
    %430 = arith.mulf %424, %429 : vector<8x32xf32>
    %431 = vector.extract_strided_slice %329 {offsets = [32, 0], sizes = [8, 32], strides = [1, 1]} : vector<64x32xf32> to vector<8x32xf32>
    %432 = arith.addf %430, %431 : vector<8x32xf32>
    %c32_139 = arith.constant 32 : index
    %c0_140 = arith.constant 0 : index
    %433 = vector.load %arg4[%c32_139, %c0_140] : memref<64x32xf32, #tpu.memory_space<vmem>>, vector<8x32xf32>
    tpu.vector_store %arg4[%c32_139, %c0_140], %432 {strides = array<i32>} : memref<64x32xf32, #tpu.memory_space<vmem>>, vector<8x32xf32>,
    %c40_141 = arith.constant 40 : index
    %c0_142 = arith.constant 0 : index
    %434 = vector.load %arg6[%c40_141, %c0_142] : memref<64x128xf32, #tpu.memory_space<vmem>>, vector<8x128xf32>
    %cst_143 = arith.constant dense<0.000000e+00> : vector<8x128xf32>
    %435 = tpu.matmul %430, %327, %cst_143 {dimension_numbers = #tpu.dot_dimension_numbers<[1], [0], [0], [1], [0, 0, 1, 1], [], []>} : vector<8x32xf32>, vector<32x128xf32>, vector<8x128xf32> -> vector<8x128xf32>
    %436 = arith.addf %434, %435 : vector<8x128xf32>
    %437 = arith.negf %436 : vector<8x128xf32>
    %438 = math.exp %437 : vector<8x128xf32>
    %cst_144 = arith.constant 1.000000e+00 : f32
    %439 = vector.broadcast %cst_144 : f32 to vector<8x128xf32>
    %440 = arith.addf %439, %438 : vector<8x128xf32>
    %441 = arith.divf %439, %440 : vector<8x128xf32>
    %442 = vector.extract_strided_slice %436 {offsets = [0, 64], sizes = [8, 32], strides = [1, 1]} : vector<8x128xf32> to vector<8x32xf32>
    %443 = math.tanh %442 : vector<8x32xf32>
    %444 = vector.extract_strided_slice %441 {offsets = [0, 0], sizes = [8, 32], strides = [1, 1]} : vector<8x128xf32> to vector<8x32xf32>
    %445 = vector.extract_strided_slice %441 {offsets = [0, 96], sizes = [8, 32], strides = [1, 1]} : vector<8x128xf32> to vector<8x32xf32>
    %446 = vector.extract_strided_slice %441 {offsets = [0, 32], sizes = [8, 32], strides = [1, 1]} : vector<8x128xf32> to vector<8x32xf32>
    %447 = arith.mulf %446, %428 : vector<8x32xf32>
    %448 = arith.mulf %444, %443 : vector<8x32xf32>
    %449 = arith.addf %447, %448 : vector<8x32xf32>
    %450 = math.tanh %449 : vector<8x32xf32>
    %451 = arith.mulf %445, %450 : vector<8x32xf32>
    %452 = vector.extract_strided_slice %329 {offsets = [40, 0], sizes = [8, 32], strides = [1, 1]} : vector<64x32xf32> to vector<8x32xf32>
    %453 = arith.addf %451, %452 : vector<8x32xf32>
    %c40_145 = arith.constant 40 : index
    %c0_146 = arith.constant 0 : index
    %454 = vector.load %arg4[%c40_145, %c0_146] : memref<64x32xf32, #tpu.memory_space<vmem>>, vector<8x32xf32>
    tpu.vector_store %arg4[%c40_145, %c0_146], %453 {strides = array<i32>} : memref<64x32xf32, #tpu.memory_space<vmem>>, vector<8x32xf32>,
    %c48_147 = arith.constant 48 : index
    %c0_148 = arith.constant 0 : index
    %455 = vector.load %arg6[%c48_147, %c0_148] : memref<64x128xf32, #tpu.memory_space<vmem>>, vector<8x128xf32>
    %cst_149 = arith.constant dense<0.000000e+00> : vector<8x128xf32>
    %456 = tpu.matmul %451, %327, %cst_149 {dimension_numbers = #tpu.dot_dimension_numbers<[1], [0], [0], [1], [0, 0, 1, 1], [], []>} : vector<8x32xf32>, vector<32x128xf32>, vector<8x128xf32> -> vector<8x128xf32>
    %457 = arith.addf %455, %456 : vector<8x128xf32>
    %458 = arith.negf %457 : vector<8x128xf32>
    %459 = math.exp %458 : vector<8x128xf32>
    %cst_150 = arith.constant 1.000000e+00 : f32
    %460 = vector.broadcast %cst_150 : f32 to vector<8x128xf32>
    %461 = arith.addf %460, %459 : vector<8x128xf32>
    %462 = arith.divf %460, %461 : vector<8x128xf32>
    %463 = vector.extract_strided_slice %457 {offsets = [0, 64], sizes = [8, 32], strides = [1, 1]} : vector<8x128xf32> to vector<8x32xf32>
    %464 = math.tanh %463 : vector<8x32xf32>
    %465 = vector.extract_strided_slice %462 {offsets = [0, 0], sizes = [8, 32], strides = [1, 1]} : vector<8x128xf32> to vector<8x32xf32>
    %466 = vector.extract_strided_slice %462 {offsets = [0, 96], sizes = [8, 32], strides = [1, 1]} : vector<8x128xf32> to vector<8x32xf32>
    %467 = vector.extract_strided_slice %462 {offsets = [0, 32], sizes = [8, 32], strides = [1, 1]} : vector<8x128xf32> to vector<8x32xf32>
    %468 = arith.mulf %467, %449 : vector<8x32xf32>
    %469 = arith.mulf %465, %464 : vector<8x32xf32>
    %470 = arith.addf %468, %469 : vector<8x32xf32>
    %471 = math.tanh %470 : vector<8x32xf32>
    %472 = arith.mulf %466, %471 : vector<8x32xf32>
    %473 = vector.extract_strided_slice %329 {offsets = [48, 0], sizes = [8, 32], strides = [1, 1]} : vector<64x32xf32> to vector<8x32xf32>
    %474 = arith.addf %472, %473 : vector<8x32xf32>
    %c48_151 = arith.constant 48 : index
    %c0_152 = arith.constant 0 : index
    %475 = vector.load %arg4[%c48_151, %c0_152] : memref<64x32xf32, #tpu.memory_space<vmem>>, vector<8x32xf32>
    tpu.vector_store %arg4[%c48_151, %c0_152], %474 {strides = array<i32>} : memref<64x32xf32, #tpu.memory_space<vmem>>, vector<8x32xf32>,
    %c56_153 = arith.constant 56 : index
    %c0_154 = arith.constant 0 : index
    %476 = vector.load %arg6[%c56_153, %c0_154] : memref<64x128xf32, #tpu.memory_space<vmem>>, vector<8x128xf32>
    %cst_155 = arith.constant dense<0.000000e+00> : vector<8x128xf32>
    %477 = tpu.matmul %472, %327, %cst_155 {dimension_numbers = #tpu.dot_dimension_numbers<[1], [0], [0], [1], [0, 0, 1, 1], [], []>} : vector<8x32xf32>, vector<32x128xf32>, vector<8x128xf32> -> vector<8x128xf32>
    %478 = arith.addf %476, %477 : vector<8x128xf32>
    %479 = arith.negf %478 : vector<8x128xf32>
    %480 = math.exp %479 : vector<8x128xf32>
    %cst_156 = arith.constant 1.000000e+00 : f32
    %481 = vector.broadcast %cst_156 : f32 to vector<8x128xf32>
    %482 = arith.addf %481, %480 : vector<8x128xf32>
    %483 = arith.divf %481, %482 : vector<8x128xf32>
    %484 = vector.extract_strided_slice %478 {offsets = [0, 64], sizes = [8, 32], strides = [1, 1]} : vector<8x128xf32> to vector<8x32xf32>
    %485 = math.tanh %484 : vector<8x32xf32>
    %486 = vector.extract_strided_slice %483 {offsets = [0, 0], sizes = [8, 32], strides = [1, 1]} : vector<8x128xf32> to vector<8x32xf32>
    %487 = vector.extract_strided_slice %483 {offsets = [0, 96], sizes = [8, 32], strides = [1, 1]} : vector<8x128xf32> to vector<8x32xf32>
    %488 = vector.extract_strided_slice %483 {offsets = [0, 32], sizes = [8, 32], strides = [1, 1]} : vector<8x128xf32> to vector<8x32xf32>
    %489 = arith.mulf %488, %470 : vector<8x32xf32>
    %490 = arith.mulf %486, %485 : vector<8x32xf32>
    %491 = arith.addf %489, %490 : vector<8x32xf32>
    %492 = math.tanh %491 : vector<8x32xf32>
    %493 = arith.mulf %487, %492 : vector<8x32xf32>
    %494 = vector.extract_strided_slice %329 {offsets = [56, 0], sizes = [8, 32], strides = [1, 1]} : vector<64x32xf32> to vector<8x32xf32>
    %495 = arith.addf %493, %494 : vector<8x32xf32>
    %c56_157 = arith.constant 56 : index
    %c0_158 = arith.constant 0 : index
    %496 = vector.load %arg4[%c56_157, %c0_158] : memref<64x32xf32, #tpu.memory_space<vmem>>, vector<8x32xf32>
    tpu.vector_store %arg4[%c56_157, %c0_158], %495 {strides = array<i32>} : memref<64x32xf32, #tpu.memory_space<vmem>>, vector<8x32xf32>,
    %c168 = arith.constant 168 : index
    %c0_159 = arith.constant 0 : index
    %497 = vector.load %arg1[%c168, %c0_159] : memref<366x128xf32, #tpu.memory_space<vmem>>, vector<32x128xf32>
    %c200 = arith.constant 200 : index
    %c0_160 = arith.constant 0 : index
    %498 = vector.load %arg1[%c200, %c0_160] : memref<366x128xf32, #tpu.memory_space<vmem>>, vector<32x128xf32>
    %c363 = arith.constant 363 : index
    %c0_161 = arith.constant 0 : index
    %499 = vector.load %arg1[%c363, %c0_161] : memref<366x128xf32, #tpu.memory_space<vmem>>, vector<1x128xf32>
    %c0_162 = arith.constant 0 : index
    %c0_163 = arith.constant 0 : index
    %500 = vector.load %arg4[%c0_162, %c0_163] : memref<64x32xf32, #tpu.memory_space<vmem>>, vector<64x32xf32>
    %cst_164 = arith.constant dense<0.000000e+00> : vector<64x128xf32>
    %501 = tpu.matmul %500, %497, %cst_164 {dimension_numbers = #tpu.dot_dimension_numbers<[1], [0], [0], [1], [0, 0, 1, 1], [], []>} : vector<64x32xf32>, vector<32x128xf32>, vector<64x128xf32> -> vector<64x128xf32>
    %502 = vector.broadcast %499 : vector<1x128xf32> to vector<64x128xf32>
    %503 = arith.addf %501, %502 : vector<64x128xf32>
    %c0_165 = arith.constant 0 : index
    %c0_166 = arith.constant 0 : index
    %504 = vector.load %arg6[%c0_165, %c0_166] : memref<64x128xf32, #tpu.memory_space<vmem>>, vector<64x128xf32>
    tpu.vector_store %arg6[%c0_165, %c0_166], %503 {strides = array<i32>} : memref<64x128xf32, #tpu.memory_space<vmem>>, vector<64x128xf32>,
    %c0_167 = arith.constant 0 : index
    %c0_168 = arith.constant 0 : index
    %505 = vector.load %arg6[%c0_167, %c0_168] : memref<64x128xf32, #tpu.memory_space<vmem>>, vector<8x128xf32>
    %506 = arith.negf %505 : vector<8x128xf32>
    %507 = math.exp %506 : vector<8x128xf32>
    %cst_169 = arith.constant 1.000000e+00 : f32
    %508 = vector.broadcast %cst_169 : f32 to vector<8x128xf32>
    %509 = arith.addf %508, %507 : vector<8x128xf32>
    %510 = arith.divf %508, %509 : vector<8x128xf32>
    %511 = vector.extract_strided_slice %505 {offsets = [0, 64], sizes = [8, 32], strides = [1, 1]} : vector<8x128xf32> to vector<8x32xf32>
    %512 = math.tanh %511 : vector<8x32xf32>
    %513 = vector.extract_strided_slice %510 {offsets = [0, 0], sizes = [8, 32], strides = [1, 1]} : vector<8x128xf32> to vector<8x32xf32>
    %514 = vector.extract_strided_slice %510 {offsets = [0, 96], sizes = [8, 32], strides = [1, 1]} : vector<8x128xf32> to vector<8x32xf32>
    %515 = arith.mulf %513, %512 : vector<8x32xf32>
    %516 = math.tanh %515 : vector<8x32xf32>
    %517 = arith.mulf %514, %516 : vector<8x32xf32>
    %518 = vector.extract_strided_slice %500 {offsets = [0, 0], sizes = [8, 32], strides = [1, 1]} : vector<64x32xf32> to vector<8x32xf32>
    %519 = arith.addf %517, %518 : vector<8x32xf32>
    %c0_170 = arith.constant 0 : index
    %c0_171 = arith.constant 0 : index
    %520 = vector.load %arg5[%c0_170, %c0_171] : memref<64x32xf32, #tpu.memory_space<vmem>>, vector<8x32xf32>
    tpu.vector_store %arg5[%c0_170, %c0_171], %519 {strides = array<i32>} : memref<64x32xf32, #tpu.memory_space<vmem>>, vector<8x32xf32>,
    %c8_172 = arith.constant 8 : index
    %c0_173 = arith.constant 0 : index
    %521 = vector.load %arg6[%c8_172, %c0_173] : memref<64x128xf32, #tpu.memory_space<vmem>>, vector<8x128xf32>
    %cst_174 = arith.constant dense<0.000000e+00> : vector<8x128xf32>
    %522 = tpu.matmul %517, %498, %cst_174 {dimension_numbers = #tpu.dot_dimension_numbers<[1], [0], [0], [1], [0, 0, 1, 1], [], []>} : vector<8x32xf32>, vector<32x128xf32>, vector<8x128xf32> -> vector<8x128xf32>
    %523 = arith.addf %521, %522 : vector<8x128xf32>
    %524 = arith.negf %523 : vector<8x128xf32>
    %525 = math.exp %524 : vector<8x128xf32>
    %cst_175 = arith.constant 1.000000e+00 : f32
    %526 = vector.broadcast %cst_175 : f32 to vector<8x128xf32>
    %527 = arith.addf %526, %525 : vector<8x128xf32>
    %528 = arith.divf %526, %527 : vector<8x128xf32>
    %529 = vector.extract_strided_slice %523 {offsets = [0, 64], sizes = [8, 32], strides = [1, 1]} : vector<8x128xf32> to vector<8x32xf32>
    %530 = math.tanh %529 : vector<8x32xf32>
    %531 = vector.extract_strided_slice %528 {offsets = [0, 0], sizes = [8, 32], strides = [1, 1]} : vector<8x128xf32> to vector<8x32xf32>
    %532 = vector.extract_strided_slice %528 {offsets = [0, 96], sizes = [8, 32], strides = [1, 1]} : vector<8x128xf32> to vector<8x32xf32>
    %533 = vector.extract_strided_slice %528 {offsets = [0, 32], sizes = [8, 32], strides = [1, 1]} : vector<8x128xf32> to vector<8x32xf32>
    %534 = arith.mulf %533, %515 : vector<8x32xf32>
    %535 = arith.mulf %531, %530 : vector<8x32xf32>
    %536 = arith.addf %534, %535 : vector<8x32xf32>
    %537 = math.tanh %536 : vector<8x32xf32>
    %538 = arith.mulf %532, %537 : vector<8x32xf32>
    %539 = vector.extract_strided_slice %500 {offsets = [8, 0], sizes = [8, 32], strides = [1, 1]} : vector<64x32xf32> to vector<8x32xf32>
    %540 = arith.addf %538, %539 : vector<8x32xf32>
    %c8_176 = arith.constant 8 : index
    %c0_177 = arith.constant 0 : index
    %541 = vector.load %arg5[%c8_176, %c0_177] : memref<64x32xf32, #tpu.memory_space<vmem>>, vector<8x32xf32>
    tpu.vector_store %arg5[%c8_176, %c0_177], %540 {strides = array<i32>} : memref<64x32xf32, #tpu.memory_space<vmem>>, vector<8x32xf32>,
    %c16_178 = arith.constant 16 : index
    %c0_179 = arith.constant 0 : index
    %542 = vector.load %arg6[%c16_178, %c0_179] : memref<64x128xf32, #tpu.memory_space<vmem>>, vector<8x128xf32>
    %cst_180 = arith.constant dense<0.000000e+00> : vector<8x128xf32>
    %543 = tpu.matmul %538, %498, %cst_180 {dimension_numbers = #tpu.dot_dimension_numbers<[1], [0], [0], [1], [0, 0, 1, 1], [], []>} : vector<8x32xf32>, vector<32x128xf32>, vector<8x128xf32> -> vector<8x128xf32>
    %544 = arith.addf %542, %543 : vector<8x128xf32>
    %545 = arith.negf %544 : vector<8x128xf32>
    %546 = math.exp %545 : vector<8x128xf32>
    %cst_181 = arith.constant 1.000000e+00 : f32
    %547 = vector.broadcast %cst_181 : f32 to vector<8x128xf32>
    %548 = arith.addf %547, %546 : vector<8x128xf32>
    %549 = arith.divf %547, %548 : vector<8x128xf32>
    %550 = vector.extract_strided_slice %544 {offsets = [0, 64], sizes = [8, 32], strides = [1, 1]} : vector<8x128xf32> to vector<8x32xf32>
    %551 = math.tanh %550 : vector<8x32xf32>
    %552 = vector.extract_strided_slice %549 {offsets = [0, 0], sizes = [8, 32], strides = [1, 1]} : vector<8x128xf32> to vector<8x32xf32>
    %553 = vector.extract_strided_slice %549 {offsets = [0, 96], sizes = [8, 32], strides = [1, 1]} : vector<8x128xf32> to vector<8x32xf32>
    %554 = vector.extract_strided_slice %549 {offsets = [0, 32], sizes = [8, 32], strides = [1, 1]} : vector<8x128xf32> to vector<8x32xf32>
    %555 = arith.mulf %554, %536 : vector<8x32xf32>
    %556 = arith.mulf %552, %551 : vector<8x32xf32>
    %557 = arith.addf %555, %556 : vector<8x32xf32>
    %558 = math.tanh %557 : vector<8x32xf32>
    %559 = arith.mulf %553, %558 : vector<8x32xf32>
    %560 = vector.extract_strided_slice %500 {offsets = [16, 0], sizes = [8, 32], strides = [1, 1]} : vector<64x32xf32> to vector<8x32xf32>
    %561 = arith.addf %559, %560 : vector<8x32xf32>
    %c16_182 = arith.constant 16 : index
    %c0_183 = arith.constant 0 : index
    %562 = vector.load %arg5[%c16_182, %c0_183] : memref<64x32xf32, #tpu.memory_space<vmem>>, vector<8x32xf32>
    tpu.vector_store %arg5[%c16_182, %c0_183], %561 {strides = array<i32>} : memref<64x32xf32, #tpu.memory_space<vmem>>, vector<8x32xf32>,
    %c24_184 = arith.constant 24 : index
    %c0_185 = arith.constant 0 : index
    %563 = vector.load %arg6[%c24_184, %c0_185] : memref<64x128xf32, #tpu.memory_space<vmem>>, vector<8x128xf32>
    %cst_186 = arith.constant dense<0.000000e+00> : vector<8x128xf32>
    %564 = tpu.matmul %559, %498, %cst_186 {dimension_numbers = #tpu.dot_dimension_numbers<[1], [0], [0], [1], [0, 0, 1, 1], [], []>} : vector<8x32xf32>, vector<32x128xf32>, vector<8x128xf32> -> vector<8x128xf32>
    %565 = arith.addf %563, %564 : vector<8x128xf32>
    %566 = arith.negf %565 : vector<8x128xf32>
    %567 = math.exp %566 : vector<8x128xf32>
    %cst_187 = arith.constant 1.000000e+00 : f32
    %568 = vector.broadcast %cst_187 : f32 to vector<8x128xf32>
    %569 = arith.addf %568, %567 : vector<8x128xf32>
    %570 = arith.divf %568, %569 : vector<8x128xf32>
    %571 = vector.extract_strided_slice %565 {offsets = [0, 64], sizes = [8, 32], strides = [1, 1]} : vector<8x128xf32> to vector<8x32xf32>
    %572 = math.tanh %571 : vector<8x32xf32>
    %573 = vector.extract_strided_slice %570 {offsets = [0, 0], sizes = [8, 32], strides = [1, 1]} : vector<8x128xf32> to vector<8x32xf32>
    %574 = vector.extract_strided_slice %570 {offsets = [0, 96], sizes = [8, 32], strides = [1, 1]} : vector<8x128xf32> to vector<8x32xf32>
    %575 = vector.extract_strided_slice %570 {offsets = [0, 32], sizes = [8, 32], strides = [1, 1]} : vector<8x128xf32> to vector<8x32xf32>
    %576 = arith.mulf %575, %557 : vector<8x32xf32>
    %577 = arith.mulf %573, %572 : vector<8x32xf32>
    %578 = arith.addf %576, %577 : vector<8x32xf32>
    %579 = math.tanh %578 : vector<8x32xf32>
    %580 = arith.mulf %574, %579 : vector<8x32xf32>
    %581 = vector.extract_strided_slice %500 {offsets = [24, 0], sizes = [8, 32], strides = [1, 1]} : vector<64x32xf32> to vector<8x32xf32>
    %582 = arith.addf %580, %581 : vector<8x32xf32>
    %c24_188 = arith.constant 24 : index
    %c0_189 = arith.constant 0 : index
    %583 = vector.load %arg5[%c24_188, %c0_189] : memref<64x32xf32, #tpu.memory_space<vmem>>, vector<8x32xf32>
    tpu.vector_store %arg5[%c24_188, %c0_189], %582 {strides = array<i32>} : memref<64x32xf32, #tpu.memory_space<vmem>>, vector<8x32xf32>,
    %c32_190 = arith.constant 32 : index
    %c0_191 = arith.constant 0 : index
    %584 = vector.load %arg6[%c32_190, %c0_191] : memref<64x128xf32, #tpu.memory_space<vmem>>, vector<8x128xf32>
    %cst_192 = arith.constant dense<0.000000e+00> : vector<8x128xf32>
    %585 = tpu.matmul %580, %498, %cst_192 {dimension_numbers = #tpu.dot_dimension_numbers<[1], [0], [0], [1], [0, 0, 1, 1], [], []>} : vector<8x32xf32>, vector<32x128xf32>, vector<8x128xf32> -> vector<8x128xf32>
    %586 = arith.addf %584, %585 : vector<8x128xf32>
    %587 = arith.negf %586 : vector<8x128xf32>
    %588 = math.exp %587 : vector<8x128xf32>
    %cst_193 = arith.constant 1.000000e+00 : f32
    %589 = vector.broadcast %cst_193 : f32 to vector<8x128xf32>
    %590 = arith.addf %589, %588 : vector<8x128xf32>
    %591 = arith.divf %589, %590 : vector<8x128xf32>
    %592 = vector.extract_strided_slice %586 {offsets = [0, 64], sizes = [8, 32], strides = [1, 1]} : vector<8x128xf32> to vector<8x32xf32>
    %593 = math.tanh %592 : vector<8x32xf32>
    %594 = vector.extract_strided_slice %591 {offsets = [0, 0], sizes = [8, 32], strides = [1, 1]} : vector<8x128xf32> to vector<8x32xf32>
    %595 = vector.extract_strided_slice %591 {offsets = [0, 96], sizes = [8, 32], strides = [1, 1]} : vector<8x128xf32> to vector<8x32xf32>
    %596 = vector.extract_strided_slice %591 {offsets = [0, 32], sizes = [8, 32], strides = [1, 1]} : vector<8x128xf32> to vector<8x32xf32>
    %597 = arith.mulf %596, %578 : vector<8x32xf32>
    %598 = arith.mulf %594, %593 : vector<8x32xf32>
    %599 = arith.addf %597, %598 : vector<8x32xf32>
    %600 = math.tanh %599 : vector<8x32xf32>
    %601 = arith.mulf %595, %600 : vector<8x32xf32>
    %602 = vector.extract_strided_slice %500 {offsets = [32, 0], sizes = [8, 32], strides = [1, 1]} : vector<64x32xf32> to vector<8x32xf32>
    %603 = arith.addf %601, %602 : vector<8x32xf32>
    %c32_194 = arith.constant 32 : index
    %c0_195 = arith.constant 0 : index
    %604 = vector.load %arg5[%c32_194, %c0_195] : memref<64x32xf32, #tpu.memory_space<vmem>>, vector<8x32xf32>
    tpu.vector_store %arg5[%c32_194, %c0_195], %603 {strides = array<i32>} : memref<64x32xf32, #tpu.memory_space<vmem>>, vector<8x32xf32>,
    %c40_196 = arith.constant 40 : index
    %c0_197 = arith.constant 0 : index
    %605 = vector.load %arg6[%c40_196, %c0_197] : memref<64x128xf32, #tpu.memory_space<vmem>>, vector<8x128xf32>
    %cst_198 = arith.constant dense<0.000000e+00> : vector<8x128xf32>
    %606 = tpu.matmul %601, %498, %cst_198 {dimension_numbers = #tpu.dot_dimension_numbers<[1], [0], [0], [1], [0, 0, 1, 1], [], []>} : vector<8x32xf32>, vector<32x128xf32>, vector<8x128xf32> -> vector<8x128xf32>
    %607 = arith.addf %605, %606 : vector<8x128xf32>
    %608 = arith.negf %607 : vector<8x128xf32>
    %609 = math.exp %608 : vector<8x128xf32>
    %cst_199 = arith.constant 1.000000e+00 : f32
    %610 = vector.broadcast %cst_199 : f32 to vector<8x128xf32>
    %611 = arith.addf %610, %609 : vector<8x128xf32>
    %612 = arith.divf %610, %611 : vector<8x128xf32>
    %613 = vector.extract_strided_slice %607 {offsets = [0, 64], sizes = [8, 32], strides = [1, 1]} : vector<8x128xf32> to vector<8x32xf32>
    %614 = math.tanh %613 : vector<8x32xf32>
    %615 = vector.extract_strided_slice %612 {offsets = [0, 0], sizes = [8, 32], strides = [1, 1]} : vector<8x128xf32> to vector<8x32xf32>
    %616 = vector.extract_strided_slice %612 {offsets = [0, 96], sizes = [8, 32], strides = [1, 1]} : vector<8x128xf32> to vector<8x32xf32>
    %617 = vector.extract_strided_slice %612 {offsets = [0, 32], sizes = [8, 32], strides = [1, 1]} : vector<8x128xf32> to vector<8x32xf32>
    %618 = arith.mulf %617, %599 : vector<8x32xf32>
    %619 = arith.mulf %615, %614 : vector<8x32xf32>
    %620 = arith.addf %618, %619 : vector<8x32xf32>
    %621 = math.tanh %620 : vector<8x32xf32>
    %622 = arith.mulf %616, %621 : vector<8x32xf32>
    %623 = vector.extract_strided_slice %500 {offsets = [40, 0], sizes = [8, 32], strides = [1, 1]} : vector<64x32xf32> to vector<8x32xf32>
    %624 = arith.addf %622, %623 : vector<8x32xf32>
    %c40_200 = arith.constant 40 : index
    %c0_201 = arith.constant 0 : index
    %625 = vector.load %arg5[%c40_200, %c0_201] : memref<64x32xf32, #tpu.memory_space<vmem>>, vector<8x32xf32>
    tpu.vector_store %arg5[%c40_200, %c0_201], %624 {strides = array<i32>} : memref<64x32xf32, #tpu.memory_space<vmem>>, vector<8x32xf32>,
    %c48_202 = arith.constant 48 : index
    %c0_203 = arith.constant 0 : index
    %626 = vector.load %arg6[%c48_202, %c0_203] : memref<64x128xf32, #tpu.memory_space<vmem>>, vector<8x128xf32>
    %cst_204 = arith.constant dense<0.000000e+00> : vector<8x128xf32>
    %627 = tpu.matmul %622, %498, %cst_204 {dimension_numbers = #tpu.dot_dimension_numbers<[1], [0], [0], [1], [0, 0, 1, 1], [], []>} : vector<8x32xf32>, vector<32x128xf32>, vector<8x128xf32> -> vector<8x128xf32>
    %628 = arith.addf %626, %627 : vector<8x128xf32>
    %629 = arith.negf %628 : vector<8x128xf32>
    %630 = math.exp %629 : vector<8x128xf32>
    %cst_205 = arith.constant 1.000000e+00 : f32
    %631 = vector.broadcast %cst_205 : f32 to vector<8x128xf32>
    %632 = arith.addf %631, %630 : vector<8x128xf32>
    %633 = arith.divf %631, %632 : vector<8x128xf32>
    %634 = vector.extract_strided_slice %628 {offsets = [0, 64], sizes = [8, 32], strides = [1, 1]} : vector<8x128xf32> to vector<8x32xf32>
    %635 = math.tanh %634 : vector<8x32xf32>
    %636 = vector.extract_strided_slice %633 {offsets = [0, 0], sizes = [8, 32], strides = [1, 1]} : vector<8x128xf32> to vector<8x32xf32>
    %637 = vector.extract_strided_slice %633 {offsets = [0, 96], sizes = [8, 32], strides = [1, 1]} : vector<8x128xf32> to vector<8x32xf32>
    %638 = vector.extract_strided_slice %633 {offsets = [0, 32], sizes = [8, 32], strides = [1, 1]} : vector<8x128xf32> to vector<8x32xf32>
    %639 = arith.mulf %638, %620 : vector<8x32xf32>
    %640 = arith.mulf %636, %635 : vector<8x32xf32>
    %641 = arith.addf %639, %640 : vector<8x32xf32>
    %642 = math.tanh %641 : vector<8x32xf32>
    %643 = arith.mulf %637, %642 : vector<8x32xf32>
    %644 = vector.extract_strided_slice %500 {offsets = [48, 0], sizes = [8, 32], strides = [1, 1]} : vector<64x32xf32> to vector<8x32xf32>
    %645 = arith.addf %643, %644 : vector<8x32xf32>
    %c48_206 = arith.constant 48 : index
    %c0_207 = arith.constant 0 : index
    %646 = vector.load %arg5[%c48_206, %c0_207] : memref<64x32xf32, #tpu.memory_space<vmem>>, vector<8x32xf32>
    tpu.vector_store %arg5[%c48_206, %c0_207], %645 {strides = array<i32>} : memref<64x32xf32, #tpu.memory_space<vmem>>, vector<8x32xf32>,
    %c56_208 = arith.constant 56 : index
    %c0_209 = arith.constant 0 : index
    %647 = vector.load %arg6[%c56_208, %c0_209] : memref<64x128xf32, #tpu.memory_space<vmem>>, vector<8x128xf32>
    %cst_210 = arith.constant dense<0.000000e+00> : vector<8x128xf32>
    %648 = tpu.matmul %643, %498, %cst_210 {dimension_numbers = #tpu.dot_dimension_numbers<[1], [0], [0], [1], [0, 0, 1, 1], [], []>} : vector<8x32xf32>, vector<32x128xf32>, vector<8x128xf32> -> vector<8x128xf32>
    %649 = arith.addf %647, %648 : vector<8x128xf32>
    %650 = arith.negf %649 : vector<8x128xf32>
    %651 = math.exp %650 : vector<8x128xf32>
    %cst_211 = arith.constant 1.000000e+00 : f32
    %652 = vector.broadcast %cst_211 : f32 to vector<8x128xf32>
    %653 = arith.addf %652, %651 : vector<8x128xf32>
    %654 = arith.divf %652, %653 : vector<8x128xf32>
    %655 = vector.extract_strided_slice %649 {offsets = [0, 64], sizes = [8, 32], strides = [1, 1]} : vector<8x128xf32> to vector<8x32xf32>
    %656 = math.tanh %655 : vector<8x32xf32>
    %657 = vector.extract_strided_slice %654 {offsets = [0, 0], sizes = [8, 32], strides = [1, 1]} : vector<8x128xf32> to vector<8x32xf32>
    %658 = vector.extract_strided_slice %654 {offsets = [0, 96], sizes = [8, 32], strides = [1, 1]} : vector<8x128xf32> to vector<8x32xf32>
    %659 = vector.extract_strided_slice %654 {offsets = [0, 32], sizes = [8, 32], strides = [1, 1]} : vector<8x128xf32> to vector<8x32xf32>
    %660 = arith.mulf %659, %641 : vector<8x32xf32>
    %661 = arith.mulf %657, %656 : vector<8x32xf32>
    %662 = arith.addf %660, %661 : vector<8x32xf32>
    %663 = math.tanh %662 : vector<8x32xf32>
    %664 = arith.mulf %658, %663 : vector<8x32xf32>
    %665 = vector.extract_strided_slice %500 {offsets = [56, 0], sizes = [8, 32], strides = [1, 1]} : vector<64x32xf32> to vector<8x32xf32>
    %666 = arith.addf %664, %665 : vector<8x32xf32>
    %c56_212 = arith.constant 56 : index
    %c0_213 = arith.constant 0 : index
    %667 = vector.load %arg5[%c56_212, %c0_213] : memref<64x32xf32, #tpu.memory_space<vmem>>, vector<8x32xf32>
    tpu.vector_store %arg5[%c56_212, %c0_213], %666 {strides = array<i32>} : memref<64x32xf32, #tpu.memory_space<vmem>>, vector<8x32xf32>,
    %c232 = arith.constant 232 : index
    %c0_214 = arith.constant 0 : index
    %668 = vector.load %arg1[%c232, %c0_214] : memref<366x128xf32, #tpu.memory_space<vmem>>, vector<32x128xf32>
    %c264 = arith.constant 264 : index
    %c0_215 = arith.constant 0 : index
    %669 = vector.load %arg1[%c264, %c0_215] : memref<366x128xf32, #tpu.memory_space<vmem>>, vector<32x128xf32>
    %c364 = arith.constant 364 : index
    %c0_216 = arith.constant 0 : index
    %670 = vector.load %arg1[%c364, %c0_216] : memref<366x128xf32, #tpu.memory_space<vmem>>, vector<1x128xf32>
    %c0_217 = arith.constant 0 : index
    %c0_218 = arith.constant 0 : index
    %671 = vector.load %arg5[%c0_217, %c0_218] : memref<64x32xf32, #tpu.memory_space<vmem>>, vector<64x32xf32>
    %cst_219 = arith.constant dense<0.000000e+00> : vector<64x128xf32>
    %672 = tpu.matmul %671, %668, %cst_219 {dimension_numbers = #tpu.dot_dimension_numbers<[1], [0], [0], [1], [0, 0, 1, 1], [], []>} : vector<64x32xf32>, vector<32x128xf32>, vector<64x128xf32> -> vector<64x128xf32>
    %673 = vector.broadcast %670 : vector<1x128xf32> to vector<64x128xf32>
    %674 = arith.addf %672, %673 : vector<64x128xf32>
    %c0_220 = arith.constant 0 : index
    %c0_221 = arith.constant 0 : index
    %675 = vector.load %arg6[%c0_220, %c0_221] : memref<64x128xf32, #tpu.memory_space<vmem>>, vector<64x128xf32>
    tpu.vector_store %arg6[%c0_220, %c0_221], %674 {strides = array<i32>} : memref<64x128xf32, #tpu.memory_space<vmem>>, vector<64x128xf32>,
    %c0_222 = arith.constant 0 : index
    %c0_223 = arith.constant 0 : index
    %676 = vector.load %arg6[%c0_222, %c0_223] : memref<64x128xf32, #tpu.memory_space<vmem>>, vector<8x128xf32>
    %677 = arith.negf %676 : vector<8x128xf32>
    %678 = math.exp %677 : vector<8x128xf32>
    %cst_224 = arith.constant 1.000000e+00 : f32
    %679 = vector.broadcast %cst_224 : f32 to vector<8x128xf32>
    %680 = arith.addf %679, %678 : vector<8x128xf32>
    %681 = arith.divf %679, %680 : vector<8x128xf32>
    %682 = vector.extract_strided_slice %676 {offsets = [0, 64], sizes = [8, 32], strides = [1, 1]} : vector<8x128xf32> to vector<8x32xf32>
    %683 = math.tanh %682 : vector<8x32xf32>
    %684 = vector.extract_strided_slice %681 {offsets = [0, 0], sizes = [8, 32], strides = [1, 1]} : vector<8x128xf32> to vector<8x32xf32>
    %685 = vector.extract_strided_slice %681 {offsets = [0, 96], sizes = [8, 32], strides = [1, 1]} : vector<8x128xf32> to vector<8x32xf32>
    %686 = arith.mulf %684, %683 : vector<8x32xf32>
    %687 = math.tanh %686 : vector<8x32xf32>
    %688 = arith.mulf %685, %687 : vector<8x32xf32>
    %689 = vector.extract_strided_slice %671 {offsets = [0, 0], sizes = [8, 32], strides = [1, 1]} : vector<64x32xf32> to vector<8x32xf32>
    %690 = arith.addf %688, %689 : vector<8x32xf32>
    %c0_225 = arith.constant 0 : index
    %c0_226 = arith.constant 0 : index
    %691 = vector.load %arg4[%c0_225, %c0_226] : memref<64x32xf32, #tpu.memory_space<vmem>>, vector<8x32xf32>
    tpu.vector_store %arg4[%c0_225, %c0_226], %690 {strides = array<i32>} : memref<64x32xf32, #tpu.memory_space<vmem>>, vector<8x32xf32>,
    %c8_227 = arith.constant 8 : index
    %c0_228 = arith.constant 0 : index
    %692 = vector.load %arg6[%c8_227, %c0_228] : memref<64x128xf32, #tpu.memory_space<vmem>>, vector<8x128xf32>
    %cst_229 = arith.constant dense<0.000000e+00> : vector<8x128xf32>
    %693 = tpu.matmul %688, %669, %cst_229 {dimension_numbers = #tpu.dot_dimension_numbers<[1], [0], [0], [1], [0, 0, 1, 1], [], []>} : vector<8x32xf32>, vector<32x128xf32>, vector<8x128xf32> -> vector<8x128xf32>
    %694 = arith.addf %692, %693 : vector<8x128xf32>
    %695 = arith.negf %694 : vector<8x128xf32>
    %696 = math.exp %695 : vector<8x128xf32>
    %cst_230 = arith.constant 1.000000e+00 : f32
    %697 = vector.broadcast %cst_230 : f32 to vector<8x128xf32>
    %698 = arith.addf %697, %696 : vector<8x128xf32>
    %699 = arith.divf %697, %698 : vector<8x128xf32>
    %700 = vector.extract_strided_slice %694 {offsets = [0, 64], sizes = [8, 32], strides = [1, 1]} : vector<8x128xf32> to vector<8x32xf32>
    %701 = math.tanh %700 : vector<8x32xf32>
    %702 = vector.extract_strided_slice %699 {offsets = [0, 0], sizes = [8, 32], strides = [1, 1]} : vector<8x128xf32> to vector<8x32xf32>
    %703 = vector.extract_strided_slice %699 {offsets = [0, 96], sizes = [8, 32], strides = [1, 1]} : vector<8x128xf32> to vector<8x32xf32>
    %704 = vector.extract_strided_slice %699 {offsets = [0, 32], sizes = [8, 32], strides = [1, 1]} : vector<8x128xf32> to vector<8x32xf32>
    %705 = arith.mulf %704, %686 : vector<8x32xf32>
    %706 = arith.mulf %702, %701 : vector<8x32xf32>
    %707 = arith.addf %705, %706 : vector<8x32xf32>
    %708 = math.tanh %707 : vector<8x32xf32>
    %709 = arith.mulf %703, %708 : vector<8x32xf32>
    %710 = vector.extract_strided_slice %671 {offsets = [8, 0], sizes = [8, 32], strides = [1, 1]} : vector<64x32xf32> to vector<8x32xf32>
    %711 = arith.addf %709, %710 : vector<8x32xf32>
    %c8_231 = arith.constant 8 : index
    %c0_232 = arith.constant 0 : index
    %712 = vector.load %arg4[%c8_231, %c0_232] : memref<64x32xf32, #tpu.memory_space<vmem>>, vector<8x32xf32>
    tpu.vector_store %arg4[%c8_231, %c0_232], %711 {strides = array<i32>} : memref<64x32xf32, #tpu.memory_space<vmem>>, vector<8x32xf32>,
    %c16_233 = arith.constant 16 : index
    %c0_234 = arith.constant 0 : index
    %713 = vector.load %arg6[%c16_233, %c0_234] : memref<64x128xf32, #tpu.memory_space<vmem>>, vector<8x128xf32>
    %cst_235 = arith.constant dense<0.000000e+00> : vector<8x128xf32>
    %714 = tpu.matmul %709, %669, %cst_235 {dimension_numbers = #tpu.dot_dimension_numbers<[1], [0], [0], [1], [0, 0, 1, 1], [], []>} : vector<8x32xf32>, vector<32x128xf32>, vector<8x128xf32> -> vector<8x128xf32>
    %715 = arith.addf %713, %714 : vector<8x128xf32>
    %716 = arith.negf %715 : vector<8x128xf32>
    %717 = math.exp %716 : vector<8x128xf32>
    %cst_236 = arith.constant 1.000000e+00 : f32
    %718 = vector.broadcast %cst_236 : f32 to vector<8x128xf32>
    %719 = arith.addf %718, %717 : vector<8x128xf32>
    %720 = arith.divf %718, %719 : vector<8x128xf32>
    %721 = vector.extract_strided_slice %715 {offsets = [0, 64], sizes = [8, 32], strides = [1, 1]} : vector<8x128xf32> to vector<8x32xf32>
    %722 = math.tanh %721 : vector<8x32xf32>
    %723 = vector.extract_strided_slice %720 {offsets = [0, 0], sizes = [8, 32], strides = [1, 1]} : vector<8x128xf32> to vector<8x32xf32>
    %724 = vector.extract_strided_slice %720 {offsets = [0, 96], sizes = [8, 32], strides = [1, 1]} : vector<8x128xf32> to vector<8x32xf32>
    %725 = vector.extract_strided_slice %720 {offsets = [0, 32], sizes = [8, 32], strides = [1, 1]} : vector<8x128xf32> to vector<8x32xf32>
    %726 = arith.mulf %725, %707 : vector<8x32xf32>
    %727 = arith.mulf %723, %722 : vector<8x32xf32>
    %728 = arith.addf %726, %727 : vector<8x32xf32>
    %729 = math.tanh %728 : vector<8x32xf32>
    %730 = arith.mulf %724, %729 : vector<8x32xf32>
    %731 = vector.extract_strided_slice %671 {offsets = [16, 0], sizes = [8, 32], strides = [1, 1]} : vector<64x32xf32> to vector<8x32xf32>
    %732 = arith.addf %730, %731 : vector<8x32xf32>
    %c16_237 = arith.constant 16 : index
    %c0_238 = arith.constant 0 : index
    %733 = vector.load %arg4[%c16_237, %c0_238] : memref<64x32xf32, #tpu.memory_space<vmem>>, vector<8x32xf32>
    tpu.vector_store %arg4[%c16_237, %c0_238], %732 {strides = array<i32>} : memref<64x32xf32, #tpu.memory_space<vmem>>, vector<8x32xf32>,
    %c24_239 = arith.constant 24 : index
    %c0_240 = arith.constant 0 : index
    %734 = vector.load %arg6[%c24_239, %c0_240] : memref<64x128xf32, #tpu.memory_space<vmem>>, vector<8x128xf32>
    %cst_241 = arith.constant dense<0.000000e+00> : vector<8x128xf32>
    %735 = tpu.matmul %730, %669, %cst_241 {dimension_numbers = #tpu.dot_dimension_numbers<[1], [0], [0], [1], [0, 0, 1, 1], [], []>} : vector<8x32xf32>, vector<32x128xf32>, vector<8x128xf32> -> vector<8x128xf32>
    %736 = arith.addf %734, %735 : vector<8x128xf32>
    %737 = arith.negf %736 : vector<8x128xf32>
    %738 = math.exp %737 : vector<8x128xf32>
    %cst_242 = arith.constant 1.000000e+00 : f32
    %739 = vector.broadcast %cst_242 : f32 to vector<8x128xf32>
    %740 = arith.addf %739, %738 : vector<8x128xf32>
    %741 = arith.divf %739, %740 : vector<8x128xf32>
    %742 = vector.extract_strided_slice %736 {offsets = [0, 64], sizes = [8, 32], strides = [1, 1]} : vector<8x128xf32> to vector<8x32xf32>
    %743 = math.tanh %742 : vector<8x32xf32>
    %744 = vector.extract_strided_slice %741 {offsets = [0, 0], sizes = [8, 32], strides = [1, 1]} : vector<8x128xf32> to vector<8x32xf32>
    %745 = vector.extract_strided_slice %741 {offsets = [0, 96], sizes = [8, 32], strides = [1, 1]} : vector<8x128xf32> to vector<8x32xf32>
    %746 = vector.extract_strided_slice %741 {offsets = [0, 32], sizes = [8, 32], strides = [1, 1]} : vector<8x128xf32> to vector<8x32xf32>
    %747 = arith.mulf %746, %728 : vector<8x32xf32>
    %748 = arith.mulf %744, %743 : vector<8x32xf32>
    %749 = arith.addf %747, %748 : vector<8x32xf32>
    %750 = math.tanh %749 : vector<8x32xf32>
    %751 = arith.mulf %745, %750 : vector<8x32xf32>
    %752 = vector.extract_strided_slice %671 {offsets = [24, 0], sizes = [8, 32], strides = [1, 1]} : vector<64x32xf32> to vector<8x32xf32>
    %753 = arith.addf %751, %752 : vector<8x32xf32>
    %c24_243 = arith.constant 24 : index
    %c0_244 = arith.constant 0 : index
    %754 = vector.load %arg4[%c24_243, %c0_244] : memref<64x32xf32, #tpu.memory_space<vmem>>, vector<8x32xf32>
    tpu.vector_store %arg4[%c24_243, %c0_244], %753 {strides = array<i32>} : memref<64x32xf32, #tpu.memory_space<vmem>>, vector<8x32xf32>,
    %c32_245 = arith.constant 32 : index
    %c0_246 = arith.constant 0 : index
    %755 = vector.load %arg6[%c32_245, %c0_246] : memref<64x128xf32, #tpu.memory_space<vmem>>, vector<8x128xf32>
    %cst_247 = arith.constant dense<0.000000e+00> : vector<8x128xf32>
    %756 = tpu.matmul %751, %669, %cst_247 {dimension_numbers = #tpu.dot_dimension_numbers<[1], [0], [0], [1], [0, 0, 1, 1], [], []>} : vector<8x32xf32>, vector<32x128xf32>, vector<8x128xf32> -> vector<8x128xf32>
    %757 = arith.addf %755, %756 : vector<8x128xf32>
    %758 = arith.negf %757 : vector<8x128xf32>
    %759 = math.exp %758 : vector<8x128xf32>
    %cst_248 = arith.constant 1.000000e+00 : f32
    %760 = vector.broadcast %cst_248 : f32 to vector<8x128xf32>
    %761 = arith.addf %760, %759 : vector<8x128xf32>
    %762 = arith.divf %760, %761 : vector<8x128xf32>
    %763 = vector.extract_strided_slice %757 {offsets = [0, 64], sizes = [8, 32], strides = [1, 1]} : vector<8x128xf32> to vector<8x32xf32>
    %764 = math.tanh %763 : vector<8x32xf32>
    %765 = vector.extract_strided_slice %762 {offsets = [0, 0], sizes = [8, 32], strides = [1, 1]} : vector<8x128xf32> to vector<8x32xf32>
    %766 = vector.extract_strided_slice %762 {offsets = [0, 96], sizes = [8, 32], strides = [1, 1]} : vector<8x128xf32> to vector<8x32xf32>
    %767 = vector.extract_strided_slice %762 {offsets = [0, 32], sizes = [8, 32], strides = [1, 1]} : vector<8x128xf32> to vector<8x32xf32>
    %768 = arith.mulf %767, %749 : vector<8x32xf32>
    %769 = arith.mulf %765, %764 : vector<8x32xf32>
    %770 = arith.addf %768, %769 : vector<8x32xf32>
    %771 = math.tanh %770 : vector<8x32xf32>
    %772 = arith.mulf %766, %771 : vector<8x32xf32>
    %773 = vector.extract_strided_slice %671 {offsets = [32, 0], sizes = [8, 32], strides = [1, 1]} : vector<64x32xf32> to vector<8x32xf32>
    %774 = arith.addf %772, %773 : vector<8x32xf32>
    %c32_249 = arith.constant 32 : index
    %c0_250 = arith.constant 0 : index
    %775 = vector.load %arg4[%c32_249, %c0_250] : memref<64x32xf32, #tpu.memory_space<vmem>>, vector<8x32xf32>
    tpu.vector_store %arg4[%c32_249, %c0_250], %774 {strides = array<i32>} : memref<64x32xf32, #tpu.memory_space<vmem>>, vector<8x32xf32>,
    %c40_251 = arith.constant 40 : index
    %c0_252 = arith.constant 0 : index
    %776 = vector.load %arg6[%c40_251, %c0_252] : memref<64x128xf32, #tpu.memory_space<vmem>>, vector<8x128xf32>
    %cst_253 = arith.constant dense<0.000000e+00> : vector<8x128xf32>
    %777 = tpu.matmul %772, %669, %cst_253 {dimension_numbers = #tpu.dot_dimension_numbers<[1], [0], [0], [1], [0, 0, 1, 1], [], []>} : vector<8x32xf32>, vector<32x128xf32>, vector<8x128xf32> -> vector<8x128xf32>
    %778 = arith.addf %776, %777 : vector<8x128xf32>
    %779 = arith.negf %778 : vector<8x128xf32>
    %780 = math.exp %779 : vector<8x128xf32>
    %cst_254 = arith.constant 1.000000e+00 : f32
    %781 = vector.broadcast %cst_254 : f32 to vector<8x128xf32>
    %782 = arith.addf %781, %780 : vector<8x128xf32>
    %783 = arith.divf %781, %782 : vector<8x128xf32>
    %784 = vector.extract_strided_slice %778 {offsets = [0, 64], sizes = [8, 32], strides = [1, 1]} : vector<8x128xf32> to vector<8x32xf32>
    %785 = math.tanh %784 : vector<8x32xf32>
    %786 = vector.extract_strided_slice %783 {offsets = [0, 0], sizes = [8, 32], strides = [1, 1]} : vector<8x128xf32> to vector<8x32xf32>
    %787 = vector.extract_strided_slice %783 {offsets = [0, 96], sizes = [8, 32], strides = [1, 1]} : vector<8x128xf32> to vector<8x32xf32>
    %788 = vector.extract_strided_slice %783 {offsets = [0, 32], sizes = [8, 32], strides = [1, 1]} : vector<8x128xf32> to vector<8x32xf32>
    %789 = arith.mulf %788, %770 : vector<8x32xf32>
    %790 = arith.mulf %786, %785 : vector<8x32xf32>
    %791 = arith.addf %789, %790 : vector<8x32xf32>
    %792 = math.tanh %791 : vector<8x32xf32>
    %793 = arith.mulf %787, %792 : vector<8x32xf32>
    %794 = vector.extract_strided_slice %671 {offsets = [40, 0], sizes = [8, 32], strides = [1, 1]} : vector<64x32xf32> to vector<8x32xf32>
    %795 = arith.addf %793, %794 : vector<8x32xf32>
    %c40_255 = arith.constant 40 : index
    %c0_256 = arith.constant 0 : index
    %796 = vector.load %arg4[%c40_255, %c0_256] : memref<64x32xf32, #tpu.memory_space<vmem>>, vector<8x32xf32>
    tpu.vector_store %arg4[%c40_255, %c0_256], %795 {strides = array<i32>} : memref<64x32xf32, #tpu.memory_space<vmem>>, vector<8x32xf32>,
    %c48_257 = arith.constant 48 : index
    %c0_258 = arith.constant 0 : index
    %797 = vector.load %arg6[%c48_257, %c0_258] : memref<64x128xf32, #tpu.memory_space<vmem>>, vector<8x128xf32>
    %cst_259 = arith.constant dense<0.000000e+00> : vector<8x128xf32>
    %798 = tpu.matmul %793, %669, %cst_259 {dimension_numbers = #tpu.dot_dimension_numbers<[1], [0], [0], [1], [0, 0, 1, 1], [], []>} : vector<8x32xf32>, vector<32x128xf32>, vector<8x128xf32> -> vector<8x128xf32>
    %799 = arith.addf %797, %798 : vector<8x128xf32>
    %800 = arith.negf %799 : vector<8x128xf32>
    %801 = math.exp %800 : vector<8x128xf32>
    %cst_260 = arith.constant 1.000000e+00 : f32
    %802 = vector.broadcast %cst_260 : f32 to vector<8x128xf32>
    %803 = arith.addf %802, %801 : vector<8x128xf32>
    %804 = arith.divf %802, %803 : vector<8x128xf32>
    %805 = vector.extract_strided_slice %799 {offsets = [0, 64], sizes = [8, 32], strides = [1, 1]} : vector<8x128xf32> to vector<8x32xf32>
    %806 = math.tanh %805 : vector<8x32xf32>
    %807 = vector.extract_strided_slice %804 {offsets = [0, 0], sizes = [8, 32], strides = [1, 1]} : vector<8x128xf32> to vector<8x32xf32>
    %808 = vector.extract_strided_slice %804 {offsets = [0, 96], sizes = [8, 32], strides = [1, 1]} : vector<8x128xf32> to vector<8x32xf32>
    %809 = vector.extract_strided_slice %804 {offsets = [0, 32], sizes = [8, 32], strides = [1, 1]} : vector<8x128xf32> to vector<8x32xf32>
    %810 = arith.mulf %809, %791 : vector<8x32xf32>
    %811 = arith.mulf %807, %806 : vector<8x32xf32>
    %812 = arith.addf %810, %811 : vector<8x32xf32>
    %813 = math.tanh %812 : vector<8x32xf32>
    %814 = arith.mulf %808, %813 : vector<8x32xf32>
    %815 = vector.extract_strided_slice %671 {offsets = [48, 0], sizes = [8, 32], strides = [1, 1]} : vector<64x32xf32> to vector<8x32xf32>
    %816 = arith.addf %814, %815 : vector<8x32xf32>
    %c48_261 = arith.constant 48 : index
    %c0_262 = arith.constant 0 : index
    %817 = vector.load %arg4[%c48_261, %c0_262] : memref<64x32xf32, #tpu.memory_space<vmem>>, vector<8x32xf32>
    tpu.vector_store %arg4[%c48_261, %c0_262], %816 {strides = array<i32>} : memref<64x32xf32, #tpu.memory_space<vmem>>, vector<8x32xf32>,
    %c56_263 = arith.constant 56 : index
    %c0_264 = arith.constant 0 : index
    %818 = vector.load %arg6[%c56_263, %c0_264] : memref<64x128xf32, #tpu.memory_space<vmem>>, vector<8x128xf32>
    %cst_265 = arith.constant dense<0.000000e+00> : vector<8x128xf32>
    %819 = tpu.matmul %814, %669, %cst_265 {dimension_numbers = #tpu.dot_dimension_numbers<[1], [0], [0], [1], [0, 0, 1, 1], [], []>} : vector<8x32xf32>, vector<32x128xf32>, vector<8x128xf32> -> vector<8x128xf32>
    %820 = arith.addf %818, %819 : vector<8x128xf32>
    %821 = arith.negf %820 : vector<8x128xf32>
    %822 = math.exp %821 : vector<8x128xf32>
    %cst_266 = arith.constant 1.000000e+00 : f32
    %823 = vector.broadcast %cst_266 : f32 to vector<8x128xf32>
    %824 = arith.addf %823, %822 : vector<8x128xf32>
    %825 = arith.divf %823, %824 : vector<8x128xf32>
    %826 = vector.extract_strided_slice %820 {offsets = [0, 64], sizes = [8, 32], strides = [1, 1]} : vector<8x128xf32> to vector<8x32xf32>
    %827 = math.tanh %826 : vector<8x32xf32>
    %828 = vector.extract_strided_slice %825 {offsets = [0, 0], sizes = [8, 32], strides = [1, 1]} : vector<8x128xf32> to vector<8x32xf32>
    %829 = vector.extract_strided_slice %825 {offsets = [0, 96], sizes = [8, 32], strides = [1, 1]} : vector<8x128xf32> to vector<8x32xf32>
    %830 = vector.extract_strided_slice %825 {offsets = [0, 32], sizes = [8, 32], strides = [1, 1]} : vector<8x128xf32> to vector<8x32xf32>
    %831 = arith.mulf %830, %812 : vector<8x32xf32>
    %832 = arith.mulf %828, %827 : vector<8x32xf32>
    %833 = arith.addf %831, %832 : vector<8x32xf32>
    %834 = math.tanh %833 : vector<8x32xf32>
    %835 = arith.mulf %829, %834 : vector<8x32xf32>
    %836 = vector.extract_strided_slice %671 {offsets = [56, 0], sizes = [8, 32], strides = [1, 1]} : vector<64x32xf32> to vector<8x32xf32>
    %837 = arith.addf %835, %836 : vector<8x32xf32>
    %c56_267 = arith.constant 56 : index
    %c0_268 = arith.constant 0 : index
    %838 = vector.load %arg4[%c56_267, %c0_268] : memref<64x32xf32, #tpu.memory_space<vmem>>, vector<8x32xf32>
    tpu.vector_store %arg4[%c56_267, %c0_268], %837 {strides = array<i32>} : memref<64x32xf32, #tpu.memory_space<vmem>>, vector<8x32xf32>,
    %c296 = arith.constant 296 : index
    %c0_269 = arith.constant 0 : index
    %839 = vector.load %arg1[%c296, %c0_269] : memref<366x128xf32, #tpu.memory_space<vmem>>, vector<32x128xf32>
    %c328 = arith.constant 328 : index
    %c0_270 = arith.constant 0 : index
    %840 = vector.load %arg1[%c328, %c0_270] : memref<366x128xf32, #tpu.memory_space<vmem>>, vector<32x128xf32>
    %c365 = arith.constant 365 : index
    %c0_271 = arith.constant 0 : index
    %841 = vector.load %arg1[%c365, %c0_271] : memref<366x128xf32, #tpu.memory_space<vmem>>, vector<1x128xf32>
    %c0_272 = arith.constant 0 : index
    %c0_273 = arith.constant 0 : index
    %842 = vector.load %arg4[%c0_272, %c0_273] : memref<64x32xf32, #tpu.memory_space<vmem>>, vector<64x32xf32>
    %cst_274 = arith.constant dense<0.000000e+00> : vector<64x128xf32>
    %843 = tpu.matmul %842, %839, %cst_274 {dimension_numbers = #tpu.dot_dimension_numbers<[1], [0], [0], [1], [0, 0, 1, 1], [], []>} : vector<64x32xf32>, vector<32x128xf32>, vector<64x128xf32> -> vector<64x128xf32>
    %844 = vector.broadcast %841 : vector<1x128xf32> to vector<64x128xf32>
    %845 = arith.addf %843, %844 : vector<64x128xf32>
    %c0_275 = arith.constant 0 : index
    %c0_276 = arith.constant 0 : index
    %846 = vector.load %arg6[%c0_275, %c0_276] : memref<64x128xf32, #tpu.memory_space<vmem>>, vector<64x128xf32>
    tpu.vector_store %arg6[%c0_275, %c0_276], %845 {strides = array<i32>} : memref<64x128xf32, #tpu.memory_space<vmem>>, vector<64x128xf32>,
    %c0_277 = arith.constant 0 : index
    %c0_278 = arith.constant 0 : index
    %847 = vector.load %arg6[%c0_277, %c0_278] : memref<64x128xf32, #tpu.memory_space<vmem>>, vector<8x128xf32>
    %848 = arith.negf %847 : vector<8x128xf32>
    %849 = math.exp %848 : vector<8x128xf32>
    %cst_279 = arith.constant 1.000000e+00 : f32
    %850 = vector.broadcast %cst_279 : f32 to vector<8x128xf32>
    %851 = arith.addf %850, %849 : vector<8x128xf32>
    %852 = arith.divf %850, %851 : vector<8x128xf32>
    %853 = vector.extract_strided_slice %847 {offsets = [0, 64], sizes = [8, 32], strides = [1, 1]} : vector<8x128xf32> to vector<8x32xf32>
    %854 = math.tanh %853 : vector<8x32xf32>
    %855 = vector.extract_strided_slice %852 {offsets = [0, 0], sizes = [8, 32], strides = [1, 1]} : vector<8x128xf32> to vector<8x32xf32>
    %856 = vector.extract_strided_slice %852 {offsets = [0, 96], sizes = [8, 32], strides = [1, 1]} : vector<8x128xf32> to vector<8x32xf32>
    %857 = arith.mulf %855, %854 : vector<8x32xf32>
    %858 = math.tanh %857 : vector<8x32xf32>
    %859 = arith.mulf %856, %858 : vector<8x32xf32>
    %860 = vector.extract_strided_slice %842 {offsets = [0, 0], sizes = [8, 32], strides = [1, 1]} : vector<64x32xf32> to vector<8x32xf32>
    %861 = arith.addf %859, %860 : vector<8x32xf32>
    %c0_280 = arith.constant 0 : index
    %c0_281 = arith.constant 0 : index
    %862 = vector.load %arg5[%c0_280, %c0_281] : memref<64x32xf32, #tpu.memory_space<vmem>>, vector<8x32xf32>
    tpu.vector_store %arg5[%c0_280, %c0_281], %861 {strides = array<i32>} : memref<64x32xf32, #tpu.memory_space<vmem>>, vector<8x32xf32>,
    %c8_282 = arith.constant 8 : index
    %c0_283 = arith.constant 0 : index
    %863 = vector.load %arg6[%c8_282, %c0_283] : memref<64x128xf32, #tpu.memory_space<vmem>>, vector<8x128xf32>
    %cst_284 = arith.constant dense<0.000000e+00> : vector<8x128xf32>
    %864 = tpu.matmul %859, %840, %cst_284 {dimension_numbers = #tpu.dot_dimension_numbers<[1], [0], [0], [1], [0, 0, 1, 1], [], []>} : vector<8x32xf32>, vector<32x128xf32>, vector<8x128xf32> -> vector<8x128xf32>
    %865 = arith.addf %863, %864 : vector<8x128xf32>
    %866 = arith.negf %865 : vector<8x128xf32>
    %867 = math.exp %866 : vector<8x128xf32>
    %cst_285 = arith.constant 1.000000e+00 : f32
    %868 = vector.broadcast %cst_285 : f32 to vector<8x128xf32>
    %869 = arith.addf %868, %867 : vector<8x128xf32>
    %870 = arith.divf %868, %869 : vector<8x128xf32>
    %871 = vector.extract_strided_slice %865 {offsets = [0, 64], sizes = [8, 32], strides = [1, 1]} : vector<8x128xf32> to vector<8x32xf32>
    %872 = math.tanh %871 : vector<8x32xf32>
    %873 = vector.extract_strided_slice %870 {offsets = [0, 0], sizes = [8, 32], strides = [1, 1]} : vector<8x128xf32> to vector<8x32xf32>
    %874 = vector.extract_strided_slice %870 {offsets = [0, 96], sizes = [8, 32], strides = [1, 1]} : vector<8x128xf32> to vector<8x32xf32>
    %875 = vector.extract_strided_slice %870 {offsets = [0, 32], sizes = [8, 32], strides = [1, 1]} : vector<8x128xf32> to vector<8x32xf32>
    %876 = arith.mulf %875, %857 : vector<8x32xf32>
    %877 = arith.mulf %873, %872 : vector<8x32xf32>
    %878 = arith.addf %876, %877 : vector<8x32xf32>
    %879 = math.tanh %878 : vector<8x32xf32>
    %880 = arith.mulf %874, %879 : vector<8x32xf32>
    %881 = vector.extract_strided_slice %842 {offsets = [8, 0], sizes = [8, 32], strides = [1, 1]} : vector<64x32xf32> to vector<8x32xf32>
    %882 = arith.addf %880, %881 : vector<8x32xf32>
    %c8_286 = arith.constant 8 : index
    %c0_287 = arith.constant 0 : index
    %883 = vector.load %arg5[%c8_286, %c0_287] : memref<64x32xf32, #tpu.memory_space<vmem>>, vector<8x32xf32>
    tpu.vector_store %arg5[%c8_286, %c0_287], %882 {strides = array<i32>} : memref<64x32xf32, #tpu.memory_space<vmem>>, vector<8x32xf32>,
    %c16_288 = arith.constant 16 : index
    %c0_289 = arith.constant 0 : index
    %884 = vector.load %arg6[%c16_288, %c0_289] : memref<64x128xf32, #tpu.memory_space<vmem>>, vector<8x128xf32>
    %cst_290 = arith.constant dense<0.000000e+00> : vector<8x128xf32>
    %885 = tpu.matmul %880, %840, %cst_290 {dimension_numbers = #tpu.dot_dimension_numbers<[1], [0], [0], [1], [0, 0, 1, 1], [], []>} : vector<8x32xf32>, vector<32x128xf32>, vector<8x128xf32> -> vector<8x128xf32>
    %886 = arith.addf %884, %885 : vector<8x128xf32>
    %887 = arith.negf %886 : vector<8x128xf32>
    %888 = math.exp %887 : vector<8x128xf32>
    %cst_291 = arith.constant 1.000000e+00 : f32
    %889 = vector.broadcast %cst_291 : f32 to vector<8x128xf32>
    %890 = arith.addf %889, %888 : vector<8x128xf32>
    %891 = arith.divf %889, %890 : vector<8x128xf32>
    %892 = vector.extract_strided_slice %886 {offsets = [0, 64], sizes = [8, 32], strides = [1, 1]} : vector<8x128xf32> to vector<8x32xf32>
    %893 = math.tanh %892 : vector<8x32xf32>
    %894 = vector.extract_strided_slice %891 {offsets = [0, 0], sizes = [8, 32], strides = [1, 1]} : vector<8x128xf32> to vector<8x32xf32>
    %895 = vector.extract_strided_slice %891 {offsets = [0, 96], sizes = [8, 32], strides = [1, 1]} : vector<8x128xf32> to vector<8x32xf32>
    %896 = vector.extract_strided_slice %891 {offsets = [0, 32], sizes = [8, 32], strides = [1, 1]} : vector<8x128xf32> to vector<8x32xf32>
    %897 = arith.mulf %896, %878 : vector<8x32xf32>
    %898 = arith.mulf %894, %893 : vector<8x32xf32>
    %899 = arith.addf %897, %898 : vector<8x32xf32>
    %900 = math.tanh %899 : vector<8x32xf32>
    %901 = arith.mulf %895, %900 : vector<8x32xf32>
    %902 = vector.extract_strided_slice %842 {offsets = [16, 0], sizes = [8, 32], strides = [1, 1]} : vector<64x32xf32> to vector<8x32xf32>
    %903 = arith.addf %901, %902 : vector<8x32xf32>
    %c16_292 = arith.constant 16 : index
    %c0_293 = arith.constant 0 : index
    %904 = vector.load %arg5[%c16_292, %c0_293] : memref<64x32xf32, #tpu.memory_space<vmem>>, vector<8x32xf32>
    tpu.vector_store %arg5[%c16_292, %c0_293], %903 {strides = array<i32>} : memref<64x32xf32, #tpu.memory_space<vmem>>, vector<8x32xf32>,
    %c24_294 = arith.constant 24 : index
    %c0_295 = arith.constant 0 : index
    %905 = vector.load %arg6[%c24_294, %c0_295] : memref<64x128xf32, #tpu.memory_space<vmem>>, vector<8x128xf32>
    %cst_296 = arith.constant dense<0.000000e+00> : vector<8x128xf32>
    %906 = tpu.matmul %901, %840, %cst_296 {dimension_numbers = #tpu.dot_dimension_numbers<[1], [0], [0], [1], [0, 0, 1, 1], [], []>} : vector<8x32xf32>, vector<32x128xf32>, vector<8x128xf32> -> vector<8x128xf32>
    %907 = arith.addf %905, %906 : vector<8x128xf32>
    %908 = arith.negf %907 : vector<8x128xf32>
    %909 = math.exp %908 : vector<8x128xf32>
    %cst_297 = arith.constant 1.000000e+00 : f32
    %910 = vector.broadcast %cst_297 : f32 to vector<8x128xf32>
    %911 = arith.addf %910, %909 : vector<8x128xf32>
    %912 = arith.divf %910, %911 : vector<8x128xf32>
    %913 = vector.extract_strided_slice %907 {offsets = [0, 64], sizes = [8, 32], strides = [1, 1]} : vector<8x128xf32> to vector<8x32xf32>
    %914 = math.tanh %913 : vector<8x32xf32>
    %915 = vector.extract_strided_slice %912 {offsets = [0, 0], sizes = [8, 32], strides = [1, 1]} : vector<8x128xf32> to vector<8x32xf32>
    %916 = vector.extract_strided_slice %912 {offsets = [0, 96], sizes = [8, 32], strides = [1, 1]} : vector<8x128xf32> to vector<8x32xf32>
    %917 = vector.extract_strided_slice %912 {offsets = [0, 32], sizes = [8, 32], strides = [1, 1]} : vector<8x128xf32> to vector<8x32xf32>
    %918 = arith.mulf %917, %899 : vector<8x32xf32>
    %919 = arith.mulf %915, %914 : vector<8x32xf32>
    %920 = arith.addf %918, %919 : vector<8x32xf32>
    %921 = math.tanh %920 : vector<8x32xf32>
    %922 = arith.mulf %916, %921 : vector<8x32xf32>
    %923 = vector.extract_strided_slice %842 {offsets = [24, 0], sizes = [8, 32], strides = [1, 1]} : vector<64x32xf32> to vector<8x32xf32>
    %924 = arith.addf %922, %923 : vector<8x32xf32>
    %c24_298 = arith.constant 24 : index
    %c0_299 = arith.constant 0 : index
    %925 = vector.load %arg5[%c24_298, %c0_299] : memref<64x32xf32, #tpu.memory_space<vmem>>, vector<8x32xf32>
    tpu.vector_store %arg5[%c24_298, %c0_299], %924 {strides = array<i32>} : memref<64x32xf32, #tpu.memory_space<vmem>>, vector<8x32xf32>,
    %c32_300 = arith.constant 32 : index
    %c0_301 = arith.constant 0 : index
    %926 = vector.load %arg6[%c32_300, %c0_301] : memref<64x128xf32, #tpu.memory_space<vmem>>, vector<8x128xf32>
    %cst_302 = arith.constant dense<0.000000e+00> : vector<8x128xf32>
    %927 = tpu.matmul %922, %840, %cst_302 {dimension_numbers = #tpu.dot_dimension_numbers<[1], [0], [0], [1], [0, 0, 1, 1], [], []>} : vector<8x32xf32>, vector<32x128xf32>, vector<8x128xf32> -> vector<8x128xf32>
    %928 = arith.addf %926, %927 : vector<8x128xf32>
    %929 = arith.negf %928 : vector<8x128xf32>
    %930 = math.exp %929 : vector<8x128xf32>
    %cst_303 = arith.constant 1.000000e+00 : f32
    %931 = vector.broadcast %cst_303 : f32 to vector<8x128xf32>
    %932 = arith.addf %931, %930 : vector<8x128xf32>
    %933 = arith.divf %931, %932 : vector<8x128xf32>
    %934 = vector.extract_strided_slice %928 {offsets = [0, 64], sizes = [8, 32], strides = [1, 1]} : vector<8x128xf32> to vector<8x32xf32>
    %935 = math.tanh %934 : vector<8x32xf32>
    %936 = vector.extract_strided_slice %933 {offsets = [0, 0], sizes = [8, 32], strides = [1, 1]} : vector<8x128xf32> to vector<8x32xf32>
    %937 = vector.extract_strided_slice %933 {offsets = [0, 96], sizes = [8, 32], strides = [1, 1]} : vector<8x128xf32> to vector<8x32xf32>
    %938 = vector.extract_strided_slice %933 {offsets = [0, 32], sizes = [8, 32], strides = [1, 1]} : vector<8x128xf32> to vector<8x32xf32>
    %939 = arith.mulf %938, %920 : vector<8x32xf32>
    %940 = arith.mulf %936, %935 : vector<8x32xf32>
    %941 = arith.addf %939, %940 : vector<8x32xf32>
    %942 = math.tanh %941 : vector<8x32xf32>
    %943 = arith.mulf %937, %942 : vector<8x32xf32>
    %944 = vector.extract_strided_slice %842 {offsets = [32, 0], sizes = [8, 32], strides = [1, 1]} : vector<64x32xf32> to vector<8x32xf32>
    %945 = arith.addf %943, %944 : vector<8x32xf32>
    %c32_304 = arith.constant 32 : index
    %c0_305 = arith.constant 0 : index
    %946 = vector.load %arg5[%c32_304, %c0_305] : memref<64x32xf32, #tpu.memory_space<vmem>>, vector<8x32xf32>
    tpu.vector_store %arg5[%c32_304, %c0_305], %945 {strides = array<i32>} : memref<64x32xf32, #tpu.memory_space<vmem>>, vector<8x32xf32>,
    %c40_306 = arith.constant 40 : index
    %c0_307 = arith.constant 0 : index
    %947 = vector.load %arg6[%c40_306, %c0_307] : memref<64x128xf32, #tpu.memory_space<vmem>>, vector<8x128xf32>
    %cst_308 = arith.constant dense<0.000000e+00> : vector<8x128xf32>
    %948 = tpu.matmul %943, %840, %cst_308 {dimension_numbers = #tpu.dot_dimension_numbers<[1], [0], [0], [1], [0, 0, 1, 1], [], []>} : vector<8x32xf32>, vector<32x128xf32>, vector<8x128xf32> -> vector<8x128xf32>
    %949 = arith.addf %947, %948 : vector<8x128xf32>
    %950 = arith.negf %949 : vector<8x128xf32>
    %951 = math.exp %950 : vector<8x128xf32>
    %cst_309 = arith.constant 1.000000e+00 : f32
    %952 = vector.broadcast %cst_309 : f32 to vector<8x128xf32>
    %953 = arith.addf %952, %951 : vector<8x128xf32>
    %954 = arith.divf %952, %953 : vector<8x128xf32>
    %955 = vector.extract_strided_slice %949 {offsets = [0, 64], sizes = [8, 32], strides = [1, 1]} : vector<8x128xf32> to vector<8x32xf32>
    %956 = math.tanh %955 : vector<8x32xf32>
    %957 = vector.extract_strided_slice %954 {offsets = [0, 0], sizes = [8, 32], strides = [1, 1]} : vector<8x128xf32> to vector<8x32xf32>
    %958 = vector.extract_strided_slice %954 {offsets = [0, 96], sizes = [8, 32], strides = [1, 1]} : vector<8x128xf32> to vector<8x32xf32>
    %959 = vector.extract_strided_slice %954 {offsets = [0, 32], sizes = [8, 32], strides = [1, 1]} : vector<8x128xf32> to vector<8x32xf32>
    %960 = arith.mulf %959, %941 : vector<8x32xf32>
    %961 = arith.mulf %957, %956 : vector<8x32xf32>
    %962 = arith.addf %960, %961 : vector<8x32xf32>
    %963 = math.tanh %962 : vector<8x32xf32>
    %964 = arith.mulf %958, %963 : vector<8x32xf32>
    %965 = vector.extract_strided_slice %842 {offsets = [40, 0], sizes = [8, 32], strides = [1, 1]} : vector<64x32xf32> to vector<8x32xf32>
    %966 = arith.addf %964, %965 : vector<8x32xf32>
    %c40_310 = arith.constant 40 : index
    %c0_311 = arith.constant 0 : index
    %967 = vector.load %arg5[%c40_310, %c0_311] : memref<64x32xf32, #tpu.memory_space<vmem>>, vector<8x32xf32>
    tpu.vector_store %arg5[%c40_310, %c0_311], %966 {strides = array<i32>} : memref<64x32xf32, #tpu.memory_space<vmem>>, vector<8x32xf32>,
    %c48_312 = arith.constant 48 : index
    %c0_313 = arith.constant 0 : index
    %968 = vector.load %arg6[%c48_312, %c0_313] : memref<64x128xf32, #tpu.memory_space<vmem>>, vector<8x128xf32>
    %cst_314 = arith.constant dense<0.000000e+00> : vector<8x128xf32>
    %969 = tpu.matmul %964, %840, %cst_314 {dimension_numbers = #tpu.dot_dimension_numbers<[1], [0], [0], [1], [0, 0, 1, 1], [], []>} : vector<8x32xf32>, vector<32x128xf32>, vector<8x128xf32> -> vector<8x128xf32>
    %970 = arith.addf %968, %969 : vector<8x128xf32>
    %971 = arith.negf %970 : vector<8x128xf32>
    %972 = math.exp %971 : vector<8x128xf32>
    %cst_315 = arith.constant 1.000000e+00 : f32
    %973 = vector.broadcast %cst_315 : f32 to vector<8x128xf32>
    %974 = arith.addf %973, %972 : vector<8x128xf32>
    %975 = arith.divf %973, %974 : vector<8x128xf32>
    %976 = vector.extract_strided_slice %970 {offsets = [0, 64], sizes = [8, 32], strides = [1, 1]} : vector<8x128xf32> to vector<8x32xf32>
    %977 = math.tanh %976 : vector<8x32xf32>
    %978 = vector.extract_strided_slice %975 {offsets = [0, 0], sizes = [8, 32], strides = [1, 1]} : vector<8x128xf32> to vector<8x32xf32>
    %979 = vector.extract_strided_slice %975 {offsets = [0, 96], sizes = [8, 32], strides = [1, 1]} : vector<8x128xf32> to vector<8x32xf32>
    %980 = vector.extract_strided_slice %975 {offsets = [0, 32], sizes = [8, 32], strides = [1, 1]} : vector<8x128xf32> to vector<8x32xf32>
    %981 = arith.mulf %980, %962 : vector<8x32xf32>
    %982 = arith.mulf %978, %977 : vector<8x32xf32>
    %983 = arith.addf %981, %982 : vector<8x32xf32>
    %984 = math.tanh %983 : vector<8x32xf32>
    %985 = arith.mulf %979, %984 : vector<8x32xf32>
    %986 = vector.extract_strided_slice %842 {offsets = [48, 0], sizes = [8, 32], strides = [1, 1]} : vector<64x32xf32> to vector<8x32xf32>
    %987 = arith.addf %985, %986 : vector<8x32xf32>
    %c48_316 = arith.constant 48 : index
    %c0_317 = arith.constant 0 : index
    %988 = vector.load %arg5[%c48_316, %c0_317] : memref<64x32xf32, #tpu.memory_space<vmem>>, vector<8x32xf32>
    tpu.vector_store %arg5[%c48_316, %c0_317], %987 {strides = array<i32>} : memref<64x32xf32, #tpu.memory_space<vmem>>, vector<8x32xf32>,
    %c56_318 = arith.constant 56 : index
    %c0_319 = arith.constant 0 : index
    %989 = vector.load %arg6[%c56_318, %c0_319] : memref<64x128xf32, #tpu.memory_space<vmem>>, vector<8x128xf32>
    %cst_320 = arith.constant dense<0.000000e+00> : vector<8x128xf32>
    %990 = tpu.matmul %985, %840, %cst_320 {dimension_numbers = #tpu.dot_dimension_numbers<[1], [0], [0], [1], [0, 0, 1, 1], [], []>} : vector<8x32xf32>, vector<32x128xf32>, vector<8x128xf32> -> vector<8x128xf32>
    %991 = arith.addf %989, %990 : vector<8x128xf32>
    %992 = arith.negf %991 : vector<8x128xf32>
    %993 = math.exp %992 : vector<8x128xf32>
    %cst_321 = arith.constant 1.000000e+00 : f32
    %994 = vector.broadcast %cst_321 : f32 to vector<8x128xf32>
    %995 = arith.addf %994, %993 : vector<8x128xf32>
    %996 = arith.divf %994, %995 : vector<8x128xf32>
    %997 = vector.extract_strided_slice %991 {offsets = [0, 64], sizes = [8, 32], strides = [1, 1]} : vector<8x128xf32> to vector<8x32xf32>
    %998 = math.tanh %997 : vector<8x32xf32>
    %999 = vector.extract_strided_slice %996 {offsets = [0, 0], sizes = [8, 32], strides = [1, 1]} : vector<8x128xf32> to vector<8x32xf32>
    %1000 = vector.extract_strided_slice %996 {offsets = [0, 96], sizes = [8, 32], strides = [1, 1]} : vector<8x128xf32> to vector<8x32xf32>
    %1001 = vector.extract_strided_slice %996 {offsets = [0, 32], sizes = [8, 32], strides = [1, 1]} : vector<8x128xf32> to vector<8x32xf32>
    %1002 = arith.mulf %1001, %983 : vector<8x32xf32>
    %1003 = arith.mulf %999, %998 : vector<8x32xf32>
    %1004 = arith.addf %1002, %1003 : vector<8x32xf32>
    %1005 = math.tanh %1004 : vector<8x32xf32>
    %1006 = arith.mulf %1000, %1005 : vector<8x32xf32>
    %1007 = vector.extract_strided_slice %842 {offsets = [56, 0], sizes = [8, 32], strides = [1, 1]} : vector<64x32xf32> to vector<8x32xf32>
    %1008 = arith.addf %1006, %1007 : vector<8x32xf32>
    %c56_322 = arith.constant 56 : index
    %c0_323 = arith.constant 0 : index
    %1009 = vector.load %arg5[%c56_322, %c0_323] : memref<64x32xf32, #tpu.memory_space<vmem>>, vector<8x32xf32>
    tpu.vector_store %arg5[%c56_322, %c0_323], %1008 {strides = array<i32>} : memref<64x32xf32, #tpu.memory_space<vmem>>, vector<8x32xf32>,
    %c0_324 = arith.constant 0 : index
    %c0_325 = arith.constant 0 : index
    %1010 = vector.load %arg5[%c0_324, %c0_325] : memref<64x32xf32, #tpu.memory_space<vmem>>, vector<64x32xf32>
    %c0_326 = arith.constant 0 : index
    %c0_327 = arith.constant 0 : index
    %1011 = vector.load %arg2[%c0_326, %c0_327] : memref<164x128xf32, #tpu.memory_space<vmem>>, vector<32x128xf32>
    %c32_328 = arith.constant 32 : index
    %c0_329 = arith.constant 0 : index
    %1012 = vector.load %arg2[%c32_328, %c0_329] : memref<164x128xf32, #tpu.memory_space<vmem>>, vector<128x128xf32>
    %c160 = arith.constant 160 : index
    %c0_330 = arith.constant 0 : index
    %1013 = vector.load %arg2[%c160, %c0_330] : memref<164x128xf32, #tpu.memory_space<vmem>>, vector<1x128xf32>
    %c161 = arith.constant 161 : index
    %c0_331 = arith.constant 0 : index
    %1014 = vector.load %arg2[%c161, %c0_331] : memref<164x128xf32, #tpu.memory_space<vmem>>, vector<1x128xf32>
    %c162 = arith.constant 162 : index
    %c0_332 = arith.constant 0 : index
    %1015 = vector.load %arg2[%c162, %c0_332] : memref<164x128xf32, #tpu.memory_space<vmem>>, vector<1x128xf32>
    %c163 = arith.constant 163 : index
    %c0_333 = arith.constant 0 : index
    %1016 = vector.load %arg2[%c163, %c0_333] : memref<164x128xf32, #tpu.memory_space<vmem>>, vector<1x128xf32>
    %1017 = vector.extract_strided_slice %1016 {offsets = [0, 0], sizes = [1, 1], strides = [1, 1]} : vector<1x128xf32> to vector<1x1xf32>
    %1018 = vector.extract_strided_slice %1016 {offsets = [0, 1], sizes = [1, 1], strides = [1, 1]} : vector<1x128xf32> to vector<1x1xf32>
    %1019 = vector.extract_strided_slice %1016 {offsets = [0, 2], sizes = [1, 1], strides = [1, 1]} : vector<1x128xf32> to vector<1x1xf32>
    %cst_334 = arith.constant dense<0.000000e+00> : vector<64x128xf32>
    %1020 = tpu.matmul %1010, %1011, %cst_334 {dimension_numbers = #tpu.dot_dimension_numbers<[1], [0], [0], [1], [0, 0, 1, 1], [], []>} : vector<64x32xf32>, vector<32x128xf32>, vector<64x128xf32> -> vector<64x128xf32>
    %1021 = vector.broadcast %1013 : vector<1x128xf32> to vector<64x128xf32>
    %1022 = arith.addf %1020, %1021 : vector<64x128xf32>
    %cst_335 = arith.constant 0.000000e+00 : f32
    %1023 = vector.broadcast %cst_335 : f32 to vector<64x128xf32>
    %1024 = arith.maximumf %1022, %1023 : vector<64x128xf32>
    %cst_336 = arith.constant dense<0.000000e+00> : vector<64x128xf32>
    %1025 = tpu.matmul %1024, %1012, %cst_336 {dimension_numbers = #tpu.dot_dimension_numbers<[1], [0], [0], [1], [0, 0, 1, 1], [], []>} : vector<64x128xf32>, vector<128x128xf32>, vector<64x128xf32> -> vector<64x128xf32>
    %1026 = vector.broadcast %1014 : vector<1x128xf32> to vector<64x128xf32>
    %1027 = arith.addf %1025, %1026 : vector<64x128xf32>
    %cst_337 = arith.constant 0.000000e+00 : f32
    %1028 = vector.broadcast %cst_337 : f32 to vector<64x128xf32>
    %1029 = arith.maximumf %1027, %1028 : vector<64x128xf32>
    %1030 = vector.broadcast %1015 : vector<1x128xf32> to vector<64x128xf32>
    %1031 = arith.mulf %1029, %1030 : vector<64x128xf32>
    %cst_338 = arith.constant dense<0.000000e+00> : vector<64xf32>
    %1032 = vector.multi_reduction <add>, %1031, %cst_338 [1] : vector<64x128xf32> to vector<64xf32>
    %1033 = vector.shape_cast %1032 : vector<64xf32> to vector<64x1xf32>
    %1034 = vector.broadcast %1017 : vector<1x1xf32> to vector<64x1xf32>
    %1035 = arith.addf %1033, %1034 : vector<64x1xf32>
    %cst_339 = arith.constant 0.000000e+00 : f32
    %1036 = vector.broadcast %cst_339 : f32 to vector<64x1xf32>
    %1037 = arith.maximumf %1035, %1036 : vector<64x1xf32>
    %1038 = vector.broadcast %1018 : vector<1x1xf32> to vector<64x1xf32>
    %1039 = arith.mulf %1037, %1038 : vector<64x1xf32>
    %1040 = vector.broadcast %1019 : vector<1x1xf32> to vector<64x1xf32>
    %1041 = arith.addf %1039, %1040 : vector<64x1xf32>
    %1042 = arith.negf %1041 : vector<64x1xf32>
    %1043 = math.exp %1042 : vector<64x1xf32>
    %cst_340 = arith.constant 1.000000e+00 : f32
    %1044 = vector.broadcast %cst_340 : f32 to vector<64x1xf32>
    %1045 = arith.addf %1044, %1043 : vector<64x1xf32>
    %1046 = arith.divf %1044, %1045 : vector<64x1xf32>
    %c0_341 = arith.constant 0 : index
    %c0_342 = arith.constant 0 : index
    %1047 = vector.load %arg3[%c0_341, %c0_342] : memref<64x1xf32, #tpu.memory_space<vmem>>, vector<64x1xf32>
    tpu.vector_store %arg3[%c0_341, %c0_342], %1046 {strides = array<i32>} : memref<64x1xf32, #tpu.memory_space<vmem>>, vector<64x1xf32>,
    return
  }
}

</mosaic_0001>

<llo_original>
// kernel: reslstm_forward.1
$region0: #{reslstm_forward.1}
  #allocation0 [shape = 'u32[]', space=smem, size = 0x4, offset = 0x4, fixed_abs, tag = 'smem constant byte address 0x4 - core index']
  #allocation1 [shape = 'u32[144,128]{1,0:T(1,128)}', space=vmem, size = 0x12000, scoped, tag = 'internal scratch']
  #allocation2 [shape = 'f32[64,32]{1,0:T(8,128)}', space=vmem, size = 0x8000, scoped, tag = 'scratch operand']
  #allocation3 [shape = 'f32[64,32]{1,0:T(8,128)}', space=vmem, size = 0x8000, scoped, tag = 'scratch operand']
  #allocation4 [shape = 'f32[64,128]{1,0:T(8,128)}', space=vmem, size = 0x8000, scoped, tag = 'scratch operand']
  %s0 = inlined_call_operand.vmem [shape: f32[64,8], index: 0, kind: input, shape index: {}]
  %s1 = inlined_call_operand.hbm [shape: f32[366,128], index: 1, kind: input, shape index: {}]
  %s2 = inlined_call_operand.vmem [shape: f32[164,128], index: 2, kind: input, shape index: {}]
  %s3 = inlined_call_operand.vmem [shape: f32[64,1], index: 3, kind: output, shape index: {}]
  %s4 = sld [smem:[#allocation0]]
  $region26: #{reslstm_forward.1} parent=0
    _
  %s6 = ssub.s32 1, %s4
  %s7 = scalar_select 0, %s6, %s4
  $region1: #{reslstm_forward.1} parent=0
    #allocation5 [shape = 'u8[188416]{0}', space=vmem, size = 0x2e000, scoped, tag = 'input window, operand 1, single buffered']
    #allocation6 [shape = 's32[1]{0}', space=sflag, size = 0x4, scoped, tag = 'scoped memory for reslstm_forward.1']
    %8 = vsyncpa [#allocation6], 0
    // Predicated region
    $region2: #{reslstm_forward.1} parent=1 // pred_check
      _
    $region3: #{reslstm_forward.1} parent=1 // pred_check_branch
      %10 = sbr.rel (0) target = $region5
    $region4: #{reslstm_forward.1} parent=1 // pred_region
      _
    $region5: #{reslstm_forward.1} parent=1 // pred_fallthru
      _
    // Predicated region
    $region6: #{reslstm_forward.1} parent=1 // pred_check
      _
    $region7: #{reslstm_forward.1} parent=1 // pred_check_branch
      %12 = sbr.rel (0) target = $region9
    $region8: #{reslstm_forward.1} parent=1 // pred_region
      %s14 = ssub.s32 5888, 5888
      %15 = vsyncadd [#allocation6], %s14
      %s16 = sshll.u32 [#allocation5], 4
      %s17 = int_to_ptr.vmem [resolvable:$true] %s16
      %22 = dma.hbm_to_vmem [thread:$0]  %s1, 5888, %s17, [#allocation6], 128, 128, 8
    $region9: #{reslstm_forward.1} parent=1 // pred_fallthru
      _
    // Predicated region
    $region10: #{reslstm_forward.1} parent=1 // pred_check
      _
    $region11: #{reslstm_forward.1} parent=1 // pred_check_branch
      %24 = sbr.rel (0) target = $region13
    $region12: #{reslstm_forward.1} parent=1 // pred_region
      _
    $region13: #{reslstm_forward.1} parent=1 // pred_fallthru
      _
    // Predicated region
    $region14: #{reslstm_forward.1} parent=1 // pred_check
      _
    $region15: #{reslstm_forward.1} parent=1 // pred_check_branch
      %26 = sbr.rel (0) target = $region17
    $region16: #{reslstm_forward.1} parent=1 // pred_region
      %27 = dma.done [#allocation6], 5888
    $region17: #{reslstm_forward.1} parent=1 // pred_fallthru
      _
    %v28 = vld [vmem:[#allocation5] sm:$0xff]
    %v29 = vld [vmem:[#allocation5 + $0x8] sm:$0xff]
    %v30 = vld [vmem:[#allocation5 + $0x10] sm:$0xff]
    %v31 = vld [vmem:[#allocation5 + $0x18] sm:$0xff]
    %v32 = vld [vmem:[#allocation5 + $0x20] sm:$0xff]
    %v33 = vld [vmem:[#allocation5 + $0x168] sm:$0x1]
    %v34 = vld [vmem:[%s0] sm:$0xff]
    %v35 = vld [vmem:[%s0 + $0x8] sm:$0xff]
    %v36 = vld [vmem:[%s0 + $0x10] sm:$0xff]
    %v37 = vld [vmem:[%s0 + $0x18] sm:$0xff]
    %v38 = vld [vmem:[%s0 + $0x20] sm:$0xff]
    %v39 = vld [vmem:[%s0 + $0x28] sm:$0xff]
    %v40 = vld [vmem:[%s0 + $0x30] sm:$0xff]
    %v41 = vld [vmem:[%s0 + $0x38] sm:$0xff]
    %v42 = vlaneseq
    %v43 = vshrl.u32 %v42, 7
    %v44 = vsub.s32 0, %v43
    %v45 = vrot.slane %v33, %v44
    %vm46 = vcmask 64512
    %v48 = vsel %vm46, %v34, 0
    %v51 = vsel %vm46, %v35, 0
    %v54 = vsel %vm46, %v36, 0
    %v57 = vsel %vm46, %v37, 0
    %v60 = vsel %vm46, %v38, 0
    %v63 = vsel %vm46, %v39, 0
    %v66 = vsel %vm46, %v40, 0
    %v69 = vsel %vm46, %v41, 0
    %71 = vmatprep.subr.mxu0 0.0
    %72 = vmatpush1.msra.mxu0 %v28
    %73 = vmatprep.subr.mxu0 0.0
    %74 = vmatpush1.msra.mxu0 0.0
    %75 = vmatprep.subr.mxu0 0.0
    %76 = vmatpush1.msra.mxu0 0.0
    %77 = vmatprep.subr.mxu0 0.0
    %78 = vmatpush1.msra.mxu0 0.0
    %79 = vmatprep.subr.mxu0 0.0
    %80 = vmatpush1.msra.mxu0 0.0
    %81 = vmatprep.subr.mxu0 0.0
    %82 = vmatpush1.msra.mxu0 0.0
    %83 = vmatprep.subr.mxu0 0.0
    %84 = vmatpush1.msra.mxu0 0.0
    %85 = vmatprep.subr.mxu0 0.0
    %86 = vmatpush1.msra.mxu0 0.0
    %87 = vmatprep.subr.mxu0 0.0
    %88 = vmatpush1.msra.mxu0 0.0
    %89 = vmatprep.subr.mxu0 0.0
    %90 = vmatpush1.msra.mxu0 0.0
    %91 = vmatprep.subr.mxu0 0.0
    %92 = vmatpush1.msra.mxu0 0.0
    %93 = vmatprep.subr.mxu0 0.0
    %94 = vmatpush1.msra.mxu0 0.0
    %95 = vmatprep.subr.mxu0 0.0
    %96 = vmatpush1.msra.mxu0 0.0
    %97 = vmatprep.subr.mxu0 0.0
    %98 = vmatpush1.msra.mxu0 0.0
    %99 = vmatprep.subr.mxu0 0.0
    %100 = vmatpush1.msra.mxu0 0.0
    %101 = vmatprep.subr.mxu0 0.0
    %102 = vmatpush1.msra.mxu0 0.0
    %103 = vmatprep.subr.mxu0 0.0
    %104 = vmatpush1.msra.mxu0 0.0
    %105 = vmatprep.subr.mxu0 0.0
    %106 = vmatpush1.msra.mxu0 0.0
    %107 = vmatprep.subr.mxu0 0.0
    %108 = vmatpush1.msra.mxu0 0.0
    %109 = vmatprep.subr.mxu0 0.0
    %110 = vmatpush1.msra.mxu0 0.0
    %111 = vmatprep.subr.mxu0 0.0
    %112 = vmatpush1.msra.mxu0 0.0
    %113 = vmatprep.subr.mxu0 0.0
    %114 = vmatpush1.msra.mxu0 0.0
    %115 = vmatprep.subr.mxu0 0.0
    %116 = vmatpush1.msra.mxu0 0.0
    %117 = vmatprep.subr.mxu0 0.0
    %118 = vmatpush1.msra.mxu0 0.0
    %119 = vmatprep.subr.mxu0 0.0
    %120 = vmatpush1.msra.mxu0 0.0
    %121 = vmatprep.subr.mxu0 0.0
    %122 = vmatpush1.msra.mxu0 0.0
    %123 = vmatprep.subr.mxu0 0.0
    %124 = vmatpush1.msra.mxu0 0.0
    %125 = vmatprep.subr.mxu0 0.0
    %126 = vmatpush1.msra.mxu0 0.0
    %127 = vmatprep.subr.mxu0 0.0
    %128 = vmatpush1.msra.mxu0 0.0
    %129 = vmatprep.subr.mxu0 0.0
    %130 = vmatpush1.msra.mxu0 0.0
    %131 = vmatprep.subr.mxu0 0.0
    %132 = vmatpush1.msra.mxu0 0.0
    %133 = vmatprep.subr.mxu0 0.0
    %134 = vmatpush1.msra.mxu0 0.0
    %135 = vmatprep.mubr.f32.mxu0 0.0
    %136 = vmatmul.mubr.f32.gmra.mrb[0].mxu0 %v48
    %v137 = vpop.f32.mrb[0].mxu0
    %v138 = vadd.f32 %v45, %v137
    %v139 = vpop.f32.mrb[0].mxu0
    %140 = vmatprep.mubr.f32.mxu0 0.0
    %141 = vmatmul.mubr.f32.gmra.mrb[0].mxu0 %v51
    %v142 = vpop.f32.mrb[0].mxu0
    %v143 = vadd.f32 %v45, %v142
    %v144 = vpop.f32.mrb[0].mxu0
    %145 = vmatprep.mubr.f32.mxu0 0.0
    %146 = vmatmul.mubr.f32.gmra.mrb[0].mxu0 %v54
    %v147 = vpop.f32.mrb[0].mxu0
    %v148 = vadd.f32 %v45, %v147
    %v149 = vpop.f32.mrb[0].mxu0
    %150 = vmatprep.mubr.f32.mxu0 0.0
    %151 = vmatmul.mubr.f32.gmra.mrb[0].mxu0 %v57
    %v152 = vpop.f32.mrb[0].mxu0
    %v153 = vadd.f32 %v45, %v152
    %v154 = vpop.f32.mrb[0].mxu0
    %155 = vmatprep.mubr.f32.mxu0 0.0
    %156 = vmatmul.mubr.f32.gmra.mrb[0].mxu0 %v60
    %v157 = vpop.f32.mrb[0].mxu0
    %v158 = vadd.f32 %v45, %v157
    %v159 = vpop.f32.mrb[0].mxu0
    %160 = vmatprep.mubr.f32.mxu0 0.0
    %161 = vmatmul.mubr.f32.gmra.mrb[0].mxu0 %v63
    %v162 = vpop.f32.mrb[0].mxu0
    %v163 = vadd.f32 %v45, %v162
    %v164 = vpop.f32.mrb[0].mxu0
    %165 = vmatprep.mubr.f32.mxu0 0.0
    %166 = vmatmul.mubr.f32.gmra.mrb[0].mxu0 %v66
    %v167 = vpop.f32.mrb[0].mxu0
    %v168 = vadd.f32 %v45, %v167
    %v169 = vpop.f32.mrb[0].mxu0
    %170 = vmatprep.mubr.f32.mxu0 0.0
    %171 = vmatmul.mubr.f32.gmra.mrb[0].mxu0 %v69
    %v172 = vpop.f32.mrb[0].mxu0
    %v173 = vadd.f32 %v45, %v172
    %v174 = vpop.f32.mrb[0].mxu0
    %175 = vdwg.mxu0
    %176 = vst [vmem:[#allocation4] sm:$0xff] %v138
    %177 = vst [vmem:[#allocation4 + $0x8] sm:$0xff] %v143
    %178 = vst [vmem:[#allocation4 + $0x10] sm:$0xff] %v148
    %179 = vst [vmem:[#allocation4 + $0x18] sm:$0xff] %v153
    %180 = vst [vmem:[#allocation4 + $0x20] sm:$0xff] %v158
    %181 = vst [vmem:[#allocation4 + $0x28] sm:$0xff] %v163
    %182 = vst [vmem:[#allocation4 + $0x30] sm:$0xff] %v168
    %183 = vst [vmem:[#allocation4 + $0x38] sm:$0xff] %v173
    %v184 = vld [vmem:[#allocation4] sm:$0xff]
    %v185 = vxor.u32 %v184, 2147483648
    %v186 = vmul.f32 %v185, 1.442695
    %v187 = vpow.pop %v186
    %v188 = vadd.f32 %v187, 1.0
    %v189 = vrcp.pop %v188
    %v190 = vmul.f32 1.0, %v189
    %v191 = vtanh.pop %v184
    %193 = vrot.lane.b32.xlu0 %v191, 64
    %v194 = vpop.permute.xlu0 %193
    %v196 = vmul.f32 %v190, %v194
    %v197 = vtanh.pop %v196
    %199 = vrot.lane.b32.xlu0 %v197, 96
    %v200 = vpop.permute.xlu0 %199
    %v202 = vmul.f32 %v190, %v200
    %204 = vrot.lane.b32.xlu0 %v202, 32
    %v205 = vpop.permute.xlu0 %204
    %vm207 = vcmask 261120
    %208 = vst.msk [vmem:[#allocation2] sm:$0xff] %vm207, %v205
    %v209 = vld [vmem:[#allocation4 + $0x8] sm:$0xff]
    %v210 = vsel %vm207, %v205, 0
    %212 = vmatprep.subr.mxu0 0.0
    %213 = vmatpush1.msra.mxu0 %v29
    %214 = vmatprep.subr.mxu0 0.0
    %215 = vmatpush1.msra.mxu0 %v30
    %216 = vmatprep.subr.mxu0 0.0
    %217 = vmatpush1.msra.mxu0 %v31
    %218 = vmatprep.subr.mxu0 0.0
    %219 = vmatpush1.msra.mxu0 %v32
    %220 = vmatprep.subr.mxu0 0.0
    %221 = vmatpush1.msra.mxu0 0.0
    %222 = vmatprep.subr.mxu0 0.0
    %223 = vmatpush1.msra.mxu0 0.0
    %224 = vmatprep.subr.mxu0 0.0
    %225 = vmatpush1.msra.mxu0 0.0
    %226 = vmatprep.subr.mxu0 0.0
    %227 = vmatpush1.msra.mxu0 0.0
    %228 = vmatprep.subr.mxu0 0.0
    %229 = vmatpush1.msra.mxu0 0.0
    %230 = vmatprep.subr.mxu0 0.0
    %231 = vmatpush1.msra.mxu0 0.0
    %232 = vmatprep.subr.mxu0 0.0
    %233 = vmatpush1.msra.mxu0 0.0
    %234 = vmatprep.subr.mxu0 0.0
    %235 = vmatpush1.msra.mxu0 0.0
    %236 = vmatprep.subr.mxu0 0.0
    %237 = vmatpush1.msra.mxu0 0.0
    %238 = vmatprep.subr.mxu0 0.0
    %239 = vmatpush1.msra.mxu0 0.0
    %240 = vmatprep.subr.mxu0 0.0
    %241 = vmatpush1.msra.mxu0 0.0
    %242 = vmatprep.subr.mxu0 0.0
    %243 = vmatpush1.msra.mxu0 0.0
    %244 = vmatprep.subr.mxu0 0.0
    %245 = vmatpush1.msra.mxu0 0.0
    %246 = vmatprep.subr.mxu0 0.0
    %247 = vmatpush1.msra.mxu0 0.0
    %248 = vmatprep.subr.mxu0 0.0
    %249 = vmatpush1.msra.mxu0 0.0
    %250 = vmatprep.subr.mxu0 0.0
    %251 = vmatpush1.msra.mxu0 0.0
    %252 = vmatprep.subr.mxu0 0.0
    %253 = vmatpush1.msra.mxu0 0.0
    %254 = vmatprep.subr.mxu0 0.0
    %255 = vmatpush1.msra.mxu0 0.0
    %256 = vmatprep.subr.mxu0 0.0
    %257 = vmatpush1.msra.mxu0 0.0
    %258 = vmatprep.subr.mxu0 0.0
    %259 = vmatpush1.msra.mxu0 0.0
    %260 = vmatprep.subr.mxu0 0.0
    %261 = vmatpush1.msra.mxu0 0.0
    %262 = vmatprep.subr.mxu0 0.0
    %263 = vmatpush1.msra.mxu0 0.0
    %264 = vmatprep.subr.mxu0 0.0
    %265 = vmatpush1.msra.mxu0 0.0
    %266 = vmatprep.subr.mxu0 0.0
    %267 = vmatpush1.msra.mxu0 0.0
    %268 = vmatprep.subr.mxu0 0.0
    %269 = vmatpush1.msra.mxu0 0.0
    %270 = vmatprep.subr.mxu0 0.0
    %271 = vmatpush1.msra.mxu0 0.0
    %272 = vmatprep.subr.mxu0 0.0
    %273 = vmatpush1.msra.mxu0 0.0
    %274 = vmatprep.subr.mxu0 0.0
    %275 = vmatpush1.msra.mxu0 0.0
    %276 = vmatprep.mubr.f32.mxu0 0.0
    %277 = vmatmul.mubr.f32.gmra.mrb[0].mxu0 %v210
    %v278 = vpop.f32.mrb[0].mxu0
    %v279 = vadd.f32 0.0, %v278
    %v280 = vpop.f32.mrb[0].mxu0
    %281 = vdwg.mxu0
    %v282 = vadd.f32 %v209, %v279
    %v283 = vxor.u32 %v282, 2147483648
    %v284 = vmul.f32 %v283, 1.442695
    %v285 = vpow.pop %v284
    %v286 = vadd.f32 %v285, 1.0
    %v287 = vrcp.pop %v286
    %v288 = vmul.f32 1.0, %v287
    %v289 = vtanh.pop %v282
    %291 = vrot.lane.b32.xlu0 %v196, 32
    %v292 = vpop.permute.xlu0 %291
    %v294 = vmul.f32 %v288, %v292
    %296 = vrot.lane.b32.xlu0 %v289, 64
    %v297 = vpop.permute.xlu0 %296
    %v299 = vmul.f32 %v288, %v297
    %301 = vrot.lane.b32.xlu0 %v299, 32
    %v302 = vpop.permute.xlu0 %301
    %v304 = vadd.f32 %v294, %v302
    %v305 = vtanh.pop %v304
    %307 = vrot.lane.b32.xlu0 %v305, 64
    %v308 = vpop.permute.xlu0 %307
    %v310 = vmul.f32 %v288, %v308
    %312 = vrot.lane.b32.xlu0 %v310, 32
    %v313 = vpop.permute.xlu0 %312
    %315 = vst.msk [vmem:[#allocation2 + $0x8] sm:$0xff] %vm207, %v313
    %v316 = vld [vmem:[#allocation4 + $0x10] sm:$0xff]
    %v317 = vsel %vm207, %v313, 0
    %319 = vmatprep.subr.mxu0 0.0
    %320 = vmatpush1.msra.mxu0 %v29
    %321 = vmatprep.subr.mxu0 0.0
    %322 = vmatpush1.msra.mxu0 %v30
    %323 = vmatprep.subr.mxu0 0.0
    %324 = vmatpush1.msra.mxu0 %v31
    %325 = vmatprep.subr.mxu0 0.0
    %326 = vmatpush1.msra.mxu0 %v32
    %327 = vmatprep.subr.mxu0 0.0
    %328 = vmatpush1.msra.mxu0 0.0
    %329 = vmatprep.subr.mxu0 0.0
    %330 = vmatpush1.msra.mxu0 0.0
    %331 = vmatprep.subr.mxu0 0.0
    %332 = vmatpush1.msra.mxu0 0.0
    %333 = vmatprep.subr.mxu0 0.0
    %334 = vmatpush1.msra.mxu0 0.0
    %335 = vmatprep.subr.mxu0 0.0
    %336 = vmatpush1.msra.mxu0 0.0
    %337 = vmatprep.subr.mxu0 0.0
    %338 = vmatpush1.msra.mxu0 0.0
    %339 = vmatprep.subr.mxu0 0.0
    %340 = vmatpush1.msra.mxu0 0.0
    %341 = vmatprep.subr.mxu0 0.0
    %342 = vmatpush1.msra.mxu0 0.0
    %343 = vmatprep.subr.mxu0 0.0
    %344 = vmatpush1.msra.mxu0 0.0
    %345 = vmatprep.subr.mxu0 0.0
    %346 = vmatpush1.msra.mxu0 0.0
    %347 = vmatprep.subr.mxu0 0.0
    %348 = vmatpush1.msra.mxu0 0.0
    %349 = vmatprep.subr.mxu0 0.0
    %350 = vmatpush1.msra.mxu0 0.0
    %351 = vmatprep.subr.mxu0 0.0
    %352 = vmatpush1.msra.mxu0 0.0
    %353 = vmatprep.subr.mxu0 0.0
    %354 = vmatpush1.msra.mxu0 0.0
    %355 = vmatprep.subr.mxu0 0.0
    %356 = vmatpush1.msra.mxu0 0.0
    %357 = vmatprep.subr.mxu0 0.0
    %358 = vmatpush1.msra.mxu0 0.0
    %359 = vmatprep.subr.mxu0 0.0
    %360 = vmatpush1.msra.mxu0 0.0
    %361 = vmatprep.subr.mxu0 0.0
    %362 = vmatpush1.msra.mxu0 0.0
    %363 = vmatprep.subr.mxu0 0.0
    %364 = vmatpush1.msra.mxu0 0.0
    %365 = vmatprep.subr.mxu0 0.0
    %366 = vmatpush1.msra.mxu0 0.0
    %367 = vmatprep.subr.mxu0 0.0
    %368 = vmatpush1.msra.mxu0 0.0
    %369 = vmatprep.subr.mxu0 0.0
    %370 = vmatpush1.msra.mxu0 0.0
    %371 = vmatprep.subr.mxu0 0.0
    %372 = vmatpush1.msra.mxu0 0.0
    %373 = vmatprep.subr.mxu0 0.0
    %374 = vmatpush1.msra.mxu0 0.0
    %375 = vmatprep.subr.mxu0 0.0
    %376 = vmatpush1.msra.mxu0 0.0
    %377 = vmatprep.subr.mxu0 0.0
    %378 = vmatpush1.msra.mxu0 0.0
    %379 = vmatprep.subr.mxu0 0.0
    %380 = vmatpush1.msra.mxu0 0.0
    %381 = vmatprep.subr.mxu0 0.0
    %382 = vmatpush1.msra.mxu0 0.0
    %383 = vmatprep.mubr.f32.mxu0 0.0
    %384 = vmatmul.mubr.f32.gmra.mrb[0].mxu0 %v317
    %v385 = vpop.f32.mrb[0].mxu0
    %v386 = vadd.f32 0.0, %v385
    %v387 = vpop.f32.mrb[0].mxu0
    %388 = vdwg.mxu0
    %v389 = vadd.f32 %v316, %v386
    %v390 = vxor.u32 %v389, 2147483648
    %v391 = vmul.f32 %v390, 1.442695
    %v392 = vpow.pop %v391
    %v393 = vadd.f32 %v392, 1.0
    %v394 = vrcp.pop %v393
    %v395 = vmul.f32 1.0, %v394
    %v396 = vtanh.pop %v389
    %v397 = vmul.f32 %v395, %v304
    %399 = vrot.lane.b32.xlu0 %v396, 64
    %v400 = vpop.permute.xlu0 %399
    %v402 = vmul.f32 %v395, %v400
    %404 = vrot.lane.b32.xlu0 %v402, 32
    %v405 = vpop.permute.xlu0 %404
    %v407 = vadd.f32 %v397, %v405
    %v408 = vtanh.pop %v407
    %410 = vrot.lane.b32.xlu0 %v408, 64
    %v411 = vpop.permute.xlu0 %410
    %v413 = vmul.f32 %v395, %v411
    %415 = vrot.lane.b32.xlu0 %v413, 32
    %v416 = vpop.permute.xlu0 %415
    %418 = vst.msk [vmem:[#allocation2 + $0x10] sm:$0xff] %vm207, %v416
    %v419 = vld [vmem:[#allocation4 + $0x18] sm:$0xff]
    %v420 = vsel %vm207, %v416, 0
    %422 = vmatprep.subr.mxu0 0.0
    %423 = vmatpush1.msra.mxu0 %v29
    %424 = vmatprep.subr.mxu0 0.0
    %425 = vmatpush1.msra.mxu0 %v30
    %426 = vmatprep.subr.mxu0 0.0
    %427 = vmatpush1.msra.mxu0 %v31
    %428 = vmatprep.subr.mxu0 0.0
    %429 = vmatpush1.msra.mxu0 %v32
    %430 = vmatprep.subr.mxu0 0.0
    %431 = vmatpush1.msra.mxu0 0.0
    %432 = vmatprep.subr.mxu0 0.0
    %433 = vmatpush1.msra.mxu0 0.0
    %434 = vmatprep.subr.mxu0 0.0
    %435 = vmatpush1.msra.mxu0 0.0
    %436 = vmatprep.subr.mxu0 0.0
    %437 = vmatpush1.msra.mxu0 0.0
    %438 = vmatprep.subr.mxu0 0.0
    %439 = vmatpush1.msra.mxu0 0.0
    %440 = vmatprep.subr.mxu0 0.0
    %441 = vmatpush1.msra.mxu0 0.0
    %442 = vmatprep.subr.mxu0 0.0
    %443 = vmatpush1.msra.mxu0 0.0
    %444 = vmatprep.subr.mxu0 0.0
    %445 = vmatpush1.msra.mxu0 0.0
    %446 = vmatprep.subr.mxu0 0.0
    %447 = vmatpush1.msra.mxu0 0.0
    %448 = vmatprep.subr.mxu0 0.0
    %449 = vmatpush1.msra.mxu0 0.0
    %450 = vmatprep.subr.mxu0 0.0
    %451 = vmatpush1.msra.mxu0 0.0
    %452 = vmatprep.subr.mxu0 0.0
    %453 = vmatpush1.msra.mxu0 0.0
    %454 = vmatprep.subr.mxu0 0.0
    %455 = vmatpush1.msra.mxu0 0.0
    %456 = vmatprep.subr.mxu0 0.0
    %457 = vmatpush1.msra.mxu0 0.0
    %458 = vmatprep.subr.mxu0 0.0
    %459 = vmatpush1.msra.mxu0 0.0
    %460 = vmatprep.subr.mxu0 0.0
    %461 = vmatpush1.msra.mxu0 0.0
    %462 = vmatprep.subr.mxu0 0.0
    %463 = vmatpush1.msra.mxu0 0.0
    %464 = vmatprep.subr.mxu0 0.0
    %465 = vmatpush1.msra.mxu0 0.0
    %466 = vmatprep.subr.mxu0 0.0
    %467 = vmatpush1.msra.mxu0 0.0
    %468 = vmatprep.subr.mxu0 0.0
    %469 = vmatpush1.msra.mxu0 0.0
    %470 = vmatprep.subr.mxu0 0.0
    %471 = vmatpush1.msra.mxu0 0.0
    %472 = vmatprep.subr.mxu0 0.0
    %473 = vmatpush1.msra.mxu0 0.0
    %474 = vmatprep.subr.mxu0 0.0
    %475 = vmatpush1.msra.mxu0 0.0
    %476 = vmatprep.subr.mxu0 0.0
    %477 = vmatpush1.msra.mxu0 0.0
    %478 = vmatprep.subr.mxu0 0.0
    %479 = vmatpush1.msra.mxu0 0.0
    %480 = vmatprep.subr.mxu0 0.0
    %481 = vmatpush1.msra.mxu0 0.0
    %482 = vmatprep.subr.mxu0 0.0
    %483 = vmatpush1.msra.mxu0 0.0
    %484 = vmatprep.subr.mxu0 0.0
    %485 = vmatpush1.msra.mxu0 0.0
    %486 = vmatprep.mubr.f32.mxu0 0.0
    %487 = vmatmul.mubr.f32.gmra.mrb[0].mxu0 %v420
    %v488 = vpop.f32.mrb[0].mxu0
    %v489 = vadd.f32 0.0, %v488
    %v490 = vpop.f32.mrb[0].mxu0
    %491 = vdwg.mxu0
    %v492 = vadd.f32 %v419, %v489
    %v493 = vxor.u32 %v492, 2147483648
    %v494 = vmul.f32 %v493, 1.442695
    %v495 = vpow.pop %v494
    %v496 = vadd.f32 %v495, 1.0
    %v497 = vrcp.pop %v496
    %v498 = vmul.f32 1.0, %v497
    %v499 = vtanh.pop %v492
    %v500 = vmul.f32 %v498, %v407
    %502 = vrot.lane.b32.xlu0 %v499, 64
    %v503 = vpop.permute.xlu0 %502
    %v505 = vmul.f32 %v498, %v503
    %507 = vrot.lane.b32.xlu0 %v505, 32
    %v508 = vpop.permute.xlu0 %507
    %v510 = vadd.f32 %v500, %v508
    %v511 = vtanh.pop %v510
    %513 = vrot.lane.b32.xlu0 %v511, 64
    %v514 = vpop.permute.xlu0 %513
    %v516 = vmul.f32 %v498, %v514
    %518 = vrot.lane.b32.xlu0 %v516, 32
    %v519 = vpop.permute.xlu0 %518
    %521 = vst.msk [vmem:[#allocation2 + $0x18] sm:$0xff] %vm207, %v519
    %v522 = vld [vmem:[#allocation4 + $0x20] sm:$0xff]
    %v523 = vsel %vm207, %v519, 0
    %525 = vmatprep.subr.mxu0 0.0
    %526 = vmatpush1.msra.mxu0 %v29
    %527 = vmatprep.subr.mxu0 0.0
    %528 = vmatpush1.msra.mxu0 %v30
    %529 = vmatprep.subr.mxu0 0.0
    %530 = vmatpush1.msra.mxu0 %v31
    %531 = vmatprep.subr.mxu0 0.0
    %532 = vmatpush1.msra.mxu0 %v32
    %533 = vmatprep.subr.mxu0 0.0
    %534 = vmatpush1.msra.mxu0 0.0
    %535 = vmatprep.subr.mxu0 0.0
    %536 = vmatpush1.msra.mxu0 0.0
    %537 = vmatprep.subr.mxu0 0.0
    %538 = vmatpush1.msra.mxu0 0.0
    %539 = vmatprep.subr.mxu0 0.0
    %540 = vmatpush1.msra.mxu0 0.0
    %541 = vmatprep.subr.mxu0 0.0
    %542 = vmatpush1.msra.mxu0 0.0
    %543 = vmatprep.subr.mxu0 0.0
    %544 = vmatpush1.msra.mxu0 0.0
    %545 = vmatprep.subr.mxu0 0.0
    %546 = vmatpush1.msra.mxu0 0.0
    %547 = vmatprep.subr.mxu0 0.0
    %548 = vmatpush1.msra.mxu0 0.0
    %549 = vmatprep.subr.mxu0 0.0
    %550 = vmatpush1.msra.mxu0 0.0
    %551 = vmatprep.subr.mxu0 0.0
    %552 = vmatpush1.msra.mxu0 0.0
    %553 = vmatprep.subr.mxu0 0.0
    %554 = vmatpush1.msra.mxu0 0.0
    %555 = vmatprep.subr.mxu0 0.0
    %556 = vmatpush1.msra.mxu0 0.0
    %557 = vmatprep.subr.mxu0 0.0
    %558 = vmatpush1.msra.mxu0 0.0
    %559 = vmatprep.subr.mxu0 0.0
    %560 = vmatpush1.msra.mxu0 0.0
    %561 = vmatprep.subr.mxu0 0.0
    %562 = vmatpush1.msra.mxu0 0.0
    %563 = vmatprep.subr.mxu0 0.0
    %564 = vmatpush1.msra.mxu0 0.0
    %565 = vmatprep.subr.mxu0 0.0
    %566 = vmatpush1.msra.mxu0 0.0
    %567 = vmatprep.subr.mxu0 0.0
    %568 = vmatpush1.msra.mxu0 0.0
    %569 = vmatprep.subr.mxu0 0.0
    %570 = vmatpush1.msra.mxu0 0.0
    %571 = vmatprep.subr.mxu0 0.0
    %572 = vmatpush1.msra.mxu0 0.0
    %573 = vmatprep.subr.mxu0 0.0
    %574 = vmatpush1.msra.mxu0 0.0
    %575 = vmatprep.subr.mxu0 0.0
    %576 = vmatpush1.msra.mxu0 0.0
    %577 = vmatprep.subr.mxu0 0.0
    %578 = vmatpush1.msra.mxu0 0.0
    %579 = vmatprep.subr.mxu0 0.0
    %580 = vmatpush1.msra.mxu0 0.0
    %581 = vmatprep.subr.mxu0 0.0
    %582 = vmatpush1.msra.mxu0 0.0
    %583 = vmatprep.subr.mxu0 0.0
    %584 = vmatpush1.msra.mxu0 0.0
    %585 = vmatprep.subr.mxu0 0.0
    %586 = vmatpush1.msra.mxu0 0.0
    %587 = vmatprep.subr.mxu0 0.0
    %588 = vmatpush1.msra.mxu0 0.0
    %589 = vmatprep.mubr.f32.mxu0 0.0
    %590 = vmatmul.mubr.f32.gmra.mrb[0].mxu0 %v523
    %v591 = vpop.f32.mrb[0].mxu0
    %v592 = vadd.f32 0.0, %v591
    %v593 = vpop.f32.mrb[0].mxu0
    %594 = vdwg.mxu0
    %v595 = vadd.f32 %v522, %v592
    %v596 = vxor.u32 %v595, 2147483648
    %v597 = vmul.f32 %v596, 1.442695
    %v598 = vpow.pop %v597
    %v599 = vadd.f32 %v598, 1.0
    %v600 = vrcp.pop %v599
    %v601 = vmul.f32 1.0, %v600
    %v602 = vtanh.pop %v595
    %v603 = vmul.f32 %v601, %v510
    %605 = vrot.lane.b32.xlu0 %v602, 64
    %v606 = vpop.permute.xlu0 %605
    %v608 = vmul.f32 %v601, %v606
    %610 = vrot.lane.b32.xlu0 %v608, 32
    %v611 = vpop.permute.xlu0 %610
    %v613 = vadd.f32 %v603, %v611
    %v614 = vtanh.pop %v613
    %616 = vrot.lane.b32.xlu0 %v614, 64
    %v617 = vpop.permute.xlu0 %616
    %v619 = vmul.f32 %v601, %v617
    %621 = vrot.lane.b32.xlu0 %v619, 32
    %v622 = vpop.permute.xlu0 %621
    %624 = vst.msk [vmem:[#allocation2 + $0x20] sm:$0xff] %vm207, %v622
    %v625 = vld [vmem:[#allocation4 + $0x28] sm:$0xff]
    %v626 = vsel %vm207, %v622, 0
    %628 = vmatprep.subr.mxu0 0.0
    %629 = vmatpush1.msra.mxu0 %v29
    %630 = vmatprep.subr.mxu0 0.0
    %631 = vmatpush1.msra.mxu0 %v30
    %632 = vmatprep.subr.mxu0 0.0
    %633 = vmatpush1.msra.mxu0 %v31
    %634 = vmatprep.subr.mxu0 0.0
    %635 = vmatpush1.msra.mxu0 %v32
    %636 = vmatprep.subr.mxu0 0.0
    %637 = vmatpush1.msra.mxu0 0.0
    %638 = vmatprep.subr.mxu0 0.0
    %639 = vmatpush1.msra.mxu0 0.0
    %640 = vmatprep.subr.mxu0 0.0
    %641 = vmatpush1.msra.mxu0 0.0
    %642 = vmatprep.subr.mxu0 0.0
    %643 = vmatpush1.msra.mxu0 0.0
    %644 = vmatprep.subr.mxu0 0.0
    %645 = vmatpush1.msra.mxu0 0.0
    %646 = vmatprep.subr.mxu0 0.0
    %647 = vmatpush1.msra.mxu0 0.0
    %648 = vmatprep.subr.mxu0 0.0
    %649 = vmatpush1.msra.mxu0 0.0
    %650 = vmatprep.subr.mxu0 0.0
    %651 = vmatpush1.msra.mxu0 0.0
    %652 = vmatprep.subr.mxu0 0.0
    %653 = vmatpush1.msra.mxu0 0.0
    %654 = vmatprep.subr.mxu0 0.0
    %655 = vmatpush1.msra.mxu0 0.0
    %656 = vmatprep.subr.mxu0 0.0
    %657 = vmatpush1.msra.mxu0 0.0
    %658 = vmatprep.subr.mxu0 0.0
    %659 = vmatpush1.msra.mxu0 0.0
    %660 = vmatprep.subr.mxu0 0.0
    %661 = vmatpush1.msra.mxu0 0.0
    %662 = vmatprep.subr.mxu0 0.0
    %663 = vmatpush1.msra.mxu0 0.0
    %664 = vmatprep.subr.mxu0 0.0
    %665 = vmatpush1.msra.mxu0 0.0
    %666 = vmatprep.subr.mxu0 0.0
    %667 = vmatpush1.msra.mxu0 0.0
    %668 = vmatprep.subr.mxu0 0.0
    %669 = vmatpush1.msra.mxu0 0.0
    %670 = vmatprep.subr.mxu0 0.0
    %671 = vmatpush1.msra.mxu0 0.0
    %672 = vmatprep.subr.mxu0 0.0
    %673 = vmatpush1.msra.mxu0 0.0
    %674 = vmatprep.subr.mxu0 0.0
    %675 = vmatpush1.msra.mxu0 0.0
    %676 = vmatprep.subr.mxu0 0.0
    %677 = vmatpush1.msra.mxu0 0.0
    %678 = vmatprep.subr.mxu0 0.0
    %679 = vmatpush1.msra.mxu0 0.0
    %680 = vmatprep.subr.mxu0 0.0
    %681 = vmatpush1.msra.mxu0 0.0
    %682 = vmatprep.subr.mxu0 0.0
    %683 = vmatpush1.msra.mxu0 0.0
    %684 = vmatprep.subr.mxu0 0.0
    %685 = vmatpush1.msra.mxu0 0.0
    %686 = vmatprep.subr.mxu0 0.0
    %687 = vmatpush1.msra.mxu0 0.0
    %688 = vmatprep.subr.mxu0 0.0
    %689 = vmatpush1.msra.mxu0 0.0
    %690 = vmatprep.subr.mxu0 0.0
    %691 = vmatpush1.msra.mxu0 0.0
    %692 = vmatprep.mubr.f32.mxu0 0.0
    %693 = vmatmul.mubr.f32.gmra.mrb[0].mxu0 %v626
    %v694 = vpop.f32.mrb[0].mxu0
    %v695 = vadd.f32 0.0, %v694
    %v696 = vpop.f32.mrb[0].mxu0
    %697 = vdwg.mxu0
    %v698 = vadd.f32 %v625, %v695
    %v699 = vxor.u32 %v698, 2147483648
    %v700 = vmul.f32 %v699, 1.442695
    %v701 = vpow.pop %v700
    %v702 = vadd.f32 %v701, 1.0
    %v703 = vrcp.pop %v702
    %v704 = vmul.f32 1.0, %v703
    %v705 = vtanh.pop %v698
    %v706 = vmul.f32 %v704, %v613
    %708 = vrot.lane.b32.xlu0 %v705, 64
    %v709 = vpop.permute.xlu0 %708
    %v711 = vmul.f32 %v704, %v709
    %713 = vrot.lane.b32.xlu0 %v711, 32
    %v714 = vpop.permute.xlu0 %713
    %v716 = vadd.f32 %v706, %v714
    %v717 = vtanh.pop %v716
    %719 = vrot.lane.b32.xlu0 %v717, 64
    %v720 = vpop.permute.xlu0 %719
    %v722 = vmul.f32 %v704, %v720
    %724 = vrot.lane.b32.xlu0 %v722, 32
    %v725 = vpop.permute.xlu0 %724
    %727 = vst.msk [vmem:[#allocation2 + $0x28] sm:$0xff] %vm207, %v725
    %v728 = vld [vmem:[#allocation4 + $0x30] sm:$0xff]
    %v729 = vsel %vm207, %v725, 0
    %731 = vmatprep.subr.mxu0 0.0
    %732 = vmatpush1.msra.mxu0 %v29
    %733 = vmatprep.subr.mxu0 0.0
    %734 = vmatpush1.msra.mxu0 %v30
    %735 = vmatprep.subr.mxu0 0.0
    %736 = vmatpush1.msra.mxu0 %v31
    %737 = vmatprep.subr.mxu0 0.0
    %738 = vmatpush1.msra.mxu0 %v32
    %739 = vmatprep.subr.mxu0 0.0
    %740 = vmatpush1.msra.mxu0 0.0
    %741 = vmatprep.subr.mxu0 0.0
    %742 = vmatpush1.msra.mxu0 0.0
    %743 = vmatprep.subr.mxu0 0.0
    %744 = vmatpush1.msra.mxu0 0.0
    %745 = vmatprep.subr.mxu0 0.0
    %746 = vmatpush1.msra.mxu0 0.0
    %747 = vmatprep.subr.mxu0 0.0
    %748 = vmatpush1.msra.mxu0 0.0
    %749 = vmatprep.subr.mxu0 0.0
    %750 = vmatpush1.msra.mxu0 0.0
    %751 = vmatprep.subr.mxu0 0.0
    %752 = vmatpush1.msra.mxu0 0.0
    %753 = vmatprep.subr.mxu0 0.0
    %754 = vmatpush1.msra.mxu0 0.0
    %755 = vmatprep.subr.mxu0 0.0
    %756 = vmatpush1.msra.mxu0 0.0
    %757 = vmatprep.subr.mxu0 0.0
    %758 = vmatpush1.msra.mxu0 0.0
    %759 = vmatprep.subr.mxu0 0.0
    %760 = vmatpush1.msra.mxu0 0.0
    %761 = vmatprep.subr.mxu0 0.0
    %762 = vmatpush1.msra.mxu0 0.0
    %763 = vmatprep.subr.mxu0 0.0
    %764 = vmatpush1.msra.mxu0 0.0
    %765 = vmatprep.subr.mxu0 0.0
    %766 = vmatpush1.msra.mxu0 0.0
    %767 = vmatprep.subr.mxu0 0.0
    %768 = vmatpush1.msra.mxu0 0.0
    %769 = vmatprep.subr.mxu0 0.0
    %770 = vmatpush1.msra.mxu0 0.0
    %771 = vmatprep.subr.mxu0 0.0
    %772 = vmatpush1.msra.mxu0 0.0
    %773 = vmatprep.subr.mxu0 0.0
    %774 = vmatpush1.msra.mxu0 0.0
    %775 = vmatprep.subr.mxu0 0.0
    %776 = vmatpush1.msra.mxu0 0.0
    %777 = vmatprep.subr.mxu0 0.0
    %778 = vmatpush1.msra.mxu0 0.0
    %779 = vmatprep.subr.mxu0 0.0
    %780 = vmatpush1.msra.mxu0 0.0
    %781 = vmatprep.subr.mxu0 0.0
    %782 = vmatpush1.msra.mxu0 0.0
    %783 = vmatprep.subr.mxu0 0.0
    %784 = vmatpush1.msra.mxu0 0.0
    %785 = vmatprep.subr.mxu0 0.0
    %786 = vmatpush1.msra.mxu0 0.0
    %787 = vmatprep.subr.mxu0 0.0
    %788 = vmatpush1.msra.mxu0 0.0
    %789 = vmatprep.subr.mxu0 0.0
    %790 = vmatpush1.msra.mxu0 0.0
    %791 = vmatprep.subr.mxu0 0.0
    %792 = vmatpush1.msra.mxu0 0.0
    %793 = vmatprep.subr.mxu0 0.0
    %794 = vmatpush1.msra.mxu0 0.0
    %795 = vmatprep.mubr.f32.mxu0 0.0
    %796 = vmatmul.mubr.f32.gmra.mrb[0].mxu0 %v729
    %v797 = vpop.f32.mrb[0].mxu0
    %v798 = vadd.f32 0.0, %v797
    %v799 = vpop.f32.mrb[0].mxu0
    %800 = vdwg.mxu0
    %v801 = vadd.f32 %v728, %v798
    %v802 = vxor.u32 %v801, 2147483648
    %v803 = vmul.f32 %v802, 1.442695
    %v804 = vpow.pop %v803
    %v805 = vadd.f32 %v804, 1.0
    %v806 = vrcp.pop %v805
    %v807 = vmul.f32 1.0, %v806
    %v808 = vtanh.pop %v801
    %v809 = vmul.f32 %v807, %v716
    %811 = vrot.lane.b32.xlu0 %v808, 64
    %v812 = vpop.permute.xlu0 %811
    %v814 = vmul.f32 %v807, %v812
    %816 = vrot.lane.b32.xlu0 %v814, 32
    %v817 = vpop.permute.xlu0 %816
    %v819 = vadd.f32 %v809, %v817
    %v820 = vtanh.pop %v819
    %822 = vrot.lane.b32.xlu0 %v820, 64
    %v823 = vpop.permute.xlu0 %822
    %v825 = vmul.f32 %v807, %v823
    %827 = vrot.lane.b32.xlu0 %v825, 32
    %v828 = vpop.permute.xlu0 %827
    %830 = vst.msk [vmem:[#allocation2 + $0x30] sm:$0xff] %vm207, %v828
    %v831 = vld [vmem:[#allocation4 + $0x38] sm:$0xff]
    %v832 = vsel %vm207, %v828, 0
    %834 = vmatprep.subr.mxu0 0.0
    %835 = vmatpush1.msra.mxu0 %v29
    %836 = vmatprep.subr.mxu0 0.0
    %837 = vmatpush1.msra.mxu0 %v30
    %838 = vmatprep.subr.mxu0 0.0
    %839 = vmatpush1.msra.mxu0 %v31
    %840 = vmatprep.subr.mxu0 0.0
    %841 = vmatpush1.msra.mxu0 %v32
    %842 = vmatprep.subr.mxu0 0.0
    %843 = vmatpush1.msra.mxu0 0.0
    %844 = vmatprep.subr.mxu0 0.0
    %845 = vmatpush1.msra.mxu0 0.0
    %846 = vmatprep.subr.mxu0 0.0
    %847 = vmatpush1.msra.mxu0 0.0
    %848 = vmatprep.subr.mxu0 0.0
    %849 = vmatpush1.msra.mxu0 0.0
    %850 = vmatprep.subr.mxu0 0.0
    %851 = vmatpush1.msra.mxu0 0.0
    %852 = vmatprep.subr.mxu0 0.0
    %853 = vmatpush1.msra.mxu0 0.0
    %854 = vmatprep.subr.mxu0 0.0
    %855 = vmatpush1.msra.mxu0 0.0
    %856 = vmatprep.subr.mxu0 0.0
    %857 = vmatpush1.msra.mxu0 0.0
    %858 = vmatprep.subr.mxu0 0.0
    %859 = vmatpush1.msra.mxu0 0.0
    %860 = vmatprep.subr.mxu0 0.0
    %861 = vmatpush1.msra.mxu0 0.0
    %862 = vmatprep.subr.mxu0 0.0
    %863 = vmatpush1.msra.mxu0 0.0
    %864 = vmatprep.subr.mxu0 0.0
    %865 = vmatpush1.msra.mxu0 0.0
    %866 = vmatprep.subr.mxu0 0.0
    %867 = vmatpush1.msra.mxu0 0.0
    %868 = vmatprep.subr.mxu0 0.0
    %869 = vmatpush1.msra.mxu0 0.0
    %870 = vmatprep.subr.mxu0 0.0
    %871 = vmatpush1.msra.mxu0 0.0
    %872 = vmatprep.subr.mxu0 0.0
    %873 = vmatpush1.msra.mxu0 0.0
    %874 = vmatprep.subr.mxu0 0.0
    %875 = vmatpush1.msra.mxu0 0.0
    %876 = vmatprep.subr.mxu0 0.0
    %877 = vmatpush1.msra.mxu0 0.0
    %878 = vmatprep.subr.mxu0 0.0
    %879 = vmatpush1.msra.mxu0 0.0
    %880 = vmatprep.subr.mxu0 0.0
    %881 = vmatpush1.msra.mxu0 0.0
    %882 = vmatprep.subr.mxu0 0.0
    %883 = vmatpush1.msra.mxu0 0.0
    %884 = vmatprep.subr.mxu0 0.0
    %885 = vmatpush1.msra.mxu0 0.0
    %886 = vmatprep.subr.mxu0 0.0
    %887 = vmatpush1.msra.mxu0 0.0
    %888 = vmatprep.subr.mxu0 0.0
    %889 = vmatpush1.msra.mxu0 0.0
    %890 = vmatprep.subr.mxu0 0.0
    %891 = vmatpush1.msra.mxu0 0.0
    %892 = vmatprep.subr.mxu0 0.0
    %893 = vmatpush1.msra.mxu0 0.0
    %894 = vmatprep.subr.mxu0 0.0
    %895 = vmatpush1.msra.mxu0 0.0
    %896 = vmatprep.subr.mxu0 0.0
    %897 = vmatpush1.msra.mxu0 0.0
    %898 = vmatprep.mubr.f32.mxu0 0.0
    %899 = vmatmul.mubr.f32.gmra.mrb[0].mxu0 %v832
    %v900 = vpop.f32.mrb[0].mxu0
    %v901 = vadd.f32 0.0, %v900
    %v902 = vpop.f32.mrb[0].mxu0
    %903 = vdwg.mxu0
    %v904 = vadd.f32 %v831, %v901
    %v905 = vxor.u32 %v904, 2147483648
    %v906 = vmul.f32 %v905, 1.442695
    %v907 = vpow.pop %v906
    %v908 = vadd.f32 %v907, 1.0
    %v909 = vrcp.pop %v908
    %v910 = vmul.f32 1.0, %v909
    %v911 = vtanh.pop %v904
    %v912 = vmul.f32 %v910, %v819
    %914 = vrot.lane.b32.xlu0 %v911, 64
    %v915 = vpop.permute.xlu0 %914
    %v917 = vmul.f32 %v910, %v915
    %919 = vrot.lane.b32.xlu0 %v917, 32
    %v920 = vpop.permute.xlu0 %919
    %v922 = vadd.f32 %v912, %v920
    %v923 = vtanh.pop %v922
    %925 = vrot.lane.b32.xlu0 %v923, 64
    %v926 = vpop.permute.xlu0 %925
    %v928 = vmul.f32 %v910, %v926
    %930 = vrot.lane.b32.xlu0 %v928, 32
    %v931 = vpop.permute.xlu0 %930
    %933 = vst.msk [vmem:[#allocation2 + $0x38] sm:$0xff] %vm207, %v931
    %v934 = vld [vmem:[#allocation5 + $0x28] sm:$0xff]
    %v935 = vld [vmem:[#allocation5 + $0x30] sm:$0xff]
    %v936 = vld [vmem:[#allocation5 + $0x38] sm:$0xff]
    %v937 = vld [vmem:[#allocation5 + $0x40] sm:$0xff]
    %v938 = vld [vmem:[#allocation5 + $0x48] sm:$0xff]
    %v939 = vld [vmem:[#allocation5 + $0x50] sm:$0xff]
    %v940 = vld [vmem:[#allocation5 + $0x58] sm:$0xff]
    %v941 = vld [vmem:[#allocation5 + $0x60] sm:$0xff]
    %v942 = vld [vmem:[#allocation5 + $0x169] sm:$0x1]
    %v943 = vld [vmem:[#allocation2] sm:$0xff]
    %v944 = vld [vmem:[#allocation2 + $0x8] sm:$0xff]
    %v945 = vld [vmem:[#allocation2 + $0x10] sm:$0xff]
    %v946 = vld [vmem:[#allocation2 + $0x18] sm:$0xff]
    %v947 = vld [vmem:[#allocation2 + $0x20] sm:$0xff]
    %v948 = vld [vmem:[#allocation2 + $0x28] sm:$0xff]
    %v949 = vld [vmem:[#allocation2 + $0x30] sm:$0xff]
    %v950 = vld [vmem:[#allocation2 + $0x38] sm:$0xff]
    %v951 = vlaneseq
    %v952 = vshrl.u32 %v951, 7
    %v953 = vsub.s32 0, %v952
    %v954 = vrot.slane %v942, %v953
    %v956 = vsel %vm207, %v943, 0
    %v959 = vsel %vm207, %v944, 0
    %v962 = vsel %vm207, %v945, 0
    %v965 = vsel %vm207, %v946, 0
    %v968 = vsel %vm207, %v947, 0
    %v971 = vsel %vm207, %v948, 0
    %v974 = vsel %vm207, %v949, 0
    %v977 = vsel %vm207, %v950, 0
    %979 = vmatprep.subr.mxu0 0.0
    %980 = vmatpush1.msra.mxu0 %v934
    %981 = vmatprep.subr.mxu0 0.0
    %982 = vmatpush1.msra.mxu0 %v935
    %983 = vmatprep.subr.mxu0 0.0
    %984 = vmatpush1.msra.mxu0 %v936
    %985 = vmatprep.subr.mxu0 0.0
    %986 = vmatpush1.msra.mxu0 %v937
    %987 = vmatprep.subr.mxu0 0.0
    %988 = vmatpush1.msra.mxu0 0.0
    %989 = vmatprep.subr.mxu0 0.0
    %990 = vmatpush1.msra.mxu0 0.0
    %991 = vmatprep.subr.mxu0 0.0
    %992 = vmatpush1.msra.mxu0 0.0
    %993 = vmatprep.subr.mxu0 0.0
    %994 = vmatpush1.msra.mxu0 0.0
    %995 = vmatprep.subr.mxu0 0.0
    %996 = vmatpush1.msra.mxu0 0.0
    %997 = vmatprep.subr.mxu0 0.0
    %998 = vmatpush1.msra.mxu0 0.0
    %999 = vmatprep.subr.mxu0 0.0
    %1000 = vmatpush1.msra.mxu0 0.0
    %1001 = vmatprep.subr.mxu0 0.0
    %1002 = vmatpush1.msra.mxu0 0.0
    %1003 = vmatprep.subr.mxu0 0.0
    %1004 = vmatpush1.msra.mxu0 0.0
    %1005 = vmatprep.subr.mxu0 0.0
    %1006 = vmatpush1.msra.mxu0 0.0
    %1007 = vmatprep.subr.mxu0 0.0
    %1008 = vmatpush1.msra.mxu0 0.0
    %1009 = vmatprep.subr.mxu0 0.0
    %1010 = vmatpush1.msra.mxu0 0.0
    %1011 = vmatprep.subr.mxu0 0.0
    %1012 = vmatpush1.msra.mxu0 0.0
    %1013 = vmatprep.subr.mxu0 0.0
    %1014 = vmatpush1.msra.mxu0 0.0
    %1015 = vmatprep.subr.mxu0 0.0
    %1016 = vmatpush1.msra.mxu0 0.0
    %1017 = vmatprep.subr.mxu0 0.0
    %1018 = vmatpush1.msra.mxu0 0.0
    %1019 = vmatprep.subr.mxu0 0.0
    %1020 = vmatpush1.msra.mxu0 0.0
    %1021 = vmatprep.subr.mxu0 0.0
    %1022 = vmatpush1.msra.mxu0 0.0
    %1023 = vmatprep.subr.mxu0 0.0
    %1024 = vmatpush1.msra.mxu0 0.0
    %1025 = vmatprep.subr.mxu0 0.0
    %1026 = vmatpush1.msra.mxu0 0.0
    %1027 = vmatprep.subr.mxu0 0.0
    %1028 = vmatpush1.msra.mxu0 0.0
    %1029 = vmatprep.subr.mxu0 0.0
    %1030 = vmatpush1.msra.mxu0 0.0
    %1031 = vmatprep.subr.mxu0 0.0
    %1032 = vmatpush1.msra.mxu0 0.0
    %1033 = vmatprep.subr.mxu0 0.0
    %1034 = vmatpush1.msra.mxu0 0.0
    %1035 = vmatprep.subr.mxu0 0.0
    %1036 = vmatpush1.msra.mxu0 0.0
    %1037 = vmatprep.subr.mxu0 0.0
    %1038 = vmatpush1.msra.mxu0 0.0
    %1039 = vmatprep.subr.mxu0 0.0
    %1040 = vmatpush1.msra.mxu0 0.0
    %1041 = vmatprep.subr.mxu0 0.0
    %1042 = vmatpush1.msra.mxu0 0.0
    %1043 = vmatprep.mubr.f32.mxu0 0.0
    %1044 = vmatmul.mubr.f32.gmra.mrb[0].mxu0 %v956
    %v1045 = vpop.f32.mrb[0].mxu0
    %v1046 = vadd.f32 %v954, %v1045
    %v1047 = vpop.f32.mrb[0].mxu0
    %1048 = vmatprep.mubr.f32.mxu0 0.0
    %1049 = vmatmul.mubr.f32.gmra.mrb[0].mxu0 %v959
    %v1050 = vpop.f32.mrb[0].mxu0
    %v1051 = vadd.f32 %v954, %v1050
    %v1052 = vpop.f32.mrb[0].mxu0
    %1053 = vmatprep.mubr.f32.mxu0 0.0
    %1054 = vmatmul.mubr.f32.gmra.mrb[0].mxu0 %v962
    %v1055 = vpop.f32.mrb[0].mxu0
    %v1056 = vadd.f32 %v954, %v1055
    %v1057 = vpop.f32.mrb[0].mxu0
    %1058 = vmatprep.mubr.f32.mxu0 0.0
    %1059 = vmatmul.mubr.f32.gmra.mrb[0].mxu0 %v965
    %v1060 = vpop.f32.mrb[0].mxu0
    %v1061 = vadd.f32 %v954, %v1060
    %v1062 = vpop.f32.mrb[0].mxu0
    %1063 = vmatprep.mubr.f32.mxu0 0.0
    %1064 = vmatmul.mubr.f32.gmra.mrb[0].mxu0 %v968
    %v1065 = vpop.f32.mrb[0].mxu0
    %v1066 = vadd.f32 %v954, %v1065
    %v1067 = vpop.f32.mrb[0].mxu0
    %1068 = vmatprep.mubr.f32.mxu0 0.0
    %1069 = vmatmul.mubr.f32.gmra.mrb[0].mxu0 %v971
    %v1070 = vpop.f32.mrb[0].mxu0
    %v1071 = vadd.f32 %v954, %v1070
    %v1072 = vpop.f32.mrb[0].mxu0
    %1073 = vmatprep.mubr.f32.mxu0 0.0
    %1074 = vmatmul.mubr.f32.gmra.mrb[0].mxu0 %v974
    %v1075 = vpop.f32.mrb[0].mxu0
    %v1076 = vadd.f32 %v954, %v1075
    %v1077 = vpop.f32.mrb[0].mxu0
    %1078 = vmatprep.mubr.f32.mxu0 0.0
    %1079 = vmatmul.mubr.f32.gmra.mrb[0].mxu0 %v977
    %v1080 = vpop.f32.mrb[0].mxu0
    %v1081 = vadd.f32 %v954, %v1080
    %v1082 = vpop.f32.mrb[0].mxu0
    %1083 = vdwg.mxu0
    %1084 = vst [vmem:[#allocation4] sm:$0xff] %v1046
    %1085 = vst [vmem:[#allocation4 + $0x8] sm:$0xff] %v1051
    %1086 = vst [vmem:[#allocation4 + $0x10] sm:$0xff] %v1056
    %1087 = vst [vmem:[#allocation4 + $0x18] sm:$0xff] %v1061
    %1088 = vst [vmem:[#allocation4 + $0x20] sm:$0xff] %v1066
    %1089 = vst [vmem:[#allocation4 + $0x28] sm:$0xff] %v1071
    %1090 = vst [vmem:[#allocation4 + $0x30] sm:$0xff] %v1076
    %1091 = vst [vmem:[#allocation4 + $0x38] sm:$0xff] %v1081
    %v1092 = vld [vmem:[#allocation4] sm:$0xff]
    %v1093 = vxor.u32 %v1092, 2147483648
    %v1094 = vmul.f32 %v1093, 1.442695
    %v1095 = vpow.pop %v1094
    %v1096 = vadd.f32 %v1095, 1.0
    %v1097 = vrcp.pop %v1096
    %v1098 = vmul.f32 1.0, %v1097
    %v1099 = vtanh.pop %v1092
    %1101 = vrot.lane.b32.xlu0 %v1099, 64
    %v1102 = vpop.permute.xlu0 %1101
    %v1104 = vmul.f32 %v1098, %v1102
    %v1105 = vtanh.pop %v1104
    %1107 = vrot.lane.b32.xlu0 %v1105, 96
    %v1108 = vpop.permute.xlu0 %1107
    %v1110 = vmul.f32 %v1098, %v1108
    %1111 = vrot.lane.b32.xlu0 %v943, 96
    %v1112 = vpop.permute.xlu0 %1111
    %v1114 = vadd.f32 %v1110, %v1112
    %1116 = vrot.lane.b32.xlu0 %v1114, 32
    %v1117 = vpop.permute.xlu0 %1116
    %1119 = vst.msk [vmem:[#allocation3] sm:$0xff] %vm207, %v1117
    %v1120 = vld [vmem:[#allocation4 + $0x8] sm:$0xff]
    %1122 = vrot.lane.b32.xlu0 %v1110, 32
    %v1123 = vpop.permute.xlu0 %1122
    %v1124 = vsel %vm207, %v1123, 0
    %1126 = vmatprep.subr.mxu0 0.0
    %1127 = vmatpush1.msra.mxu0 %v938
    %1128 = vmatprep.subr.mxu0 0.0
    %1129 = vmatpush1.msra.mxu0 %v939
    %1130 = vmatprep.subr.mxu0 0.0
    %1131 = vmatpush1.msra.mxu0 %v940
    %1132 = vmatprep.subr.mxu0 0.0
    %1133 = vmatpush1.msra.mxu0 %v941
    %1134 = vmatprep.subr.mxu0 0.0
    %1135 = vmatpush1.msra.mxu0 0.0
    %1136 = vmatprep.subr.mxu0 0.0
    %1137 = vmatpush1.msra.mxu0 0.0
    %1138 = vmatprep.subr.mxu0 0.0
    %1139 = vmatpush1.msra.mxu0 0.0
    %1140 = vmatprep.subr.mxu0 0.0
    %1141 = vmatpush1.msra.mxu0 0.0
    %1142 = vmatprep.subr.mxu0 0.0
    %1143 = vmatpush1.msra.mxu0 0.0
    %1144 = vmatprep.subr.mxu0 0.0
    %1145 = vmatpush1.msra.mxu0 0.0
    %1146 = vmatprep.subr.mxu0 0.0
    %1147 = vmatpush1.msra.mxu0 0.0
    %1148 = vmatprep.subr.mxu0 0.0
    %1149 = vmatpush1.msra.mxu0 0.0
    %1150 = vmatprep.subr.mxu0 0.0
    %1151 = vmatpush1.msra.mxu0 0.0
    %1152 = vmatprep.subr.mxu0 0.0
    %1153 = vmatpush1.msra.mxu0 0.0
    %1154 = vmatprep.subr.mxu0 0.0
    %1155 = vmatpush1.msra.mxu0 0.0
    %1156 = vmatprep.subr.mxu0 0.0
    %1157 = vmatpush1.msra.mxu0 0.0
    %1158 = vmatprep.subr.mxu0 0.0
    %1159 = vmatpush1.msra.mxu0 0.0
    %1160 = vmatprep.subr.mxu0 0.0
    %1161 = vmatpush1.msra.mxu0 0.0
    %1162 = vmatprep.subr.mxu0 0.0
    %1163 = vmatpush1.msra.mxu0 0.0
    %1164 = vmatprep.subr.mxu0 0.0
    %1165 = vmatpush1.msra.mxu0 0.0
    %1166 = vmatprep.subr.mxu0 0.0
    %1167 = vmatpush1.msra.mxu0 0.0
    %1168 = vmatprep.subr.mxu0 0.0
    %1169 = vmatpush1.msra.mxu0 0.0
    %1170 = vmatprep.subr.mxu0 0.0
    %1171 = vmatpush1.msra.mxu0 0.0
    %1172 = vmatprep.subr.mxu0 0.0
    %1173 = vmatpush1.msra.mxu0 0.0
    %1174 = vmatprep.subr.mxu0 0.0
    %1175 = vmatpush1.msra.mxu0 0.0
    %1176 = vmatprep.subr.mxu0 0.0
    %1177 = vmatpush1.msra.mxu0 0.0
    %1178 = vmatprep.subr.mxu0 0.0
    %1179 = vmatpush1.msra.mxu0 0.0
    %1180 = vmatprep.subr.mxu0 0.0
    %1181 = vmatpush1.msra.mxu0 0.0
    %1182 = vmatprep.subr.mxu0 0.0
    %1183 = vmatpush1.msra.mxu0 0.0
    %1184 = vmatprep.subr.mxu0 0.0
    %1185 = vmatpush1.msra.mxu0 0.0
    %1186 = vmatprep.subr.mxu0 0.0
    %1187 = vmatpush1.msra.mxu0 0.0
    %1188 = vmatprep.subr.mxu0 0.0
    %1189 = vmatpush1.msra.mxu0 0.0
    %1190 = vmatprep.mubr.f32.mxu0 0.0
    %1191 = vmatmul.mubr.f32.gmra.mrb[0].mxu0 %v1124
    %v1192 = vpop.f32.mrb[0].mxu0
    %v1193 = vadd.f32 0.0, %v1192
    %v1194 = vpop.f32.mrb[0].mxu0
    %1195 = vdwg.mxu0
    %v1196 = vadd.f32 %v1120, %v1193
    %v1197 = vxor.u32 %v1196, 2147483648
    %v1198 = vmul.f32 %v1197, 1.442695
    %v1199 = vpow.pop %v1198
    %v1200 = vadd.f32 %v1199, 1.0
    %v1201 = vrcp.pop %v1200
    %v1202 = vmul.f32 1.0, %v1201
    %v1203 = vtanh.pop %v1196
    %1205 = vrot.lane.b32.xlu0 %v1104, 32
    %v1206 = vpop.permute.xlu0 %1205
    %v1208 = vmul.f32 %v1202, %v1206
    %1210 = vrot.lane.b32.xlu0 %v1203, 64
    %v1211 = vpop.permute.xlu0 %1210
    %v1213 = vmul.f32 %v1202, %v1211
    %1215 = vrot.lane.b32.xlu0 %v1213, 32
    %v1216 = vpop.permute.xlu0 %1215
    %v1218 = vadd.f32 %v1208, %v1216
    %v1219 = vtanh.pop %v1218
    %1221 = vrot.lane.b32.xlu0 %v1219, 64
    %v1222 = vpop.permute.xlu0 %1221
    %v1224 = vmul.f32 %v1202, %v1222
    %1225 = vrot.lane.b32.xlu0 %v944, 96
    %v1226 = vpop.permute.xlu0 %1225
    %v1228 = vadd.f32 %v1224, %v1226
    %1230 = vrot.lane.b32.xlu0 %v1228, 32
    %v1231 = vpop.permute.xlu0 %1230
    %1233 = vst.msk [vmem:[#allocation3 + $0x8] sm:$0xff] %vm207, %v1231
    %v1234 = vld [vmem:[#allocation4 + $0x10] sm:$0xff]
    %1236 = vrot.lane.b32.xlu0 %v1224, 32
    %v1237 = vpop.permute.xlu0 %1236
    %v1238 = vsel %vm207, %v1237, 0
    %1240 = vmatprep.subr.mxu0 0.0
    %1241 = vmatpush1.msra.mxu0 %v938
    %1242 = vmatprep.subr.mxu0 0.0
    %1243 = vmatpush1.msra.mxu0 %v939
    %1244 = vmatprep.subr.mxu0 0.0
    %1245 = vmatpush1.msra.mxu0 %v940
    %1246 = vmatprep.subr.mxu0 0.0
    %1247 = vmatpush1.msra.mxu0 %v941
    %1248 = vmatprep.subr.mxu0 0.0
    %1249 = vmatpush1.msra.mxu0 0.0
    %1250 = vmatprep.subr.mxu0 0.0
    %1251 = vmatpush1.msra.mxu0 0.0
    %1252 = vmatprep.subr.mxu0 0.0
    %1253 = vmatpush1.msra.mxu0 0.0
    %1254 = vmatprep.subr.mxu0 0.0
    %1255 = vmatpush1.msra.mxu0 0.0
    %1256 = vmatprep.subr.mxu0 0.0
    %1257 = vmatpush1.msra.mxu0 0.0
    %1258 = vmatprep.subr.mxu0 0.0
    %1259 = vmatpush1.msra.mxu0 0.0
    %1260 = vmatprep.subr.mxu0 0.0
    %1261 = vmatpush1.msra.mxu0 0.0
    %1262 = vmatprep.subr.mxu0 0.0
    %1263 = vmatpush1.msra.mxu0 0.0
    %1264 = vmatprep.subr.mxu0 0.0
    %1265 = vmatpush1.msra.mxu0 0.0
    %1266 = vmatprep.subr.mxu0 0.0
    %1267 = vmatpush1.msra.mxu0 0.0
    %1268 = vmatprep.subr.mxu0 0.0
    %1269 = vmatpush1.msra.mxu0 0.0
    %1270 = vmatprep.subr.mxu0 0.0
    %1271 = vmatpush1.msra.mxu0 0.0
    %1272 = vmatprep.subr.mxu0 0.0
    %1273 = vmatpush1.msra.mxu0 0.0
    %1274 = vmatprep.subr.mxu0 0.0
    %1275 = vmatpush1.msra.mxu0 0.0
    %1276 = vmatprep.subr.mxu0 0.0
    %1277 = vmatpush1.msra.mxu0 0.0
    %1278 = vmatprep.subr.mxu0 0.0
    %1279 = vmatpush1.msra.mxu0 0.0
    %1280 = vmatprep.subr.mxu0 0.0
    %1281 = vmatpush1.msra.mxu0 0.0
    %1282 = vmatprep.subr.mxu0 0.0
    %1283 = vmatpush1.msra.mxu0 0.0
    %1284 = vmatprep.subr.mxu0 0.0
    %1285 = vmatpush1.msra.mxu0 0.0
    %1286 = vmatprep.subr.mxu0 0.0
    %1287 = vmatpush1.msra.mxu0 0.0
    %1288 = vmatprep.subr.mxu0 0.0
    %1289 = vmatpush1.msra.mxu0 0.0
    %1290 = vmatprep.subr.mxu0 0.0
    %1291 = vmatpush1.msra.mxu0 0.0
    %1292 = vmatprep.subr.mxu0 0.0
    %1293 = vmatpush1.msra.mxu0 0.0
    %1294 = vmatprep.subr.mxu0 0.0
    %1295 = vmatpush1.msra.mxu0 0.0
    %1296 = vmatprep.subr.mxu0 0.0
    %1297 = vmatpush1.msra.mxu0 0.0
    %1298 = vmatprep.subr.mxu0 0.0
    %1299 = vmatpush1.msra.mxu0 0.0
    %1300 = vmatprep.subr.mxu0 0.0
    %1301 = vmatpush1.msra.mxu0 0.0
    %1302 = vmatprep.subr.mxu0 0.0
    %1303 = vmatpush1.msra.mxu0 0.0
    %1304 = vmatprep.mubr.f32.mxu0 0.0
    %1305 = vmatmul.mubr.f32.gmra.mrb[0].mxu0 %v1238
    %v1306 = vpop.f32.mrb[0].mxu0
    %v1307 = vadd.f32 0.0, %v1306
    %v1308 = vpop.f32.mrb[0].mxu0
    %1309 = vdwg.mxu0
    %v1310 = vadd.f32 %v1234, %v1307
    %v1311 = vxor.u32 %v1310, 2147483648
    %v1312 = vmul.f32 %v1311, 1.442695
    %v1313 = vpow.pop %v1312
    %v1314 = vadd.f32 %v1313, 1.0
    %v1315 = vrcp.pop %v1314
    %v1316 = vmul.f32 1.0, %v1315
    %v1317 = vtanh.pop %v1310
    %v1318 = vmul.f32 %v1316, %v1218
    %1320 = vrot.lane.b32.xlu0 %v1317, 64
    %v1321 = vpop.permute.xlu0 %1320
    %v1323 = vmul.f32 %v1316, %v1321
    %1325 = vrot.lane.b32.xlu0 %v1323, 32
    %v1326 = vpop.permute.xlu0 %1325
    %v1328 = vadd.f32 %v1318, %v1326
    %v1329 = vtanh.pop %v1328
    %1331 = vrot.lane.b32.xlu0 %v1329, 64
    %v1332 = vpop.permute.xlu0 %1331
    %v1334 = vmul.f32 %v1316, %v1332
    %1335 = vrot.lane.b32.xlu0 %v945, 96
    %v1336 = vpop.permute.xlu0 %1335
    %v1338 = vadd.f32 %v1334, %v1336
    %1340 = vrot.lane.b32.xlu0 %v1338, 32
    %v1341 = vpop.permute.xlu0 %1340
    %1343 = vst.msk [vmem:[#allocation3 + $0x10] sm:$0xff] %vm207, %v1341
    %v1344 = vld [vmem:[#allocation4 + $0x18] sm:$0xff]
    %1346 = vrot.lane.b32.xlu0 %v1334, 32
    %v1347 = vpop.permute.xlu0 %1346
    %v1348 = vsel %vm207, %v1347, 0
    %1350 = vmatprep.subr.mxu0 0.0
    %1351 = vmatpush1.msra.mxu0 %v938
    %1352 = vmatprep.subr.mxu0 0.0
    %1353 = vmatpush1.msra.mxu0 %v939
    %1354 = vmatprep.subr.mxu0 0.0
    %1355 = vmatpush1.msra.mxu0 %v940
    %1356 = vmatprep.subr.mxu0 0.0
    %1357 = vmatpush1.msra.mxu0 %v941
    %1358 = vmatprep.subr.mxu0 0.0
    %1359 = vmatpush1.msra.mxu0 0.0
    %1360 = vmatprep.subr.mxu0 0.0
    %1361 = vmatpush1.msra.mxu0 0.0
    %1362 = vmatprep.subr.mxu0 0.0
    %1363 = vmatpush1.msra.mxu0 0.0
    %1364 = vmatprep.subr.mxu0 0.0
    %1365 = vmatpush1.msra.mxu0 0.0
    %1366 = vmatprep.subr.mxu0 0.0
    %1367 = vmatpush1.msra.mxu0 0.0
    %1368 = vmatprep.subr.mxu0 0.0
    %1369 = vmatpush1.msra.mxu0 0.0
    %1370 = vmatprep.subr.mxu0 0.0
    %1371 = vmatpush1.msra.mxu0 0.0
    %1372 = vmatprep.subr.mxu0 0.0
    %1373 = vmatpush1.msra.mxu0 0.0
    %1374 = vmatprep.subr.mxu0 0.0
    %1375 = vmatpush1.msra.mxu0 0.0
    %1376 = vmatprep.subr.mxu0 0.0
    %1377 = vmatpush1.msra.mxu0 0.0
    %1378 = vmatprep.subr.mxu0 0.0
    %1379 = vmatpush1.msra.mxu0 0.0
    %1380 = vmatprep.subr.mxu0 0.0
    %1381 = vmatpush1.msra.mxu0 0.0
    %1382 = vmatprep.subr.mxu0 0.0
    %1383 = vmatpush1.msra.mxu0 0.0
    %1384 = vmatprep.subr.mxu0 0.0
    %1385 = vmatpush1.msra.mxu0 0.0
    %1386 = vmatprep.subr.mxu0 0.0
    %1387 = vmatpush1.msra.mxu0 0.0
    %1388 = vmatprep.subr.mxu0 0.0
    %1389 = vmatpush1.msra.mxu0 0.0
    %1390 = vmatprep.subr.mxu0 0.0
    %1391 = vmatpush1.msra.mxu0 0.0
    %1392 = vmatprep.subr.mxu0 0.0
    %1393 = vmatpush1.msra.mxu0 0.0
    %1394 = vmatprep.subr.mxu0 0.0
    %1395 = vmatpush1.msra.mxu0 0.0
    %1396 = vmatprep.subr.mxu0 0.0
    %1397 = vmatpush1.msra.mxu0 0.0
    %1398 = vmatprep.subr.mxu0 0.0
    %1399 = vmatpush1.msra.mxu0 0.0
    %1400 = vmatprep.subr.mxu0 0.0
    %1401 = vmatpush1.msra.mxu0 0.0
    %1402 = vmatprep.subr.mxu0 0.0
    %1403 = vmatpush1.msra.mxu0 0.0
    %1404 = vmatprep.subr.mxu0 0.0
    %1405 = vmatpush1.msra.mxu0 0.0
    %1406 = vmatprep.subr.mxu0 0.0
    %1407 = vmatpush1.msra.mxu0 0.0
    %1408 = vmatprep.subr.mxu0 0.0
    %1409 = vmatpush1.msra.mxu0 0.0
    %1410 = vmatprep.subr.mxu0 0.0
    %1411 = vmatpush1.msra.mxu0 0.0
    %1412 = vmatprep.subr.mxu0 0.0
    %1413 = vmatpush1.msra.mxu0 0.0
    %1414 = vmatprep.mubr.f32.mxu0 0.0
    %1415 = vmatmul.mubr.f32.gmra.mrb[0].mxu0 %v1348
    %v1416 = vpop.f32.mrb[0].mxu0
    %v1417 = vadd.f32 0.0, %v1416
    %v1418 = vpop.f32.mrb[0].mxu0
    %1419 = vdwg.mxu0
    %v1420 = vadd.f32 %v1344, %v1417
    %v1421 = vxor.u32 %v1420, 2147483648
    %v1422 = vmul.f32 %v1421, 1.442695
    %v1423 = vpow.pop %v1422
    %v1424 = vadd.f32 %v1423, 1.0
    %v1425 = vrcp.pop %v1424
    %v1426 = vmul.f32 1.0, %v1425
    %v1427 = vtanh.pop %v1420
    %v1428 = vmul.f32 %v1426, %v1328
    %1430 = vrot.lane.b32.xlu0 %v1427, 64
    %v1431 = vpop.permute.xlu0 %1430
    %v1433 = vmul.f32 %v1426, %v1431
    %1435 = vrot.lane.b32.xlu0 %v1433, 32
    %v1436 = vpop.permute.xlu0 %1435
    %v1438 = vadd.f32 %v1428, %v1436
    %v1439 = vtanh.pop %v1438
    %1441 = vrot.lane.b32.xlu0 %v1439, 64
    %v1442 = vpop.permute.xlu0 %1441
    %v1444 = vmul.f32 %v1426, %v1442
    %1445 = vrot.lane.b32.xlu0 %v946, 96
    %v1446 = vpop.permute.xlu0 %1445
    %v1448 = vadd.f32 %v1444, %v1446
    %1450 = vrot.lane.b32.xlu0 %v1448, 32
    %v1451 = vpop.permute.xlu0 %1450
    %1453 = vst.msk [vmem:[#allocation3 + $0x18] sm:$0xff] %vm207, %v1451
    %v1454 = vld [vmem:[#allocation4 + $0x20] sm:$0xff]
    %1456 = vrot.lane.b32.xlu0 %v1444, 32
    %v1457 = vpop.permute.xlu0 %1456
    %v1458 = vsel %vm207, %v1457, 0
    %1460 = vmatprep.subr.mxu0 0.0
    %1461 = vmatpush1.msra.mxu0 %v938
    %1462 = vmatprep.subr.mxu0 0.0
    %1463 = vmatpush1.msra.mxu0 %v939
    %1464 = vmatprep.subr.mxu0 0.0
    %1465 = vmatpush1.msra.mxu0 %v940
    %1466 = vmatprep.subr.mxu0 0.0
    %1467 = vmatpush1.msra.mxu0 %v941
    %1468 = vmatprep.subr.mxu0 0.0
    %1469 = vmatpush1.msra.mxu0 0.0
    %1470 = vmatprep.subr.mxu0 0.0
    %1471 = vmatpush1.msra.mxu0 0.0
    %1472 = vmatprep.subr.mxu0 0.0
    %1473 = vmatpush1.msra.mxu0 0.0
    %1474 = vmatprep.subr.mxu0 0.0
    %1475 = vmatpush1.msra.mxu0 0.0
    %1476 = vmatprep.subr.mxu0 0.0
    %1477 = vmatpush1.msra.mxu0 0.0
    %1478 = vmatprep.subr.mxu0 0.0
    %1479 = vmatpush1.msra.mxu0 0.0
    %1480 = vmatprep.subr.mxu0 0.0
    %1481 = vmatpush1.msra.mxu0 0.0
    %1482 = vmatprep.subr.mxu0 0.0
    %1483 = vmatpush1.msra.mxu0 0.0
    %1484 = vmatprep.subr.mxu0 0.0
    %1485 = vmatpush1.msra.mxu0 0.0
    %1486 = vmatprep.subr.mxu0 0.0
    %1487 = vmatpush1.msra.mxu0 0.0
    %1488 = vmatprep.subr.mxu0 0.0
    %1489 = vmatpush1.msra.mxu0 0.0
    %1490 = vmatprep.subr.mxu0 0.0
    %1491 = vmatpush1.msra.mxu0 0.0
    %1492 = vmatprep.subr.mxu0 0.0
    %1493 = vmatpush1.msra.mxu0 0.0
    %1494 = vmatprep.subr.mxu0 0.0
    %1495 = vmatpush1.msra.mxu0 0.0
    %1496 = vmatprep.subr.mxu0 0.0
    %1497 = vmatpush1.msra.mxu0 0.0
    %1498 = vmatprep.subr.mxu0 0.0
    %1499 = vmatpush1.msra.mxu0 0.0
    %1500 = vmatprep.subr.mxu0 0.0
    %1501 = vmatpush1.msra.mxu0 0.0
    %1502 = vmatprep.subr.mxu0 0.0
    %1503 = vmatpush1.msra.mxu0 0.0
    %1504 = vmatprep.subr.mxu0 0.0
    %1505 = vmatpush1.msra.mxu0 0.0
    %1506 = vmatprep.subr.mxu0 0.0
    %1507 = vmatpush1.msra.mxu0 0.0
    %1508 = vmatprep.subr.mxu0 0.0
    %1509 = vmatpush1.msra.mxu0 0.0
    %1510 = vmatprep.subr.mxu0 0.0
    %1511 = vmatpush1.msra.mxu0 0.0
    %1512 = vmatprep.subr.mxu0 0.0
    %1513 = vmatpush1.msra.mxu0 0.0
    %1514 = vmatprep.subr.mxu0 0.0
    %1515 = vmatpush1.msra.mxu0 0.0
    %1516 = vmatprep.subr.mxu0 0.0
    %1517 = vmatpush1.msra.mxu0 0.0
    %1518 = vmatprep.subr.mxu0 0.0
    %1519 = vmatpush1.msra.mxu0 0.0
    %1520 = vmatprep.subr.mxu0 0.0
    %1521 = vmatpush1.msra.mxu0 0.0
    %1522 = vmatprep.subr.mxu0 0.0
    %1523 = vmatpush1.msra.mxu0 0.0
    %1524 = vmatprep.mubr.f32.mxu0 0.0
    %1525 = vmatmul.mubr.f32.gmra.mrb[0].mxu0 %v1458
    %v1526 = vpop.f32.mrb[0].mxu0
    %v1527 = vadd.f32 0.0, %v1526
    %v1528 = vpop.f32.mrb[0].mxu0
    %1529 = vdwg.mxu0
    %v1530 = vadd.f32 %v1454, %v1527
    %v1531 = vxor.u32 %v1530, 2147483648
    %v1532 = vmul.f32 %v1531, 1.442695
    %v1533 = vpow.pop %v1532
    %v1534 = vadd.f32 %v1533, 1.0
    %v1535 = vrcp.pop %v1534
    %v1536 = vmul.f32 1.0, %v1535
    %v1537 = vtanh.pop %v1530
    %v1538 = vmul.f32 %v1536, %v1438
    %1540 = vrot.lane.b32.xlu0 %v1537, 64
    %v1541 = vpop.permute.xlu0 %1540
    %v1543 = vmul.f32 %v1536, %v1541
    %1545 = vrot.lane.b32.xlu0 %v1543, 32
    %v1546 = vpop.permute.xlu0 %1545
    %v1548 = vadd.f32 %v1538, %v1546
    %v1549 = vtanh.pop %v1548
    %1551 = vrot.lane.b32.xlu0 %v1549, 64
    %v1552 = vpop.permute.xlu0 %1551
    %v1554 = vmul.f32 %v1536, %v1552
    %1555 = vrot.lane.b32.xlu0 %v947, 96
    %v1556 = vpop.permute.xlu0 %1555
    %v1558 = vadd.f32 %v1554, %v1556
    %1560 = vrot.lane.b32.xlu0 %v1558, 32
    %v1561 = vpop.permute.xlu0 %1560
    %1563 = vst.msk [vmem:[#allocation3 + $0x20] sm:$0xff] %vm207, %v1561
    %v1564 = vld [vmem:[#allocation4 + $0x28] sm:$0xff]
    %1566 = vrot.lane.b32.xlu0 %v1554, 32
    %v1567 = vpop.permute.xlu0 %1566
    %v1568 = vsel %vm207, %v1567, 0
    %1570 = vmatprep.subr.mxu0 0.0
    %1571 = vmatpush1.msra.mxu0 %v938
    %1572 = vmatprep.subr.mxu0 0.0
    %1573 = vmatpush1.msra.mxu0 %v939
    %1574 = vmatprep.subr.mxu0 0.0
    %1575 = vmatpush1.msra.mxu0 %v940
    %1576 = vmatprep.subr.mxu0 0.0
    %1577 = vmatpush1.msra.mxu0 %v941
    %1578 = vmatprep.subr.mxu0 0.0
    %1579 = vmatpush1.msra.mxu0 0.0
    %1580 = vmatprep.subr.mxu0 0.0
    %1581 = vmatpush1.msra.mxu0 0.0
    %1582 = vmatprep.subr.mxu0 0.0
    %1583 = vmatpush1.msra.mxu0 0.0
    %1584 = vmatprep.subr.mxu0 0.0
    %1585 = vmatpush1.msra.mxu0 0.0
    %1586 = vmatprep.subr.mxu0 0.0
    %1587 = vmatpush1.msra.mxu0 0.0
    %1588 = vmatprep.subr.mxu0 0.0
    %1589 = vmatpush1.msra.mxu0 0.0
    %1590 = vmatprep.subr.mxu0 0.0
    %1591 = vmatpush1.msra.mxu0 0.0
    %1592 = vmatprep.subr.mxu0 0.0
    %1593 = vmatpush1.msra.mxu0 0.0
    %1594 = vmatprep.subr.mxu0 0.0
    %1595 = vmatpush1.msra.mxu0 0.0
    %1596 = vmatprep.subr.mxu0 0.0
    %1597 = vmatpush1.msra.mxu0 0.0
    %1598 = vmatprep.subr.mxu0 0.0
    %1599 = vmatpush1.msra.mxu0 0.0
    %1600 = vmatprep.subr.mxu0 0.0
    %1601 = vmatpush1.msra.mxu0 0.0
    %1602 = vmatprep.subr.mxu0 0.0
    %1603 = vmatpush1.msra.mxu0 0.0
    %1604 = vmatprep.subr.mxu0 0.0
    %1605 = vmatpush1.msra.mxu0 0.0
    %1606 = vmatprep.subr.mxu0 0.0
    %1607 = vmatpush1.msra.mxu0 0.0
    %1608 = vmatprep.subr.mxu0 0.0
    %1609 = vmatpush1.msra.mxu0 0.0
    %1610 = vmatprep.subr.mxu0 0.0
    %1611 = vmatpush1.msra.mxu0 0.0
    %1612 = vmatprep.subr.mxu0 0.0
    %1613 = vmatpush1.msra.mxu0 0.0
    %1614 = vmatprep.subr.mxu0 0.0
    %1615 = vmatpush1.msra.mxu0 0.0
    %1616 = vmatprep.subr.mxu0 0.0
    %1617 = vmatpush1.msra.mxu0 0.0
    %1618 = vmatprep.subr.mxu0 0.0
    %1619 = vmatpush1.msra.mxu0 0.0
    %1620 = vmatprep.subr.mxu0 0.0
    %1621 = vmatpush1.msra.mxu0 0.0
    %1622 = vmatprep.subr.mxu0 0.0
    %1623 = vmatpush1.msra.mxu0 0.0
    %1624 = vmatprep.subr.mxu0 0.0
    %1625 = vmatpush1.msra.mxu0 0.0
    %1626 = vmatprep.subr.mxu0 0.0
    %1627 = vmatpush1.msra.mxu0 0.0
    %1628 = vmatprep.subr.mxu0 0.0
    %1629 = vmatpush1.msra.mxu0 0.0
    %1630 = vmatprep.subr.mxu0 0.0
    %1631 = vmatpush1.msra.mxu0 0.0
    %1632 = vmatprep.subr.mxu0 0.0
    %1633 = vmatpush1.msra.mxu0 0.0
    %1634 = vmatprep.mubr.f32.mxu0 0.0
    %1635 = vmatmul.mubr.f32.gmra.mrb[0].mxu0 %v1568
    %v1636 = vpop.f32.mrb[0].mxu0
    %v1637 = vadd.f32 0.0, %v1636
    %v1638 = vpop.f32.mrb[0].mxu0
    %1639 = vdwg.mxu0
    %v1640 = vadd.f32 %v1564, %v1637
    %v1641 = vxor.u32 %v1640, 2147483648
    %v1642 = vmul.f32 %v1641, 1.442695
    %v1643 = vpow.pop %v1642
    %v1644 = vadd.f32 %v1643, 1.0
    %v1645 = vrcp.pop %v1644
    %v1646 = vmul.f32 1.0, %v1645
    %v1647 = vtanh.pop %v1640
    %v1648 = vmul.f32 %v1646, %v1548
    %1650 = vrot.lane.b32.xlu0 %v1647, 64
    %v1651 = vpop.permute.xlu0 %1650
    %v1653 = vmul.f32 %v1646, %v1651
    %1655 = vrot.lane.b32.xlu0 %v1653, 32
    %v1656 = vpop.permute.xlu0 %1655
    %v1658 = vadd.f32 %v1648, %v1656
    %v1659 = vtanh.pop %v1658
    %1661 = vrot.lane.b32.xlu0 %v1659, 64
    %v1662 = vpop.permute.xlu0 %1661
    %v1664 = vmul.f32 %v1646, %v1662
    %1665 = vrot.lane.b32.xlu0 %v948, 96
    %v1666 = vpop.permute.xlu0 %1665
    %v1668 = vadd.f32 %v1664, %v1666
    %1670 = vrot.lane.b32.xlu0 %v1668, 32
    %v1671 = vpop.permute.xlu0 %1670
    %1673 = vst.msk [vmem:[#allocation3 + $0x28] sm:$0xff] %vm207, %v1671
    %v1674 = vld [vmem:[#allocation4 + $0x30] sm:$0xff]
    %1676 = vrot.lane.b32.xlu0 %v1664, 32
    %v1677 = vpop.permute.xlu0 %1676
    %v1678 = vsel %vm207, %v1677, 0
    %1680 = vmatprep.subr.mxu0 0.0
    %1681 = vmatpush1.msra.mxu0 %v938
    %1682 = vmatprep.subr.mxu0 0.0
    %1683 = vmatpush1.msra.mxu0 %v939
    %1684 = vmatprep.subr.mxu0 0.0
    %1685 = vmatpush1.msra.mxu0 %v940
    %1686 = vmatprep.subr.mxu0 0.0
    %1687 = vmatpush1.msra.mxu0 %v941
    %1688 = vmatprep.subr.mxu0 0.0
    %1689 = vmatpush1.msra.mxu0 0.0
    %1690 = vmatprep.subr.mxu0 0.0
    %1691 = vmatpush1.msra.mxu0 0.0
    %1692 = vmatprep.subr.mxu0 0.0
    %1693 = vmatpush1.msra.mxu0 0.0
    %1694 = vmatprep.subr.mxu0 0.0
    %1695 = vmatpush1.msra.mxu0 0.0
    %1696 = vmatprep.subr.mxu0 0.0
    %1697 = vmatpush1.msra.mxu0 0.0
    %1698 = vmatprep.subr.mxu0 0.0
    %1699 = vmatpush1.msra.mxu0 0.0
    %1700 = vmatprep.subr.mxu0 0.0
    %1701 = vmatpush1.msra.mxu0 0.0
    %1702 = vmatprep.subr.mxu0 0.0
    %1703 = vmatpush1.msra.mxu0 0.0
    %1704 = vmatprep.subr.mxu0 0.0
    %1705 = vmatpush1.msra.mxu0 0.0
    %1706 = vmatprep.subr.mxu0 0.0
    %1707 = vmatpush1.msra.mxu0 0.0
    %1708 = vmatprep.subr.mxu0 0.0
    %1709 = vmatpush1.msra.mxu0 0.0
    %1710 = vmatprep.subr.mxu0 0.0
    %1711 = vmatpush1.msra.mxu0 0.0
    %1712 = vmatprep.subr.mxu0 0.0
    %1713 = vmatpush1.msra.mxu0 0.0
    %1714 = vmatprep.subr.mxu0 0.0
    %1715 = vmatpush1.msra.mxu0 0.0
    %1716 = vmatprep.subr.mxu0 0.0
    %1717 = vmatpush1.msra.mxu0 0.0
    %1718 = vmatprep.subr.mxu0 0.0
    %1719 = vmatpush1.msra.mxu0 0.0
    %1720 = vmatprep.subr.mxu0 0.0
    %1721 = vmatpush1.msra.mxu0 0.0
    %1722 = vmatprep.subr.mxu0 0.0
    %1723 = vmatpush1.msra.mxu0 0.0
    %1724 = vmatprep.subr.mxu0 0.0
    %1725 = vmatpush1.msra.mxu0 0.0
    %1726 = vmatprep.subr.mxu0 0.0
    %1727 = vmatpush1.msra.mxu0 0.0
    %1728 = vmatprep.subr.mxu0 0.0
    %1729 = vmatpush1.msra.mxu0 0.0
    %1730 = vmatprep.subr.mxu0 0.0
    %1731 = vmatpush1.msra.mxu0 0.0
    %1732 = vmatprep.subr.mxu0 0.0
    %1733 = vmatpush1.msra.mxu0 0.0
    %1734 = vmatprep.subr.mxu0 0.0
    %1735 = vmatpush1.msra.mxu0 0.0
    %1736 = vmatprep.subr.mxu0 0.0
    %1737 = vmatpush1.msra.mxu0 0.0
    %1738 = vmatprep.subr.mxu0 0.0
    %1739 = vmatpush1.msra.mxu0 0.0
    %1740 = vmatprep.subr.mxu0 0.0
    %1741 = vmatpush1.msra.mxu0 0.0
    %1742 = vmatprep.subr.mxu0 0.0
    %1743 = vmatpush1.msra.mxu0 0.0
    %1744 = vmatprep.mubr.f32.mxu0 0.0
    %1745 = vmatmul.mubr.f32.gmra.mrb[0].mxu0 %v1678
    %v1746 = vpop.f32.mrb[0].mxu0
    %v1747 = vadd.f32 0.0, %v1746
    %v1748 = vpop.f32.mrb[0].mxu0
    %1749 = vdwg.mxu0
    %v1750 = vadd.f32 %v1674, %v1747
    %v1751 = vxor.u32 %v1750, 2147483648
    %v1752 = vmul.f32 %v1751, 1.442695
    %v1753 = vpow.pop %v1752
    %v1754 = vadd.f32 %v1753, 1.0
    %v1755 = vrcp.pop %v1754
    %v1756 = vmul.f32 1.0, %v1755
    %v1757 = vtanh.pop %v1750
    %v1758 = vmul.f32 %v1756, %v1658
    %1760 = vrot.lane.b32.xlu0 %v1757, 64
    %v1761 = vpop.permute.xlu0 %1760
    %v1763 = vmul.f32 %v1756, %v1761
    %1765 = vrot.lane.b32.xlu0 %v1763, 32
    %v1766 = vpop.permute.xlu0 %1765
    %v1768 = vadd.f32 %v1758, %v1766
    %v1769 = vtanh.pop %v1768
    %1771 = vrot.lane.b32.xlu0 %v1769, 64
    %v1772 = vpop.permute.xlu0 %1771
    %v1774 = vmul.f32 %v1756, %v1772
    %1775 = vrot.lane.b32.xlu0 %v949, 96
    %v1776 = vpop.permute.xlu0 %1775
    %v1778 = vadd.f32 %v1774, %v1776
    %1780 = vrot.lane.b32.xlu0 %v1778, 32
    %v1781 = vpop.permute.xlu0 %1780
    %1783 = vst.msk [vmem:[#allocation3 + $0x30] sm:$0xff] %vm207, %v1781
    %v1784 = vld [vmem:[#allocation4 + $0x38] sm:$0xff]
    %1786 = vrot.lane.b32.xlu0 %v1774, 32
    %v1787 = vpop.permute.xlu0 %1786
    %v1788 = vsel %vm207, %v1787, 0
    %1790 = vmatprep.subr.mxu0 0.0
    %1791 = vmatpush1.msra.mxu0 %v938
    %1792 = vmatprep.subr.mxu0 0.0
    %1793 = vmatpush1.msra.mxu0 %v939
    %1794 = vmatprep.subr.mxu0 0.0
    %1795 = vmatpush1.msra.mxu0 %v940
    %1796 = vmatprep.subr.mxu0 0.0
    %1797 = vmatpush1.msra.mxu0 %v941
    %1798 = vmatprep.subr.mxu0 0.0
    %1799 = vmatpush1.msra.mxu0 0.0
    %1800 = vmatprep.subr.mxu0 0.0
    %1801 = vmatpush1.msra.mxu0 0.0
    %1802 = vmatprep.subr.mxu0 0.0
    %1803 = vmatpush1.msra.mxu0 0.0
    %1804 = vmatprep.subr.mxu0 0.0
    %1805 = vmatpush1.msra.mxu0 0.0
    %1806 = vmatprep.subr.mxu0 0.0
    %1807 = vmatpush1.msra.mxu0 0.0
    %1808 = vmatprep.subr.mxu0 0.0
    %1809 = vmatpush1.msra.mxu0 0.0
    %1810 = vmatprep.subr.mxu0 0.0
    %1811 = vmatpush1.msra.mxu0 0.0
    %1812 = vmatprep.subr.mxu0 0.0
    %1813 = vmatpush1.msra.mxu0 0.0
    %1814 = vmatprep.subr.mxu0 0.0
    %1815 = vmatpush1.msra.mxu0 0.0
    %1816 = vmatprep.subr.mxu0 0.0
    %1817 = vmatpush1.msra.mxu0 0.0
    %1818 = vmatprep.subr.mxu0 0.0
    %1819 = vmatpush1.msra.mxu0 0.0
    %1820 = vmatprep.subr.mxu0 0.0
    %1821 = vmatpush1.msra.mxu0 0.0
    %1822 = vmatprep.subr.mxu0 0.0
    %1823 = vmatpush1.msra.mxu0 0.0
    %1824 = vmatprep.subr.mxu0 0.0
    %1825 = vmatpush1.msra.mxu0 0.0
    %1826 = vmatprep.subr.mxu0 0.0
    %1827 = vmatpush1.msra.mxu0 0.0
    %1828 = vmatprep.subr.mxu0 0.0
    %1829 = vmatpush1.msra.mxu0 0.0
    %1830 = vmatprep.subr.mxu0 0.0
    %1831 = vmatpush1.msra.mxu0 0.0
    %1832 = vmatprep.subr.mxu0 0.0
    %1833 = vmatpush1.msra.mxu0 0.0
    %1834 = vmatprep.subr.mxu0 0.0
    %1835 = vmatpush1.msra.mxu0 0.0
    %1836 = vmatprep.subr.mxu0 0.0
    %1837 = vmatpush1.msra.mxu0 0.0
    %1838 = vmatprep.subr.mxu0 0.0
    %1839 = vmatpush1.msra.mxu0 0.0
    %1840 = vmatprep.subr.mxu0 0.0
    %1841 = vmatpush1.msra.mxu0 0.0
    %1842 = vmatprep.subr.mxu0 0.0
    %1843 = vmatpush1.msra.mxu0 0.0
    %1844 = vmatprep.subr.mxu0 0.0
    %1845 = vmatpush1.msra.mxu0 0.0
    %1846 = vmatprep.subr.mxu0 0.0
    %1847 = vmatpush1.msra.mxu0 0.0
    %1848 = vmatprep.subr.mxu0 0.0
    %1849 = vmatpush1.msra.mxu0 0.0
    %1850 = vmatprep.subr.mxu0 0.0
    %1851 = vmatpush1.msra.mxu0 0.0
    %1852 = vmatprep.subr.mxu0 0.0
    %1853 = vmatpush1.msra.mxu0 0.0
    %1854 = vmatprep.mubr.f32.mxu0 0.0
    %1855 = vmatmul.mubr.f32.gmra.mrb[0].mxu0 %v1788
    %v1856 = vpop.f32.mrb[0].mxu0
    %v1857 = vadd.f32 0.0, %v1856
    %v1858 = vpop.f32.mrb[0].mxu0
    %1859 = vdwg.mxu0
    %v1860 = vadd.f32 %v1784, %v1857
    %v1861 = vxor.u32 %v1860, 2147483648
    %v1862 = vmul.f32 %v1861, 1.442695
    %v1863 = vpow.pop %v1862
    %v1864 = vadd.f32 %v1863, 1.0
    %v1865 = vrcp.pop %v1864
    %v1866 = vmul.f32 1.0, %v1865
    %v1867 = vtanh.pop %v1860
    %v1868 = vmul.f32 %v1866, %v1768
    %1870 = vrot.lane.b32.xlu0 %v1867, 64
    %v1871 = vpop.permute.xlu0 %1870
    %v1873 = vmul.f32 %v1866, %v1871
    %1875 = vrot.lane.b32.xlu0 %v1873, 32
    %v1876 = vpop.permute.xlu0 %1875
    %v1878 = vadd.f32 %v1868, %v1876
    %v1879 = vtanh.pop %v1878
    %1881 = vrot.lane.b32.xlu0 %v1879, 64
    %v1882 = vpop.permute.xlu0 %1881
    %v1884 = vmul.f32 %v1866, %v1882
    %1885 = vrot.lane.b32.xlu0 %v950, 96
    %v1886 = vpop.permute.xlu0 %1885
    %v1888 = vadd.f32 %v1884, %v1886
    %1890 = vrot.lane.b32.xlu0 %v1888, 32
    %v1891 = vpop.permute.xlu0 %1890
    %1893 = vst.msk [vmem:[#allocation3 + $0x38] sm:$0xff] %vm207, %v1891
    %v1894 = vld [vmem:[#allocation5 + $0x68] sm:$0xff]
    %v1895 = vld [vmem:[#allocation5 + $0x70] sm:$0xff]
    %v1896 = vld [vmem:[#allocation5 + $0x78] sm:$0xff]
    %v1897 = vld [vmem:[#allocation5 + $0x80] sm:$0xff]
    %v1898 = vld [vmem:[#allocation5 + $0x88] sm:$0xff]
    %v1899 = vld [vmem:[#allocation5 + $0x90] sm:$0xff]
    %v1900 = vld [vmem:[#allocation5 + $0x98] sm:$0xff]
    %v1901 = vld [vmem:[#allocation5 + $0xa0] sm:$0xff]
    %v1902 = vld [vmem:[#allocation5 + $0x16a] sm:$0x1]
    %v1903 = vld [vmem:[#allocation3] sm:$0xff]
    %v1904 = vld [vmem:[#allocation3 + $0x8] sm:$0xff]
    %v1905 = vld [vmem:[#allocation3 + $0x10] sm:$0xff]
    %v1906 = vld [vmem:[#allocation3 + $0x18] sm:$0xff]
    %v1907 = vld [vmem:[#allocation3 + $0x20] sm:$0xff]
    %v1908 = vld [vmem:[#allocation3 + $0x28] sm:$0xff]
    %v1909 = vld [vmem:[#allocation3 + $0x30] sm:$0xff]
    %v1910 = vld [vmem:[#allocation3 + $0x38] sm:$0xff]
    %v1911 = vlaneseq
    %v1912 = vshrl.u32 %v1911, 7
    %v1913 = vsub.s32 0, %v1912
    %v1914 = vrot.slane %v1902, %v1913
    %v1916 = vsel %vm207, %v1903, 0
    %v1919 = vsel %vm207, %v1904, 0
    %v1922 = vsel %vm207, %v1905, 0
    %v1925 = vsel %vm207, %v1906, 0
    %v1928 = vsel %vm207, %v1907, 0
    %v1931 = vsel %vm207, %v1908, 0
    %v1934 = vsel %vm207, %v1909, 0
    %v1937 = vsel %vm207, %v1910, 0
    %1939 = vmatprep.subr.mxu0 0.0
    %1940 = vmatpush1.msra.mxu0 %v1894
    %1941 = vmatprep.subr.mxu0 0.0
    %1942 = vmatpush1.msra.mxu0 %v1895
    %1943 = vmatprep.subr.mxu0 0.0
    %1944 = vmatpush1.msra.mxu0 %v1896
    %1945 = vmatprep.subr.mxu0 0.0
    %1946 = vmatpush1.msra.mxu0 %v1897
    %1947 = vmatprep.subr.mxu0 0.0
    %1948 = vmatpush1.msra.mxu0 0.0
    %1949 = vmatprep.subr.mxu0 0.0
    %1950 = vmatpush1.msra.mxu0 0.0
    %1951 = vmatprep.subr.mxu0 0.0
    %1952 = vmatpush1.msra.mxu0 0.0
    %1953 = vmatprep.subr.mxu0 0.0
    %1954 = vmatpush1.msra.mxu0 0.0
    %1955 = vmatprep.subr.mxu0 0.0
    %1956 = vmatpush1.msra.mxu0 0.0
    %1957 = vmatprep.subr.mxu0 0.0
    %1958 = vmatpush1.msra.mxu0 0.0
    %1959 = vmatprep.subr.mxu0 0.0
    %1960 = vmatpush1.msra.mxu0 0.0
    %1961 = vmatprep.subr.mxu0 0.0
    %1962 = vmatpush1.msra.mxu0 0.0
    %1963 = vmatprep.subr.mxu0 0.0
    %1964 = vmatpush1.msra.mxu0 0.0
    %1965 = vmatprep.subr.mxu0 0.0
    %1966 = vmatpush1.msra.mxu0 0.0
    %1967 = vmatprep.subr.mxu0 0.0
    %1968 = vmatpush1.msra.mxu0 0.0
    %1969 = vmatprep.subr.mxu0 0.0
    %1970 = vmatpush1.msra.mxu0 0.0
    %1971 = vmatprep.subr.mxu0 0.0
    %1972 = vmatpush1.msra.mxu0 0.0
    %1973 = vmatprep.subr.mxu0 0.0
    %1974 = vmatpush1.msra.mxu0 0.0
    %1975 = vmatprep.subr.mxu0 0.0
    %1976 = vmatpush1.msra.mxu0 0.0
    %1977 = vmatprep.subr.mxu0 0.0
    %1978 = vmatpush1.msra.mxu0 0.0
    %1979 = vmatprep.subr.mxu0 0.0
    %1980 = vmatpush1.msra.mxu0 0.0
    %1981 = vmatprep.subr.mxu0 0.0
    %1982 = vmatpush1.msra.mxu0 0.0
    %1983 = vmatprep.subr.mxu0 0.0
    %1984 = vmatpush1.msra.mxu0 0.0
    %1985 = vmatprep.subr.mxu0 0.0
    %1986 = vmatpush1.msra.mxu0 0.0
    %1987 = vmatprep.subr.mxu0 0.0
    %1988 = vmatpush1.msra.mxu0 0.0
    %1989 = vmatprep.subr.mxu0 0.0
    %1990 = vmatpush1.msra.mxu0 0.0
    %1991 = vmatprep.subr.mxu0 0.0
    %1992 = vmatpush1.msra.mxu0 0.0
    %1993 = vmatprep.subr.mxu0 0.0
    %1994 = vmatpush1.msra.mxu0 0.0
    %1995 = vmatprep.subr.mxu0 0.0
    %1996 = vmatpush1.msra.mxu0 0.0
    %1997 = vmatprep.subr.mxu0 0.0
    %1998 = vmatpush1.msra.mxu0 0.0
    %1999 = vmatprep.subr.mxu0 0.0
    %2000 = vmatpush1.msra.mxu0 0.0
    %2001 = vmatprep.subr.mxu0 0.0
    %2002 = vmatpush1.msra.mxu0 0.0
    %2003 = vmatprep.mubr.f32.mxu0 0.0
    %2004 = vmatmul.mubr.f32.gmra.mrb[0].mxu0 %v1916
    %v2005 = vpop.f32.mrb[0].mxu0
    %v2006 = vadd.f32 %v1914, %v2005
    %v2007 = vpop.f32.mrb[0].mxu0
    %2008 = vmatprep.mubr.f32.mxu0 0.0
    %2009 = vmatmul.mubr.f32.gmra.mrb[0].mxu0 %v1919
    %v2010 = vpop.f32.mrb[0].mxu0
    %v2011 = vadd.f32 %v1914, %v2010
    %v2012 = vpop.f32.mrb[0].mxu0
    %2013 = vmatprep.mubr.f32.mxu0 0.0
    %2014 = vmatmul.mubr.f32.gmra.mrb[0].mxu0 %v1922
    %v2015 = vpop.f32.mrb[0].mxu0
    %v2016 = vadd.f32 %v1914, %v2015
    %v2017 = vpop.f32.mrb[0].mxu0
    %2018 = vmatprep.mubr.f32.mxu0 0.0
    %2019 = vmatmul.mubr.f32.gmra.mrb[0].mxu0 %v1925
    %v2020 = vpop.f32.mrb[0].mxu0
    %v2021 = vadd.f32 %v1914, %v2020
    %v2022 = vpop.f32.mrb[0].mxu0
    %2023 = vmatprep.mubr.f32.mxu0 0.0
    %2024 = vmatmul.mubr.f32.gmra.mrb[0].mxu0 %v1928
    %v2025 = vpop.f32.mrb[0].mxu0
    %v2026 = vadd.f32 %v1914, %v2025
    %v2027 = vpop.f32.mrb[0].mxu0
    %2028 = vmatprep.mubr.f32.mxu0 0.0
    %2029 = vmatmul.mubr.f32.gmra.mrb[0].mxu0 %v1931
    %v2030 = vpop.f32.mrb[0].mxu0
    %v2031 = vadd.f32 %v1914, %v2030
    %v2032 = vpop.f32.mrb[0].mxu0
    %2033 = vmatprep.mubr.f32.mxu0 0.0
    %2034 = vmatmul.mubr.f32.gmra.mrb[0].mxu0 %v1934
    %v2035 = vpop.f32.mrb[0].mxu0
    %v2036 = vadd.f32 %v1914, %v2035
    %v2037 = vpop.f32.mrb[0].mxu0
    %2038 = vmatprep.mubr.f32.mxu0 0.0
    %2039 = vmatmul.mubr.f32.gmra.mrb[0].mxu0 %v1937
    %v2040 = vpop.f32.mrb[0].mxu0
    %v2041 = vadd.f32 %v1914, %v2040
    %v2042 = vpop.f32.mrb[0].mxu0
    %2043 = vdwg.mxu0
    %2044 = vst [vmem:[#allocation4] sm:$0xff] %v2006
    %2045 = vst [vmem:[#allocation4 + $0x8] sm:$0xff] %v2011
    %2046 = vst [vmem:[#allocation4 + $0x10] sm:$0xff] %v2016
    %2047 = vst [vmem:[#allocation4 + $0x18] sm:$0xff] %v2021
    %2048 = vst [vmem:[#allocation4 + $0x20] sm:$0xff] %v2026
    %2049 = vst [vmem:[#allocation4 + $0x28] sm:$0xff] %v2031
    %2050 = vst [vmem:[#allocation4 + $0x30] sm:$0xff] %v2036
    %2051 = vst [vmem:[#allocation4 + $0x38] sm:$0xff] %v2041
    %v2052 = vld [vmem:[#allocation4] sm:$0xff]
    %v2053 = vxor.u32 %v2052, 2147483648
    %v2054 = vmul.f32 %v2053, 1.442695
    %v2055 = vpow.pop %v2054
    %v2056 = vadd.f32 %v2055, 1.0
    %v2057 = vrcp.pop %v2056
    %v2058 = vmul.f32 1.0, %v2057
    %v2059 = vtanh.pop %v2052
    %2061 = vrot.lane.b32.xlu0 %v2059, 64
    %v2062 = vpop.permute.xlu0 %2061
    %v2064 = vmul.f32 %v2058, %v2062
    %v2065 = vtanh.pop %v2064
    %2067 = vrot.lane.b32.xlu0 %v2065, 96
    %v2068 = vpop.permute.xlu0 %2067
    %v2070 = vmul.f32 %v2058, %v2068
    %2071 = vrot.lane.b32.xlu0 %v1903, 96
    %v2072 = vpop.permute.xlu0 %2071
    %v2074 = vadd.f32 %v2070, %v2072
    %2076 = vrot.lane.b32.xlu0 %v2074, 32
    %v2077 = vpop.permute.xlu0 %2076
    %2079 = vst.msk [vmem:[#allocation2] sm:$0xff] %vm207, %v2077
    %v2080 = vld [vmem:[#allocation4 + $0x8] sm:$0xff]
    %2082 = vrot.lane.b32.xlu0 %v2070, 32
    %v2083 = vpop.permute.xlu0 %2082
    %v2084 = vsel %vm207, %v2083, 0
    %2086 = vmatprep.subr.mxu0 0.0
    %2087 = vmatpush1.msra.mxu0 %v1898
    %2088 = vmatprep.subr.mxu0 0.0
    %2089 = vmatpush1.msra.mxu0 %v1899
    %2090 = vmatprep.subr.mxu0 0.0
    %2091 = vmatpush1.msra.mxu0 %v1900
    %2092 = vmatprep.subr.mxu0 0.0
    %2093 = vmatpush1.msra.mxu0 %v1901
    %2094 = vmatprep.subr.mxu0 0.0
    %2095 = vmatpush1.msra.mxu0 0.0
    %2096 = vmatprep.subr.mxu0 0.0
    %2097 = vmatpush1.msra.mxu0 0.0
    %2098 = vmatprep.subr.mxu0 0.0
    %2099 = vmatpush1.msra.mxu0 0.0
    %2100 = vmatprep.subr.mxu0 0.0
    %2101 = vmatpush1.msra.mxu0 0.0
    %2102 = vmatprep.subr.mxu0 0.0
    %2103 = vmatpush1.msra.mxu0 0.0
    %2104 = vmatprep.subr.mxu0 0.0
    %2105 = vmatpush1.msra.mxu0 0.0
    %2106 = vmatprep.subr.mxu0 0.0
    %2107 = vmatpush1.msra.mxu0 0.0
    %2108 = vmatprep.subr.mxu0 0.0
    %2109 = vmatpush1.msra.mxu0 0.0
    %2110 = vmatprep.subr.mxu0 0.0
    %2111 = vmatpush1.msra.mxu0 0.0
    %2112 = vmatprep.subr.mxu0 0.0
    %2113 = vmatpush1.msra.mxu0 0.0
    %2114 = vmatprep.subr.mxu0 0.0
    %2115 = vmatpush1.msra.mxu0 0.0
    %2116 = vmatprep.subr.mxu0 0.0
    %2117 = vmatpush1.msra.mxu0 0.0
    %2118 = vmatprep.subr.mxu0 0.0
    %2119 = vmatpush1.msra.mxu0 0.0
    %2120 = vmatprep.subr.mxu0 0.0
    %2121 = vmatpush1.msra.mxu0 0.0
    %2122 = vmatprep.subr.mxu0 0.0
    %2123 = vmatpush1.msra.mxu0 0.0
    %2124 = vmatprep.subr.mxu0 0.0
    %2125 = vmatpush1.msra.mxu0 0.0
    %2126 = vmatprep.subr.mxu0 0.0
    %2127 = vmatpush1.msra.mxu0 0.0
    %2128 = vmatprep.subr.mxu0 0.0
    %2129 = vmatpush1.msra.mxu0 0.0
    %2130 = vmatprep.subr.mxu0 0.0
    %2131 = vmatpush1.msra.mxu0 0.0
    %2132 = vmatprep.subr.mxu0 0.0
    %2133 = vmatpush1.msra.mxu0 0.0
    %2134 = vmatprep.subr.mxu0 0.0
    %2135 = vmatpush1.msra.mxu0 0.0
    %2136 = vmatprep.subr.mxu0 0.0
    %2137 = vmatpush1.msra.mxu0 0.0
    %2138 = vmatprep.subr.mxu0 0.0
    %2139 = vmatpush1.msra.mxu0 0.0
    %2140 = vmatprep.subr.mxu0 0.0
    %2141 = vmatpush1.msra.mxu0 0.0
    %2142 = vmatprep.subr.mxu0 0.0
    %2143 = vmatpush1.msra.mxu0 0.0
    %2144 = vmatprep.subr.mxu0 0.0
    %2145 = vmatpush1.msra.mxu0 0.0
    %2146 = vmatprep.subr.mxu0 0.0
    %2147 = vmatpush1.msra.mxu0 0.0
    %2148 = vmatprep.subr.mxu0 0.0
    %2149 = vmatpush1.msra.mxu0 0.0
    %2150 = vmatprep.mubr.f32.mxu0 0.0
    %2151 = vmatmul.mubr.f32.gmra.mrb[0].mxu0 %v2084
    %v2152 = vpop.f32.mrb[0].mxu0
    %v2153 = vadd.f32 0.0, %v2152
    %v2154 = vpop.f32.mrb[0].mxu0
    %2155 = vdwg.mxu0
    %v2156 = vadd.f32 %v2080, %v2153
    %v2157 = vxor.u32 %v2156, 2147483648
    %v2158 = vmul.f32 %v2157, 1.442695
    %v2159 = vpow.pop %v2158
    %v2160 = vadd.f32 %v2159, 1.0
    %v2161 = vrcp.pop %v2160
    %v2162 = vmul.f32 1.0, %v2161
    %v2163 = vtanh.pop %v2156
    %2165 = vrot.lane.b32.xlu0 %v2064, 32
    %v2166 = vpop.permute.xlu0 %2165
    %v2168 = vmul.f32 %v2162, %v2166
    %2170 = vrot.lane.b32.xlu0 %v2163, 64
    %v2171 = vpop.permute.xlu0 %2170
    %v2173 = vmul.f32 %v2162, %v2171
    %2175 = vrot.lane.b32.xlu0 %v2173, 32
    %v2176 = vpop.permute.xlu0 %2175
    %v2178 = vadd.f32 %v2168, %v2176
    %v2179 = vtanh.pop %v2178
    %2181 = vrot.lane.b32.xlu0 %v2179, 64
    %v2182 = vpop.permute.xlu0 %2181
    %v2184 = vmul.f32 %v2162, %v2182
    %2185 = vrot.lane.b32.xlu0 %v1904, 96
    %v2186 = vpop.permute.xlu0 %2185
    %v2188 = vadd.f32 %v2184, %v2186
    %2190 = vrot.lane.b32.xlu0 %v2188, 32
    %v2191 = vpop.permute.xlu0 %2190
    %2193 = vst.msk [vmem:[#allocation2 + $0x8] sm:$0xff] %vm207, %v2191
    %v2194 = vld [vmem:[#allocation4 + $0x10] sm:$0xff]
    %2196 = vrot.lane.b32.xlu0 %v2184, 32
    %v2197 = vpop.permute.xlu0 %2196
    %v2198 = vsel %vm207, %v2197, 0
    %2200 = vmatprep.subr.mxu0 0.0
    %2201 = vmatpush1.msra.mxu0 %v1898
    %2202 = vmatprep.subr.mxu0 0.0
    %2203 = vmatpush1.msra.mxu0 %v1899
    %2204 = vmatprep.subr.mxu0 0.0
    %2205 = vmatpush1.msra.mxu0 %v1900
    %2206 = vmatprep.subr.mxu0 0.0
    %2207 = vmatpush1.msra.mxu0 %v1901
    %2208 = vmatprep.subr.mxu0 0.0
    %2209 = vmatpush1.msra.mxu0 0.0
    %2210 = vmatprep.subr.mxu0 0.0
    %2211 = vmatpush1.msra.mxu0 0.0
    %2212 = vmatprep.subr.mxu0 0.0
    %2213 = vmatpush1.msra.mxu0 0.0
    %2214 = vmatprep.subr.mxu0 0.0
    %2215 = vmatpush1.msra.mxu0 0.0
    %2216 = vmatprep.subr.mxu0 0.0
    %2217 = vmatpush1.msra.mxu0 0.0
    %2218 = vmatprep.subr.mxu0 0.0
    %2219 = vmatpush1.msra.mxu0 0.0
    %2220 = vmatprep.subr.mxu0 0.0
    %2221 = vmatpush1.msra.mxu0 0.0
    %2222 = vmatprep.subr.mxu0 0.0
    %2223 = vmatpush1.msra.mxu0 0.0
    %2224 = vmatprep.subr.mxu0 0.0
    %2225 = vmatpush1.msra.mxu0 0.0
    %2226 = vmatprep.subr.mxu0 0.0
    %2227 = vmatpush1.msra.mxu0 0.0
    %2228 = vmatprep.subr.mxu0 0.0
    %2229 = vmatpush1.msra.mxu0 0.0
    %2230 = vmatprep.subr.mxu0 0.0
    %2231 = vmatpush1.msra.mxu0 0.0
    %2232 = vmatprep.subr.mxu0 0.0
    %2233 = vmatpush1.msra.mxu0 0.0
    %2234 = vmatprep.subr.mxu0 0.0
    %2235 = vmatpush1.msra.mxu0 0.0
    %2236 = vmatprep.subr.mxu0 0.0
    %2237 = vmatpush1.msra.mxu0 0.0
    %2238 = vmatprep.subr.mxu0 0.0
    %2239 = vmatpush1.msra.mxu0 0.0
    %2240 = vmatprep.subr.mxu0 0.0
    %2241 = vmatpush1.msra.mxu0 0.0
    %2242 = vmatprep.subr.mxu0 0.0
    %2243 = vmatpush1.msra.mxu0 0.0
    %2244 = vmatprep.subr.mxu0 0.0
    %2245 = vmatpush1.msra.mxu0 0.0
    %2246 = vmatprep.subr.mxu0 0.0
    %2247 = vmatpush1.msra.mxu0 0.0
    %2248 = vmatprep.subr.mxu0 0.0
    %2249 = vmatpush1.msra.mxu0 0.0
    %2250 = vmatprep.subr.mxu0 0.0
    %2251 = vmatpush1.msra.mxu0 0.0
    %2252 = vmatprep.subr.mxu0 0.0
    %2253 = vmatpush1.msra.mxu0 0.0
    %2254 = vmatprep.subr.mxu0 0.0
    %2255 = vmatpush1.msra.mxu0 0.0
    %2256 = vmatprep.subr.mxu0 0.0
    %2257 = vmatpush1.msra.mxu0 0.0
    %2258 = vmatprep.subr.mxu0 0.0
    %2259 = vmatpush1.msra.mxu0 0.0
    %2260 = vmatprep.subr.mxu0 0.0
    %2261 = vmatpush1.msra.mxu0 0.0
    %2262 = vmatprep.subr.mxu0 0.0
    %2263 = vmatpush1.msra.mxu0 0.0
    %2264 = vmatprep.mubr.f32.mxu0 0.0
    %2265 = vmatmul.mubr.f32.gmra.mrb[0].mxu0 %v2198
    %v2266 = vpop.f32.mrb[0].mxu0
    %v2267 = vadd.f32 0.0, %v2266
    %v2268 = vpop.f32.mrb[0].mxu0
    %2269 = vdwg.mxu0
    %v2270 = vadd.f32 %v2194, %v2267
    %v2271 = vxor.u32 %v2270, 2147483648
    %v2272 = vmul.f32 %v2271, 1.442695
    %v2273 = vpow.pop %v2272
    %v2274 = vadd.f32 %v2273, 1.0
    %v2275 = vrcp.pop %v2274
    %v2276 = vmul.f32 1.0, %v2275
    %v2277 = vtanh.pop %v2270
    %v2278 = vmul.f32 %v2276, %v2178
    %2280 = vrot.lane.b32.xlu0 %v2277, 64
    %v2281 = vpop.permute.xlu0 %2280
    %v2283 = vmul.f32 %v2276, %v2281
    %2285 = vrot.lane.b32.xlu0 %v2283, 32
    %v2286 = vpop.permute.xlu0 %2285
    %v2288 = vadd.f32 %v2278, %v2286
    %v2289 = vtanh.pop %v2288
    %2291 = vrot.lane.b32.xlu0 %v2289, 64
    %v2292 = vpop.permute.xlu0 %2291
    %v2294 = vmul.f32 %v2276, %v2292
    %2295 = vrot.lane.b32.xlu0 %v1905, 96
    %v2296 = vpop.permute.xlu0 %2295
    %v2298 = vadd.f32 %v2294, %v2296
    %2300 = vrot.lane.b32.xlu0 %v2298, 32
    %v2301 = vpop.permute.xlu0 %2300
    %2303 = vst.msk [vmem:[#allocation2 + $0x10] sm:$0xff] %vm207, %v2301
    %v2304 = vld [vmem:[#allocation4 + $0x18] sm:$0xff]
    %2306 = vrot.lane.b32.xlu0 %v2294, 32
    %v2307 = vpop.permute.xlu0 %2306
    %v2308 = vsel %vm207, %v2307, 0
    %2310 = vmatprep.subr.mxu0 0.0
    %2311 = vmatpush1.msra.mxu0 %v1898
    %2312 = vmatprep.subr.mxu0 0.0
    %2313 = vmatpush1.msra.mxu0 %v1899
    %2314 = vmatprep.subr.mxu0 0.0
    %2315 = vmatpush1.msra.mxu0 %v1900
    %2316 = vmatprep.subr.mxu0 0.0
    %2317 = vmatpush1.msra.mxu0 %v1901
    %2318 = vmatprep.subr.mxu0 0.0
    %2319 = vmatpush1.msra.mxu0 0.0
    %2320 = vmatprep.subr.mxu0 0.0
    %2321 = vmatpush1.msra.mxu0 0.0
    %2322 = vmatprep.subr.mxu0 0.0
    %2323 = vmatpush1.msra.mxu0 0.0
    %2324 = vmatprep.subr.mxu0 0.0
    %2325 = vmatpush1.msra.mxu0 0.0
    %2326 = vmatprep.subr.mxu0 0.0
    %2327 = vmatpush1.msra.mxu0 0.0
    %2328 = vmatprep.subr.mxu0 0.0
    %2329 = vmatpush1.msra.mxu0 0.0
    %2330 = vmatprep.subr.mxu0 0.0
    %2331 = vmatpush1.msra.mxu0 0.0
    %2332 = vmatprep.subr.mxu0 0.0
    %2333 = vmatpush1.msra.mxu0 0.0
    %2334 = vmatprep.subr.mxu0 0.0
    %2335 = vmatpush1.msra.mxu0 0.0
    %2336 = vmatprep.subr.mxu0 0.0
    %2337 = vmatpush1.msra.mxu0 0.0
    %2338 = vmatprep.subr.mxu0 0.0
    %2339 = vmatpush1.msra.mxu0 0.0
    %2340 = vmatprep.subr.mxu0 0.0
    %2341 = vmatpush1.msra.mxu0 0.0
    %2342 = vmatprep.subr.mxu0 0.0
    %2343 = vmatpush1.msra.mxu0 0.0
    %2344 = vmatprep.subr.mxu0 0.0
    %2345 = vmatpush1.msra.mxu0 0.0
    %2346 = vmatprep.subr.mxu0 0.0
    %2347 = vmatpush1.msra.mxu0 0.0
    %2348 = vmatprep.subr.mxu0 0.0
    %2349 = vmatpush1.msra.mxu0 0.0
    %2350 = vmatprep.subr.mxu0 0.0
    %2351 = vmatpush1.msra.mxu0 0.0
    %2352 = vmatprep.subr.mxu0 0.0
    %2353 = vmatpush1.msra.mxu0 0.0
    %2354 = vmatprep.subr.mxu0 0.0
    %2355 = vmatpush1.msra.mxu0 0.0
    %2356 = vmatprep.subr.mxu0 0.0
    %2357 = vmatpush1.msra.mxu0 0.0
    %2358 = vmatprep.subr.mxu0 0.0
    %2359 = vmatpush1.msra.mxu0 0.0
    %2360 = vmatprep.subr.mxu0 0.0
    %2361 = vmatpush1.msra.mxu0 0.0
    %2362 = vmatprep.subr.mxu0 0.0
    %2363 = vmatpush1.msra.mxu0 0.0
    %2364 = vmatprep.subr.mxu0 0.0
    %2365 = vmatpush1.msra.mxu0 0.0
    %2366 = vmatprep.subr.mxu0 0.0
    %2367 = vmatpush1.msra.mxu0 0.0
    %2368 = vmatprep.subr.mxu0 0.0
    %2369 = vmatpush1.msra.mxu0 0.0
    %2370 = vmatprep.subr.mxu0 0.0
    %2371 = vmatpush1.msra.mxu0 0.0
    %2372 = vmatprep.subr.mxu0 0.0
    %2373 = vmatpush1.msra.mxu0 0.0
    %2374 = vmatprep.mubr.f32.mxu0 0.0
    %2375 = vmatmul.mubr.f32.gmra.mrb[0].mxu0 %v2308
    %v2376 = vpop.f32.mrb[0].mxu0
    %v2377 = vadd.f32 0.0, %v2376
    %v2378 = vpop.f32.mrb[0].mxu0
    %2379 = vdwg.mxu0
    %v2380 = vadd.f32 %v2304, %v2377
    %v2381 = vxor.u32 %v2380, 2147483648
    %v2382 = vmul.f32 %v2381, 1.442695
    %v2383 = vpow.pop %v2382
    %v2384 = vadd.f32 %v2383, 1.0
    %v2385 = vrcp.pop %v2384
    %v2386 = vmul.f32 1.0, %v2385
    %v2387 = vtanh.pop %v2380
    %v2388 = vmul.f32 %v2386, %v2288
    %2390 = vrot.lane.b32.xlu0 %v2387, 64
    %v2391 = vpop.permute.xlu0 %2390
    %v2393 = vmul.f32 %v2386, %v2391
    %2395 = vrot.lane.b32.xlu0 %v2393, 32
    %v2396 = vpop.permute.xlu0 %2395
    %v2398 = vadd.f32 %v2388, %v2396
    %v2399 = vtanh.pop %v2398
    %2401 = vrot.lane.b32.xlu0 %v2399, 64
    %v2402 = vpop.permute.xlu0 %2401
    %v2404 = vmul.f32 %v2386, %v2402
    %2405 = vrot.lane.b32.xlu0 %v1906, 96
    %v2406 = vpop.permute.xlu0 %2405
    %v2408 = vadd.f32 %v2404, %v2406
    %2410 = vrot.lane.b32.xlu0 %v2408, 32
    %v2411 = vpop.permute.xlu0 %2410
    %2413 = vst.msk [vmem:[#allocation2 + $0x18] sm:$0xff] %vm207, %v2411
    %v2414 = vld [vmem:[#allocation4 + $0x20] sm:$0xff]
    %2416 = vrot.lane.b32.xlu0 %v2404, 32
    %v2417 = vpop.permute.xlu0 %2416
    %v2418 = vsel %vm207, %v2417, 0
    %2420 = vmatprep.subr.mxu0 0.0
    %2421 = vmatpush1.msra.mxu0 %v1898
    %2422 = vmatprep.subr.mxu0 0.0
    %2423 = vmatpush1.msra.mxu0 %v1899
    %2424 = vmatprep.subr.mxu0 0.0
    %2425 = vmatpush1.msra.mxu0 %v1900
    %2426 = vmatprep.subr.mxu0 0.0
    %2427 = vmatpush1.msra.mxu0 %v1901
    %2428 = vmatprep.subr.mxu0 0.0
    %2429 = vmatpush1.msra.mxu0 0.0
    %2430 = vmatprep.subr.mxu0 0.0
    %2431 = vmatpush1.msra.mxu0 0.0
    %2432 = vmatprep.subr.mxu0 0.0
    %2433 = vmatpush1.msra.mxu0 0.0
    %2434 = vmatprep.subr.mxu0 0.0
    %2435 = vmatpush1.msra.mxu0 0.0
    %2436 = vmatprep.subr.mxu0 0.0
    %2437 = vmatpush1.msra.mxu0 0.0
    %2438 = vmatprep.subr.mxu0 0.0
    %2439 = vmatpush1.msra.mxu0 0.0
    %2440 = vmatprep.subr.mxu0 0.0
    %2441 = vmatpush1.msra.mxu0 0.0
    %2442 = vmatprep.subr.mxu0 0.0
    %2443 = vmatpush1.msra.mxu0 0.0
    %2444 = vmatprep.subr.mxu0 0.0
    %2445 = vmatpush1.msra.mxu0 0.0
    %2446 = vmatprep.subr.mxu0 0.0
    %2447 = vmatpush1.msra.mxu0 0.0
    %2448 = vmatprep.subr.mxu0 0.0
    %2449 = vmatpush1.msra.mxu0 0.0
    %2450 = vmatprep.subr.mxu0 0.0
    %2451 = vmatpush1.msra.mxu0 0.0
    %2452 = vmatprep.subr.mxu0 0.0
    %2453 = vmatpush1.msra.mxu0 0.0
    %2454 = vmatprep.subr.mxu0 0.0
    %2455 = vmatpush1.msra.mxu0 0.0
    %2456 = vmatprep.subr.mxu0 0.0
    %2457 = vmatpush1.msra.mxu0 0.0
    %2458 = vmatprep.subr.mxu0 0.0
    %2459 = vmatpush1.msra.mxu0 0.0
    %2460 = vmatprep.subr.mxu0 0.0
    %2461 = vmatpush1.msra.mxu0 0.0
    %2462 = vmatprep.subr.mxu0 0.0
    %2463 = vmatpush1.msra.mxu0 0.0
    %2464 = vmatprep.subr.mxu0 0.0
    %2465 = vmatpush1.msra.mxu0 0.0
    %2466 = vmatprep.subr.mxu0 0.0
    %2467 = vmatpush1.msra.mxu0 0.0
    %2468 = vmatprep.subr.mxu0 0.0
    %2469 = vmatpush1.msra.mxu0 0.0
    %2470 = vmatprep.subr.mxu0 0.0
    %2471 = vmatpush1.msra.mxu0 0.0
    %2472 = vmatprep.subr.mxu0 0.0
    %2473 = vmatpush1.msra.mxu0 0.0
    %2474 = vmatprep.subr.mxu0 0.0
    %2475 = vmatpush1.msra.mxu0 0.0
    %2476 = vmatprep.subr.mxu0 0.0
    %2477 = vmatpush1.msra.mxu0 0.0
    %2478 = vmatprep.subr.mxu0 0.0
    %2479 = vmatpush1.msra.mxu0 0.0
    %2480 = vmatprep.subr.mxu0 0.0
    %2481 = vmatpush1.msra.mxu0 0.0
    %2482 = vmatprep.subr.mxu0 0.0
    %2483 = vmatpush1.msra.mxu0 0.0
    %2484 = vmatprep.mubr.f32.mxu0 0.0
    %2485 = vmatmul.mubr.f32.gmra.mrb[0].mxu0 %v2418
    %v2486 = vpop.f32.mrb[0].mxu0
    %v2487 = vadd.f32 0.0, %v2486
    %v2488 = vpop.f32.mrb[0].mxu0
    %2489 = vdwg.mxu0
    %v2490 = vadd.f32 %v2414, %v2487
    %v2491 = vxor.u32 %v2490, 2147483648
    %v2492 = vmul.f32 %v2491, 1.442695
    %v2493 = vpow.pop %v2492
    %v2494 = vadd.f32 %v2493, 1.0
    %v2495 = vrcp.pop %v2494
    %v2496 = vmul.f32 1.0, %v2495
    %v2497 = vtanh.pop %v2490
    %v2498 = vmul.f32 %v2496, %v2398
    %2500 = vrot.lane.b32.xlu0 %v2497, 64
    %v2501 = vpop.permute.xlu0 %2500
    %v2503 = vmul.f32 %v2496, %v2501
    %2505 = vrot.lane.b32.xlu0 %v2503, 32
    %v2506 = vpop.permute.xlu0 %2505
    %v2508 = vadd.f32 %v2498, %v2506
    %v2509 = vtanh.pop %v2508
    %2511 = vrot.lane.b32.xlu0 %v2509, 64
    %v2512 = vpop.permute.xlu0 %2511
    %v2514 = vmul.f32 %v2496, %v2512
    %2515 = vrot.lane.b32.xlu0 %v1907, 96
    %v2516 = vpop.permute.xlu0 %2515
    %v2518 = vadd.f32 %v2514, %v2516
    %2520 = vrot.lane.b32.xlu0 %v2518, 32
    %v2521 = vpop.permute.xlu0 %2520
    %2523 = vst.msk [vmem:[#allocation2 + $0x20] sm:$0xff] %vm207, %v2521
    %v2524 = vld [vmem:[#allocation4 + $0x28] sm:$0xff]
    %2526 = vrot.lane.b32.xlu0 %v2514, 32
    %v2527 = vpop.permute.xlu0 %2526
    %v2528 = vsel %vm207, %v2527, 0
    %2530 = vmatprep.subr.mxu0 0.0
    %2531 = vmatpush1.msra.mxu0 %v1898
    %2532 = vmatprep.subr.mxu0 0.0
    %2533 = vmatpush1.msra.mxu0 %v1899
    %2534 = vmatprep.subr.mxu0 0.0
    %2535 = vmatpush1.msra.mxu0 %v1900
    %2536 = vmatprep.subr.mxu0 0.0
    %2537 = vmatpush1.msra.mxu0 %v1901
    %2538 = vmatprep.subr.mxu0 0.0
    %2539 = vmatpush1.msra.mxu0 0.0
    %2540 = vmatprep.subr.mxu0 0.0
    %2541 = vmatpush1.msra.mxu0 0.0
    %2542 = vmatprep.subr.mxu0 0.0
    %2543 = vmatpush1.msra.mxu0 0.0
    %2544 = vmatprep.subr.mxu0 0.0
    %2545 = vmatpush1.msra.mxu0 0.0
    %2546 = vmatprep.subr.mxu0 0.0
    %2547 = vmatpush1.msra.mxu0 0.0
    %2548 = vmatprep.subr.mxu0 0.0
    %2549 = vmatpush1.msra.mxu0 0.0
    %2550 = vmatprep.subr.mxu0 0.0
    %2551 = vmatpush1.msra.mxu0 0.0
    %2552 = vmatprep.subr.mxu0 0.0
    %2553 = vmatpush1.msra.mxu0 0.0
    %2554 = vmatprep.subr.mxu0 0.0
    %2555 = vmatpush1.msra.mxu0 0.0
    %2556 = vmatprep.subr.mxu0 0.0
    %2557 = vmatpush1.msra.mxu0 0.0
    %2558 = vmatprep.subr.mxu0 0.0
    %2559 = vmatpush1.msra.mxu0 0.0
    %2560 = vmatprep.subr.mxu0 0.0
    %2561 = vmatpush1.msra.mxu0 0.0
    %2562 = vmatprep.subr.mxu0 0.0
    %2563 = vmatpush1.msra.mxu0 0.0
    %2564 = vmatprep.subr.mxu0 0.0
    %2565 = vmatpush1.msra.mxu0 0.0
    %2566 = vmatprep.subr.mxu0 0.0
    %2567 = vmatpush1.msra.mxu0 0.0
    %2568 = vmatprep.subr.mxu0 0.0
    %2569 = vmatpush1.msra.mxu0 0.0
    %2570 = vmatprep.subr.mxu0 0.0
    %2571 = vmatpush1.msra.mxu0 0.0
    %2572 = vmatprep.subr.mxu0 0.0
    %2573 = vmatpush1.msra.mxu0 0.0
    %2574 = vmatprep.subr.mxu0 0.0
    %2575 = vmatpush1.msra.mxu0 0.0
    %2576 = vmatprep.subr.mxu0 0.0
    %2577 = vmatpush1.msra.mxu0 0.0
    %2578 = vmatprep.subr.mxu0 0.0
    %2579 = vmatpush1.msra.mxu0 0.0
    %2580 = vmatprep.subr.mxu0 0.0
    %2581 = vmatpush1.msra.mxu0 0.0
    %2582 = vmatprep.subr.mxu0 0.0
    %2583 = vmatpush1.msra.mxu0 0.0
    %2584 = vmatprep.subr.mxu0 0.0
    %2585 = vmatpush1.msra.mxu0 0.0
    %2586 = vmatprep.subr.mxu0 0.0
    %2587 = vmatpush1.msra.mxu0 0.0
    %2588 = vmatprep.subr.mxu0 0.0
    %2589 = vmatpush1.msra.mxu0 0.0
    %2590 = vmatprep.subr.mxu0 0.0
    %2591 = vmatpush1.msra.mxu0 0.0
    %2592 = vmatprep.subr.mxu0 0.0
    %2593 = vmatpush1.msra.mxu0 0.0
    %2594 = vmatprep.mubr.f32.mxu0 0.0
    %2595 = vmatmul.mubr.f32.gmra.mrb[0].mxu0 %v2528
    %v2596 = vpop.f32.mrb[0].mxu0
    %v2597 = vadd.f32 0.0, %v2596
    %v2598 = vpop.f32.mrb[0].mxu0
    %2599 = vdwg.mxu0
    %v2600 = vadd.f32 %v2524, %v2597
    %v2601 = vxor.u32 %v2600, 2147483648
    %v2602 = vmul.f32 %v2601, 1.442695
    %v2603 = vpow.pop %v2602
    %v2604 = vadd.f32 %v2603, 1.0
    %v2605 = vrcp.pop %v2604
    %v2606 = vmul.f32 1.0, %v2605
    %v2607 = vtanh.pop %v2600
    %v2608 = vmul.f32 %v2606, %v2508
    %2610 = vrot.lane.b32.xlu0 %v2607, 64
    %v2611 = vpop.permute.xlu0 %2610
    %v2613 = vmul.f32 %v2606, %v2611
    %2615 = vrot.lane.b32.xlu0 %v2613, 32
    %v2616 = vpop.permute.xlu0 %2615
    %v2618 = vadd.f32 %v2608, %v2616
    %v2619 = vtanh.pop %v2618
    %2621 = vrot.lane.b32.xlu0 %v2619, 64
    %v2622 = vpop.permute.xlu0 %2621
    %v2624 = vmul.f32 %v2606, %v2622
    %2625 = vrot.lane.b32.xlu0 %v1908, 96
    %v2626 = vpop.permute.xlu0 %2625
    %v2628 = vadd.f32 %v2624, %v2626
    %2630 = vrot.lane.b32.xlu0 %v2628, 32
    %v2631 = vpop.permute.xlu0 %2630
    %2633 = vst.msk [vmem:[#allocation2 + $0x28] sm:$0xff] %vm207, %v2631
    %v2634 = vld [vmem:[#allocation4 + $0x30] sm:$0xff]
    %2636 = vrot.lane.b32.xlu0 %v2624, 32
    %v2637 = vpop.permute.xlu0 %2636
    %v2638 = vsel %vm207, %v2637, 0
    %2640 = vmatprep.subr.mxu0 0.0
    %2641 = vmatpush1.msra.mxu0 %v1898
    %2642 = vmatprep.subr.mxu0 0.0
    %2643 = vmatpush1.msra.mxu0 %v1899
    %2644 = vmatprep.subr.mxu0 0.0
    %2645 = vmatpush1.msra.mxu0 %v1900
    %2646 = vmatprep.subr.mxu0 0.0
    %2647 = vmatpush1.msra.mxu0 %v1901
    %2648 = vmatprep.subr.mxu0 0.0
    %2649 = vmatpush1.msra.mxu0 0.0
    %2650 = vmatprep.subr.mxu0 0.0
    %2651 = vmatpush1.msra.mxu0 0.0
    %2652 = vmatprep.subr.mxu0 0.0
    %2653 = vmatpush1.msra.mxu0 0.0
    %2654 = vmatprep.subr.mxu0 0.0
    %2655 = vmatpush1.msra.mxu0 0.0
    %2656 = vmatprep.subr.mxu0 0.0
    %2657 = vmatpush1.msra.mxu0 0.0
    %2658 = vmatprep.subr.mxu0 0.0
    %2659 = vmatpush1.msra.mxu0 0.0
    %2660 = vmatprep.subr.mxu0 0.0
    %2661 = vmatpush1.msra.mxu0 0.0
    %2662 = vmatprep.subr.mxu0 0.0
    %2663 = vmatpush1.msra.mxu0 0.0
    %2664 = vmatprep.subr.mxu0 0.0
    %2665 = vmatpush1.msra.mxu0 0.0
    %2666 = vmatprep.subr.mxu0 0.0
    %2667 = vmatpush1.msra.mxu0 0.0
    %2668 = vmatprep.subr.mxu0 0.0
    %2669 = vmatpush1.msra.mxu0 0.0
    %2670 = vmatprep.subr.mxu0 0.0
    %2671 = vmatpush1.msra.mxu0 0.0
    %2672 = vmatprep.subr.mxu0 0.0
    %2673 = vmatpush1.msra.mxu0 0.0
    %2674 = vmatprep.subr.mxu0 0.0
    %2675 = vmatpush1.msra.mxu0 0.0
    %2676 = vmatprep.subr.mxu0 0.0
    %2677 = vmatpush1.msra.mxu0 0.0
    %2678 = vmatprep.subr.mxu0 0.0
    %2679 = vmatpush1.msra.mxu0 0.0
    %2680 = vmatprep.subr.mxu0 0.0
    %2681 = vmatpush1.msra.mxu0 0.0
    %2682 = vmatprep.subr.mxu0 0.0
    %2683 = vmatpush1.msra.mxu0 0.0
    %2684 = vmatprep.subr.mxu0 0.0
    %2685 = vmatpush1.msra.mxu0 0.0
    %2686 = vmatprep.subr.mxu0 0.0
    %2687 = vmatpush1.msra.mxu0 0.0
    %2688 = vmatprep.subr.mxu0 0.0
    %2689 = vmatpush1.msra.mxu0 0.0
    %2690 = vmatprep.subr.mxu0 0.0
    %2691 = vmatpush1.msra.mxu0 0.0
    %2692 = vmatprep.subr.mxu0 0.0
    %2693 = vmatpush1.msra.mxu0 0.0
    %2694 = vmatprep.subr.mxu0 0.0
    %2695 = vmatpush1.msra.mxu0 0.0
    %2696 = vmatprep.subr.mxu0 0.0
    %2697 = vmatpush1.msra.mxu0 0.0
    %2698 = vmatprep.subr.mxu0 0.0
    %2699 = vmatpush1.msra.mxu0 0.0
    %2700 = vmatprep.subr.mxu0 0.0
    %2701 = vmatpush1.msra.mxu0 0.0
    %2702 = vmatprep.subr.mxu0 0.0
    %2703 = vmatpush1.msra.mxu0 0.0
    %2704 = vmatprep.mubr.f32.mxu0 0.0
    %2705 = vmatmul.mubr.f32.gmra.mrb[0].mxu0 %v2638
    %v2706 = vpop.f32.mrb[0].mxu0
    %v2707 = vadd.f32 0.0, %v2706
    %v2708 = vpop.f32.mrb[0].mxu0
    %2709 = vdwg.mxu0
    %v2710 = vadd.f32 %v2634, %v2707
    %v2711 = vxor.u32 %v2710, 2147483648
    %v2712 = vmul.f32 %v2711, 1.442695
    %v2713 = vpow.pop %v2712
    %v2714 = vadd.f32 %v2713, 1.0
    %v2715 = vrcp.pop %v2714
    %v2716 = vmul.f32 1.0, %v2715
    %v2717 = vtanh.pop %v2710
    %v2718 = vmul.f32 %v2716, %v2618
    %2720 = vrot.lane.b32.xlu0 %v2717, 64
    %v2721 = vpop.permute.xlu0 %2720
    %v2723 = vmul.f32 %v2716, %v2721
    %2725 = vrot.lane.b32.xlu0 %v2723, 32
    %v2726 = vpop.permute.xlu0 %2725
    %v2728 = vadd.f32 %v2718, %v2726
    %v2729 = vtanh.pop %v2728
    %2731 = vrot.lane.b32.xlu0 %v2729, 64
    %v2732 = vpop.permute.xlu0 %2731
    %v2734 = vmul.f32 %v2716, %v2732
    %2735 = vrot.lane.b32.xlu0 %v1909, 96
    %v2736 = vpop.permute.xlu0 %2735
    %v2738 = vadd.f32 %v2734, %v2736
    %2740 = vrot.lane.b32.xlu0 %v2738, 32
    %v2741 = vpop.permute.xlu0 %2740
    %2743 = vst.msk [vmem:[#allocation2 + $0x30] sm:$0xff] %vm207, %v2741
    %v2744 = vld [vmem:[#allocation4 + $0x38] sm:$0xff]
    %2746 = vrot.lane.b32.xlu0 %v2734, 32
    %v2747 = vpop.permute.xlu0 %2746
    %v2748 = vsel %vm207, %v2747, 0
    %2750 = vmatprep.subr.mxu0 0.0
    %2751 = vmatpush1.msra.mxu0 %v1898
    %2752 = vmatprep.subr.mxu0 0.0
    %2753 = vmatpush1.msra.mxu0 %v1899
    %2754 = vmatprep.subr.mxu0 0.0
    %2755 = vmatpush1.msra.mxu0 %v1900
    %2756 = vmatprep.subr.mxu0 0.0
    %2757 = vmatpush1.msra.mxu0 %v1901
    %2758 = vmatprep.subr.mxu0 0.0
    %2759 = vmatpush1.msra.mxu0 0.0
    %2760 = vmatprep.subr.mxu0 0.0
    %2761 = vmatpush1.msra.mxu0 0.0
    %2762 = vmatprep.subr.mxu0 0.0
    %2763 = vmatpush1.msra.mxu0 0.0
    %2764 = vmatprep.subr.mxu0 0.0
    %2765 = vmatpush1.msra.mxu0 0.0
    %2766 = vmatprep.subr.mxu0 0.0
    %2767 = vmatpush1.msra.mxu0 0.0
    %2768 = vmatprep.subr.mxu0 0.0
    %2769 = vmatpush1.msra.mxu0 0.0
    %2770 = vmatprep.subr.mxu0 0.0
    %2771 = vmatpush1.msra.mxu0 0.0
    %2772 = vmatprep.subr.mxu0 0.0
    %2773 = vmatpush1.msra.mxu0 0.0
    %2774 = vmatprep.subr.mxu0 0.0
    %2775 = vmatpush1.msra.mxu0 0.0
    %2776 = vmatprep.subr.mxu0 0.0
    %2777 = vmatpush1.msra.mxu0 0.0
    %2778 = vmatprep.subr.mxu0 0.0
    %2779 = vmatpush1.msra.mxu0 0.0
    %2780 = vmatprep.subr.mxu0 0.0
    %2781 = vmatpush1.msra.mxu0 0.0
    %2782 = vmatprep.subr.mxu0 0.0
    %2783 = vmatpush1.msra.mxu0 0.0
    %2784 = vmatprep.subr.mxu0 0.0
    %2785 = vmatpush1.msra.mxu0 0.0
    %2786 = vmatprep.subr.mxu0 0.0
    %2787 = vmatpush1.msra.mxu0 0.0
    %2788 = vmatprep.subr.mxu0 0.0
    %2789 = vmatpush1.msra.mxu0 0.0
    %2790 = vmatprep.subr.mxu0 0.0
    %2791 = vmatpush1.msra.mxu0 0.0
    %2792 = vmatprep.subr.mxu0 0.0
    %2793 = vmatpush1.msra.mxu0 0.0
    %2794 = vmatprep.subr.mxu0 0.0
    %2795 = vmatpush1.msra.mxu0 0.0
    %2796 = vmatprep.subr.mxu0 0.0
    %2797 = vmatpush1.msra.mxu0 0.0
    %2798 = vmatprep.subr.mxu0 0.0
    %2799 = vmatpush1.msra.mxu0 0.0
    %2800 = vmatprep.subr.mxu0 0.0
    %2801 = vmatpush1.msra.mxu0 0.0
    %2802 = vmatprep.subr.mxu0 0.0
    %2803 = vmatpush1.msra.mxu0 0.0
    %2804 = vmatprep.subr.mxu0 0.0
    %2805 = vmatpush1.msra.mxu0 0.0
    %2806 = vmatprep.subr.mxu0 0.0
    %2807 = vmatpush1.msra.mxu0 0.0
    %2808 = vmatprep.subr.mxu0 0.0
    %2809 = vmatpush1.msra.mxu0 0.0
    %2810 = vmatprep.subr.mxu0 0.0
    %2811 = vmatpush1.msra.mxu0 0.0
    %2812 = vmatprep.subr.mxu0 0.0
    %2813 = vmatpush1.msra.mxu0 0.0
    %2814 = vmatprep.mubr.f32.mxu0 0.0
    %2815 = vmatmul.mubr.f32.gmra.mrb[0].mxu0 %v2748
    %v2816 = vpop.f32.mrb[0].mxu0
    %v2817 = vadd.f32 0.0, %v2816
    %v2818 = vpop.f32.mrb[0].mxu0
    %2819 = vdwg.mxu0
    %v2820 = vadd.f32 %v2744, %v2817
    %v2821 = vxor.u32 %v2820, 2147483648
    %v2822 = vmul.f32 %v2821, 1.442695
    %v2823 = vpow.pop %v2822
    %v2824 = vadd.f32 %v2823, 1.0
    %v2825 = vrcp.pop %v2824
    %v2826 = vmul.f32 1.0, %v2825
    %v2827 = vtanh.pop %v2820
    %v2828 = vmul.f32 %v2826, %v2728
    %2830 = vrot.lane.b32.xlu0 %v2827, 64
    %v2831 = vpop.permute.xlu0 %2830
    %v2833 = vmul.f32 %v2826, %v2831
    %2835 = vrot.lane.b32.xlu0 %v2833, 32
    %v2836 = vpop.permute.xlu0 %2835
    %v2838 = vadd.f32 %v2828, %v2836
    %v2839 = vtanh.pop %v2838
    %2841 = vrot.lane.b32.xlu0 %v2839, 64
    %v2842 = vpop.permute.xlu0 %2841
    %v2844 = vmul.f32 %v2826, %v2842
    %2845 = vrot.lane.b32.xlu0 %v1910, 96
    %v2846 = vpop.permute.xlu0 %2845
    %v2848 = vadd.f32 %v2844, %v2846
    %2850 = vrot.lane.b32.xlu0 %v2848, 32
    %v2851 = vpop.permute.xlu0 %2850
    %2853 = vst.msk [vmem:[#allocation2 + $0x38] sm:$0xff] %vm207, %v2851
    %v2854 = vld [vmem:[#allocation5 + $0xa8] sm:$0xff]
    %v2855 = vld [vmem:[#allocation5 + $0xb0] sm:$0xff]
    %v2856 = vld [vmem:[#allocation5 + $0xb8] sm:$0xff]
    %v2857 = vld [vmem:[#allocation5 + $0xc0] sm:$0xff]
    %v2858 = vld [vmem:[#allocation5 + $0xc8] sm:$0xff]
    %v2859 = vld [vmem:[#allocation5 + $0xd0] sm:$0xff]
    %v2860 = vld [vmem:[#allocation5 + $0xd8] sm:$0xff]
    %v2861 = vld [vmem:[#allocation5 + $0xe0] sm:$0xff]
    %v2862 = vld [vmem:[#allocation5 + $0x16b] sm:$0x1]
    %v2863 = vld [vmem:[#allocation2] sm:$0xff]
    %v2864 = vld [vmem:[#allocation2 + $0x8] sm:$0xff]
    %v2865 = vld [vmem:[#allocation2 + $0x10] sm:$0xff]
    %v2866 = vld [vmem:[#allocation2 + $0x18] sm:$0xff]
    %v2867 = vld [vmem:[#allocation2 + $0x20] sm:$0xff]
    %v2868 = vld [vmem:[#allocation2 + $0x28] sm:$0xff]
    %v2869 = vld [vmem:[#allocation2 + $0x30] sm:$0xff]
    %v2870 = vld [vmem:[#allocation2 + $0x38] sm:$0xff]
    %v2871 = vlaneseq
    %v2872 = vshrl.u32 %v2871, 7
    %v2873 = vsub.s32 0, %v2872
    %v2874 = vrot.slane %v2862, %v2873
    %v2876 = vsel %vm207, %v2863, 0
    %v2879 = vsel %vm207, %v2864, 0
    %v2882 = vsel %vm207, %v2865, 0
    %v2885 = vsel %vm207, %v2866, 0
    %v2888 = vsel %vm207, %v2867, 0
    %v2891 = vsel %vm207, %v2868, 0
    %v2894 = vsel %vm207, %v2869, 0
    %v2897 = vsel %vm207, %v2870, 0
    %2899 = vmatprep.subr.mxu0 0.0
    %2900 = vmatpush1.msra.mxu0 %v2854
    %2901 = vmatprep.subr.mxu0 0.0
    %2902 = vmatpush1.msra.mxu0 %v2855
    %2903 = vmatprep.subr.mxu0 0.0
    %2904 = vmatpush1.msra.mxu0 %v2856
    %2905 = vmatprep.subr.mxu0 0.0
    %2906 = vmatpush1.msra.mxu0 %v2857
    %2907 = vmatprep.subr.mxu0 0.0
    %2908 = vmatpush1.msra.mxu0 0.0
    %2909 = vmatprep.subr.mxu0 0.0
    %2910 = vmatpush1.msra.mxu0 0.0
    %2911 = vmatprep.subr.mxu0 0.0
    %2912 = vmatpush1.msra.mxu0 0.0
    %2913 = vmatprep.subr.mxu0 0.0
    %2914 = vmatpush1.msra.mxu0 0.0
    %2915 = vmatprep.subr.mxu0 0.0
    %2916 = vmatpush1.msra.mxu0 0.0
    %2917 = vmatprep.subr.mxu0 0.0
    %2918 = vmatpush1.msra.mxu0 0.0
    %2919 = vmatprep.subr.mxu0 0.0
    %2920 = vmatpush1.msra.mxu0 0.0
    %2921 = vmatprep.subr.mxu0 0.0
    %2922 = vmatpush1.msra.mxu0 0.0
    %2923 = vmatprep.subr.mxu0 0.0
    %2924 = vmatpush1.msra.mxu0 0.0
    %2925 = vmatprep.subr.mxu0 0.0
    %2926 = vmatpush1.msra.mxu0 0.0
    %2927 = vmatprep.subr.mxu0 0.0
    %2928 = vmatpush1.msra.mxu0 0.0
    %2929 = vmatprep.subr.mxu0 0.0
    %2930 = vmatpush1.msra.mxu0 0.0
    %2931 = vmatprep.subr.mxu0 0.0
    %2932 = vmatpush1.msra.mxu0 0.0
    %2933 = vmatprep.subr.mxu0 0.0
    %2934 = vmatpush1.msra.mxu0 0.0
    %2935 = vmatprep.subr.mxu0 0.0
    %2936 = vmatpush1.msra.mxu0 0.0
    %2937 = vmatprep.subr.mxu0 0.0
    %2938 = vmatpush1.msra.mxu0 0.0
    %2939 = vmatprep.subr.mxu0 0.0
    %2940 = vmatpush1.msra.mxu0 0.0
    %2941 = vmatprep.subr.mxu0 0.0
    %2942 = vmatpush1.msra.mxu0 0.0
    %2943 = vmatprep.subr.mxu0 0.0
    %2944 = vmatpush1.msra.mxu0 0.0
    %2945 = vmatprep.subr.mxu0 0.0
    %2946 = vmatpush1.msra.mxu0 0.0
    %2947 = vmatprep.subr.mxu0 0.0
    %2948 = vmatpush1.msra.mxu0 0.0
    %2949 = vmatprep.subr.mxu0 0.0
    %2950 = vmatpush1.msra.mxu0 0.0
    %2951 = vmatprep.subr.mxu0 0.0
    %2952 = vmatpush1.msra.mxu0 0.0
    %2953 = vmatprep.subr.mxu0 0.0
    %2954 = vmatpush1.msra.mxu0 0.0
    %2955 = vmatprep.subr.mxu0 0.0
    %2956 = vmatpush1.msra.mxu0 0.0
    %2957 = vmatprep.subr.mxu0 0.0
    %2958 = vmatpush1.msra.mxu0 0.0
    %2959 = vmatprep.subr.mxu0 0.0
    %2960 = vmatpush1.msra.mxu0 0.0
    %2961 = vmatprep.subr.mxu0 0.0
    %2962 = vmatpush1.msra.mxu0 0.0
    %2963 = vmatprep.mubr.f32.mxu0 0.0
    %2964 = vmatmul.mubr.f32.gmra.mrb[0].mxu0 %v2876
    %v2965 = vpop.f32.mrb[0].mxu0
    %v2966 = vadd.f32 %v2874, %v2965
    %v2967 = vpop.f32.mrb[0].mxu0
    %2968 = vmatprep.mubr.f32.mxu0 0.0
    %2969 = vmatmul.mubr.f32.gmra.mrb[0].mxu0 %v2879
    %v2970 = vpop.f32.mrb[0].mxu0
    %v2971 = vadd.f32 %v2874, %v2970
    %v2972 = vpop.f32.mrb[0].mxu0
    %2973 = vmatprep.mubr.f32.mxu0 0.0
    %2974 = vmatmul.mubr.f32.gmra.mrb[0].mxu0 %v2882
    %v2975 = vpop.f32.mrb[0].mxu0
    %v2976 = vadd.f32 %v2874, %v2975
    %v2977 = vpop.f32.mrb[0].mxu0
    %2978 = vmatprep.mubr.f32.mxu0 0.0
    %2979 = vmatmul.mubr.f32.gmra.mrb[0].mxu0 %v2885
    %v2980 = vpop.f32.mrb[0].mxu0
    %v2981 = vadd.f32 %v2874, %v2980
    %v2982 = vpop.f32.mrb[0].mxu0
    %2983 = vmatprep.mubr.f32.mxu0 0.0
    %2984 = vmatmul.mubr.f32.gmra.mrb[0].mxu0 %v2888
    %v2985 = vpop.f32.mrb[0].mxu0
    %v2986 = vadd.f32 %v2874, %v2985
    %v2987 = vpop.f32.mrb[0].mxu0
    %2988 = vmatprep.mubr.f32.mxu0 0.0
    %2989 = vmatmul.mubr.f32.gmra.mrb[0].mxu0 %v2891
    %v2990 = vpop.f32.mrb[0].mxu0
    %v2991 = vadd.f32 %v2874, %v2990
    %v2992 = vpop.f32.mrb[0].mxu0
    %2993 = vmatprep.mubr.f32.mxu0 0.0
    %2994 = vmatmul.mubr.f32.gmra.mrb[0].mxu0 %v2894
    %v2995 = vpop.f32.mrb[0].mxu0
    %v2996 = vadd.f32 %v2874, %v2995
    %v2997 = vpop.f32.mrb[0].mxu0
    %2998 = vmatprep.mubr.f32.mxu0 0.0
    %2999 = vmatmul.mubr.f32.gmra.mrb[0].mxu0 %v2897
    %v3000 = vpop.f32.mrb[0].mxu0
    %v3001 = vadd.f32 %v2874, %v3000
    %v3002 = vpop.f32.mrb[0].mxu0
    %3003 = vdwg.mxu0
    %3004 = vst [vmem:[#allocation4] sm:$0xff] %v2966
    %3005 = vst [vmem:[#allocation4 + $0x8] sm:$0xff] %v2971
    %3006 = vst [vmem:[#allocation4 + $0x10] sm:$0xff] %v2976
    %3007 = vst [vmem:[#allocation4 + $0x18] sm:$0xff] %v2981
    %3008 = vst [vmem:[#allocation4 + $0x20] sm:$0xff] %v2986
    %3009 = vst [vmem:[#allocation4 + $0x28] sm:$0xff] %v2991
    %3010 = vst [vmem:[#allocation4 + $0x30] sm:$0xff] %v2996
    %3011 = vst [vmem:[#allocation4 + $0x38] sm:$0xff] %v3001
    %v3012 = vld [vmem:[#allocation4] sm:$0xff]
    %v3013 = vxor.u32 %v3012, 2147483648
    %v3014 = vmul.f32 %v3013, 1.442695
    %v3015 = vpow.pop %v3014
    %v3016 = vadd.f32 %v3015, 1.0
    %v3017 = vrcp.pop %v3016
    %v3018 = vmul.f32 1.0, %v3017
    %v3019 = vtanh.pop %v3012
    %3021 = vrot.lane.b32.xlu0 %v3019, 64
    %v3022 = vpop.permute.xlu0 %3021
    %v3024 = vmul.f32 %v3018, %v3022
    %v3025 = vtanh.pop %v3024
    %3027 = vrot.lane.b32.xlu0 %v3025, 96
    %v3028 = vpop.permute.xlu0 %3027
    %v3030 = vmul.f32 %v3018, %v3028
    %3031 = vrot.lane.b32.xlu0 %v2863, 96
    %v3032 = vpop.permute.xlu0 %3031
    %v3034 = vadd.f32 %v3030, %v3032
    %3036 = vrot.lane.b32.xlu0 %v3034, 32
    %v3037 = vpop.permute.xlu0 %3036
    %3039 = vst.msk [vmem:[#allocation3] sm:$0xff] %vm207, %v3037
    %v3040 = vld [vmem:[#allocation4 + $0x8] sm:$0xff]
    %3042 = vrot.lane.b32.xlu0 %v3030, 32
    %v3043 = vpop.permute.xlu0 %3042
    %v3044 = vsel %vm207, %v3043, 0
    %3046 = vmatprep.subr.mxu0 0.0
    %3047 = vmatpush1.msra.mxu0 %v2858
    %3048 = vmatprep.subr.mxu0 0.0
    %3049 = vmatpush1.msra.mxu0 %v2859
    %3050 = vmatprep.subr.mxu0 0.0
    %3051 = vmatpush1.msra.mxu0 %v2860
    %3052 = vmatprep.subr.mxu0 0.0
    %3053 = vmatpush1.msra.mxu0 %v2861
    %3054 = vmatprep.subr.mxu0 0.0
    %3055 = vmatpush1.msra.mxu0 0.0
    %3056 = vmatprep.subr.mxu0 0.0
    %3057 = vmatpush1.msra.mxu0 0.0
    %3058 = vmatprep.subr.mxu0 0.0
    %3059 = vmatpush1.msra.mxu0 0.0
    %3060 = vmatprep.subr.mxu0 0.0
    %3061 = vmatpush1.msra.mxu0 0.0
    %3062 = vmatprep.subr.mxu0 0.0
    %3063 = vmatpush1.msra.mxu0 0.0
    %3064 = vmatprep.subr.mxu0 0.0
    %3065 = vmatpush1.msra.mxu0 0.0
    %3066 = vmatprep.subr.mxu0 0.0
    %3067 = vmatpush1.msra.mxu0 0.0
    %3068 = vmatprep.subr.mxu0 0.0
    %3069 = vmatpush1.msra.mxu0 0.0
    %3070 = vmatprep.subr.mxu0 0.0
    %3071 = vmatpush1.msra.mxu0 0.0
    %3072 = vmatprep.subr.mxu0 0.0
    %3073 = vmatpush1.msra.mxu0 0.0
    %3074 = vmatprep.subr.mxu0 0.0
    %3075 = vmatpush1.msra.mxu0 0.0
    %3076 = vmatprep.subr.mxu0 0.0
    %3077 = vmatpush1.msra.mxu0 0.0
    %3078 = vmatprep.subr.mxu0 0.0
    %3079 = vmatpush1.msra.mxu0 0.0
    %3080 = vmatprep.subr.mxu0 0.0
    %3081 = vmatpush1.msra.mxu0 0.0
    %3082 = vmatprep.subr.mxu0 0.0
    %3083 = vmatpush1.msra.mxu0 0.0
    %3084 = vmatprep.subr.mxu0 0.0
    %3085 = vmatpush1.msra.mxu0 0.0
    %3086 = vmatprep.subr.mxu0 0.0
    %3087 = vmatpush1.msra.mxu0 0.0
    %3088 = vmatprep.subr.mxu0 0.0
    %3089 = vmatpush1.msra.mxu0 0.0
    %3090 = vmatprep.subr.mxu0 0.0
    %3091 = vmatpush1.msra.mxu0 0.0
    %3092 = vmatprep.subr.mxu0 0.0
    %3093 = vmatpush1.msra.mxu0 0.0
    %3094 = vmatprep.subr.mxu0 0.0
    %3095 = vmatpush1.msra.mxu0 0.0
    %3096 = vmatprep.subr.mxu0 0.0
    %3097 = vmatpush1.msra.mxu0 0.0
    %3098 = vmatprep.subr.mxu0 0.0
    %3099 = vmatpush1.msra.mxu0 0.0
    %3100 = vmatprep.subr.mxu0 0.0
    %3101 = vmatpush1.msra.mxu0 0.0
    %3102 = vmatprep.subr.mxu0 0.0
    %3103 = vmatpush1.msra.mxu0 0.0
    %3104 = vmatprep.subr.mxu0 0.0
    %3105 = vmatpush1.msra.mxu0 0.0
    %3106 = vmatprep.subr.mxu0 0.0
    %3107 = vmatpush1.msra.mxu0 0.0
    %3108 = vmatprep.subr.mxu0 0.0
    %3109 = vmatpush1.msra.mxu0 0.0
    %3110 = vmatprep.mubr.f32.mxu0 0.0
    %3111 = vmatmul.mubr.f32.gmra.mrb[0].mxu0 %v3044
    %v3112 = vpop.f32.mrb[0].mxu0
    %v3113 = vadd.f32 0.0, %v3112
    %v3114 = vpop.f32.mrb[0].mxu0
    %3115 = vdwg.mxu0
    %v3116 = vadd.f32 %v3040, %v3113
    %v3117 = vxor.u32 %v3116, 2147483648
    %v3118 = vmul.f32 %v3117, 1.442695
    %v3119 = vpow.pop %v3118
    %v3120 = vadd.f32 %v3119, 1.0
    %v3121 = vrcp.pop %v3120
    %v3122 = vmul.f32 1.0, %v3121
    %v3123 = vtanh.pop %v3116
    %3125 = vrot.lane.b32.xlu0 %v3024, 32
    %v3126 = vpop.permute.xlu0 %3125
    %v3128 = vmul.f32 %v3122, %v3126
    %3130 = vrot.lane.b32.xlu0 %v3123, 64
    %v3131 = vpop.permute.xlu0 %3130
    %v3133 = vmul.f32 %v3122, %v3131
    %3135 = vrot.lane.b32.xlu0 %v3133, 32
    %v3136 = vpop.permute.xlu0 %3135
    %v3138 = vadd.f32 %v3128, %v3136
    %v3139 = vtanh.pop %v3138
    %3141 = vrot.lane.b32.xlu0 %v3139, 64
    %v3142 = vpop.permute.xlu0 %3141
    %v3144 = vmul.f32 %v3122, %v3142
    %3145 = vrot.lane.b32.xlu0 %v2864, 96
    %v3146 = vpop.permute.xlu0 %3145
    %v3148 = vadd.f32 %v3144, %v3146
    %3150 = vrot.lane.b32.xlu0 %v3148, 32
    %v3151 = vpop.permute.xlu0 %3150
    %3153 = vst.msk [vmem:[#allocation3 + $0x8] sm:$0xff] %vm207, %v3151
    %v3154 = vld [vmem:[#allocation4 + $0x10] sm:$0xff]
    %3156 = vrot.lane.b32.xlu0 %v3144, 32
    %v3157 = vpop.permute.xlu0 %3156
    %v3158 = vsel %vm207, %v3157, 0
    %3160 = vmatprep.subr.mxu0 0.0
    %3161 = vmatpush1.msra.mxu0 %v2858
    %3162 = vmatprep.subr.mxu0 0.0
    %3163 = vmatpush1.msra.mxu0 %v2859
    %3164 = vmatprep.subr.mxu0 0.0
    %3165 = vmatpush1.msra.mxu0 %v2860
    %3166 = vmatprep.subr.mxu0 0.0
    %3167 = vmatpush1.msra.mxu0 %v2861
    %3168 = vmatprep.subr.mxu0 0.0
    %3169 = vmatpush1.msra.mxu0 0.0
    %3170 = vmatprep.subr.mxu0 0.0
    %3171 = vmatpush1.msra.mxu0 0.0
    %3172 = vmatprep.subr.mxu0 0.0
    %3173 = vmatpush1.msra.mxu0 0.0
    %3174 = vmatprep.subr.mxu0 0.0
    %3175 = vmatpush1.msra.mxu0 0.0
    %3176 = vmatprep.subr.mxu0 0.0
    %3177 = vmatpush1.msra.mxu0 0.0
    %3178 = vmatprep.subr.mxu0 0.0
    %3179 = vmatpush1.msra.mxu0 0.0
    %3180 = vmatprep.subr.mxu0 0.0
    %3181 = vmatpush1.msra.mxu0 0.0
    %3182 = vmatprep.subr.mxu0 0.0
    %3183 = vmatpush1.msra.mxu0 0.0
    %3184 = vmatprep.subr.mxu0 0.0
    %3185 = vmatpush1.msra.mxu0 0.0
    %3186 = vmatprep.subr.mxu0 0.0
    %3187 = vmatpush1.msra.mxu0 0.0
    %3188 = vmatprep.subr.mxu0 0.0
    %3189 = vmatpush1.msra.mxu0 0.0
    %3190 = vmatprep.subr.mxu0 0.0
    %3191 = vmatpush1.msra.mxu0 0.0
    %3192 = vmatprep.subr.mxu0 0.0
    %3193 = vmatpush1.msra.mxu0 0.0
    %3194 = vmatprep.subr.mxu0 0.0
    %3195 = vmatpush1.msra.mxu0 0.0
    %3196 = vmatprep.subr.mxu0 0.0
    %3197 = vmatpush1.msra.mxu0 0.0
    %3198 = vmatprep.subr.mxu0 0.0
    %3199 = vmatpush1.msra.mxu0 0.0
    %3200 = vmatprep.subr.mxu0 0.0
    %3201 = vmatpush1.msra.mxu0 0.0
    %3202 = vmatprep.subr.mxu0 0.0
    %3203 = vmatpush1.msra.mxu0 0.0
    %3204 = vmatprep.subr.mxu0 0.0
    %3205 = vmatpush1.msra.mxu0 0.0
    %3206 = vmatprep.subr.mxu0 0.0
    %3207 = vmatpush1.msra.mxu0 0.0
    %3208 = vmatprep.subr.mxu0 0.0
    %3209 = vmatpush1.msra.mxu0 0.0
    %3210 = vmatprep.subr.mxu0 0.0
    %3211 = vmatpush1.msra.mxu0 0.0
    %3212 = vmatprep.subr.mxu0 0.0
    %3213 = vmatpush1.msra.mxu0 0.0
    %3214 = vmatprep.subr.mxu0 0.0
    %3215 = vmatpush1.msra.mxu0 0.0
    %3216 = vmatprep.subr.mxu0 0.0
    %3217 = vmatpush1.msra.mxu0 0.0
    %3218 = vmatprep.subr.mxu0 0.0
    %3219 = vmatpush1.msra.mxu0 0.0
    %3220 = vmatprep.subr.mxu0 0.0
    %3221 = vmatpush1.msra.mxu0 0.0
    %3222 = vmatprep.subr.mxu0 0.0
    %3223 = vmatpush1.msra.mxu0 0.0
    %3224 = vmatprep.mubr.f32.mxu0 0.0
    %3225 = vmatmul.mubr.f32.gmra.mrb[0].mxu0 %v3158
    %v3226 = vpop.f32.mrb[0].mxu0
    %v3227 = vadd.f32 0.0, %v3226
    %v3228 = vpop.f32.mrb[0].mxu0
    %3229 = vdwg.mxu0
    %v3230 = vadd.f32 %v3154, %v3227
    %v3231 = vxor.u32 %v3230, 2147483648
    %v3232 = vmul.f32 %v3231, 1.442695
    %v3233 = vpow.pop %v3232
    %v3234 = vadd.f32 %v3233, 1.0
    %v3235 = vrcp.pop %v3234
    %v3236 = vmul.f32 1.0, %v3235
    %v3237 = vtanh.pop %v3230
    %v3238 = vmul.f32 %v3236, %v3138
    %3240 = vrot.lane.b32.xlu0 %v3237, 64
    %v3241 = vpop.permute.xlu0 %3240
    %v3243 = vmul.f32 %v3236, %v3241
    %3245 = vrot.lane.b32.xlu0 %v3243, 32
    %v3246 = vpop.permute.xlu0 %3245
    %v3248 = vadd.f32 %v3238, %v3246
    %v3249 = vtanh.pop %v3248
    %3251 = vrot.lane.b32.xlu0 %v3249, 64
    %v3252 = vpop.permute.xlu0 %3251
    %v3254 = vmul.f32 %v3236, %v3252
    %3255 = vrot.lane.b32.xlu0 %v2865, 96
    %v3256 = vpop.permute.xlu0 %3255
    %v3258 = vadd.f32 %v3254, %v3256
    %3260 = vrot.lane.b32.xlu0 %v3258, 32
    %v3261 = vpop.permute.xlu0 %3260
    %3263 = vst.msk [vmem:[#allocation3 + $0x10] sm:$0xff] %vm207, %v3261
    %v3264 = vld [vmem:[#allocation4 + $0x18] sm:$0xff]
    %3266 = vrot.lane.b32.xlu0 %v3254, 32
    %v3267 = vpop.permute.xlu0 %3266
    %v3268 = vsel %vm207, %v3267, 0
    %3270 = vmatprep.subr.mxu0 0.0
    %3271 = vmatpush1.msra.mxu0 %v2858
    %3272 = vmatprep.subr.mxu0 0.0
    %3273 = vmatpush1.msra.mxu0 %v2859
    %3274 = vmatprep.subr.mxu0 0.0
    %3275 = vmatpush1.msra.mxu0 %v2860
    %3276 = vmatprep.subr.mxu0 0.0
    %3277 = vmatpush1.msra.mxu0 %v2861
    %3278 = vmatprep.subr.mxu0 0.0
    %3279 = vmatpush1.msra.mxu0 0.0
    %3280 = vmatprep.subr.mxu0 0.0
    %3281 = vmatpush1.msra.mxu0 0.0
    %3282 = vmatprep.subr.mxu0 0.0
    %3283 = vmatpush1.msra.mxu0 0.0
    %3284 = vmatprep.subr.mxu0 0.0
    %3285 = vmatpush1.msra.mxu0 0.0
    %3286 = vmatprep.subr.mxu0 0.0
    %3287 = vmatpush1.msra.mxu0 0.0
    %3288 = vmatprep.subr.mxu0 0.0
    %3289 = vmatpush1.msra.mxu0 0.0
    %3290 = vmatprep.subr.mxu0 0.0
    %3291 = vmatpush1.msra.mxu0 0.0
    %3292 = vmatprep.subr.mxu0 0.0
    %3293 = vmatpush1.msra.mxu0 0.0
    %3294 = vmatprep.subr.mxu0 0.0
    %3295 = vmatpush1.msra.mxu0 0.0
    %3296 = vmatprep.subr.mxu0 0.0
    %3297 = vmatpush1.msra.mxu0 0.0
    %3298 = vmatprep.subr.mxu0 0.0
    %3299 = vmatpush1.msra.mxu0 0.0
    %3300 = vmatprep.subr.mxu0 0.0
    %3301 = vmatpush1.msra.mxu0 0.0
    %3302 = vmatprep.subr.mxu0 0.0
    %3303 = vmatpush1.msra.mxu0 0.0
    %3304 = vmatprep.subr.mxu0 0.0
    %3305 = vmatpush1.msra.mxu0 0.0
    %3306 = vmatprep.subr.mxu0 0.0
    %3307 = vmatpush1.msra.mxu0 0.0
    %3308 = vmatprep.subr.mxu0 0.0
    %3309 = vmatpush1.msra.mxu0 0.0
    %3310 = vmatprep.subr.mxu0 0.0
    %3311 = vmatpush1.msra.mxu0 0.0
    %3312 = vmatprep.subr.mxu0 0.0
    %3313 = vmatpush1.msra.mxu0 0.0
    %3314 = vmatprep.subr.mxu0 0.0
    %3315 = vmatpush1.msra.mxu0 0.0
    %3316 = vmatprep.subr.mxu0 0.0
    %3317 = vmatpush1.msra.mxu0 0.0
    %3318 = vmatprep.subr.mxu0 0.0
    %3319 = vmatpush1.msra.mxu0 0.0
    %3320 = vmatprep.subr.mxu0 0.0
    %3321 = vmatpush1.msra.mxu0 0.0
    %3322 = vmatprep.subr.mxu0 0.0
    %3323 = vmatpush1.msra.mxu0 0.0
    %3324 = vmatprep.subr.mxu0 0.0
    %3325 = vmatpush1.msra.mxu0 0.0
    %3326 = vmatprep.subr.mxu0 0.0
    %3327 = vmatpush1.msra.mxu0 0.0
    %3328 = vmatprep.subr.mxu0 0.0
    %3329 = vmatpush1.msra.mxu0 0.0
    %3330 = vmatprep.subr.mxu0 0.0
    %3331 = vmatpush1.msra.mxu0 0.0
    %3332 = vmatprep.subr.mxu0 0.0
    %3333 = vmatpush1.msra.mxu0 0.0
    %3334 = vmatprep.mubr.f32.mxu0 0.0
    %3335 = vmatmul.mubr.f32.gmra.mrb[0].mxu0 %v3268
    %v3336 = vpop.f32.mrb[0].mxu0
    %v3337 = vadd.f32 0.0, %v3336
    %v3338 = vpop.f32.mrb[0].mxu0
    %3339 = vdwg.mxu0
    %v3340 = vadd.f32 %v3264, %v3337
    %v3341 = vxor.u32 %v3340, 2147483648
    %v3342 = vmul.f32 %v3341, 1.442695
    %v3343 = vpow.pop %v3342
    %v3344 = vadd.f32 %v3343, 1.0
    %v3345 = vrcp.pop %v3344
    %v3346 = vmul.f32 1.0, %v3345
    %v3347 = vtanh.pop %v3340
    %v3348 = vmul.f32 %v3346, %v3248
    %3350 = vrot.lane.b32.xlu0 %v3347, 64
    %v3351 = vpop.permute.xlu0 %3350
    %v3353 = vmul.f32 %v3346, %v3351
    %3355 = vrot.lane.b32.xlu0 %v3353, 32
    %v3356 = vpop.permute.xlu0 %3355
    %v3358 = vadd.f32 %v3348, %v3356
    %v3359 = vtanh.pop %v3358
    %3361 = vrot.lane.b32.xlu0 %v3359, 64
    %v3362 = vpop.permute.xlu0 %3361
    %v3364 = vmul.f32 %v3346, %v3362
    %3365 = vrot.lane.b32.xlu0 %v2866, 96
    %v3366 = vpop.permute.xlu0 %3365
    %v3368 = vadd.f32 %v3364, %v3366
    %3370 = vrot.lane.b32.xlu0 %v3368, 32
    %v3371 = vpop.permute.xlu0 %3370
    %3373 = vst.msk [vmem:[#allocation3 + $0x18] sm:$0xff] %vm207, %v3371
    %v3374 = vld [vmem:[#allocation4 + $0x20] sm:$0xff]
    %3376 = vrot.lane.b32.xlu0 %v3364, 32
    %v3377 = vpop.permute.xlu0 %3376
    %v3378 = vsel %vm207, %v3377, 0
    %3380 = vmatprep.subr.mxu0 0.0
    %3381 = vmatpush1.msra.mxu0 %v2858
    %3382 = vmatprep.subr.mxu0 0.0
    %3383 = vmatpush1.msra.mxu0 %v2859
    %3384 = vmatprep.subr.mxu0 0.0
    %3385 = vmatpush1.msra.mxu0 %v2860
    %3386 = vmatprep.subr.mxu0 0.0
    %3387 = vmatpush1.msra.mxu0 %v2861
    %3388 = vmatprep.subr.mxu0 0.0
    %3389 = vmatpush1.msra.mxu0 0.0
    %3390 = vmatprep.subr.mxu0 0.0
    %3391 = vmatpush1.msra.mxu0 0.0
    %3392 = vmatprep.subr.mxu0 0.0
    %3393 = vmatpush1.msra.mxu0 0.0
    %3394 = vmatprep.subr.mxu0 0.0
    %3395 = vmatpush1.msra.mxu0 0.0
    %3396 = vmatprep.subr.mxu0 0.0
    %3397 = vmatpush1.msra.mxu0 0.0
    %3398 = vmatprep.subr.mxu0 0.0
    %3399 = vmatpush1.msra.mxu0 0.0
    %3400 = vmatprep.subr.mxu0 0.0
    %3401 = vmatpush1.msra.mxu0 0.0
    %3402 = vmatprep.subr.mxu0 0.0
    %3403 = vmatpush1.msra.mxu0 0.0
    %3404 = vmatprep.subr.mxu0 0.0
    %3405 = vmatpush1.msra.mxu0 0.0
    %3406 = vmatprep.subr.mxu0 0.0
    %3407 = vmatpush1.msra.mxu0 0.0
    %3408 = vmatprep.subr.mxu0 0.0
    %3409 = vmatpush1.msra.mxu0 0.0
    %3410 = vmatprep.subr.mxu0 0.0
    %3411 = vmatpush1.msra.mxu0 0.0
    %3412 = vmatprep.subr.mxu0 0.0
    %3413 = vmatpush1.msra.mxu0 0.0
    %3414 = vmatprep.subr.mxu0 0.0
    %3415 = vmatpush1.msra.mxu0 0.0
    %3416 = vmatprep.subr.mxu0 0.0
    %3417 = vmatpush1.msra.mxu0 0.0
    %3418 = vmatprep.subr.mxu0 0.0
    %3419 = vmatpush1.msra.mxu0 0.0
    %3420 = vmatprep.subr.mxu0 0.0
    %3421 = vmatpush1.msra.mxu0 0.0
    %3422 = vmatprep.subr.mxu0 0.0
    %3423 = vmatpush1.msra.mxu0 0.0
    %3424 = vmatprep.subr.mxu0 0.0
    %3425 = vmatpush1.msra.mxu0 0.0
    %3426 = vmatprep.subr.mxu0 0.0
    %3427 = vmatpush1.msra.mxu0 0.0
    %3428 = vmatprep.subr.mxu0 0.0
    %3429 = vmatpush1.msra.mxu0 0.0
    %3430 = vmatprep.subr.mxu0 0.0
    %3431 = vmatpush1.msra.mxu0 0.0
    %3432 = vmatprep.subr.mxu0 0.0
    %3433 = vmatpush1.msra.mxu0 0.0
    %3434 = vmatprep.subr.mxu0 0.0
    %3435 = vmatpush1.msra.mxu0 0.0
    %3436 = vmatprep.subr.mxu0 0.0
    %3437 = vmatpush1.msra.mxu0 0.0
    %3438 = vmatprep.subr.mxu0 0.0
    %3439 = vmatpush1.msra.mxu0 0.0
    %3440 = vmatprep.subr.mxu0 0.0
    %3441 = vmatpush1.msra.mxu0 0.0
    %3442 = vmatprep.subr.mxu0 0.0
    %3443 = vmatpush1.msra.mxu0 0.0
    %3444 = vmatprep.mubr.f32.mxu0 0.0
    %3445 = vmatmul.mubr.f32.gmra.mrb[0].mxu0 %v3378
    %v3446 = vpop.f32.mrb[0].mxu0
    %v3447 = vadd.f32 0.0, %v3446
    %v3448 = vpop.f32.mrb[0].mxu0
    %3449 = vdwg.mxu0
    %v3450 = vadd.f32 %v3374, %v3447
    %v3451 = vxor.u32 %v3450, 2147483648
    %v3452 = vmul.f32 %v3451, 1.442695
    %v3453 = vpow.pop %v3452
    %v3454 = vadd.f32 %v3453, 1.0
    %v3455 = vrcp.pop %v3454
    %v3456 = vmul.f32 1.0, %v3455
    %v3457 = vtanh.pop %v3450
    %v3458 = vmul.f32 %v3456, %v3358
    %3460 = vrot.lane.b32.xlu0 %v3457, 64
    %v3461 = vpop.permute.xlu0 %3460
    %v3463 = vmul.f32 %v3456, %v3461
    %3465 = vrot.lane.b32.xlu0 %v3463, 32
    %v3466 = vpop.permute.xlu0 %3465
    %v3468 = vadd.f32 %v3458, %v3466
    %v3469 = vtanh.pop %v3468
    %3471 = vrot.lane.b32.xlu0 %v3469, 64
    %v3472 = vpop.permute.xlu0 %3471
    %v3474 = vmul.f32 %v3456, %v3472
    %3475 = vrot.lane.b32.xlu0 %v2867, 96
    %v3476 = vpop.permute.xlu0 %3475
    %v3478 = vadd.f32 %v3474, %v3476
    %3480 = vrot.lane.b32.xlu0 %v3478, 32
    %v3481 = vpop.permute.xlu0 %3480
    %3483 = vst.msk [vmem:[#allocation3 + $0x20] sm:$0xff] %vm207, %v3481
    %v3484 = vld [vmem:[#allocation4 + $0x28] sm:$0xff]
    %3486 = vrot.lane.b32.xlu0 %v3474, 32
    %v3487 = vpop.permute.xlu0 %3486
    %v3488 = vsel %vm207, %v3487, 0
    %3490 = vmatprep.subr.mxu0 0.0
    %3491 = vmatpush1.msra.mxu0 %v2858
    %3492 = vmatprep.subr.mxu0 0.0
    %3493 = vmatpush1.msra.mxu0 %v2859
    %3494 = vmatprep.subr.mxu0 0.0
    %3495 = vmatpush1.msra.mxu0 %v2860
    %3496 = vmatprep.subr.mxu0 0.0
    %3497 = vmatpush1.msra.mxu0 %v2861
    %3498 = vmatprep.subr.mxu0 0.0
    %3499 = vmatpush1.msra.mxu0 0.0
    %3500 = vmatprep.subr.mxu0 0.0
    %3501 = vmatpush1.msra.mxu0 0.0
    %3502 = vmatprep.subr.mxu0 0.0
    %3503 = vmatpush1.msra.mxu0 0.0
    %3504 = vmatprep.subr.mxu0 0.0
    %3505 = vmatpush1.msra.mxu0 0.0
    %3506 = vmatprep.subr.mxu0 0.0
    %3507 = vmatpush1.msra.mxu0 0.0
    %3508 = vmatprep.subr.mxu0 0.0
    %3509 = vmatpush1.msra.mxu0 0.0
    %3510 = vmatprep.subr.mxu0 0.0
    %3511 = vmatpush1.msra.mxu0 0.0
    %3512 = vmatprep.subr.mxu0 0.0
    %3513 = vmatpush1.msra.mxu0 0.0
    %3514 = vmatprep.subr.mxu0 0.0
    %3515 = vmatpush1.msra.mxu0 0.0
    %3516 = vmatprep.subr.mxu0 0.0
    %3517 = vmatpush1.msra.mxu0 0.0
    %3518 = vmatprep.subr.mxu0 0.0
    %3519 = vmatpush1.msra.mxu0 0.0
    %3520 = vmatprep.subr.mxu0 0.0
    %3521 = vmatpush1.msra.mxu0 0.0
    %3522 = vmatprep.subr.mxu0 0.0
    %3523 = vmatpush1.msra.mxu0 0.0
    %3524 = vmatprep.subr.mxu0 0.0
    %3525 = vmatpush1.msra.mxu0 0.0
    %3526 = vmatprep.subr.mxu0 0.0
    %3527 = vmatpush1.msra.mxu0 0.0
    %3528 = vmatprep.subr.mxu0 0.0
    %3529 = vmatpush1.msra.mxu0 0.0
    %3530 = vmatprep.subr.mxu0 0.0
    %3531 = vmatpush1.msra.mxu0 0.0
    %3532 = vmatprep.subr.mxu0 0.0
    %3533 = vmatpush1.msra.mxu0 0.0
    %3534 = vmatprep.subr.mxu0 0.0
    %3535 = vmatpush1.msra.mxu0 0.0
    %3536 = vmatprep.subr.mxu0 0.0
    %3537 = vmatpush1.msra.mxu0 0.0
    %3538 = vmatprep.subr.mxu0 0.0
    %3539 = vmatpush1.msra.mxu0 0.0
    %3540 = vmatprep.subr.mxu0 0.0
    %3541 = vmatpush1.msra.mxu0 0.0
    %3542 = vmatprep.subr.mxu0 0.0
    %3543 = vmatpush1.msra.mxu0 0.0
    %3544 = vmatprep.subr.mxu0 0.0
    %3545 = vmatpush1.msra.mxu0 0.0
    %3546 = vmatprep.subr.mxu0 0.0
    %3547 = vmatpush1.msra.mxu0 0.0
    %3548 = vmatprep.subr.mxu0 0.0
    %3549 = vmatpush1.msra.mxu0 0.0
    %3550 = vmatprep.subr.mxu0 0.0
    %3551 = vmatpush1.msra.mxu0 0.0
    %3552 = vmatprep.subr.mxu0 0.0
    %3553 = vmatpush1.msra.mxu0 0.0
    %3554 = vmatprep.mubr.f32.mxu0 0.0
    %3555 = vmatmul.mubr.f32.gmra.mrb[0].mxu0 %v3488
    %v3556 = vpop.f32.mrb[0].mxu0
    %v3557 = vadd.f32 0.0, %v3556
    %v3558 = vpop.f32.mrb[0].mxu0
    %3559 = vdwg.mxu0
    %v3560 = vadd.f32 %v3484, %v3557
    %v3561 = vxor.u32 %v3560, 2147483648
    %v3562 = vmul.f32 %v3561, 1.442695
    %v3563 = vpow.pop %v3562
    %v3564 = vadd.f32 %v3563, 1.0
    %v3565 = vrcp.pop %v3564
    %v3566 = vmul.f32 1.0, %v3565
    %v3567 = vtanh.pop %v3560
    %v3568 = vmul.f32 %v3566, %v3468
    %3570 = vrot.lane.b32.xlu0 %v3567, 64
    %v3571 = vpop.permute.xlu0 %3570
    %v3573 = vmul.f32 %v3566, %v3571
    %3575 = vrot.lane.b32.xlu0 %v3573, 32
    %v3576 = vpop.permute.xlu0 %3575
    %v3578 = vadd.f32 %v3568, %v3576
    %v3579 = vtanh.pop %v3578
    %3581 = vrot.lane.b32.xlu0 %v3579, 64
    %v3582 = vpop.permute.xlu0 %3581
    %v3584 = vmul.f32 %v3566, %v3582
    %3585 = vrot.lane.b32.xlu0 %v2868, 96
    %v3586 = vpop.permute.xlu0 %3585
    %v3588 = vadd.f32 %v3584, %v3586
    %3590 = vrot.lane.b32.xlu0 %v3588, 32
    %v3591 = vpop.permute.xlu0 %3590
    %3593 = vst.msk [vmem:[#allocation3 + $0x28] sm:$0xff] %vm207, %v3591
    %v3594 = vld [vmem:[#allocation4 + $0x30] sm:$0xff]
    %3596 = vrot.lane.b32.xlu0 %v3584, 32
    %v3597 = vpop.permute.xlu0 %3596
    %v3598 = vsel %vm207, %v3597, 0
    %3600 = vmatprep.subr.mxu0 0.0
    %3601 = vmatpush1.msra.mxu0 %v2858
    %3602 = vmatprep.subr.mxu0 0.0
    %3603 = vmatpush1.msra.mxu0 %v2859
    %3604 = vmatprep.subr.mxu0 0.0
    %3605 = vmatpush1.msra.mxu0 %v2860
    %3606 = vmatprep.subr.mxu0 0.0
    %3607 = vmatpush1.msra.mxu0 %v2861
    %3608 = vmatprep.subr.mxu0 0.0
    %3609 = vmatpush1.msra.mxu0 0.0
    %3610 = vmatprep.subr.mxu0 0.0
    %3611 = vmatpush1.msra.mxu0 0.0
    %3612 = vmatprep.subr.mxu0 0.0
    %3613 = vmatpush1.msra.mxu0 0.0
    %3614 = vmatprep.subr.mxu0 0.0
    %3615 = vmatpush1.msra.mxu0 0.0
    %3616 = vmatprep.subr.mxu0 0.0
    %3617 = vmatpush1.msra.mxu0 0.0
    %3618 = vmatprep.subr.mxu0 0.0
    %3619 = vmatpush1.msra.mxu0 0.0
    %3620 = vmatprep.subr.mxu0 0.0
    %3621 = vmatpush1.msra.mxu0 0.0
    %3622 = vmatprep.subr.mxu0 0.0
    %3623 = vmatpush1.msra.mxu0 0.0
    %3624 = vmatprep.subr.mxu0 0.0
    %3625 = vmatpush1.msra.mxu0 0.0
    %3626 = vmatprep.subr.mxu0 0.0
    %3627 = vmatpush1.msra.mxu0 0.0
    %3628 = vmatprep.subr.mxu0 0.0
    %3629 = vmatpush1.msra.mxu0 0.0
    %3630 = vmatprep.subr.mxu0 0.0
    %3631 = vmatpush1.msra.mxu0 0.0
    %3632 = vmatprep.subr.mxu0 0.0
    %3633 = vmatpush1.msra.mxu0 0.0
    %3634 = vmatprep.subr.mxu0 0.0
    %3635 = vmatpush1.msra.mxu0 0.0
    %3636 = vmatprep.subr.mxu0 0.0
    %3637 = vmatpush1.msra.mxu0 0.0
    %3638 = vmatprep.subr.mxu0 0.0
    %3639 = vmatpush1.msra.mxu0 0.0
    %3640 = vmatprep.subr.mxu0 0.0
    %3641 = vmatpush1.msra.mxu0 0.0
    %3642 = vmatprep.subr.mxu0 0.0
    %3643 = vmatpush1.msra.mxu0 0.0
    %3644 = vmatprep.subr.mxu0 0.0
    %3645 = vmatpush1.msra.mxu0 0.0
    %3646 = vmatprep.subr.mxu0 0.0
    %3647 = vmatpush1.msra.mxu0 0.0
    %3648 = vmatprep.subr.mxu0 0.0
    %3649 = vmatpush1.msra.mxu0 0.0
    %3650 = vmatprep.subr.mxu0 0.0
    %3651 = vmatpush1.msra.mxu0 0.0
    %3652 = vmatprep.subr.mxu0 0.0
    %3653 = vmatpush1.msra.mxu0 0.0
    %3654 = vmatprep.subr.mxu0 0.0
    %3655 = vmatpush1.msra.mxu0 0.0
    %3656 = vmatprep.subr.mxu0 0.0
    %3657 = vmatpush1.msra.mxu0 0.0
    %3658 = vmatprep.subr.mxu0 0.0
    %3659 = vmatpush1.msra.mxu0 0.0
    %3660 = vmatprep.subr.mxu0 0.0
    %3661 = vmatpush1.msra.mxu0 0.0
    %3662 = vmatprep.subr.mxu0 0.0
    %3663 = vmatpush1.msra.mxu0 0.0
    %3664 = vmatprep.mubr.f32.mxu0 0.0
    %3665 = vmatmul.mubr.f32.gmra.mrb[0].mxu0 %v3598
    %v3666 = vpop.f32.mrb[0].mxu0
    %v3667 = vadd.f32 0.0, %v3666
    %v3668 = vpop.f32.mrb[0].mxu0
    %3669 = vdwg.mxu0
    %v3670 = vadd.f32 %v3594, %v3667
    %v3671 = vxor.u32 %v3670, 2147483648
    %v3672 = vmul.f32 %v3671, 1.442695
    %v3673 = vpow.pop %v3672
    %v3674 = vadd.f32 %v3673, 1.0
    %v3675 = vrcp.pop %v3674
    %v3676 = vmul.f32 1.0, %v3675
    %v3677 = vtanh.pop %v3670
    %v3678 = vmul.f32 %v3676, %v3578
    %3680 = vrot.lane.b32.xlu0 %v3677, 64
    %v3681 = vpop.permute.xlu0 %3680
    %v3683 = vmul.f32 %v3676, %v3681
    %3685 = vrot.lane.b32.xlu0 %v3683, 32
    %v3686 = vpop.permute.xlu0 %3685
    %v3688 = vadd.f32 %v3678, %v3686
    %v3689 = vtanh.pop %v3688
    %3691 = vrot.lane.b32.xlu0 %v3689, 64
    %v3692 = vpop.permute.xlu0 %3691
    %v3694 = vmul.f32 %v3676, %v3692
    %3695 = vrot.lane.b32.xlu0 %v2869, 96
    %v3696 = vpop.permute.xlu0 %3695
    %v3698 = vadd.f32 %v3694, %v3696
    %3700 = vrot.lane.b32.xlu0 %v3698, 32
    %v3701 = vpop.permute.xlu0 %3700
    %3703 = vst.msk [vmem:[#allocation3 + $0x30] sm:$0xff] %vm207, %v3701
    %v3704 = vld [vmem:[#allocation4 + $0x38] sm:$0xff]
    %3706 = vrot.lane.b32.xlu0 %v3694, 32
    %v3707 = vpop.permute.xlu0 %3706
    %v3708 = vsel %vm207, %v3707, 0
    %3710 = vmatprep.subr.mxu0 0.0
    %3711 = vmatpush1.msra.mxu0 %v2858
    %3712 = vmatprep.subr.mxu0 0.0
    %3713 = vmatpush1.msra.mxu0 %v2859
    %3714 = vmatprep.subr.mxu0 0.0
    %3715 = vmatpush1.msra.mxu0 %v2860
    %3716 = vmatprep.subr.mxu0 0.0
    %3717 = vmatpush1.msra.mxu0 %v2861
    %3718 = vmatprep.subr.mxu0 0.0
    %3719 = vmatpush1.msra.mxu0 0.0
    %3720 = vmatprep.subr.mxu0 0.0
    %3721 = vmatpush1.msra.mxu0 0.0
    %3722 = vmatprep.subr.mxu0 0.0
    %3723 = vmatpush1.msra.mxu0 0.0
    %3724 = vmatprep.subr.mxu0 0.0
    %3725 = vmatpush1.msra.mxu0 0.0
    %3726 = vmatprep.subr.mxu0 0.0
    %3727 = vmatpush1.msra.mxu0 0.0
    %3728 = vmatprep.subr.mxu0 0.0
    %3729 = vmatpush1.msra.mxu0 0.0
    %3730 = vmatprep.subr.mxu0 0.0
    %3731 = vmatpush1.msra.mxu0 0.0
    %3732 = vmatprep.subr.mxu0 0.0
    %3733 = vmatpush1.msra.mxu0 0.0
    %3734 = vmatprep.subr.mxu0 0.0
    %3735 = vmatpush1.msra.mxu0 0.0
    %3736 = vmatprep.subr.mxu0 0.0
    %3737 = vmatpush1.msra.mxu0 0.0
    %3738 = vmatprep.subr.mxu0 0.0
    %3739 = vmatpush1.msra.mxu0 0.0
    %3740 = vmatprep.subr.mxu0 0.0
    %3741 = vmatpush1.msra.mxu0 0.0
    %3742 = vmatprep.subr.mxu0 0.0
    %3743 = vmatpush1.msra.mxu0 0.0
    %3744 = vmatprep.subr.mxu0 0.0
    %3745 = vmatpush1.msra.mxu0 0.0
    %3746 = vmatprep.subr.mxu0 0.0
    %3747 = vmatpush1.msra.mxu0 0.0
    %3748 = vmatprep.subr.mxu0 0.0
    %3749 = vmatpush1.msra.mxu0 0.0
    %3750 = vmatprep.subr.mxu0 0.0
    %3751 = vmatpush1.msra.mxu0 0.0
    %3752 = vmatprep.subr.mxu0 0.0
    %3753 = vmatpush1.msra.mxu0 0.0
    %3754 = vmatprep.subr.mxu0 0.0
    %3755 = vmatpush1.msra.mxu0 0.0
    %3756 = vmatprep.subr.mxu0 0.0
    %3757 = vmatpush1.msra.mxu0 0.0
    %3758 = vmatprep.subr.mxu0 0.0
    %3759 = vmatpush1.msra.mxu0 0.0
    %3760 = vmatprep.subr.mxu0 0.0
    %3761 = vmatpush1.msra.mxu0 0.0
    %3762 = vmatprep.subr.mxu0 0.0
    %3763 = vmatpush1.msra.mxu0 0.0
    %3764 = vmatprep.subr.mxu0 0.0
    %3765 = vmatpush1.msra.mxu0 0.0
    %3766 = vmatprep.subr.mxu0 0.0
    %3767 = vmatpush1.msra.mxu0 0.0
    %3768 = vmatprep.subr.mxu0 0.0
    %3769 = vmatpush1.msra.mxu0 0.0
    %3770 = vmatprep.subr.mxu0 0.0
    %3771 = vmatpush1.msra.mxu0 0.0
    %3772 = vmatprep.subr.mxu0 0.0
    %3773 = vmatpush1.msra.mxu0 0.0
    %3774 = vmatprep.mubr.f32.mxu0 0.0
    %3775 = vmatmul.mubr.f32.gmra.mrb[0].mxu0 %v3708
    %v3776 = vpop.f32.mrb[0].mxu0
    %v3777 = vadd.f32 0.0, %v3776
    %v3778 = vpop.f32.mrb[0].mxu0
    %3779 = vdwg.mxu0
    %v3780 = vadd.f32 %v3704, %v3777
    %v3781 = vxor.u32 %v3780, 2147483648
    %v3782 = vmul.f32 %v3781, 1.442695
    %v3783 = vpow.pop %v3782
    %v3784 = vadd.f32 %v3783, 1.0
    %v3785 = vrcp.pop %v3784
    %v3786 = vmul.f32 1.0, %v3785
    %v3787 = vtanh.pop %v3780
    %v3788 = vmul.f32 %v3786, %v3688
    %3790 = vrot.lane.b32.xlu0 %v3787, 64
    %v3791 = vpop.permute.xlu0 %3790
    %v3793 = vmul.f32 %v3786, %v3791
    %3795 = vrot.lane.b32.xlu0 %v3793, 32
    %v3796 = vpop.permute.xlu0 %3795
    %v3798 = vadd.f32 %v3788, %v3796
    %v3799 = vtanh.pop %v3798
    %3801 = vrot.lane.b32.xlu0 %v3799, 64
    %v3802 = vpop.permute.xlu0 %3801
    %v3804 = vmul.f32 %v3786, %v3802
    %3805 = vrot.lane.b32.xlu0 %v2870, 96
    %v3806 = vpop.permute.xlu0 %3805
    %v3808 = vadd.f32 %v3804, %v3806
    %3810 = vrot.lane.b32.xlu0 %v3808, 32
    %v3811 = vpop.permute.xlu0 %3810
    %3813 = vst.msk [vmem:[#allocation3 + $0x38] sm:$0xff] %vm207, %v3811
    %v3814 = vld [vmem:[#allocation5 + $0xe8] sm:$0xff]
    %v3815 = vld [vmem:[#allocation5 + $0xf0] sm:$0xff]
    %v3816 = vld [vmem:[#allocation5 + $0xf8] sm:$0xff]
    %v3817 = vld [vmem:[#allocation5 + $0x100] sm:$0xff]
    %v3818 = vld [vmem:[#allocation5 + $0x108] sm:$0xff]
    %v3819 = vld [vmem:[#allocation5 + $0x110] sm:$0xff]
    %v3820 = vld [vmem:[#allocation5 + $0x118] sm:$0xff]
    %v3821 = vld [vmem:[#allocation5 + $0x120] sm:$0xff]
    %v3822 = vld [vmem:[#allocation5 + $0x16c] sm:$0x1]
    %v3823 = vld [vmem:[#allocation3] sm:$0xff]
    %v3824 = vld [vmem:[#allocation3 + $0x8] sm:$0xff]
    %v3825 = vld [vmem:[#allocation3 + $0x10] sm:$0xff]
    %v3826 = vld [vmem:[#allocation3 + $0x18] sm:$0xff]
    %v3827 = vld [vmem:[#allocation3 + $0x20] sm:$0xff]
    %v3828 = vld [vmem:[#allocation3 + $0x28] sm:$0xff]
    %v3829 = vld [vmem:[#allocation3 + $0x30] sm:$0xff]
    %v3830 = vld [vmem:[#allocation3 + $0x38] sm:$0xff]
    %v3831 = vlaneseq
    %v3832 = vshrl.u32 %v3831, 7
    %v3833 = vsub.s32 0, %v3832
    %v3834 = vrot.slane %v3822, %v3833
    %v3836 = vsel %vm207, %v3823, 0
    %v3839 = vsel %vm207, %v3824, 0
    %v3842 = vsel %vm207, %v3825, 0
    %v3845 = vsel %vm207, %v3826, 0
    %v3848 = vsel %vm207, %v3827, 0
    %v3851 = vsel %vm207, %v3828, 0
    %v3854 = vsel %vm207, %v3829, 0
    %v3857 = vsel %vm207, %v3830, 0
    %3859 = vmatprep.subr.mxu0 0.0
    %3860 = vmatpush1.msra.mxu0 %v3814
    %3861 = vmatprep.subr.mxu0 0.0
    %3862 = vmatpush1.msra.mxu0 %v3815
    %3863 = vmatprep.subr.mxu0 0.0
    %3864 = vmatpush1.msra.mxu0 %v3816
    %3865 = vmatprep.subr.mxu0 0.0
    %3866 = vmatpush1.msra.mxu0 %v3817
    %3867 = vmatprep.subr.mxu0 0.0
    %3868 = vmatpush1.msra.mxu0 0.0
    %3869 = vmatprep.subr.mxu0 0.0
    %3870 = vmatpush1.msra.mxu0 0.0
    %3871 = vmatprep.subr.mxu0 0.0
    %3872 = vmatpush1.msra.mxu0 0.0
    %3873 = vmatprep.subr.mxu0 0.0
    %3874 = vmatpush1.msra.mxu0 0.0
    %3875 = vmatprep.subr.mxu0 0.0
    %3876 = vmatpush1.msra.mxu0 0.0
    %3877 = vmatprep.subr.mxu0 0.0
    %3878 = vmatpush1.msra.mxu0 0.0
    %3879 = vmatprep.subr.mxu0 0.0
    %3880 = vmatpush1.msra.mxu0 0.0
    %3881 = vmatprep.subr.mxu0 0.0
    %3882 = vmatpush1.msra.mxu0 0.0
    %3883 = vmatprep.subr.mxu0 0.0
    %3884 = vmatpush1.msra.mxu0 0.0
    %3885 = vmatprep.subr.mxu0 0.0
    %3886 = vmatpush1.msra.mxu0 0.0
    %3887 = vmatprep.subr.mxu0 0.0
    %3888 = vmatpush1.msra.mxu0 0.0
    %3889 = vmatprep.subr.mxu0 0.0
    %3890 = vmatpush1.msra.mxu0 0.0
    %3891 = vmatprep.subr.mxu0 0.0
    %3892 = vmatpush1.msra.mxu0 0.0
    %3893 = vmatprep.subr.mxu0 0.0
    %3894 = vmatpush1.msra.mxu0 0.0
    %3895 = vmatprep.subr.mxu0 0.0
    %3896 = vmatpush1.msra.mxu0 0.0
    %3897 = vmatprep.subr.mxu0 0.0
    %3898 = vmatpush1.msra.mxu0 0.0
    %3899 = vmatprep.subr.mxu0 0.0
    %3900 = vmatpush1.msra.mxu0 0.0
    %3901 = vmatprep.subr.mxu0 0.0
    %3902 = vmatpush1.msra.mxu0 0.0
    %3903 = vmatprep.subr.mxu0 0.0
    %3904 = vmatpush1.msra.mxu0 0.0
    %3905 = vmatprep.subr.mxu0 0.0
    %3906 = vmatpush1.msra.mxu0 0.0
    %3907 = vmatprep.subr.mxu0 0.0
    %3908 = vmatpush1.msra.mxu0 0.0
    %3909 = vmatprep.subr.mxu0 0.0
    %3910 = vmatpush1.msra.mxu0 0.0
    %3911 = vmatprep.subr.mxu0 0.0
    %3912 = vmatpush1.msra.mxu0 0.0
    %3913 = vmatprep.subr.mxu0 0.0
    %3914 = vmatpush1.msra.mxu0 0.0
    %3915 = vmatprep.subr.mxu0 0.0
    %3916 = vmatpush1.msra.mxu0 0.0
    %3917 = vmatprep.subr.mxu0 0.0
    %3918 = vmatpush1.msra.mxu0 0.0
    %3919 = vmatprep.subr.mxu0 0.0
    %3920 = vmatpush1.msra.mxu0 0.0
    %3921 = vmatprep.subr.mxu0 0.0
    %3922 = vmatpush1.msra.mxu0 0.0
    %3923 = vmatprep.mubr.f32.mxu0 0.0
    %3924 = vmatmul.mubr.f32.gmra.mrb[0].mxu0 %v3836
    %v3925 = vpop.f32.mrb[0].mxu0
    %v3926 = vadd.f32 %v3834, %v3925
    %v3927 = vpop.f32.mrb[0].mxu0
    %3928 = vmatprep.mubr.f32.mxu0 0.0
    %3929 = vmatmul.mubr.f32.gmra.mrb[0].mxu0 %v3839
    %v3930 = vpop.f32.mrb[0].mxu0
    %v3931 = vadd.f32 %v3834, %v3930
    %v3932 = vpop.f32.mrb[0].mxu0
    %3933 = vmatprep.mubr.f32.mxu0 0.0
    %3934 = vmatmul.mubr.f32.gmra.mrb[0].mxu0 %v3842
    %v3935 = vpop.f32.mrb[0].mxu0
    %v3936 = vadd.f32 %v3834, %v3935
    %v3937 = vpop.f32.mrb[0].mxu0
    %3938 = vmatprep.mubr.f32.mxu0 0.0
    %3939 = vmatmul.mubr.f32.gmra.mrb[0].mxu0 %v3845
    %v3940 = vpop.f32.mrb[0].mxu0
    %v3941 = vadd.f32 %v3834, %v3940
    %v3942 = vpop.f32.mrb[0].mxu0
    %3943 = vmatprep.mubr.f32.mxu0 0.0
    %3944 = vmatmul.mubr.f32.gmra.mrb[0].mxu0 %v3848
    %v3945 = vpop.f32.mrb[0].mxu0
    %v3946 = vadd.f32 %v3834, %v3945
    %v3947 = vpop.f32.mrb[0].mxu0
    %3948 = vmatprep.mubr.f32.mxu0 0.0
    %3949 = vmatmul.mubr.f32.gmra.mrb[0].mxu0 %v3851
    %v3950 = vpop.f32.mrb[0].mxu0
    %v3951 = vadd.f32 %v3834, %v3950
    %v3952 = vpop.f32.mrb[0].mxu0
    %3953 = vmatprep.mubr.f32.mxu0 0.0
    %3954 = vmatmul.mubr.f32.gmra.mrb[0].mxu0 %v3854
    %v3955 = vpop.f32.mrb[0].mxu0
    %v3956 = vadd.f32 %v3834, %v3955
    %v3957 = vpop.f32.mrb[0].mxu0
    %3958 = vmatprep.mubr.f32.mxu0 0.0
    %3959 = vmatmul.mubr.f32.gmra.mrb[0].mxu0 %v3857
    %v3960 = vpop.f32.mrb[0].mxu0
    %v3961 = vadd.f32 %v3834, %v3960
    %v3962 = vpop.f32.mrb[0].mxu0
    %3963 = vdwg.mxu0
    %3964 = vst [vmem:[#allocation4] sm:$0xff] %v3926
    %3965 = vst [vmem:[#allocation4 + $0x8] sm:$0xff] %v3931
    %3966 = vst [vmem:[#allocation4 + $0x10] sm:$0xff] %v3936
    %3967 = vst [vmem:[#allocation4 + $0x18] sm:$0xff] %v3941
    %3968 = vst [vmem:[#allocation4 + $0x20] sm:$0xff] %v3946
    %3969 = vst [vmem:[#allocation4 + $0x28] sm:$0xff] %v3951
    %3970 = vst [vmem:[#allocation4 + $0x30] sm:$0xff] %v3956
    %3971 = vst [vmem:[#allocation4 + $0x38] sm:$0xff] %v3961
    %v3972 = vld [vmem:[#allocation4] sm:$0xff]
    %v3973 = vxor.u32 %v3972, 2147483648
    %v3974 = vmul.f32 %v3973, 1.442695
    %v3975 = vpow.pop %v3974
    %v3976 = vadd.f32 %v3975, 1.0
    %v3977 = vrcp.pop %v3976
    %v3978 = vmul.f32 1.0, %v3977
    %v3979 = vtanh.pop %v3972
    %3981 = vrot.lane.b32.xlu0 %v3979, 64
    %v3982 = vpop.permute.xlu0 %3981
    %v3984 = vmul.f32 %v3978, %v3982
    %v3985 = vtanh.pop %v3984
    %3987 = vrot.lane.b32.xlu0 %v3985, 96
    %v3988 = vpop.permute.xlu0 %3987
    %v3990 = vmul.f32 %v3978, %v3988
    %3991 = vrot.lane.b32.xlu0 %v3823, 96
    %v3992 = vpop.permute.xlu0 %3991
    %v3994 = vadd.f32 %v3990, %v3992
    %3996 = vrot.lane.b32.xlu0 %v3994, 32
    %v3997 = vpop.permute.xlu0 %3996
    %3999 = vst.msk [vmem:[#allocation2] sm:$0xff] %vm207, %v3997
    %v4000 = vld [vmem:[#allocation4 + $0x8] sm:$0xff]
    %4002 = vrot.lane.b32.xlu0 %v3990, 32
    %v4003 = vpop.permute.xlu0 %4002
    %v4004 = vsel %vm207, %v4003, 0
    %4006 = vmatprep.subr.mxu0 0.0
    %4007 = vmatpush1.msra.mxu0 %v3818
    %4008 = vmatprep.subr.mxu0 0.0
    %4009 = vmatpush1.msra.mxu0 %v3819
    %4010 = vmatprep.subr.mxu0 0.0
    %4011 = vmatpush1.msra.mxu0 %v3820
    %4012 = vmatprep.subr.mxu0 0.0
    %4013 = vmatpush1.msra.mxu0 %v3821
    %4014 = vmatprep.subr.mxu0 0.0
    %4015 = vmatpush1.msra.mxu0 0.0
    %4016 = vmatprep.subr.mxu0 0.0
    %4017 = vmatpush1.msra.mxu0 0.0
    %4018 = vmatprep.subr.mxu0 0.0
    %4019 = vmatpush1.msra.mxu0 0.0
    %4020 = vmatprep.subr.mxu0 0.0
    %4021 = vmatpush1.msra.mxu0 0.0
    %4022 = vmatprep.subr.mxu0 0.0
    %4023 = vmatpush1.msra.mxu0 0.0
    %4024 = vmatprep.subr.mxu0 0.0
    %4025 = vmatpush1.msra.mxu0 0.0
    %4026 = vmatprep.subr.mxu0 0.0
    %4027 = vmatpush1.msra.mxu0 0.0
    %4028 = vmatprep.subr.mxu0 0.0
    %4029 = vmatpush1.msra.mxu0 0.0
    %4030 = vmatprep.subr.mxu0 0.0
    %4031 = vmatpush1.msra.mxu0 0.0
    %4032 = vmatprep.subr.mxu0 0.0
    %4033 = vmatpush1.msra.mxu0 0.0
    %4034 = vmatprep.subr.mxu0 0.0
    %4035 = vmatpush1.msra.mxu0 0.0
    %4036 = vmatprep.subr.mxu0 0.0
    %4037 = vmatpush1.msra.mxu0 0.0
    %4038 = vmatprep.subr.mxu0 0.0
    %4039 = vmatpush1.msra.mxu0 0.0
    %4040 = vmatprep.subr.mxu0 0.0
    %4041 = vmatpush1.msra.mxu0 0.0
    %4042 = vmatprep.subr.mxu0 0.0
    %4043 = vmatpush1.msra.mxu0 0.0
    %4044 = vmatprep.subr.mxu0 0.0
    %4045 = vmatpush1.msra.mxu0 0.0
    %4046 = vmatprep.subr.mxu0 0.0
    %4047 = vmatpush1.msra.mxu0 0.0
    %4048 = vmatprep.subr.mxu0 0.0
    %4049 = vmatpush1.msra.mxu0 0.0
    %4050 = vmatprep.subr.mxu0 0.0
    %4051 = vmatpush1.msra.mxu0 0.0
    %4052 = vmatprep.subr.mxu0 0.0
    %4053 = vmatpush1.msra.mxu0 0.0
    %4054 = vmatprep.subr.mxu0 0.0
    %4055 = vmatpush1.msra.mxu0 0.0
    %4056 = vmatprep.subr.mxu0 0.0
    %4057 = vmatpush1.msra.mxu0 0.0
    %4058 = vmatprep.subr.mxu0 0.0
    %4059 = vmatpush1.msra.mxu0 0.0
    %4060 = vmatprep.subr.mxu0 0.0
    %4061 = vmatpush1.msra.mxu0 0.0
    %4062 = vmatprep.subr.mxu0 0.0
    %4063 = vmatpush1.msra.mxu0 0.0
    %4064 = vmatprep.subr.mxu0 0.0
    %4065 = vmatpush1.msra.mxu0 0.0
    %4066 = vmatprep.subr.mxu0 0.0
    %4067 = vmatpush1.msra.mxu0 0.0
    %4068 = vmatprep.subr.mxu0 0.0
    %4069 = vmatpush1.msra.mxu0 0.0
    %4070 = vmatprep.mubr.f32.mxu0 0.0
    %4071 = vmatmul.mubr.f32.gmra.mrb[0].mxu0 %v4004
    %v4072 = vpop.f32.mrb[0].mxu0
    %v4073 = vadd.f32 0.0, %v4072
    %v4074 = vpop.f32.mrb[0].mxu0
    %4075 = vdwg.mxu0
    %v4076 = vadd.f32 %v4000, %v4073
    %v4077 = vxor.u32 %v4076, 2147483648
    %v4078 = vmul.f32 %v4077, 1.442695
    %v4079 = vpow.pop %v4078
    %v4080 = vadd.f32 %v4079, 1.0
    %v4081 = vrcp.pop %v4080
    %v4082 = vmul.f32 1.0, %v4081
    %v4083 = vtanh.pop %v4076
    %4085 = vrot.lane.b32.xlu0 %v3984, 32
    %v4086 = vpop.permute.xlu0 %4085
    %v4088 = vmul.f32 %v4082, %v4086
    %4090 = vrot.lane.b32.xlu0 %v4083, 64
    %v4091 = vpop.permute.xlu0 %4090
    %v4093 = vmul.f32 %v4082, %v4091
    %4095 = vrot.lane.b32.xlu0 %v4093, 32
    %v4096 = vpop.permute.xlu0 %4095
    %v4098 = vadd.f32 %v4088, %v4096
    %v4099 = vtanh.pop %v4098
    %4101 = vrot.lane.b32.xlu0 %v4099, 64
    %v4102 = vpop.permute.xlu0 %4101
    %v4104 = vmul.f32 %v4082, %v4102
    %4105 = vrot.lane.b32.xlu0 %v3824, 96
    %v4106 = vpop.permute.xlu0 %4105
    %v4108 = vadd.f32 %v4104, %v4106
    %4110 = vrot.lane.b32.xlu0 %v4108, 32
    %v4111 = vpop.permute.xlu0 %4110
    %4113 = vst.msk [vmem:[#allocation2 + $0x8] sm:$0xff] %vm207, %v4111
    %v4114 = vld [vmem:[#allocation4 + $0x10] sm:$0xff]
    %4116 = vrot.lane.b32.xlu0 %v4104, 32
    %v4117 = vpop.permute.xlu0 %4116
    %v4118 = vsel %vm207, %v4117, 0
    %4120 = vmatprep.subr.mxu0 0.0
    %4121 = vmatpush1.msra.mxu0 %v3818
    %4122 = vmatprep.subr.mxu0 0.0
    %4123 = vmatpush1.msra.mxu0 %v3819
    %4124 = vmatprep.subr.mxu0 0.0
    %4125 = vmatpush1.msra.mxu0 %v3820
    %4126 = vmatprep.subr.mxu0 0.0
    %4127 = vmatpush1.msra.mxu0 %v3821
    %4128 = vmatprep.subr.mxu0 0.0
    %4129 = vmatpush1.msra.mxu0 0.0
    %4130 = vmatprep.subr.mxu0 0.0
    %4131 = vmatpush1.msra.mxu0 0.0
    %4132 = vmatprep.subr.mxu0 0.0
    %4133 = vmatpush1.msra.mxu0 0.0
    %4134 = vmatprep.subr.mxu0 0.0
    %4135 = vmatpush1.msra.mxu0 0.0
    %4136 = vmatprep.subr.mxu0 0.0
    %4137 = vmatpush1.msra.mxu0 0.0
    %4138 = vmatprep.subr.mxu0 0.0
    %4139 = vmatpush1.msra.mxu0 0.0
    %4140 = vmatprep.subr.mxu0 0.0
    %4141 = vmatpush1.msra.mxu0 0.0
    %4142 = vmatprep.subr.mxu0 0.0
    %4143 = vmatpush1.msra.mxu0 0.0
    %4144 = vmatprep.subr.mxu0 0.0
    %4145 = vmatpush1.msra.mxu0 0.0
    %4146 = vmatprep.subr.mxu0 0.0
    %4147 = vmatpush1.msra.mxu0 0.0
    %4148 = vmatprep.subr.mxu0 0.0
    %4149 = vmatpush1.msra.mxu0 0.0
    %4150 = vmatprep.subr.mxu0 0.0
    %4151 = vmatpush1.msra.mxu0 0.0
    %4152 = vmatprep.subr.mxu0 0.0
    %4153 = vmatpush1.msra.mxu0 0.0
    %4154 = vmatprep.subr.mxu0 0.0
    %4155 = vmatpush1.msra.mxu0 0.0
    %4156 = vmatprep.subr.mxu0 0.0
    %4157 = vmatpush1.msra.mxu0 0.0
    %4158 = vmatprep.subr.mxu0 0.0
    %4159 = vmatpush1.msra.mxu0 0.0
    %4160 = vmatprep.subr.mxu0 0.0
    %4161 = vmatpush1.msra.mxu0 0.0
    %4162 = vmatprep.subr.mxu0 0.0
    %4163 = vmatpush1.msra.mxu0 0.0
    %4164 = vmatprep.subr.mxu0 0.0
    %4165 = vmatpush1.msra.mxu0 0.0
    %4166 = vmatprep.subr.mxu0 0.0
    %4167 = vmatpush1.msra.mxu0 0.0
    %4168 = vmatprep.subr.mxu0 0.0
    %4169 = vmatpush1.msra.mxu0 0.0
    %4170 = vmatprep.subr.mxu0 0.0
    %4171 = vmatpush1.msra.mxu0 0.0
    %4172 = vmatprep.subr.mxu0 0.0
    %4173 = vmatpush1.msra.mxu0 0.0
    %4174 = vmatprep.subr.mxu0 0.0
    %4175 = vmatpush1.msra.mxu0 0.0
    %4176 = vmatprep.subr.mxu0 0.0
    %4177 = vmatpush1.msra.mxu0 0.0
    %4178 = vmatprep.subr.mxu0 0.0
    %4179 = vmatpush1.msra.mxu0 0.0
    %4180 = vmatprep.subr.mxu0 0.0
    %4181 = vmatpush1.msra.mxu0 0.0
    %4182 = vmatprep.subr.mxu0 0.0
    %4183 = vmatpush1.msra.mxu0 0.0
    %4184 = vmatprep.mubr.f32.mxu0 0.0
    %4185 = vmatmul.mubr.f32.gmra.mrb[0].mxu0 %v4118
    %v4186 = vpop.f32.mrb[0].mxu0
    %v4187 = vadd.f32 0.0, %v4186
    %v4188 = vpop.f32.mrb[0].mxu0
    %4189 = vdwg.mxu0
    %v4190 = vadd.f32 %v4114, %v4187
    %v4191 = vxor.u32 %v4190, 2147483648
    %v4192 = vmul.f32 %v4191, 1.442695
    %v4193 = vpow.pop %v4192
    %v4194 = vadd.f32 %v4193, 1.0
    %v4195 = vrcp.pop %v4194
    %v4196 = vmul.f32 1.0, %v4195
    %v4197 = vtanh.pop %v4190
    %v4198 = vmul.f32 %v4196, %v4098
    %4200 = vrot.lane.b32.xlu0 %v4197, 64
    %v4201 = vpop.permute.xlu0 %4200
    %v4203 = vmul.f32 %v4196, %v4201
    %4205 = vrot.lane.b32.xlu0 %v4203, 32
    %v4206 = vpop.permute.xlu0 %4205
    %v4208 = vadd.f32 %v4198, %v4206
    %v4209 = vtanh.pop %v4208
    %4211 = vrot.lane.b32.xlu0 %v4209, 64
    %v4212 = vpop.permute.xlu0 %4211
    %v4214 = vmul.f32 %v4196, %v4212
    %4215 = vrot.lane.b32.xlu0 %v3825, 96
    %v4216 = vpop.permute.xlu0 %4215
    %v4218 = vadd.f32 %v4214, %v4216
    %4220 = vrot.lane.b32.xlu0 %v4218, 32
    %v4221 = vpop.permute.xlu0 %4220
    %4223 = vst.msk [vmem:[#allocation2 + $0x10] sm:$0xff] %vm207, %v4221
    %v4224 = vld [vmem:[#allocation4 + $0x18] sm:$0xff]
    %4226 = vrot.lane.b32.xlu0 %v4214, 32
    %v4227 = vpop.permute.xlu0 %4226
    %v4228 = vsel %vm207, %v4227, 0
    %4230 = vmatprep.subr.mxu0 0.0
    %4231 = vmatpush1.msra.mxu0 %v3818
    %4232 = vmatprep.subr.mxu0 0.0
    %4233 = vmatpush1.msra.mxu0 %v3819
    %4234 = vmatprep.subr.mxu0 0.0
    %4235 = vmatpush1.msra.mxu0 %v3820
    %4236 = vmatprep.subr.mxu0 0.0
    %4237 = vmatpush1.msra.mxu0 %v3821
    %4238 = vmatprep.subr.mxu0 0.0
    %4239 = vmatpush1.msra.mxu0 0.0
    %4240 = vmatprep.subr.mxu0 0.0
    %4241 = vmatpush1.msra.mxu0 0.0
    %4242 = vmatprep.subr.mxu0 0.0
    %4243 = vmatpush1.msra.mxu0 0.0
    %4244 = vmatprep.subr.mxu0 0.0
    %4245 = vmatpush1.msra.mxu0 0.0
    %4246 = vmatprep.subr.mxu0 0.0
    %4247 = vmatpush1.msra.mxu0 0.0
    %4248 = vmatprep.subr.mxu0 0.0
    %4249 = vmatpush1.msra.mxu0 0.0
    %4250 = vmatprep.subr.mxu0 0.0
    %4251 = vmatpush1.msra.mxu0 0.0
    %4252 = vmatprep.subr.mxu0 0.0
    %4253 = vmatpush1.msra.mxu0 0.0
    %4254 = vmatprep.subr.mxu0 0.0
    %4255 = vmatpush1.msra.mxu0 0.0
    %4256 = vmatprep.subr.mxu0 0.0
    %4257 = vmatpush1.msra.mxu0 0.0
    %4258 = vmatprep.subr.mxu0 0.0
    %4259 = vmatpush1.msra.mxu0 0.0
    %4260 = vmatprep.subr.mxu0 0.0
    %4261 = vmatpush1.msra.mxu0 0.0
    %4262 = vmatprep.subr.mxu0 0.0
    %4263 = vmatpush1.msra.mxu0 0.0
    %4264 = vmatprep.subr.mxu0 0.0
    %4265 = vmatpush1.msra.mxu0 0.0
    %4266 = vmatprep.subr.mxu0 0.0
    %4267 = vmatpush1.msra.mxu0 0.0
    %4268 = vmatprep.subr.mxu0 0.0
    %4269 = vmatpush1.msra.mxu0 0.0
    %4270 = vmatprep.subr.mxu0 0.0
    %4271 = vmatpush1.msra.mxu0 0.0
    %4272 = vmatprep.subr.mxu0 0.0
    %4273 = vmatpush1.msra.mxu0 0.0
    %4274 = vmatprep.subr.mxu0 0.0
    %4275 = vmatpush1.msra.mxu0 0.0
    %4276 = vmatprep.subr.mxu0 0.0
    %4277 = vmatpush1.msra.mxu0 0.0
    %4278 = vmatprep.subr.mxu0 0.0
    %4279 = vmatpush1.msra.mxu0 0.0
    %4280 = vmatprep.subr.mxu0 0.0
    %4281 = vmatpush1.msra.mxu0 0.0
    %4282 = vmatprep.subr.mxu0 0.0
    %4283 = vmatpush1.msra.mxu0 0.0
    %4284 = vmatprep.subr.mxu0 0.0
    %4285 = vmatpush1.msra.mxu0 0.0
    %4286 = vmatprep.subr.mxu0 0.0
    %4287 = vmatpush1.msra.mxu0 0.0
    %4288 = vmatprep.subr.mxu0 0.0
    %4289 = vmatpush1.msra.mxu0 0.0
    %4290 = vmatprep.subr.mxu0 0.0
    %4291 = vmatpush1.msra.mxu0 0.0
    %4292 = vmatprep.subr.mxu0 0.0
    %4293 = vmatpush1.msra.mxu0 0.0
    %4294 = vmatprep.mubr.f32.mxu0 0.0
    %4295 = vmatmul.mubr.f32.gmra.mrb[0].mxu0 %v4228
    %v4296 = vpop.f32.mrb[0].mxu0
    %v4297 = vadd.f32 0.0, %v4296
    %v4298 = vpop.f32.mrb[0].mxu0
    %4299 = vdwg.mxu0
    %v4300 = vadd.f32 %v4224, %v4297
    %v4301 = vxor.u32 %v4300, 2147483648
    %v4302 = vmul.f32 %v4301, 1.442695
    %v4303 = vpow.pop %v4302
    %v4304 = vadd.f32 %v4303, 1.0
    %v4305 = vrcp.pop %v4304
    %v4306 = vmul.f32 1.0, %v4305
    %v4307 = vtanh.pop %v4300
    %v4308 = vmul.f32 %v4306, %v4208
    %4310 = vrot.lane.b32.xlu0 %v4307, 64
    %v4311 = vpop.permute.xlu0 %4310
    %v4313 = vmul.f32 %v4306, %v4311
    %4315 = vrot.lane.b32.xlu0 %v4313, 32
    %v4316 = vpop.permute.xlu0 %4315
    %v4318 = vadd.f32 %v4308, %v4316
    %v4319 = vtanh.pop %v4318
    %4321 = vrot.lane.b32.xlu0 %v4319, 64
    %v4322 = vpop.permute.xlu0 %4321
    %v4324 = vmul.f32 %v4306, %v4322
    %4325 = vrot.lane.b32.xlu0 %v3826, 96
    %v4326 = vpop.permute.xlu0 %4325
    %v4328 = vadd.f32 %v4324, %v4326
    %4330 = vrot.lane.b32.xlu0 %v4328, 32
    %v4331 = vpop.permute.xlu0 %4330
    %4333 = vst.msk [vmem:[#allocation2 + $0x18] sm:$0xff] %vm207, %v4331
    %v4334 = vld [vmem:[#allocation4 + $0x20] sm:$0xff]
    %4336 = vrot.lane.b32.xlu0 %v4324, 32
    %v4337 = vpop.permute.xlu0 %4336
    %v4338 = vsel %vm207, %v4337, 0
    %4340 = vmatprep.subr.mxu0 0.0
    %4341 = vmatpush1.msra.mxu0 %v3818
    %4342 = vmatprep.subr.mxu0 0.0
    %4343 = vmatpush1.msra.mxu0 %v3819
    %4344 = vmatprep.subr.mxu0 0.0
    %4345 = vmatpush1.msra.mxu0 %v3820
    %4346 = vmatprep.subr.mxu0 0.0
    %4347 = vmatpush1.msra.mxu0 %v3821
    %4348 = vmatprep.subr.mxu0 0.0
    %4349 = vmatpush1.msra.mxu0 0.0
    %4350 = vmatprep.subr.mxu0 0.0
    %4351 = vmatpush1.msra.mxu0 0.0
    %4352 = vmatprep.subr.mxu0 0.0
    %4353 = vmatpush1.msra.mxu0 0.0
    %4354 = vmatprep.subr.mxu0 0.0
    %4355 = vmatpush1.msra.mxu0 0.0
    %4356 = vmatprep.subr.mxu0 0.0
    %4357 = vmatpush1.msra.mxu0 0.0
    %4358 = vmatprep.subr.mxu0 0.0
    %4359 = vmatpush1.msra.mxu0 0.0
    %4360 = vmatprep.subr.mxu0 0.0
    %4361 = vmatpush1.msra.mxu0 0.0
    %4362 = vmatprep.subr.mxu0 0.0
    %4363 = vmatpush1.msra.mxu0 0.0
    %4364 = vmatprep.subr.mxu0 0.0
    %4365 = vmatpush1.msra.mxu0 0.0
    %4366 = vmatprep.subr.mxu0 0.0
    %4367 = vmatpush1.msra.mxu0 0.0
    %4368 = vmatprep.subr.mxu0 0.0
    %4369 = vmatpush1.msra.mxu0 0.0
    %4370 = vmatprep.subr.mxu0 0.0
    %4371 = vmatpush1.msra.mxu0 0.0
    %4372 = vmatprep.subr.mxu0 0.0
    %4373 = vmatpush1.msra.mxu0 0.0
    %4374 = vmatprep.subr.mxu0 0.0
    %4375 = vmatpush1.msra.mxu0 0.0
    %4376 = vmatprep.subr.mxu0 0.0
    %4377 = vmatpush1.msra.mxu0 0.0
    %4378 = vmatprep.subr.mxu0 0.0
    %4379 = vmatpush1.msra.mxu0 0.0
    %4380 = vmatprep.subr.mxu0 0.0
    %4381 = vmatpush1.msra.mxu0 0.0
    %4382 = vmatprep.subr.mxu0 0.0
    %4383 = vmatpush1.msra.mxu0 0.0
    %4384 = vmatprep.subr.mxu0 0.0
    %4385 = vmatpush1.msra.mxu0 0.0
    %4386 = vmatprep.subr.mxu0 0.0
    %4387 = vmatpush1.msra.mxu0 0.0
    %4388 = vmatprep.subr.mxu0 0.0
    %4389 = vmatpush1.msra.mxu0 0.0
    %4390 = vmatprep.subr.mxu0 0.0
    %4391 = vmatpush1.msra.mxu0 0.0
    %4392 = vmatprep.subr.mxu0 0.0
    %4393 = vmatpush1.msra.mxu0 0.0
    %4394 = vmatprep.subr.mxu0 0.0
    %4395 = vmatpush1.msra.mxu0 0.0
    %4396 = vmatprep.subr.mxu0 0.0
    %4397 = vmatpush1.msra.mxu0 0.0
    %4398 = vmatprep.subr.mxu0 0.0
    %4399 = vmatpush1.msra.mxu0 0.0
    %4400 = vmatprep.subr.mxu0 0.0
    %4401 = vmatpush1.msra.mxu0 0.0
    %4402 = vmatprep.subr.mxu0 0.0
    %4403 = vmatpush1.msra.mxu0 0.0
    %4404 = vmatprep.mubr.f32.mxu0 0.0
    %4405 = vmatmul.mubr.f32.gmra.mrb[0].mxu0 %v4338
    %v4406 = vpop.f32.mrb[0].mxu0
    %v4407 = vadd.f32 0.0, %v4406
    %v4408 = vpop.f32.mrb[0].mxu0
    %4409 = vdwg.mxu0
    %v4410 = vadd.f32 %v4334, %v4407
    %v4411 = vxor.u32 %v4410, 2147483648
    %v4412 = vmul.f32 %v4411, 1.442695
    %v4413 = vpow.pop %v4412
    %v4414 = vadd.f32 %v4413, 1.0
    %v4415 = vrcp.pop %v4414
    %v4416 = vmul.f32 1.0, %v4415
    %v4417 = vtanh.pop %v4410
    %v4418 = vmul.f32 %v4416, %v4318
    %4420 = vrot.lane.b32.xlu0 %v4417, 64
    %v4421 = vpop.permute.xlu0 %4420
    %v4423 = vmul.f32 %v4416, %v4421
    %4425 = vrot.lane.b32.xlu0 %v4423, 32
    %v4426 = vpop.permute.xlu0 %4425
    %v4428 = vadd.f32 %v4418, %v4426
    %v4429 = vtanh.pop %v4428
    %4431 = vrot.lane.b32.xlu0 %v4429, 64
    %v4432 = vpop.permute.xlu0 %4431
    %v4434 = vmul.f32 %v4416, %v4432
    %4435 = vrot.lane.b32.xlu0 %v3827, 96
    %v4436 = vpop.permute.xlu0 %4435
    %v4438 = vadd.f32 %v4434, %v4436
    %4440 = vrot.lane.b32.xlu0 %v4438, 32
    %v4441 = vpop.permute.xlu0 %4440
    %4443 = vst.msk [vmem:[#allocation2 + $0x20] sm:$0xff] %vm207, %v4441
    %v4444 = vld [vmem:[#allocation4 + $0x28] sm:$0xff]
    %4446 = vrot.lane.b32.xlu0 %v4434, 32
    %v4447 = vpop.permute.xlu0 %4446
    %v4448 = vsel %vm207, %v4447, 0
    %4450 = vmatprep.subr.mxu0 0.0
    %4451 = vmatpush1.msra.mxu0 %v3818
    %4452 = vmatprep.subr.mxu0 0.0
    %4453 = vmatpush1.msra.mxu0 %v3819
    %4454 = vmatprep.subr.mxu0 0.0
    %4455 = vmatpush1.msra.mxu0 %v3820
    %4456 = vmatprep.subr.mxu0 0.0
    %4457 = vmatpush1.msra.mxu0 %v3821
    %4458 = vmatprep.subr.mxu0 0.0
    %4459 = vmatpush1.msra.mxu0 0.0
    %4460 = vmatprep.subr.mxu0 0.0
    %4461 = vmatpush1.msra.mxu0 0.0
    %4462 = vmatprep.subr.mxu0 0.0
    %4463 = vmatpush1.msra.mxu0 0.0
    %4464 = vmatprep.subr.mxu0 0.0
    %4465 = vmatpush1.msra.mxu0 0.0
    %4466 = vmatprep.subr.mxu0 0.0
    %4467 = vmatpush1.msra.mxu0 0.0
    %4468 = vmatprep.subr.mxu0 0.0
    %4469 = vmatpush1.msra.mxu0 0.0
    %4470 = vmatprep.subr.mxu0 0.0
    %4471 = vmatpush1.msra.mxu0 0.0
    %4472 = vmatprep.subr.mxu0 0.0
    %4473 = vmatpush1.msra.mxu0 0.0
    %4474 = vmatprep.subr.mxu0 0.0
    %4475 = vmatpush1.msra.mxu0 0.0
    %4476 = vmatprep.subr.mxu0 0.0
    %4477 = vmatpush1.msra.mxu0 0.0
    %4478 = vmatprep.subr.mxu0 0.0
    %4479 = vmatpush1.msra.mxu0 0.0
    %4480 = vmatprep.subr.mxu0 0.0
    %4481 = vmatpush1.msra.mxu0 0.0
    %4482 = vmatprep.subr.mxu0 0.0
    %4483 = vmatpush1.msra.mxu0 0.0
    %4484 = vmatprep.subr.mxu0 0.0
    %4485 = vmatpush1.msra.mxu0 0.0
    %4486 = vmatprep.subr.mxu0 0.0
    %4487 = vmatpush1.msra.mxu0 0.0
    %4488 = vmatprep.subr.mxu0 0.0
    %4489 = vmatpush1.msra.mxu0 0.0
    %4490 = vmatprep.subr.mxu0 0.0
    %4491 = vmatpush1.msra.mxu0 0.0
    %4492 = vmatprep.subr.mxu0 0.0
    %4493 = vmatpush1.msra.mxu0 0.0
    %4494 = vmatprep.subr.mxu0 0.0
    %4495 = vmatpush1.msra.mxu0 0.0
    %4496 = vmatprep.subr.mxu0 0.0
    %4497 = vmatpush1.msra.mxu0 0.0
    %4498 = vmatprep.subr.mxu0 0.0
    %4499 = vmatpush1.msra.mxu0 0.0
    %4500 = vmatprep.subr.mxu0 0.0
    %4501 = vmatpush1.msra.mxu0 0.0
    %4502 = vmatprep.subr.mxu0 0.0
    %4503 = vmatpush1.msra.mxu0 0.0
    %4504 = vmatprep.subr.mxu0 0.0
    %4505 = vmatpush1.msra.mxu0 0.0
    %4506 = vmatprep.subr.mxu0 0.0
    %4507 = vmatpush1.msra.mxu0 0.0
    %4508 = vmatprep.subr.mxu0 0.0
    %4509 = vmatpush1.msra.mxu0 0.0
    %4510 = vmatprep.subr.mxu0 0.0
    %4511 = vmatpush1.msra.mxu0 0.0
    %4512 = vmatprep.subr.mxu0 0.0
    %4513 = vmatpush1.msra.mxu0 0.0
    %4514 = vmatprep.mubr.f32.mxu0 0.0
    %4515 = vmatmul.mubr.f32.gmra.mrb[0].mxu0 %v4448
    %v4516 = vpop.f32.mrb[0].mxu0
    %v4517 = vadd.f32 0.0, %v4516
    %v4518 = vpop.f32.mrb[0].mxu0
    %4519 = vdwg.mxu0
    %v4520 = vadd.f32 %v4444, %v4517
    %v4521 = vxor.u32 %v4520, 2147483648
    %v4522 = vmul.f32 %v4521, 1.442695
    %v4523 = vpow.pop %v4522
    %v4524 = vadd.f32 %v4523, 1.0
    %v4525 = vrcp.pop %v4524
    %v4526 = vmul.f32 1.0, %v4525
    %v4527 = vtanh.pop %v4520
    %v4528 = vmul.f32 %v4526, %v4428
    %4530 = vrot.lane.b32.xlu0 %v4527, 64
    %v4531 = vpop.permute.xlu0 %4530
    %v4533 = vmul.f32 %v4526, %v4531
    %4535 = vrot.lane.b32.xlu0 %v4533, 32
    %v4536 = vpop.permute.xlu0 %4535
    %v4538 = vadd.f32 %v4528, %v4536
    %v4539 = vtanh.pop %v4538
    %4541 = vrot.lane.b32.xlu0 %v4539, 64
    %v4542 = vpop.permute.xlu0 %4541
    %v4544 = vmul.f32 %v4526, %v4542
    %4545 = vrot.lane.b32.xlu0 %v3828, 96
    %v4546 = vpop.permute.xlu0 %4545
    %v4548 = vadd.f32 %v4544, %v4546
    %4550 = vrot.lane.b32.xlu0 %v4548, 32
    %v4551 = vpop.permute.xlu0 %4550
    %4553 = vst.msk [vmem:[#allocation2 + $0x28] sm:$0xff] %vm207, %v4551
    %v4554 = vld [vmem:[#allocation4 + $0x30] sm:$0xff]
    %4556 = vrot.lane.b32.xlu0 %v4544, 32
    %v4557 = vpop.permute.xlu0 %4556
    %v4558 = vsel %vm207, %v4557, 0
    %4560 = vmatprep.subr.mxu0 0.0
    %4561 = vmatpush1.msra.mxu0 %v3818
    %4562 = vmatprep.subr.mxu0 0.0
    %4563 = vmatpush1.msra.mxu0 %v3819
    %4564 = vmatprep.subr.mxu0 0.0
    %4565 = vmatpush1.msra.mxu0 %v3820
    %4566 = vmatprep.subr.mxu0 0.0
    %4567 = vmatpush1.msra.mxu0 %v3821
    %4568 = vmatprep.subr.mxu0 0.0
    %4569 = vmatpush1.msra.mxu0 0.0
    %4570 = vmatprep.subr.mxu0 0.0
    %4571 = vmatpush1.msra.mxu0 0.0
    %4572 = vmatprep.subr.mxu0 0.0
    %4573 = vmatpush1.msra.mxu0 0.0
    %4574 = vmatprep.subr.mxu0 0.0
    %4575 = vmatpush1.msra.mxu0 0.0
    %4576 = vmatprep.subr.mxu0 0.0
    %4577 = vmatpush1.msra.mxu0 0.0
    %4578 = vmatprep.subr.mxu0 0.0
    %4579 = vmatpush1.msra.mxu0 0.0
    %4580 = vmatprep.subr.mxu0 0.0
    %4581 = vmatpush1.msra.mxu0 0.0
    %4582 = vmatprep.subr.mxu0 0.0
    %4583 = vmatpush1.msra.mxu0 0.0
    %4584 = vmatprep.subr.mxu0 0.0
    %4585 = vmatpush1.msra.mxu0 0.0
    %4586 = vmatprep.subr.mxu0 0.0
    %4587 = vmatpush1.msra.mxu0 0.0
    %4588 = vmatprep.subr.mxu0 0.0
    %4589 = vmatpush1.msra.mxu0 0.0
    %4590 = vmatprep.subr.mxu0 0.0
    %4591 = vmatpush1.msra.mxu0 0.0
    %4592 = vmatprep.subr.mxu0 0.0
    %4593 = vmatpush1.msra.mxu0 0.0
    %4594 = vmatprep.subr.mxu0 0.0
    %4595 = vmatpush1.msra.mxu0 0.0
    %4596 = vmatprep.subr.mxu0 0.0
    %4597 = vmatpush1.msra.mxu0 0.0
    %4598 = vmatprep.subr.mxu0 0.0
    %4599 = vmatpush1.msra.mxu0 0.0
    %4600 = vmatprep.subr.mxu0 0.0
    %4601 = vmatpush1.msra.mxu0 0.0
    %4602 = vmatprep.subr.mxu0 0.0
    %4603 = vmatpush1.msra.mxu0 0.0
    %4604 = vmatprep.subr.mxu0 0.0
    %4605 = vmatpush1.msra.mxu0 0.0
    %4606 = vmatprep.subr.mxu0 0.0
    %4607 = vmatpush1.msra.mxu0 0.0
    %4608 = vmatprep.subr.mxu0 0.0
    %4609 = vmatpush1.msra.mxu0 0.0
    %4610 = vmatprep.subr.mxu0 0.0
    %4611 = vmatpush1.msra.mxu0 0.0
    %4612 = vmatprep.subr.mxu0 0.0
    %4613 = vmatpush1.msra.mxu0 0.0
    %4614 = vmatprep.subr.mxu0 0.0
    %4615 = vmatpush1.msra.mxu0 0.0
    %4616 = vmatprep.subr.mxu0 0.0
    %4617 = vmatpush1.msra.mxu0 0.0
    %4618 = vmatprep.subr.mxu0 0.0
    %4619 = vmatpush1.msra.mxu0 0.0
    %4620 = vmatprep.subr.mxu0 0.0
    %4621 = vmatpush1.msra.mxu0 0.0
    %4622 = vmatprep.subr.mxu0 0.0
    %4623 = vmatpush1.msra.mxu0 0.0
    %4624 = vmatprep.mubr.f32.mxu0 0.0
    %4625 = vmatmul.mubr.f32.gmra.mrb[0].mxu0 %v4558
    %v4626 = vpop.f32.mrb[0].mxu0
    %v4627 = vadd.f32 0.0, %v4626
    %v4628 = vpop.f32.mrb[0].mxu0
    %4629 = vdwg.mxu0
    %v4630 = vadd.f32 %v4554, %v4627
    %v4631 = vxor.u32 %v4630, 2147483648
    %v4632 = vmul.f32 %v4631, 1.442695
    %v4633 = vpow.pop %v4632
    %v4634 = vadd.f32 %v4633, 1.0
    %v4635 = vrcp.pop %v4634
    %v4636 = vmul.f32 1.0, %v4635
    %v4637 = vtanh.pop %v4630
    %v4638 = vmul.f32 %v4636, %v4538
    %4640 = vrot.lane.b32.xlu0 %v4637, 64
    %v4641 = vpop.permute.xlu0 %4640
    %v4643 = vmul.f32 %v4636, %v4641
    %4645 = vrot.lane.b32.xlu0 %v4643, 32
    %v4646 = vpop.permute.xlu0 %4645
    %v4648 = vadd.f32 %v4638, %v4646
    %v4649 = vtanh.pop %v4648
    %4651 = vrot.lane.b32.xlu0 %v4649, 64
    %v4652 = vpop.permute.xlu0 %4651
    %v4654 = vmul.f32 %v4636, %v4652
    %4655 = vrot.lane.b32.xlu0 %v3829, 96
    %v4656 = vpop.permute.xlu0 %4655
    %v4658 = vadd.f32 %v4654, %v4656
    %4660 = vrot.lane.b32.xlu0 %v4658, 32
    %v4661 = vpop.permute.xlu0 %4660
    %4663 = vst.msk [vmem:[#allocation2 + $0x30] sm:$0xff] %vm207, %v4661
    %v4664 = vld [vmem:[#allocation4 + $0x38] sm:$0xff]
    %4666 = vrot.lane.b32.xlu0 %v4654, 32
    %v4667 = vpop.permute.xlu0 %4666
    %v4668 = vsel %vm207, %v4667, 0
    %4670 = vmatprep.subr.mxu0 0.0
    %4671 = vmatpush1.msra.mxu0 %v3818
    %4672 = vmatprep.subr.mxu0 0.0
    %4673 = vmatpush1.msra.mxu0 %v3819
    %4674 = vmatprep.subr.mxu0 0.0
    %4675 = vmatpush1.msra.mxu0 %v3820
    %4676 = vmatprep.subr.mxu0 0.0
    %4677 = vmatpush1.msra.mxu0 %v3821
    %4678 = vmatprep.subr.mxu0 0.0
    %4679 = vmatpush1.msra.mxu0 0.0
    %4680 = vmatprep.subr.mxu0 0.0
    %4681 = vmatpush1.msra.mxu0 0.0
    %4682 = vmatprep.subr.mxu0 0.0
    %4683 = vmatpush1.msra.mxu0 0.0
    %4684 = vmatprep.subr.mxu0 0.0
    %4685 = vmatpush1.msra.mxu0 0.0
    %4686 = vmatprep.subr.mxu0 0.0
    %4687 = vmatpush1.msra.mxu0 0.0
    %4688 = vmatprep.subr.mxu0 0.0
    %4689 = vmatpush1.msra.mxu0 0.0
    %4690 = vmatprep.subr.mxu0 0.0
    %4691 = vmatpush1.msra.mxu0 0.0
    %4692 = vmatprep.subr.mxu0 0.0
    %4693 = vmatpush1.msra.mxu0 0.0
    %4694 = vmatprep.subr.mxu0 0.0
    %4695 = vmatpush1.msra.mxu0 0.0
    %4696 = vmatprep.subr.mxu0 0.0
    %4697 = vmatpush1.msra.mxu0 0.0
    %4698 = vmatprep.subr.mxu0 0.0
    %4699 = vmatpush1.msra.mxu0 0.0
    %4700 = vmatprep.subr.mxu0 0.0
    %4701 = vmatpush1.msra.mxu0 0.0
    %4702 = vmatprep.subr.mxu0 0.0
    %4703 = vmatpush1.msra.mxu0 0.0
    %4704 = vmatprep.subr.mxu0 0.0
    %4705 = vmatpush1.msra.mxu0 0.0
    %4706 = vmatprep.subr.mxu0 0.0
    %4707 = vmatpush1.msra.mxu0 0.0
    %4708 = vmatprep.subr.mxu0 0.0
    %4709 = vmatpush1.msra.mxu0 0.0
    %4710 = vmatprep.subr.mxu0 0.0
    %4711 = vmatpush1.msra.mxu0 0.0
    %4712 = vmatprep.subr.mxu0 0.0
    %4713 = vmatpush1.msra.mxu0 0.0
    %4714 = vmatprep.subr.mxu0 0.0
    %4715 = vmatpush1.msra.mxu0 0.0
    %4716 = vmatprep.subr.mxu0 0.0
    %4717 = vmatpush1.msra.mxu0 0.0
    %4718 = vmatprep.subr.mxu0 0.0
    %4719 = vmatpush1.msra.mxu0 0.0
    %4720 = vmatprep.subr.mxu0 0.0
    %4721 = vmatpush1.msra.mxu0 0.0
    %4722 = vmatprep.subr.mxu0 0.0
    %4723 = vmatpush1.msra.mxu0 0.0
    %4724 = vmatprep.subr.mxu0 0.0
    %4725 = vmatpush1.msra.mxu0 0.0
    %4726 = vmatprep.subr.mxu0 0.0
    %4727 = vmatpush1.msra.mxu0 0.0
    %4728 = vmatprep.subr.mxu0 0.0
    %4729 = vmatpush1.msra.mxu0 0.0
    %4730 = vmatprep.subr.mxu0 0.0
    %4731 = vmatpush1.msra.mxu0 0.0
    %4732 = vmatprep.subr.mxu0 0.0
    %4733 = vmatpush1.msra.mxu0 0.0
    %4734 = vmatprep.mubr.f32.mxu0 0.0
    %4735 = vmatmul.mubr.f32.gmra.mrb[0].mxu0 %v4668
    %v4736 = vpop.f32.mrb[0].mxu0
    %v4737 = vadd.f32 0.0, %v4736
    %v4738 = vpop.f32.mrb[0].mxu0
    %4739 = vdwg.mxu0
    %v4740 = vadd.f32 %v4664, %v4737
    %v4741 = vxor.u32 %v4740, 2147483648
    %v4742 = vmul.f32 %v4741, 1.442695
    %v4743 = vpow.pop %v4742
    %v4744 = vadd.f32 %v4743, 1.0
    %v4745 = vrcp.pop %v4744
    %v4746 = vmul.f32 1.0, %v4745
    %v4747 = vtanh.pop %v4740
    %v4748 = vmul.f32 %v4746, %v4648
    %4750 = vrot.lane.b32.xlu0 %v4747, 64
    %v4751 = vpop.permute.xlu0 %4750
    %v4753 = vmul.f32 %v4746, %v4751
    %4755 = vrot.lane.b32.xlu0 %v4753, 32
    %v4756 = vpop.permute.xlu0 %4755
    %v4758 = vadd.f32 %v4748, %v4756
    %v4759 = vtanh.pop %v4758
    %4761 = vrot.lane.b32.xlu0 %v4759, 64
    %v4762 = vpop.permute.xlu0 %4761
    %v4764 = vmul.f32 %v4746, %v4762
    %4765 = vrot.lane.b32.xlu0 %v3830, 96
    %v4766 = vpop.permute.xlu0 %4765
    %v4768 = vadd.f32 %v4764, %v4766
    %4770 = vrot.lane.b32.xlu0 %v4768, 32
    %v4771 = vpop.permute.xlu0 %4770
    %4773 = vst.msk [vmem:[#allocation2 + $0x38] sm:$0xff] %vm207, %v4771
    %v4774 = vld [vmem:[#allocation5 + $0x128] sm:$0xff]
    %v4775 = vld [vmem:[#allocation5 + $0x130] sm:$0xff]
    %v4776 = vld [vmem:[#allocation5 + $0x138] sm:$0xff]
    %v4777 = vld [vmem:[#allocation5 + $0x140] sm:$0xff]
    %v4778 = vld [vmem:[#allocation5 + $0x148] sm:$0xff]
    %v4779 = vld [vmem:[#allocation5 + $0x150] sm:$0xff]
    %v4780 = vld [vmem:[#allocation5 + $0x158] sm:$0xff]
    %v4781 = vld [vmem:[#allocation5 + $0x160] sm:$0xff]
    %v4782 = vld [vmem:[#allocation5 + $0x16d] sm:$0x1]
    %v4783 = vld [vmem:[#allocation2] sm:$0xff]
    %v4784 = vld [vmem:[#allocation2 + $0x8] sm:$0xff]
    %v4785 = vld [vmem:[#allocation2 + $0x10] sm:$0xff]
    %v4786 = vld [vmem:[#allocation2 + $0x18] sm:$0xff]
    %v4787 = vld [vmem:[#allocation2 + $0x20] sm:$0xff]
    %v4788 = vld [vmem:[#allocation2 + $0x28] sm:$0xff]
    %v4789 = vld [vmem:[#allocation2 + $0x30] sm:$0xff]
    %v4790 = vld [vmem:[#allocation2 + $0x38] sm:$0xff]
    %v4791 = vlaneseq
    %v4792 = vshrl.u32 %v4791, 7
    %v4793 = vsub.s32 0, %v4792
    %v4794 = vrot.slane %v4782, %v4793
    %v4796 = vsel %vm207, %v4783, 0
    %v4799 = vsel %vm207, %v4784, 0
    %v4802 = vsel %vm207, %v4785, 0
    %v4805 = vsel %vm207, %v4786, 0
    %v4808 = vsel %vm207, %v4787, 0
    %v4811 = vsel %vm207, %v4788, 0
    %v4814 = vsel %vm207, %v4789, 0
    %v4817 = vsel %vm207, %v4790, 0
    %4819 = vmatprep.subr.mxu0 0.0
    %4820 = vmatpush1.msra.mxu0 %v4774
    %4821 = vmatprep.subr.mxu0 0.0
    %4822 = vmatpush1.msra.mxu0 %v4775
    %4823 = vmatprep.subr.mxu0 0.0
    %4824 = vmatpush1.msra.mxu0 %v4776
    %4825 = vmatprep.subr.mxu0 0.0
    %4826 = vmatpush1.msra.mxu0 %v4777
    %4827 = vmatprep.subr.mxu0 0.0
    %4828 = vmatpush1.msra.mxu0 0.0
    %4829 = vmatprep.subr.mxu0 0.0
    %4830 = vmatpush1.msra.mxu0 0.0
    %4831 = vmatprep.subr.mxu0 0.0
    %4832 = vmatpush1.msra.mxu0 0.0
    %4833 = vmatprep.subr.mxu0 0.0
    %4834 = vmatpush1.msra.mxu0 0.0
    %4835 = vmatprep.subr.mxu0 0.0
    %4836 = vmatpush1.msra.mxu0 0.0
    %4837 = vmatprep.subr.mxu0 0.0
    %4838 = vmatpush1.msra.mxu0 0.0
    %4839 = vmatprep.subr.mxu0 0.0
    %4840 = vmatpush1.msra.mxu0 0.0
    %4841 = vmatprep.subr.mxu0 0.0
    %4842 = vmatpush1.msra.mxu0 0.0
    %4843 = vmatprep.subr.mxu0 0.0
    %4844 = vmatpush1.msra.mxu0 0.0
    %4845 = vmatprep.subr.mxu0 0.0
    %4846 = vmatpush1.msra.mxu0 0.0
    %4847 = vmatprep.subr.mxu0 0.0
    %4848 = vmatpush1.msra.mxu0 0.0
    %4849 = vmatprep.subr.mxu0 0.0
    %4850 = vmatpush1.msra.mxu0 0.0
    %4851 = vmatprep.subr.mxu0 0.0
    %4852 = vmatpush1.msra.mxu0 0.0
    %4853 = vmatprep.subr.mxu0 0.0
    %4854 = vmatpush1.msra.mxu0 0.0
    %4855 = vmatprep.subr.mxu0 0.0
    %4856 = vmatpush1.msra.mxu0 0.0
    %4857 = vmatprep.subr.mxu0 0.0
    %4858 = vmatpush1.msra.mxu0 0.0
    %4859 = vmatprep.subr.mxu0 0.0
    %4860 = vmatpush1.msra.mxu0 0.0
    %4861 = vmatprep.subr.mxu0 0.0
    %4862 = vmatpush1.msra.mxu0 0.0
    %4863 = vmatprep.subr.mxu0 0.0
    %4864 = vmatpush1.msra.mxu0 0.0
    %4865 = vmatprep.subr.mxu0 0.0
    %4866 = vmatpush1.msra.mxu0 0.0
    %4867 = vmatprep.subr.mxu0 0.0
    %4868 = vmatpush1.msra.mxu0 0.0
    %4869 = vmatprep.subr.mxu0 0.0
    %4870 = vmatpush1.msra.mxu0 0.0
    %4871 = vmatprep.subr.mxu0 0.0
    %4872 = vmatpush1.msra.mxu0 0.0
    %4873 = vmatprep.subr.mxu0 0.0
    %4874 = vmatpush1.msra.mxu0 0.0
    %4875 = vmatprep.subr.mxu0 0.0
    %4876 = vmatpush1.msra.mxu0 0.0
    %4877 = vmatprep.subr.mxu0 0.0
    %4878 = vmatpush1.msra.mxu0 0.0
    %4879 = vmatprep.subr.mxu0 0.0
    %4880 = vmatpush1.msra.mxu0 0.0
    %4881 = vmatprep.subr.mxu0 0.0
    %4882 = vmatpush1.msra.mxu0 0.0
    %4883 = vmatprep.mubr.f32.mxu0 0.0
    %4884 = vmatmul.mubr.f32.gmra.mrb[0].mxu0 %v4796
    %v4885 = vpop.f32.mrb[0].mxu0
    %v4886 = vadd.f32 %v4794, %v4885
    %v4887 = vpop.f32.mrb[0].mxu0
    %4888 = vmatprep.mubr.f32.mxu0 0.0
    %4889 = vmatmul.mubr.f32.gmra.mrb[0].mxu0 %v4799
    %v4890 = vpop.f32.mrb[0].mxu0
    %v4891 = vadd.f32 %v4794, %v4890
    %v4892 = vpop.f32.mrb[0].mxu0
    %4893 = vmatprep.mubr.f32.mxu0 0.0
    %4894 = vmatmul.mubr.f32.gmra.mrb[0].mxu0 %v4802
    %v4895 = vpop.f32.mrb[0].mxu0
    %v4896 = vadd.f32 %v4794, %v4895
    %v4897 = vpop.f32.mrb[0].mxu0
    %4898 = vmatprep.mubr.f32.mxu0 0.0
    %4899 = vmatmul.mubr.f32.gmra.mrb[0].mxu0 %v4805
    %v4900 = vpop.f32.mrb[0].mxu0
    %v4901 = vadd.f32 %v4794, %v4900
    %v4902 = vpop.f32.mrb[0].mxu0
    %4903 = vmatprep.mubr.f32.mxu0 0.0
    %4904 = vmatmul.mubr.f32.gmra.mrb[0].mxu0 %v4808
    %v4905 = vpop.f32.mrb[0].mxu0
    %v4906 = vadd.f32 %v4794, %v4905
    %v4907 = vpop.f32.mrb[0].mxu0
    %4908 = vmatprep.mubr.f32.mxu0 0.0
    %4909 = vmatmul.mubr.f32.gmra.mrb[0].mxu0 %v4811
    %v4910 = vpop.f32.mrb[0].mxu0
    %v4911 = vadd.f32 %v4794, %v4910
    %v4912 = vpop.f32.mrb[0].mxu0
    %4913 = vmatprep.mubr.f32.mxu0 0.0
    %4914 = vmatmul.mubr.f32.gmra.mrb[0].mxu0 %v4814
    %v4915 = vpop.f32.mrb[0].mxu0
    %v4916 = vadd.f32 %v4794, %v4915
    %v4917 = vpop.f32.mrb[0].mxu0
    %4918 = vmatprep.mubr.f32.mxu0 0.0
    %4919 = vmatmul.mubr.f32.gmra.mrb[0].mxu0 %v4817
    %v4920 = vpop.f32.mrb[0].mxu0
    %v4921 = vadd.f32 %v4794, %v4920
    %v4922 = vpop.f32.mrb[0].mxu0
    %4923 = vdwg.mxu0
    %4924 = vst [vmem:[#allocation4] sm:$0xff] %v4886
    %4925 = vst [vmem:[#allocation4 + $0x8] sm:$0xff] %v4891
    %4926 = vst [vmem:[#allocation4 + $0x10] sm:$0xff] %v4896
    %4927 = vst [vmem:[#allocation4 + $0x18] sm:$0xff] %v4901
    %4928 = vst [vmem:[#allocation4 + $0x20] sm:$0xff] %v4906
    %4929 = vst [vmem:[#allocation4 + $0x28] sm:$0xff] %v4911
    %4930 = vst [vmem:[#allocation4 + $0x30] sm:$0xff] %v4916
    %4931 = vst [vmem:[#allocation4 + $0x38] sm:$0xff] %v4921
    %v4932 = vld [vmem:[#allocation4] sm:$0xff]
    %v4933 = vxor.u32 %v4932, 2147483648
    %v4934 = vmul.f32 %v4933, 1.442695
    %v4935 = vpow.pop %v4934
    %v4936 = vadd.f32 %v4935, 1.0
    %v4937 = vrcp.pop %v4936
    %v4938 = vmul.f32 1.0, %v4937
    %v4939 = vtanh.pop %v4932
    %4941 = vrot.lane.b32.xlu0 %v4939, 64
    %v4942 = vpop.permute.xlu0 %4941
    %v4944 = vmul.f32 %v4938, %v4942
    %v4945 = vtanh.pop %v4944
    %4947 = vrot.lane.b32.xlu0 %v4945, 96
    %v4948 = vpop.permute.xlu0 %4947
    %v4950 = vmul.f32 %v4938, %v4948
    %4951 = vrot.lane.b32.xlu0 %v4783, 96
    %v4952 = vpop.permute.xlu0 %4951
    %v4954 = vadd.f32 %v4950, %v4952
    %4956 = vrot.lane.b32.xlu0 %v4954, 32
    %v4957 = vpop.permute.xlu0 %4956
    %4959 = vst.msk [vmem:[#allocation3] sm:$0xff] %vm207, %v4957
    %v4960 = vld [vmem:[#allocation4 + $0x8] sm:$0xff]
    %4962 = vrot.lane.b32.xlu0 %v4950, 32
    %v4963 = vpop.permute.xlu0 %4962
    %v4964 = vsel %vm207, %v4963, 0
    %4966 = vmatprep.subr.mxu0 0.0
    %4967 = vmatpush1.msra.mxu0 %v4778
    %4968 = vmatprep.subr.mxu0 0.0
    %4969 = vmatpush1.msra.mxu0 %v4779
    %4970 = vmatprep.subr.mxu0 0.0
    %4971 = vmatpush1.msra.mxu0 %v4780
    %4972 = vmatprep.subr.mxu0 0.0
    %4973 = vmatpush1.msra.mxu0 %v4781
    %4974 = vmatprep.subr.mxu0 0.0
    %4975 = vmatpush1.msra.mxu0 0.0
    %4976 = vmatprep.subr.mxu0 0.0
    %4977 = vmatpush1.msra.mxu0 0.0
    %4978 = vmatprep.subr.mxu0 0.0
    %4979 = vmatpush1.msra.mxu0 0.0
    %4980 = vmatprep.subr.mxu0 0.0
    %4981 = vmatpush1.msra.mxu0 0.0
    %4982 = vmatprep.subr.mxu0 0.0
    %4983 = vmatpush1.msra.mxu0 0.0
    %4984 = vmatprep.subr.mxu0 0.0
    %4985 = vmatpush1.msra.mxu0 0.0
    %4986 = vmatprep.subr.mxu0 0.0
    %4987 = vmatpush1.msra.mxu0 0.0
    %4988 = vmatprep.subr.mxu0 0.0
    %4989 = vmatpush1.msra.mxu0 0.0
    %4990 = vmatprep.subr.mxu0 0.0
    %4991 = vmatpush1.msra.mxu0 0.0
    %4992 = vmatprep.subr.mxu0 0.0
    %4993 = vmatpush1.msra.mxu0 0.0
    %4994 = vmatprep.subr.mxu0 0.0
    %4995 = vmatpush1.msra.mxu0 0.0
    %4996 = vmatprep.subr.mxu0 0.0
    %4997 = vmatpush1.msra.mxu0 0.0
    %4998 = vmatprep.subr.mxu0 0.0
    %4999 = vmatpush1.msra.mxu0 0.0
    %5000 = vmatprep.subr.mxu0 0.0
    %5001 = vmatpush1.msra.mxu0 0.0
    %5002 = vmatprep.subr.mxu0 0.0
    %5003 = vmatpush1.msra.mxu0 0.0
    %5004 = vmatprep.subr.mxu0 0.0
    %5005 = vmatpush1.msra.mxu0 0.0
    %5006 = vmatprep.subr.mxu0 0.0
    %5007 = vmatpush1.msra.mxu0 0.0
    %5008 = vmatprep.subr.mxu0 0.0
    %5009 = vmatpush1.msra.mxu0 0.0
    %5010 = vmatprep.subr.mxu0 0.0
    %5011 = vmatpush1.msra.mxu0 0.0
    %5012 = vmatprep.subr.mxu0 0.0
    %5013 = vmatpush1.msra.mxu0 0.0
    %5014 = vmatprep.subr.mxu0 0.0
    %5015 = vmatpush1.msra.mxu0 0.0
    %5016 = vmatprep.subr.mxu0 0.0
    %5017 = vmatpush1.msra.mxu0 0.0
    %5018 = vmatprep.subr.mxu0 0.0
    %5019 = vmatpush1.msra.mxu0 0.0
    %5020 = vmatprep.subr.mxu0 0.0
    %5021 = vmatpush1.msra.mxu0 0.0
    %5022 = vmatprep.subr.mxu0 0.0
    %5023 = vmatpush1.msra.mxu0 0.0
    %5024 = vmatprep.subr.mxu0 0.0
    %5025 = vmatpush1.msra.mxu0 0.0
    %5026 = vmatprep.subr.mxu0 0.0
    %5027 = vmatpush1.msra.mxu0 0.0
    %5028 = vmatprep.subr.mxu0 0.0
    %5029 = vmatpush1.msra.mxu0 0.0
    %5030 = vmatprep.mubr.f32.mxu0 0.0
    %5031 = vmatmul.mubr.f32.gmra.mrb[0].mxu0 %v4964
    %v5032 = vpop.f32.mrb[0].mxu0
    %v5033 = vadd.f32 0.0, %v5032
    %v5034 = vpop.f32.mrb[0].mxu0
    %5035 = vdwg.mxu0
    %v5036 = vadd.f32 %v4960, %v5033
    %v5037 = vxor.u32 %v5036, 2147483648
    %v5038 = vmul.f32 %v5037, 1.442695
    %v5039 = vpow.pop %v5038
    %v5040 = vadd.f32 %v5039, 1.0
    %v5041 = vrcp.pop %v5040
    %v5042 = vmul.f32 1.0, %v5041
    %v5043 = vtanh.pop %v5036
    %5045 = vrot.lane.b32.xlu0 %v4944, 32
    %v5046 = vpop.permute.xlu0 %5045
    %v5048 = vmul.f32 %v5042, %v5046
    %5050 = vrot.lane.b32.xlu0 %v5043, 64
    %v5051 = vpop.permute.xlu0 %5050
    %v5053 = vmul.f32 %v5042, %v5051
    %5055 = vrot.lane.b32.xlu0 %v5053, 32
    %v5056 = vpop.permute.xlu0 %5055
    %v5058 = vadd.f32 %v5048, %v5056
    %v5059 = vtanh.pop %v5058
    %5061 = vrot.lane.b32.xlu0 %v5059, 64
    %v5062 = vpop.permute.xlu0 %5061
    %v5064 = vmul.f32 %v5042, %v5062
    %5065 = vrot.lane.b32.xlu0 %v4784, 96
    %v5066 = vpop.permute.xlu0 %5065
    %v5068 = vadd.f32 %v5064, %v5066
    %5070 = vrot.lane.b32.xlu0 %v5068, 32
    %v5071 = vpop.permute.xlu0 %5070
    %5073 = vst.msk [vmem:[#allocation3 + $0x8] sm:$0xff] %vm207, %v5071
    %v5074 = vld [vmem:[#allocation4 + $0x10] sm:$0xff]
    %5076 = vrot.lane.b32.xlu0 %v5064, 32
    %v5077 = vpop.permute.xlu0 %5076
    %v5078 = vsel %vm207, %v5077, 0
    %5080 = vmatprep.subr.mxu0 0.0
    %5081 = vmatpush1.msra.mxu0 %v4778
    %5082 = vmatprep.subr.mxu0 0.0
    %5083 = vmatpush1.msra.mxu0 %v4779
    %5084 = vmatprep.subr.mxu0 0.0
    %5085 = vmatpush1.msra.mxu0 %v4780
    %5086 = vmatprep.subr.mxu0 0.0
    %5087 = vmatpush1.msra.mxu0 %v4781
    %5088 = vmatprep.subr.mxu0 0.0
    %5089 = vmatpush1.msra.mxu0 0.0
    %5090 = vmatprep.subr.mxu0 0.0
    %5091 = vmatpush1.msra.mxu0 0.0
    %5092 = vmatprep.subr.mxu0 0.0
    %5093 = vmatpush1.msra.mxu0 0.0
    %5094 = vmatprep.subr.mxu0 0.0
    %5095 = vmatpush1.msra.mxu0 0.0
    %5096 = vmatprep.subr.mxu0 0.0
    %5097 = vmatpush1.msra.mxu0 0.0
    %5098 = vmatprep.subr.mxu0 0.0
    %5099 = vmatpush1.msra.mxu0 0.0
    %5100 = vmatprep.subr.mxu0 0.0
    %5101 = vmatpush1.msra.mxu0 0.0
    %5102 = vmatprep.subr.mxu0 0.0
    %5103 = vmatpush1.msra.mxu0 0.0
    %5104 = vmatprep.subr.mxu0 0.0
    %5105 = vmatpush1.msra.mxu0 0.0
    %5106 = vmatprep.subr.mxu0 0.0
    %5107 = vmatpush1.msra.mxu0 0.0
    %5108 = vmatprep.subr.mxu0 0.0
    %5109 = vmatpush1.msra.mxu0 0.0
    %5110 = vmatprep.subr.mxu0 0.0
    %5111 = vmatpush1.msra.mxu0 0.0
    %5112 = vmatprep.subr.mxu0 0.0
    %5113 = vmatpush1.msra.mxu0 0.0
    %5114 = vmatprep.subr.mxu0 0.0
    %5115 = vmatpush1.msra.mxu0 0.0
    %5116 = vmatprep.subr.mxu0 0.0
    %5117 = vmatpush1.msra.mxu0 0.0
    %5118 = vmatprep.subr.mxu0 0.0
    %5119 = vmatpush1.msra.mxu0 0.0
    %5120 = vmatprep.subr.mxu0 0.0
    %5121 = vmatpush1.msra.mxu0 0.0
    %5122 = vmatprep.subr.mxu0 0.0
    %5123 = vmatpush1.msra.mxu0 0.0
    %5124 = vmatprep.subr.mxu0 0.0
    %5125 = vmatpush1.msra.mxu0 0.0
    %5126 = vmatprep.subr.mxu0 0.0
    %5127 = vmatpush1.msra.mxu0 0.0
    %5128 = vmatprep.subr.mxu0 0.0
    %5129 = vmatpush1.msra.mxu0 0.0
    %5130 = vmatprep.subr.mxu0 0.0
    %5131 = vmatpush1.msra.mxu0 0.0
    %5132 = vmatprep.subr.mxu0 0.0
    %5133 = vmatpush1.msra.mxu0 0.0
    %5134 = vmatprep.subr.mxu0 0.0
    %5135 = vmatpush1.msra.mxu0 0.0
    %5136 = vmatprep.subr.mxu0 0.0
    %5137 = vmatpush1.msra.mxu0 0.0
    %5138 = vmatprep.subr.mxu0 0.0
    %5139 = vmatpush1.msra.mxu0 0.0
    %5140 = vmatprep.subr.mxu0 0.0
    %5141 = vmatpush1.msra.mxu0 0.0
    %5142 = vmatprep.subr.mxu0 0.0
    %5143 = vmatpush1.msra.mxu0 0.0
    %5144 = vmatprep.mubr.f32.mxu0 0.0
    %5145 = vmatmul.mubr.f32.gmra.mrb[0].mxu0 %v5078
    %v5146 = vpop.f32.mrb[0].mxu0
    %v5147 = vadd.f32 0.0, %v5146
    %v5148 = vpop.f32.mrb[0].mxu0
    %5149 = vdwg.mxu0
    %v5150 = vadd.f32 %v5074, %v5147
    %v5151 = vxor.u32 %v5150, 2147483648
    %v5152 = vmul.f32 %v5151, 1.442695
    %v5153 = vpow.pop %v5152
    %v5154 = vadd.f32 %v5153, 1.0
    %v5155 = vrcp.pop %v5154
    %v5156 = vmul.f32 1.0, %v5155
    %v5157 = vtanh.pop %v5150
    %v5158 = vmul.f32 %v5156, %v5058
    %5160 = vrot.lane.b32.xlu0 %v5157, 64
    %v5161 = vpop.permute.xlu0 %5160
    %v5163 = vmul.f32 %v5156, %v5161
    %5165 = vrot.lane.b32.xlu0 %v5163, 32
    %v5166 = vpop.permute.xlu0 %5165
    %v5168 = vadd.f32 %v5158, %v5166
    %v5169 = vtanh.pop %v5168
    %5171 = vrot.lane.b32.xlu0 %v5169, 64
    %v5172 = vpop.permute.xlu0 %5171
    %v5174 = vmul.f32 %v5156, %v5172
    %5175 = vrot.lane.b32.xlu0 %v4785, 96
    %v5176 = vpop.permute.xlu0 %5175
    %v5178 = vadd.f32 %v5174, %v5176
    %5180 = vrot.lane.b32.xlu0 %v5178, 32
    %v5181 = vpop.permute.xlu0 %5180
    %5183 = vst.msk [vmem:[#allocation3 + $0x10] sm:$0xff] %vm207, %v5181
    %v5184 = vld [vmem:[#allocation4 + $0x18] sm:$0xff]
    %5186 = vrot.lane.b32.xlu0 %v5174, 32
    %v5187 = vpop.permute.xlu0 %5186
    %v5188 = vsel %vm207, %v5187, 0
    %5190 = vmatprep.subr.mxu0 0.0
    %5191 = vmatpush1.msra.mxu0 %v4778
    %5192 = vmatprep.subr.mxu0 0.0
    %5193 = vmatpush1.msra.mxu0 %v4779
    %5194 = vmatprep.subr.mxu0 0.0
    %5195 = vmatpush1.msra.mxu0 %v4780
    %5196 = vmatprep.subr.mxu0 0.0
    %5197 = vmatpush1.msra.mxu0 %v4781
    %5198 = vmatprep.subr.mxu0 0.0
    %5199 = vmatpush1.msra.mxu0 0.0
    %5200 = vmatprep.subr.mxu0 0.0
    %5201 = vmatpush1.msra.mxu0 0.0
    %5202 = vmatprep.subr.mxu0 0.0
    %5203 = vmatpush1.msra.mxu0 0.0
    %5204 = vmatprep.subr.mxu0 0.0
    %5205 = vmatpush1.msra.mxu0 0.0
    %5206 = vmatprep.subr.mxu0 0.0
    %5207 = vmatpush1.msra.mxu0 0.0
    %5208 = vmatprep.subr.mxu0 0.0
    %5209 = vmatpush1.msra.mxu0 0.0
    %5210 = vmatprep.subr.mxu0 0.0
    %5211 = vmatpush1.msra.mxu0 0.0
    %5212 = vmatprep.subr.mxu0 0.0
    %5213 = vmatpush1.msra.mxu0 0.0
    %5214 = vmatprep.subr.mxu0 0.0
    %5215 = vmatpush1.msra.mxu0 0.0
    %5216 = vmatprep.subr.mxu0 0.0
    %5217 = vmatpush1.msra.mxu0 0.0
    %5218 = vmatprep.subr.mxu0 0.0
    %5219 = vmatpush1.msra.mxu0 0.0
    %5220 = vmatprep.subr.mxu0 0.0
    %5221 = vmatpush1.msra.mxu0 0.0
    %5222 = vmatprep.subr.mxu0 0.0
    %5223 = vmatpush1.msra.mxu0 0.0
    %5224 = vmatprep.subr.mxu0 0.0
    %5225 = vmatpush1.msra.mxu0 0.0
    %5226 = vmatprep.subr.mxu0 0.0
    %5227 = vmatpush1.msra.mxu0 0.0
    %5228 = vmatprep.subr.mxu0 0.0
    %5229 = vmatpush1.msra.mxu0 0.0
    %5230 = vmatprep.subr.mxu0 0.0
    %5231 = vmatpush1.msra.mxu0 0.0
    %5232 = vmatprep.subr.mxu0 0.0
    %5233 = vmatpush1.msra.mxu0 0.0
    %5234 = vmatprep.subr.mxu0 0.0
    %5235 = vmatpush1.msra.mxu0 0.0
    %5236 = vmatprep.subr.mxu0 0.0
    %5237 = vmatpush1.msra.mxu0 0.0
    %5238 = vmatprep.subr.mxu0 0.0
    %5239 = vmatpush1.msra.mxu0 0.0
    %5240 = vmatprep.subr.mxu0 0.0
    %5241 = vmatpush1.msra.mxu0 0.0
    %5242 = vmatprep.subr.mxu0 0.0
    %5243 = vmatpush1.msra.mxu0 0.0
    %5244 = vmatprep.subr.mxu0 0.0
    %5245 = vmatpush1.msra.mxu0 0.0
    %5246 = vmatprep.subr.mxu0 0.0
    %5247 = vmatpush1.msra.mxu0 0.0
    %5248 = vmatprep.subr.mxu0 0.0
    %5249 = vmatpush1.msra.mxu0 0.0
    %5250 = vmatprep.subr.mxu0 0.0
    %5251 = vmatpush1.msra.mxu0 0.0
    %5252 = vmatprep.subr.mxu0 0.0
    %5253 = vmatpush1.msra.mxu0 0.0
    %5254 = vmatprep.mubr.f32.mxu0 0.0
    %5255 = vmatmul.mubr.f32.gmra.mrb[0].mxu0 %v5188
    %v5256 = vpop.f32.mrb[0].mxu0
    %v5257 = vadd.f32 0.0, %v5256
    %v5258 = vpop.f32.mrb[0].mxu0
    %5259 = vdwg.mxu0
    %v5260 = vadd.f32 %v5184, %v5257
    %v5261 = vxor.u32 %v5260, 2147483648
    %v5262 = vmul.f32 %v5261, 1.442695
    %v5263 = vpow.pop %v5262
    %v5264 = vadd.f32 %v5263, 1.0
    %v5265 = vrcp.pop %v5264
    %v5266 = vmul.f32 1.0, %v5265
    %v5267 = vtanh.pop %v5260
    %v5268 = vmul.f32 %v5266, %v5168
    %5270 = vrot.lane.b32.xlu0 %v5267, 64
    %v5271 = vpop.permute.xlu0 %5270
    %v5273 = vmul.f32 %v5266, %v5271
    %5275 = vrot.lane.b32.xlu0 %v5273, 32
    %v5276 = vpop.permute.xlu0 %5275
    %v5278 = vadd.f32 %v5268, %v5276
    %v5279 = vtanh.pop %v5278
    %5281 = vrot.lane.b32.xlu0 %v5279, 64
    %v5282 = vpop.permute.xlu0 %5281
    %v5284 = vmul.f32 %v5266, %v5282
    %5285 = vrot.lane.b32.xlu0 %v4786, 96
    %v5286 = vpop.permute.xlu0 %5285
    %v5288 = vadd.f32 %v5284, %v5286
    %5290 = vrot.lane.b32.xlu0 %v5288, 32
    %v5291 = vpop.permute.xlu0 %5290
    %5293 = vst.msk [vmem:[#allocation3 + $0x18] sm:$0xff] %vm207, %v5291
    %v5294 = vld [vmem:[#allocation4 + $0x20] sm:$0xff]
    %5296 = vrot.lane.b32.xlu0 %v5284, 32
    %v5297 = vpop.permute.xlu0 %5296
    %v5298 = vsel %vm207, %v5297, 0
    %5300 = vmatprep.subr.mxu0 0.0
    %5301 = vmatpush1.msra.mxu0 %v4778
    %5302 = vmatprep.subr.mxu0 0.0
    %5303 = vmatpush1.msra.mxu0 %v4779
    %5304 = vmatprep.subr.mxu0 0.0
    %5305 = vmatpush1.msra.mxu0 %v4780
    %5306 = vmatprep.subr.mxu0 0.0
    %5307 = vmatpush1.msra.mxu0 %v4781
    %5308 = vmatprep.subr.mxu0 0.0
    %5309 = vmatpush1.msra.mxu0 0.0
    %5310 = vmatprep.subr.mxu0 0.0
    %5311 = vmatpush1.msra.mxu0 0.0
    %5312 = vmatprep.subr.mxu0 0.0
    %5313 = vmatpush1.msra.mxu0 0.0
    %5314 = vmatprep.subr.mxu0 0.0
    %5315 = vmatpush1.msra.mxu0 0.0
    %5316 = vmatprep.subr.mxu0 0.0
    %5317 = vmatpush1.msra.mxu0 0.0
    %5318 = vmatprep.subr.mxu0 0.0
    %5319 = vmatpush1.msra.mxu0 0.0
    %5320 = vmatprep.subr.mxu0 0.0
    %5321 = vmatpush1.msra.mxu0 0.0
    %5322 = vmatprep.subr.mxu0 0.0
    %5323 = vmatpush1.msra.mxu0 0.0
    %5324 = vmatprep.subr.mxu0 0.0
    %5325 = vmatpush1.msra.mxu0 0.0
    %5326 = vmatprep.subr.mxu0 0.0
    %5327 = vmatpush1.msra.mxu0 0.0
    %5328 = vmatprep.subr.mxu0 0.0
    %5329 = vmatpush1.msra.mxu0 0.0
    %5330 = vmatprep.subr.mxu0 0.0
    %5331 = vmatpush1.msra.mxu0 0.0
    %5332 = vmatprep.subr.mxu0 0.0
    %5333 = vmatpush1.msra.mxu0 0.0
    %5334 = vmatprep.subr.mxu0 0.0
    %5335 = vmatpush1.msra.mxu0 0.0
    %5336 = vmatprep.subr.mxu0 0.0
    %5337 = vmatpush1.msra.mxu0 0.0
    %5338 = vmatprep.subr.mxu0 0.0
    %5339 = vmatpush1.msra.mxu0 0.0
    %5340 = vmatprep.subr.mxu0 0.0
    %5341 = vmatpush1.msra.mxu0 0.0
    %5342 = vmatprep.subr.mxu0 0.0
    %5343 = vmatpush1.msra.mxu0 0.0
    %5344 = vmatprep.subr.mxu0 0.0
    %5345 = vmatpush1.msra.mxu0 0.0
    %5346 = vmatprep.subr.mxu0 0.0
    %5347 = vmatpush1.msra.mxu0 0.0
    %5348 = vmatprep.subr.mxu0 0.0
    %5349 = vmatpush1.msra.mxu0 0.0
    %5350 = vmatprep.subr.mxu0 0.0
    %5351 = vmatpush1.msra.mxu0 0.0
    %5352 = vmatprep.subr.mxu0 0.0
    %5353 = vmatpush1.msra.mxu0 0.0
    %5354 = vmatprep.subr.mxu0 0.0
    %5355 = vmatpush1.msra.mxu0 0.0
    %5356 = vmatprep.subr.mxu0 0.0
    %5357 = vmatpush1.msra.mxu0 0.0
    %5358 = vmatprep.subr.mxu0 0.0
    %5359 = vmatpush1.msra.mxu0 0.0
    %5360 = vmatprep.subr.mxu0 0.0
    %5361 = vmatpush1.msra.mxu0 0.0
    %5362 = vmatprep.subr.mxu0 0.0
    %5363 = vmatpush1.msra.mxu0 0.0
    %5364 = vmatprep.mubr.f32.mxu0 0.0
    %5365 = vmatmul.mubr.f32.gmra.mrb[0].mxu0 %v5298
    %v5366 = vpop.f32.mrb[0].mxu0
    %v5367 = vadd.f32 0.0, %v5366
    %v5368 = vpop.f32.mrb[0].mxu0
    %5369 = vdwg.mxu0
    %v5370 = vadd.f32 %v5294, %v5367
    %v5371 = vxor.u32 %v5370, 2147483648
    %v5372 = vmul.f32 %v5371, 1.442695
    %v5373 = vpow.pop %v5372
    %v5374 = vadd.f32 %v5373, 1.0
    %v5375 = vrcp.pop %v5374
    %v5376 = vmul.f32 1.0, %v5375
    %v5377 = vtanh.pop %v5370
    %v5378 = vmul.f32 %v5376, %v5278
    %5380 = vrot.lane.b32.xlu0 %v5377, 64
    %v5381 = vpop.permute.xlu0 %5380
    %v5383 = vmul.f32 %v5376, %v5381
    %5385 = vrot.lane.b32.xlu0 %v5383, 32
    %v5386 = vpop.permute.xlu0 %5385
    %v5388 = vadd.f32 %v5378, %v5386
    %v5389 = vtanh.pop %v5388
    %5391 = vrot.lane.b32.xlu0 %v5389, 64
    %v5392 = vpop.permute.xlu0 %5391
    %v5394 = vmul.f32 %v5376, %v5392
    %5395 = vrot.lane.b32.xlu0 %v4787, 96
    %v5396 = vpop.permute.xlu0 %5395
    %v5398 = vadd.f32 %v5394, %v5396
    %5400 = vrot.lane.b32.xlu0 %v5398, 32
    %v5401 = vpop.permute.xlu0 %5400
    %5403 = vst.msk [vmem:[#allocation3 + $0x20] sm:$0xff] %vm207, %v5401
    %v5404 = vld [vmem:[#allocation4 + $0x28] sm:$0xff]
    %5406 = vrot.lane.b32.xlu0 %v5394, 32
    %v5407 = vpop.permute.xlu0 %5406
    %v5408 = vsel %vm207, %v5407, 0
    %5410 = vmatprep.subr.mxu0 0.0
    %5411 = vmatpush1.msra.mxu0 %v4778
    %5412 = vmatprep.subr.mxu0 0.0
    %5413 = vmatpush1.msra.mxu0 %v4779
    %5414 = vmatprep.subr.mxu0 0.0
    %5415 = vmatpush1.msra.mxu0 %v4780
    %5416 = vmatprep.subr.mxu0 0.0
    %5417 = vmatpush1.msra.mxu0 %v4781
    %5418 = vmatprep.subr.mxu0 0.0
    %5419 = vmatpush1.msra.mxu0 0.0
    %5420 = vmatprep.subr.mxu0 0.0
    %5421 = vmatpush1.msra.mxu0 0.0
    %5422 = vmatprep.subr.mxu0 0.0
    %5423 = vmatpush1.msra.mxu0 0.0
    %5424 = vmatprep.subr.mxu0 0.0
    %5425 = vmatpush1.msra.mxu0 0.0
    %5426 = vmatprep.subr.mxu0 0.0
    %5427 = vmatpush1.msra.mxu0 0.0
    %5428 = vmatprep.subr.mxu0 0.0
    %5429 = vmatpush1.msra.mxu0 0.0
    %5430 = vmatprep.subr.mxu0 0.0
    %5431 = vmatpush1.msra.mxu0 0.0
    %5432 = vmatprep.subr.mxu0 0.0
    %5433 = vmatpush1.msra.mxu0 0.0
    %5434 = vmatprep.subr.mxu0 0.0
    %5435 = vmatpush1.msra.mxu0 0.0
    %5436 = vmatprep.subr.mxu0 0.0
    %5437 = vmatpush1.msra.mxu0 0.0
    %5438 = vmatprep.subr.mxu0 0.0
    %5439 = vmatpush1.msra.mxu0 0.0
    %5440 = vmatprep.subr.mxu0 0.0
    %5441 = vmatpush1.msra.mxu0 0.0
    %5442 = vmatprep.subr.mxu0 0.0
    %5443 = vmatpush1.msra.mxu0 0.0
    %5444 = vmatprep.subr.mxu0 0.0
    %5445 = vmatpush1.msra.mxu0 0.0
    %5446 = vmatprep.subr.mxu0 0.0
    %5447 = vmatpush1.msra.mxu0 0.0
    %5448 = vmatprep.subr.mxu0 0.0
    %5449 = vmatpush1.msra.mxu0 0.0
    %5450 = vmatprep.subr.mxu0 0.0
    %5451 = vmatpush1.msra.mxu0 0.0
    %5452 = vmatprep.subr.mxu0 0.0
    %5453 = vmatpush1.msra.mxu0 0.0
    %5454 = vmatprep.subr.mxu0 0.0
    %5455 = vmatpush1.msra.mxu0 0.0
    %5456 = vmatprep.subr.mxu0 0.0
    %5457 = vmatpush1.msra.mxu0 0.0
    %5458 = vmatprep.subr.mxu0 0.0
    %5459 = vmatpush1.msra.mxu0 0.0
    %5460 = vmatprep.subr.mxu0 0.0
    %5461 = vmatpush1.msra.mxu0 0.0
    %5462 = vmatprep.subr.mxu0 0.0
    %5463 = vmatpush1.msra.mxu0 0.0
    %5464 = vmatprep.subr.mxu0 0.0
    %5465 = vmatpush1.msra.mxu0 0.0
    %5466 = vmatprep.subr.mxu0 0.0
    %5467 = vmatpush1.msra.mxu0 0.0
    %5468 = vmatprep.subr.mxu0 0.0
    %5469 = vmatpush1.msra.mxu0 0.0
    %5470 = vmatprep.subr.mxu0 0.0
    %5471 = vmatpush1.msra.mxu0 0.0
    %5472 = vmatprep.subr.mxu0 0.0
    %5473 = vmatpush1.msra.mxu0 0.0
    %5474 = vmatprep.mubr.f32.mxu0 0.0
    %5475 = vmatmul.mubr.f32.gmra.mrb[0].mxu0 %v5408
    %v5476 = vpop.f32.mrb[0].mxu0
    %v5477 = vadd.f32 0.0, %v5476
    %v5478 = vpop.f32.mrb[0].mxu0
    %5479 = vdwg.mxu0
    %v5480 = vadd.f32 %v5404, %v5477
    %v5481 = vxor.u32 %v5480, 2147483648
    %v5482 = vmul.f32 %v5481, 1.442695
    %v5483 = vpow.pop %v5482
    %v5484 = vadd.f32 %v5483, 1.0
    %v5485 = vrcp.pop %v5484
    %v5486 = vmul.f32 1.0, %v5485
    %v5487 = vtanh.pop %v5480
    %v5488 = vmul.f32 %v5486, %v5388
    %5490 = vrot.lane.b32.xlu0 %v5487, 64
    %v5491 = vpop.permute.xlu0 %5490
    %v5493 = vmul.f32 %v5486, %v5491
    %5495 = vrot.lane.b32.xlu0 %v5493, 32
    %v5496 = vpop.permute.xlu0 %5495
    %v5498 = vadd.f32 %v5488, %v5496
    %v5499 = vtanh.pop %v5498
    %5501 = vrot.lane.b32.xlu0 %v5499, 64
    %v5502 = vpop.permute.xlu0 %5501
    %v5504 = vmul.f32 %v5486, %v5502
    %5505 = vrot.lane.b32.xlu0 %v4788, 96
    %v5506 = vpop.permute.xlu0 %5505
    %v5508 = vadd.f32 %v5504, %v5506
    %5510 = vrot.lane.b32.xlu0 %v5508, 32
    %v5511 = vpop.permute.xlu0 %5510
    %5513 = vst.msk [vmem:[#allocation3 + $0x28] sm:$0xff] %vm207, %v5511
    %v5514 = vld [vmem:[#allocation4 + $0x30] sm:$0xff]
    %5516 = vrot.lane.b32.xlu0 %v5504, 32
    %v5517 = vpop.permute.xlu0 %5516
    %v5518 = vsel %vm207, %v5517, 0
    %5520 = vmatprep.subr.mxu0 0.0
    %5521 = vmatpush1.msra.mxu0 %v4778
    %5522 = vmatprep.subr.mxu0 0.0
    %5523 = vmatpush1.msra.mxu0 %v4779
    %5524 = vmatprep.subr.mxu0 0.0
    %5525 = vmatpush1.msra.mxu0 %v4780
    %5526 = vmatprep.subr.mxu0 0.0
    %5527 = vmatpush1.msra.mxu0 %v4781
    %5528 = vmatprep.subr.mxu0 0.0
    %5529 = vmatpush1.msra.mxu0 0.0
    %5530 = vmatprep.subr.mxu0 0.0
    %5531 = vmatpush1.msra.mxu0 0.0
    %5532 = vmatprep.subr.mxu0 0.0
    %5533 = vmatpush1.msra.mxu0 0.0
    %5534 = vmatprep.subr.mxu0 0.0
    %5535 = vmatpush1.msra.mxu0 0.0
    %5536 = vmatprep.subr.mxu0 0.0
    %5537 = vmatpush1.msra.mxu0 0.0
    %5538 = vmatprep.subr.mxu0 0.0
    %5539 = vmatpush1.msra.mxu0 0.0
    %5540 = vmatprep.subr.mxu0 0.0
    %5541 = vmatpush1.msra.mxu0 0.0
    %5542 = vmatprep.subr.mxu0 0.0
    %5543 = vmatpush1.msra.mxu0 0.0
    %5544 = vmatprep.subr.mxu0 0.0
    %5545 = vmatpush1.msra.mxu0 0.0
    %5546 = vmatprep.subr.mxu0 0.0
    %5547 = vmatpush1.msra.mxu0 0.0
    %5548 = vmatprep.subr.mxu0 0.0
    %5549 = vmatpush1.msra.mxu0 0.0
    %5550 = vmatprep.subr.mxu0 0.0
    %5551 = vmatpush1.msra.mxu0 0.0
    %5552 = vmatprep.subr.mxu0 0.0
    %5553 = vmatpush1.msra.mxu0 0.0
    %5554 = vmatprep.subr.mxu0 0.0
    %5555 = vmatpush1.msra.mxu0 0.0
    %5556 = vmatprep.subr.mxu0 0.0
    %5557 = vmatpush1.msra.mxu0 0.0
    %5558 = vmatprep.subr.mxu0 0.0
    %5559 = vmatpush1.msra.mxu0 0.0
    %5560 = vmatprep.subr.mxu0 0.0
    %5561 = vmatpush1.msra.mxu0 0.0
    %5562 = vmatprep.subr.mxu0 0.0
    %5563 = vmatpush1.msra.mxu0 0.0
    %5564 = vmatprep.subr.mxu0 0.0
    %5565 = vmatpush1.msra.mxu0 0.0
    %5566 = vmatprep.subr.mxu0 0.0
    %5567 = vmatpush1.msra.mxu0 0.0
    %5568 = vmatprep.subr.mxu0 0.0
    %5569 = vmatpush1.msra.mxu0 0.0
    %5570 = vmatprep.subr.mxu0 0.0
    %5571 = vmatpush1.msra.mxu0 0.0
    %5572 = vmatprep.subr.mxu0 0.0
    %5573 = vmatpush1.msra.mxu0 0.0
    %5574 = vmatprep.subr.mxu0 0.0
    %5575 = vmatpush1.msra.mxu0 0.0
    %5576 = vmatprep.subr.mxu0 0.0
    %5577 = vmatpush1.msra.mxu0 0.0
    %5578 = vmatprep.subr.mxu0 0.0
    %5579 = vmatpush1.msra.mxu0 0.0
    %5580 = vmatprep.subr.mxu0 0.0
    %5581 = vmatpush1.msra.mxu0 0.0
    %5582 = vmatprep.subr.mxu0 0.0
    %5583 = vmatpush1.msra.mxu0 0.0
    %5584 = vmatprep.mubr.f32.mxu0 0.0
    %5585 = vmatmul.mubr.f32.gmra.mrb[0].mxu0 %v5518
    %v5586 = vpop.f32.mrb[0].mxu0
    %v5587 = vadd.f32 0.0, %v5586
    %v5588 = vpop.f32.mrb[0].mxu0
    %5589 = vdwg.mxu0
    %v5590 = vadd.f32 %v5514, %v5587
    %v5591 = vxor.u32 %v5590, 2147483648
    %v5592 = vmul.f32 %v5591, 1.442695
    %v5593 = vpow.pop %v5592
    %v5594 = vadd.f32 %v5593, 1.0
    %v5595 = vrcp.pop %v5594
    %v5596 = vmul.f32 1.0, %v5595
    %v5597 = vtanh.pop %v5590
    %v5598 = vmul.f32 %v5596, %v5498
    %5600 = vrot.lane.b32.xlu0 %v5597, 64
    %v5601 = vpop.permute.xlu0 %5600
    %v5603 = vmul.f32 %v5596, %v5601
    %5605 = vrot.lane.b32.xlu0 %v5603, 32
    %v5606 = vpop.permute.xlu0 %5605
    %v5608 = vadd.f32 %v5598, %v5606
    %v5609 = vtanh.pop %v5608
    %5611 = vrot.lane.b32.xlu0 %v5609, 64
    %v5612 = vpop.permute.xlu0 %5611
    %v5614 = vmul.f32 %v5596, %v5612
    %5615 = vrot.lane.b32.xlu0 %v4789, 96
    %v5616 = vpop.permute.xlu0 %5615
    %v5618 = vadd.f32 %v5614, %v5616
    %5620 = vrot.lane.b32.xlu0 %v5618, 32
    %v5621 = vpop.permute.xlu0 %5620
    %5623 = vst.msk [vmem:[#allocation3 + $0x30] sm:$0xff] %vm207, %v5621
    %v5624 = vld [vmem:[#allocation4 + $0x38] sm:$0xff]
    %5626 = vrot.lane.b32.xlu0 %v5614, 32
    %v5627 = vpop.permute.xlu0 %5626
    %v5628 = vsel %vm207, %v5627, 0
    %5630 = vmatprep.subr.mxu0 0.0
    %5631 = vmatpush1.msra.mxu0 %v4778
    %5632 = vmatprep.subr.mxu0 0.0
    %5633 = vmatpush1.msra.mxu0 %v4779
    %5634 = vmatprep.subr.mxu0 0.0
    %5635 = vmatpush1.msra.mxu0 %v4780
    %5636 = vmatprep.subr.mxu0 0.0
    %5637 = vmatpush1.msra.mxu0 %v4781
    %5638 = vmatprep.subr.mxu0 0.0
    %5639 = vmatpush1.msra.mxu0 0.0
    %5640 = vmatprep.subr.mxu0 0.0
    %5641 = vmatpush1.msra.mxu0 0.0
    %5642 = vmatprep.subr.mxu0 0.0
    %5643 = vmatpush1.msra.mxu0 0.0
    %5644 = vmatprep.subr.mxu0 0.0
    %5645 = vmatpush1.msra.mxu0 0.0
    %5646 = vmatprep.subr.mxu0 0.0
    %5647 = vmatpush1.msra.mxu0 0.0
    %5648 = vmatprep.subr.mxu0 0.0
    %5649 = vmatpush1.msra.mxu0 0.0
    %5650 = vmatprep.subr.mxu0 0.0
    %5651 = vmatpush1.msra.mxu0 0.0
    %5652 = vmatprep.subr.mxu0 0.0
    %5653 = vmatpush1.msra.mxu0 0.0
    %5654 = vmatprep.subr.mxu0 0.0
    %5655 = vmatpush1.msra.mxu0 0.0
    %5656 = vmatprep.subr.mxu0 0.0
    %5657 = vmatpush1.msra.mxu0 0.0
    %5658 = vmatprep.subr.mxu0 0.0
    %5659 = vmatpush1.msra.mxu0 0.0
    %5660 = vmatprep.subr.mxu0 0.0
    %5661 = vmatpush1.msra.mxu0 0.0
    %5662 = vmatprep.subr.mxu0 0.0
    %5663 = vmatpush1.msra.mxu0 0.0
    %5664 = vmatprep.subr.mxu0 0.0
    %5665 = vmatpush1.msra.mxu0 0.0
    %5666 = vmatprep.subr.mxu0 0.0
    %5667 = vmatpush1.msra.mxu0 0.0
    %5668 = vmatprep.subr.mxu0 0.0
    %5669 = vmatpush1.msra.mxu0 0.0
    %5670 = vmatprep.subr.mxu0 0.0
    %5671 = vmatpush1.msra.mxu0 0.0
    %5672 = vmatprep.subr.mxu0 0.0
    %5673 = vmatpush1.msra.mxu0 0.0
    %5674 = vmatprep.subr.mxu0 0.0
    %5675 = vmatpush1.msra.mxu0 0.0
    %5676 = vmatprep.subr.mxu0 0.0
    %5677 = vmatpush1.msra.mxu0 0.0
    %5678 = vmatprep.subr.mxu0 0.0
    %5679 = vmatpush1.msra.mxu0 0.0
    %5680 = vmatprep.subr.mxu0 0.0
    %5681 = vmatpush1.msra.mxu0 0.0
    %5682 = vmatprep.subr.mxu0 0.0
    %5683 = vmatpush1.msra.mxu0 0.0
    %5684 = vmatprep.subr.mxu0 0.0
    %5685 = vmatpush1.msra.mxu0 0.0
    %5686 = vmatprep.subr.mxu0 0.0
    %5687 = vmatpush1.msra.mxu0 0.0
    %5688 = vmatprep.subr.mxu0 0.0
    %5689 = vmatpush1.msra.mxu0 0.0
    %5690 = vmatprep.subr.mxu0 0.0
    %5691 = vmatpush1.msra.mxu0 0.0
    %5692 = vmatprep.subr.mxu0 0.0
    %5693 = vmatpush1.msra.mxu0 0.0
    %5694 = vmatprep.mubr.f32.mxu0 0.0
    %5695 = vmatmul.mubr.f32.gmra.mrb[0].mxu0 %v5628
    %v5696 = vpop.f32.mrb[0].mxu0
    %v5697 = vadd.f32 0.0, %v5696
    %v5698 = vpop.f32.mrb[0].mxu0
    %5699 = vdwg.mxu0
    %v5700 = vadd.f32 %v5624, %v5697
    %v5701 = vxor.u32 %v5700, 2147483648
    %v5702 = vmul.f32 %v5701, 1.442695
    %v5703 = vpow.pop %v5702
    %v5704 = vadd.f32 %v5703, 1.0
    %v5705 = vrcp.pop %v5704
    %v5706 = vmul.f32 1.0, %v5705
    %v5707 = vtanh.pop %v5700
    %v5708 = vmul.f32 %v5706, %v5608
    %5710 = vrot.lane.b32.xlu0 %v5707, 64
    %v5711 = vpop.permute.xlu0 %5710
    %v5713 = vmul.f32 %v5706, %v5711
    %5715 = vrot.lane.b32.xlu0 %v5713, 32
    %v5716 = vpop.permute.xlu0 %5715
    %v5718 = vadd.f32 %v5708, %v5716
    %v5719 = vtanh.pop %v5718
    %5721 = vrot.lane.b32.xlu0 %v5719, 64
    %v5722 = vpop.permute.xlu0 %5721
    %v5724 = vmul.f32 %v5706, %v5722
    %5725 = vrot.lane.b32.xlu0 %v4790, 96
    %v5726 = vpop.permute.xlu0 %5725
    %v5728 = vadd.f32 %v5724, %v5726
    %5730 = vrot.lane.b32.xlu0 %v5728, 32
    %v5731 = vpop.permute.xlu0 %5730
    %5733 = vst.msk [vmem:[#allocation3 + $0x38] sm:$0xff] %vm207, %v5731
    %v5734 = vld [vmem:[#allocation3] sm:$0xff]
    %v5735 = vld [vmem:[#allocation3 + $0x8] sm:$0xff]
    %v5736 = vld [vmem:[#allocation3 + $0x10] sm:$0xff]
    %v5737 = vld [vmem:[#allocation3 + $0x18] sm:$0xff]
    %v5738 = vld [vmem:[#allocation3 + $0x20] sm:$0xff]
    %v5739 = vld [vmem:[#allocation3 + $0x28] sm:$0xff]
    %v5740 = vld [vmem:[#allocation3 + $0x30] sm:$0xff]
    %v5741 = vld [vmem:[#allocation3 + $0x38] sm:$0xff]
    %v5742 = vld [vmem:[%s2] sm:$0xff]
    %v5743 = vld [vmem:[%s2 + $0x8] sm:$0xff]
    %v5744 = vld [vmem:[%s2 + $0x10] sm:$0xff]
    %v5745 = vld [vmem:[%s2 + $0x18] sm:$0xff]
    %v5746 = vld [vmem:[%s2 + $0x20] sm:$0xff]
    %v5747 = vld [vmem:[%s2 + $0x28] sm:$0xff]
    %v5748 = vld [vmem:[%s2 + $0x30] sm:$0xff]
    %v5749 = vld [vmem:[%s2 + $0x38] sm:$0xff]
    %v5750 = vld [vmem:[%s2 + $0x40] sm:$0xff]
    %v5751 = vld [vmem:[%s2 + $0x48] sm:$0xff]
    %v5752 = vld [vmem:[%s2 + $0x50] sm:$0xff]
    %v5753 = vld [vmem:[%s2 + $0x58] sm:$0xff]
    %v5754 = vld [vmem:[%s2 + $0x60] sm:$0xff]
    %v5755 = vld [vmem:[%s2 + $0x68] sm:$0xff]
    %v5756 = vld [vmem:[%s2 + $0x70] sm:$0xff]
    %v5757 = vld [vmem:[%s2 + $0x78] sm:$0xff]
    %v5758 = vld [vmem:[%s2 + $0x80] sm:$0xff]
    %v5759 = vld [vmem:[%s2 + $0x88] sm:$0xff]
    %v5760 = vld [vmem:[%s2 + $0x90] sm:$0xff]
    %v5761 = vld [vmem:[%s2 + $0x98] sm:$0xff]
    %v5762 = vld [vmem:[%s2 + $0xa0] sm:$0x1]
    %v5763 = vld [vmem:[%s2 + $0xa1] sm:$0x1]
    %v5764 = vld [vmem:[%s2 + $0xa2] sm:$0x1]
    %v5765 = vld [vmem:[%s2 + $0xa3] sm:$0x1]
    %v5766 = vlaneseq
    %v5767 = vshrl.u32 %v5766, 7
    %v5768 = vsub.s32 0, %v5767
    %v5769 = vrot.slane %v5762, %v5768
    %v5771 = vsel %vm207, %v5734, 0
    %v5774 = vsel %vm207, %v5735, 0
    %v5777 = vsel %vm207, %v5736, 0
    %v5780 = vsel %vm207, %v5737, 0
    %v5783 = vsel %vm207, %v5738, 0
    %v5786 = vsel %vm207, %v5739, 0
    %v5789 = vsel %vm207, %v5740, 0
    %v5792 = vsel %vm207, %v5741, 0
    %5794 = vmatprep.subr.mxu0 0.0
    %5795 = vmatpush1.msra.mxu0 %v5742
    %5796 = vmatprep.subr.mxu0 0.0
    %5797 = vmatpush1.msra.mxu0 %v5743
    %5798 = vmatprep.subr.mxu0 0.0
    %5799 = vmatpush1.msra.mxu0 %v5744
    %5800 = vmatprep.subr.mxu0 0.0
    %5801 = vmatpush1.msra.mxu0 %v5745
    %5802 = vmatprep.subr.mxu0 0.0
    %5803 = vmatpush1.msra.mxu0 0.0
    %5804 = vmatprep.subr.mxu0 0.0
    %5805 = vmatpush1.msra.mxu0 0.0
    %5806 = vmatprep.subr.mxu0 0.0
    %5807 = vmatpush1.msra.mxu0 0.0
    %5808 = vmatprep.subr.mxu0 0.0
    %5809 = vmatpush1.msra.mxu0 0.0
    %5810 = vmatprep.subr.mxu0 0.0
    %5811 = vmatpush1.msra.mxu0 0.0
    %5812 = vmatprep.subr.mxu0 0.0
    %5813 = vmatpush1.msra.mxu0 0.0
    %5814 = vmatprep.subr.mxu0 0.0
    %5815 = vmatpush1.msra.mxu0 0.0
    %5816 = vmatprep.subr.mxu0 0.0
    %5817 = vmatpush1.msra.mxu0 0.0
    %5818 = vmatprep.subr.mxu0 0.0
    %5819 = vmatpush1.msra.mxu0 0.0
    %5820 = vmatprep.subr.mxu0 0.0
    %5821 = vmatpush1.msra.mxu0 0.0
    %5822 = vmatprep.subr.mxu0 0.0
    %5823 = vmatpush1.msra.mxu0 0.0
    %5824 = vmatprep.subr.mxu0 0.0
    %5825 = vmatpush1.msra.mxu0 0.0
    %5826 = vmatprep.subr.mxu0 0.0
    %5827 = vmatpush1.msra.mxu0 0.0
    %5828 = vmatprep.subr.mxu0 0.0
    %5829 = vmatpush1.msra.mxu0 0.0
    %5830 = vmatprep.subr.mxu0 0.0
    %5831 = vmatpush1.msra.mxu0 0.0
    %5832 = vmatprep.subr.mxu0 0.0
    %5833 = vmatpush1.msra.mxu0 0.0
    %5834 = vmatprep.subr.mxu0 0.0
    %5835 = vmatpush1.msra.mxu0 0.0
    %5836 = vmatprep.subr.mxu0 0.0
    %5837 = vmatpush1.msra.mxu0 0.0
    %5838 = vmatprep.subr.mxu0 0.0
    %5839 = vmatpush1.msra.mxu0 0.0
    %5840 = vmatprep.subr.mxu0 0.0
    %5841 = vmatpush1.msra.mxu0 0.0
    %5842 = vmatprep.subr.mxu0 0.0
    %5843 = vmatpush1.msra.mxu0 0.0
    %5844 = vmatprep.subr.mxu0 0.0
    %5845 = vmatpush1.msra.mxu0 0.0
    %5846 = vmatprep.subr.mxu0 0.0
    %5847 = vmatpush1.msra.mxu0 0.0
    %5848 = vmatprep.subr.mxu0 0.0
    %5849 = vmatpush1.msra.mxu0 0.0
    %5850 = vmatprep.subr.mxu0 0.0
    %5851 = vmatpush1.msra.mxu0 0.0
    %5852 = vmatprep.subr.mxu0 0.0
    %5853 = vmatpush1.msra.mxu0 0.0
    %5854 = vmatprep.subr.mxu0 0.0
    %5855 = vmatpush1.msra.mxu0 0.0
    %5856 = vmatprep.subr.mxu0 0.0
    %5857 = vmatpush1.msra.mxu0 0.0
    %5858 = vmatprep.mubr.f32.mxu0 0.0
    %5859 = vmatmul.mubr.f32.gmra.mrb[0].mxu0 %v5771
    %v5860 = vpop.f32.mrb[0].mxu0
    %v5861 = vadd.f32 %v5769, %v5860
    %v5862 = vpop.f32.mrb[0].mxu0
    %5863 = vmatprep.mubr.f32.mxu0 0.0
    %5864 = vmatmul.mubr.f32.gmra.mrb[0].mxu0 %v5774
    %v5865 = vpop.f32.mrb[0].mxu0
    %v5866 = vadd.f32 %v5769, %v5865
    %v5867 = vpop.f32.mrb[0].mxu0
    %5868 = vmatprep.mubr.f32.mxu0 0.0
    %5869 = vmatmul.mubr.f32.gmra.mrb[0].mxu0 %v5777
    %v5870 = vpop.f32.mrb[0].mxu0
    %v5871 = vadd.f32 %v5769, %v5870
    %v5872 = vpop.f32.mrb[0].mxu0
    %5873 = vmatprep.mubr.f32.mxu0 0.0
    %5874 = vmatmul.mubr.f32.gmra.mrb[0].mxu0 %v5780
    %v5875 = vpop.f32.mrb[0].mxu0
    %v5876 = vadd.f32 %v5769, %v5875
    %v5877 = vpop.f32.mrb[0].mxu0
    %5878 = vmatprep.mubr.f32.mxu0 0.0
    %5879 = vmatmul.mubr.f32.gmra.mrb[0].mxu0 %v5783
    %v5880 = vpop.f32.mrb[0].mxu0
    %v5881 = vadd.f32 %v5769, %v5880
    %v5882 = vpop.f32.mrb[0].mxu0
    %5883 = vmatprep.mubr.f32.mxu0 0.0
    %5884 = vmatmul.mubr.f32.gmra.mrb[0].mxu0 %v5786
    %v5885 = vpop.f32.mrb[0].mxu0
    %v5886 = vadd.f32 %v5769, %v5885
    %v5887 = vpop.f32.mrb[0].mxu0
    %5888 = vmatprep.mubr.f32.mxu0 0.0
    %5889 = vmatmul.mubr.f32.gmra.mrb[0].mxu0 %v5789
    %v5890 = vpop.f32.mrb[0].mxu0
    %v5891 = vadd.f32 %v5769, %v5890
    %v5892 = vpop.f32.mrb[0].mxu0
    %5893 = vmatprep.mubr.f32.mxu0 0.0
    %5894 = vmatmul.mubr.f32.gmra.mrb[0].mxu0 %v5792
    %v5895 = vpop.f32.mrb[0].mxu0
    %v5896 = vadd.f32 %v5769, %v5895
    %v5897 = vpop.f32.mrb[0].mxu0
    %5898 = vdwg.mxu0
    %v5899 = vmax.f32 %v5861, 0.0
    %v5900 = vmax.f32 %v5866, 0.0
    %v5901 = vmax.f32 %v5871, 0.0
    %v5902 = vmax.f32 %v5876, 0.0
    %v5903 = vmax.f32 %v5881, 0.0
    %v5904 = vmax.f32 %v5886, 0.0
    %v5905 = vmax.f32 %v5891, 0.0
    %v5906 = vmax.f32 %v5896, 0.0
    %v5907 = vlaneseq
    %v5908 = vshrl.u32 %v5907, 7
    %v5909 = vsub.s32 0, %v5908
    %v5910 = vrot.slane %v5763, %v5909
    %5911 = vmatprep.subr.mxu0 0.0
    %5912 = vmatpush1.msra.mxu0 %v5746
    %5913 = vmatprep.subr.mxu0 0.0
    %5914 = vmatpush1.msra.mxu0 %v5747
    %5915 = vmatprep.subr.mxu0 0.0
    %5916 = vmatpush1.msra.mxu0 %v5748
    %5917 = vmatprep.subr.mxu0 0.0
    %5918 = vmatpush1.msra.mxu0 %v5749
    %5919 = vmatprep.subr.mxu0 0.0
    %5920 = vmatpush1.msra.mxu0 %v5750
    %5921 = vmatprep.subr.mxu0 0.0
    %5922 = vmatpush1.msra.mxu0 %v5751
    %5923 = vmatprep.subr.mxu0 0.0
    %5924 = vmatpush1.msra.mxu0 %v5752
    %5925 = vmatprep.subr.mxu0 0.0
    %5926 = vmatpush1.msra.mxu0 %v5753
    %5927 = vmatprep.subr.mxu0 0.0
    %5928 = vmatpush1.msra.mxu0 %v5754
    %5929 = vmatprep.subr.mxu0 0.0
    %5930 = vmatpush1.msra.mxu0 %v5755
    %5931 = vmatprep.subr.mxu0 0.0
    %5932 = vmatpush1.msra.mxu0 %v5756
    %5933 = vmatprep.subr.mxu0 0.0
    %5934 = vmatpush1.msra.mxu0 %v5757
    %5935 = vmatprep.subr.mxu0 0.0
    %5936 = vmatpush1.msra.mxu0 %v5758
    %5937 = vmatprep.subr.mxu0 0.0
    %5938 = vmatpush1.msra.mxu0 %v5759
    %5939 = vmatprep.subr.mxu0 0.0
    %5940 = vmatpush1.msra.mxu0 %v5760
    %5941 = vmatprep.subr.mxu0 0.0
    %5942 = vmatpush1.msra.mxu0 %v5761
    %5943 = vmatprep.subr.mxu0 0.0
    %5944 = vmatpush1.msra.mxu0 0.0
    %5945 = vmatprep.subr.mxu0 0.0
    %5946 = vmatpush1.msra.mxu0 0.0
    %5947 = vmatprep.subr.mxu0 0.0
    %5948 = vmatpush1.msra.mxu0 0.0
    %5949 = vmatprep.subr.mxu0 0.0
    %5950 = vmatpush1.msra.mxu0 0.0
    %5951 = vmatprep.subr.mxu0 0.0
    %5952 = vmatpush1.msra.mxu0 0.0
    %5953 = vmatprep.subr.mxu0 0.0
    %5954 = vmatpush1.msra.mxu0 0.0
    %5955 = vmatprep.subr.mxu0 0.0
    %5956 = vmatpush1.msra.mxu0 0.0
    %5957 = vmatprep.subr.mxu0 0.0
    %5958 = vmatpush1.msra.mxu0 0.0
    %5959 = vmatprep.subr.mxu0 0.0
    %5960 = vmatpush1.msra.mxu0 0.0
    %5961 = vmatprep.subr.mxu0 0.0
    %5962 = vmatpush1.msra.mxu0 0.0
    %5963 = vmatprep.subr.mxu0 0.0
    %5964 = vmatpush1.msra.mxu0 0.0
    %5965 = vmatprep.subr.mxu0 0.0
    %5966 = vmatpush1.msra.mxu0 0.0
    %5967 = vmatprep.subr.mxu0 0.0
    %5968 = vmatpush1.msra.mxu0 0.0
    %5969 = vmatprep.subr.mxu0 0.0
    %5970 = vmatpush1.msra.mxu0 0.0
    %5971 = vmatprep.subr.mxu0 0.0
    %5972 = vmatpush1.msra.mxu0 0.0
    %5973 = vmatprep.subr.mxu0 0.0
    %5974 = vmatpush1.msra.mxu0 0.0
    %5975 = vmatprep.mubr.f32.mxu0 0.0
    %5976 = vmatmul.mubr.f32.gmra.mrb[0].mxu0 %v5899
    %v5977 = vpop.f32.mrb[0].mxu0
    %v5978 = vadd.f32 %v5910, %v5977
    %v5979 = vpop.f32.mrb[0].mxu0
    %5980 = vmatprep.mubr.f32.mxu0 0.0
    %5981 = vmatmul.mubr.f32.gmra.mrb[0].mxu0 %v5900
    %v5982 = vpop.f32.mrb[0].mxu0
    %v5983 = vadd.f32 %v5910, %v5982
    %v5984 = vpop.f32.mrb[0].mxu0
    %5985 = vmatprep.mubr.f32.mxu0 0.0
    %5986 = vmatmul.mubr.f32.gmra.mrb[0].mxu0 %v5901
    %v5987 = vpop.f32.mrb[0].mxu0
    %v5988 = vadd.f32 %v5910, %v5987
    %v5989 = vpop.f32.mrb[0].mxu0
    %5990 = vmatprep.mubr.f32.mxu0 0.0
    %5991 = vmatmul.mubr.f32.gmra.mrb[0].mxu0 %v5902
    %v5992 = vpop.f32.mrb[0].mxu0
    %v5993 = vadd.f32 %v5910, %v5992
    %v5994 = vpop.f32.mrb[0].mxu0
    %5995 = vmatprep.mubr.f32.mxu0 0.0
    %5996 = vmatmul.mubr.f32.gmra.mrb[0].mxu0 %v5903
    %v5997 = vpop.f32.mrb[0].mxu0
    %v5998 = vadd.f32 %v5910, %v5997
    %v5999 = vpop.f32.mrb[0].mxu0
    %6000 = vmatprep.mubr.f32.mxu0 0.0
    %6001 = vmatmul.mubr.f32.gmra.mrb[0].mxu0 %v5904
    %v6002 = vpop.f32.mrb[0].mxu0
    %v6003 = vadd.f32 %v5910, %v6002
    %v6004 = vpop.f32.mrb[0].mxu0
    %6005 = vmatprep.mubr.f32.mxu0 0.0
    %6006 = vmatmul.mubr.f32.gmra.mrb[0].mxu0 %v5905
    %v6007 = vpop.f32.mrb[0].mxu0
    %v6008 = vadd.f32 %v5910, %v6007
    %v6009 = vpop.f32.mrb[0].mxu0
    %6010 = vmatprep.mubr.f32.mxu0 0.0
    %6011 = vmatmul.mubr.f32.gmra.mrb[0].mxu0 %v5906
    %v6012 = vpop.f32.mrb[0].mxu0
    %v6013 = vadd.f32 %v5910, %v6012
    %v6014 = vpop.f32.mrb[0].mxu0
    %6015 = vdwg.mxu0
    %v6016 = vmax.f32 %v5978, 0.0
    %v6017 = vmax.f32 %v5983, 0.0
    %v6018 = vmax.f32 %v5988, 0.0
    %v6019 = vmax.f32 %v5993, 0.0
    %v6020 = vmax.f32 %v5998, 0.0
    %v6021 = vmax.f32 %v6003, 0.0
    %v6022 = vmax.f32 %v6008, 0.0
    %v6023 = vmax.f32 %v6013, 0.0
    %v6024 = vlaneseq
    %v6025 = vshrl.u32 %v6024, 7
    %v6026 = vsub.s32 0, %v6025
    %v6027 = vrot.slane %v5764, %v6026
    %v6028 = vmul.f32 %v6016, %v6027
    %v6029 = vmul.f32 %v6017, %v6027
    %v6030 = vmul.f32 %v6018, %v6027
    %v6031 = vmul.f32 %v6019, %v6027
    %v6032 = vmul.f32 %v6020, %v6027
    %v6033 = vmul.f32 %v6021, %v6027
    %v6034 = vmul.f32 %v6022, %v6027
    %v6035 = vmul.f32 %v6023, %v6027
    %6036 = vadd.xlane.f32.xlu0 %v6028
    %v6037 = vpop.xlane.xlu0 %6036
    %6038 = vadd.xlane.f32.xlu0 %v6029
    %v6039 = vpop.xlane.xlu0 %6038
    %6040 = vadd.xlane.f32.xlu0 %v6030
    %v6041 = vpop.xlane.xlu0 %6040
    %6042 = vadd.xlane.f32.xlu0 %v6031
    %v6043 = vpop.xlane.xlu0 %6042
    %6044 = vadd.xlane.f32.xlu0 %v6032
    %v6045 = vpop.xlane.xlu0 %6044
    %6046 = vadd.xlane.f32.xlu0 %v6033
    %v6047 = vpop.xlane.xlu0 %6046
    %6048 = vadd.xlane.f32.xlu0 %v6034
    %v6049 = vpop.xlane.xlu0 %6048
    %6050 = vadd.xlane.f32.xlu0 %v6035
    %v6051 = vpop.xlane.xlu0 %6050
    %v6052 = vlaneseq
    %v6053 = vshrl.u32 %v6052, 7
    %v6054 = vsub.s32 0, %v6053
    %v6055 = vrot.slane %v5765, %v6054
    %v6056 = vadd.f32 %v6037, %v6055
    %v6057 = vadd.f32 %v6039, %v6055
    %v6058 = vadd.f32 %v6041, %v6055
    %v6059 = vadd.f32 %v6043, %v6055
    %v6060 = vadd.f32 %v6045, %v6055
    %v6061 = vadd.f32 %v6047, %v6055
    %v6062 = vadd.f32 %v6049, %v6055
    %v6063 = vadd.f32 %v6051, %v6055
    %v6064 = vmax.f32 %v6056, 0.0
    %v6065 = vmax.f32 %v6057, 0.0
    %v6066 = vmax.f32 %v6058, 0.0
    %v6067 = vmax.f32 %v6059, 0.0
    %v6068 = vmax.f32 %v6060, 0.0
    %v6069 = vmax.f32 %v6061, 0.0
    %v6070 = vmax.f32 %v6062, 0.0
    %v6071 = vmax.f32 %v6063, 0.0
    %6073 = vrot.lane.b32.xlu0 %v6055, 127
    %v6074 = vpop.permute.xlu0 %6073
    %v6076 = vmul.f32 %v6064, %v6074
    %v6077 = vmul.f32 %v6065, %v6074
    %v6078 = vmul.f32 %v6066, %v6074
    %v6079 = vmul.f32 %v6067, %v6074
    %v6080 = vmul.f32 %v6068, %v6074
    %v6081 = vmul.f32 %v6069, %v6074
    %v6082 = vmul.f32 %v6070, %v6074
    %v6083 = vmul.f32 %v6071, %v6074
    %6084 = vrot.lane.b32.xlu0 %v6055, 126
    %v6085 = vpop.permute.xlu0 %6084
    %v6087 = vadd.f32 %v6076, %v6085
    %v6088 = vadd.f32 %v6077, %v6085
    %v6089 = vadd.f32 %v6078, %v6085
    %v6090 = vadd.f32 %v6079, %v6085
    %v6091 = vadd.f32 %v6080, %v6085
    %v6092 = vadd.f32 %v6081, %v6085
    %v6093 = vadd.f32 %v6082, %v6085
    %v6094 = vadd.f32 %v6083, %v6085
    %v6095 = vxor.u32 %v6087, 2147483648
    %v6096 = vxor.u32 %v6088, 2147483648
    %v6097 = vxor.u32 %v6089, 2147483648
    %v6098 = vxor.u32 %v6090, 2147483648
    %v6099 = vxor.u32 %v6091, 2147483648
    %v6100 = vxor.u32 %v6092, 2147483648
    %v6101 = vxor.u32 %v6093, 2147483648
    %v6102 = vxor.u32 %v6094, 2147483648
    %v6103 = vmul.f32 %v6095, 1.442695
    %v6104 = vpow.pop %v6103
    %v6105 = vmul.f32 %v6096, 1.442695
    %v6106 = vpow.pop %v6105
    %v6107 = vmul.f32 %v6097, 1.442695
    %v6108 = vpow.pop %v6107
    %v6109 = vmul.f32 %v6098, 1.442695
    %v6110 = vpow.pop %v6109
    %v6111 = vmul.f32 %v6099, 1.442695
    %v6112 = vpow.pop %v6111
    %v6113 = vmul.f32 %v6100, 1.442695
    %v6114 = vpow.pop %v6113
    %v6115 = vmul.f32 %v6101, 1.442695
    %v6116 = vpow.pop %v6115
    %v6117 = vmul.f32 %v6102, 1.442695
    %v6118 = vpow.pop %v6117
    %v6119 = vadd.f32 %v6104, 1.0
    %v6120 = vadd.f32 %v6106, 1.0
    %v6121 = vadd.f32 %v6108, 1.0
    %v6122 = vadd.f32 %v6110, 1.0
    %v6123 = vadd.f32 %v6112, 1.0
    %v6124 = vadd.f32 %v6114, 1.0
    %v6125 = vadd.f32 %v6116, 1.0
    %v6126 = vadd.f32 %v6118, 1.0
    %v6127 = vrcp.pop %v6119
    %v6128 = vmul.f32 1.0, %v6127
    %v6129 = vrcp.pop %v6120
    %v6130 = vmul.f32 1.0, %v6129
    %v6131 = vrcp.pop %v6121
    %v6132 = vmul.f32 1.0, %v6131
    %v6133 = vrcp.pop %v6122
    %v6134 = vmul.f32 1.0, %v6133
    %v6135 = vrcp.pop %v6123
    %v6136 = vmul.f32 1.0, %v6135
    %v6137 = vrcp.pop %v6124
    %v6138 = vmul.f32 1.0, %v6137
    %v6139 = vrcp.pop %v6125
    %v6140 = vmul.f32 1.0, %v6139
    %v6141 = vrcp.pop %v6126
    %v6142 = vmul.f32 1.0, %v6141
    %vm6143 = vcmask 7168
    %6144 = vst.msk [vmem:[%s3] sm:$0xff] %vm6143, %v6128
    %6145 = vst.msk [vmem:[%s3 + $0x8] sm:$0xff] %vm6143, %v6130
    %6146 = vst.msk [vmem:[%s3 + $0x10] sm:$0xff] %vm6143, %v6132
    %6147 = vst.msk [vmem:[%s3 + $0x18] sm:$0xff] %vm6143, %v6134
    %6148 = vst.msk [vmem:[%s3 + $0x20] sm:$0xff] %vm6143, %v6136
    %6149 = vst.msk [vmem:[%s3 + $0x28] sm:$0xff] %vm6143, %v6138
    %6150 = vst.msk [vmem:[%s3 + $0x30] sm:$0xff] %vm6143, %v6140
    %6151 = vst.msk [vmem:[%s3 + $0x38] sm:$0xff] %vm6143, %v6142
    // Predicated region
    $region18: #{reslstm_forward.1} parent=1 // pred_check
      _
    $region19: #{reslstm_forward.1} parent=1 // pred_check_branch
      %6153 = sbr.rel (0) target = $region21
    $region20: #{reslstm_forward.1} parent=1 // pred_region
      _
    $region21: #{reslstm_forward.1} parent=1 // pred_fallthru
      _
    // Predicated region
    $region22: #{reslstm_forward.1} parent=1 // pred_check
      _
    $region23: #{reslstm_forward.1} parent=1 // pred_check_branch
      %6155 = sbr.rel (0) target = $region25
    $region24: #{reslstm_forward.1} parent=1 // pred_region
      _
    $region25: #{reslstm_forward.1} parent=1 // pred_fallthru
      _
    %6156 = vsyncpa [#allocation6], 1

</llo_original>
